<compile_context>
chip_gen: v6e
topology: v6e:2x2x1
jax: 0.10.0
libtpu: 0.0.40
codegen_flags: <defaults>
</compile_context>

<pallas_src>
import jax
import jax.numpy as jnp
from jax import lax
from jax.experimental import pallas as pl
from jax.experimental.pallas import tpu as pltpu

# ---------------- config (small, consistent with the module) ----------------
VOCAB = 50
MAX_TOKEN_LEN = 16
HIDDEN = 32
INTER = 64
NUM_HEADS = 4
HEAD_DIM = HIDDEN // NUM_HEADS
NUM_LAYERS = 2
TAG_SIZE = 5
PAD_ID = 0
B = 2
S = 8
EPS = 1e-12
NEG_BIG = -1e9


# ============================ fused forward kernel ===========================
def fused_kernel(idsc_ref, ids2_ref, wemb_ref, pemb_ref,
                 wqkv_ref, bqkv_ref, wo_ref, bo_ref,
                 w1_ref, c1_ref, w2_ref, c2_ref, ln_ref,
                 wfc_ref, bfc_ref, wtag_ref, btag_ref,
                 start_ref, end_ref, trans_ref,
                 tags_ref):
    Bk, Sk = ids2_ref.shape
    BS = Bk * Sk
    V, H = wemb_ref.shape
    L = wqkv_ref.shape[0]
    T = trans_ref.shape[0]
    HD = H // NUM_HEADS
    scale = 1.0 / float(HD) ** 0.5

    # ------------------------- masks from input_ids -------------------------
    ids2 = ids2_ref[...]                                   # (B, S) int32
    pad2 = ids2 == PAD_ID
    neg = jnp.where(pad2, NEG_BIG, 0.0).astype(jnp.float32)   # additive key mask
    valid2 = jnp.logical_not(pad2)                         # (B, S) bool

    # --------------- embedding: one-hot matmul gather + pos add -------------
    ids_col = idsc_ref[...]                                # (B*S, 1) int32
    onehot = (ids_col ==
              lax.broadcasted_iota(jnp.int32, (BS, V), 1)).astype(jnp.float32)
    x = jnp.dot(onehot, wemb_ref[...], preferred_element_type=jnp.float32)
    posm = pemb_ref[0:Sk, :]                               # (S, H)
    x = x + jnp.concatenate([posm] * Bk, axis=0)           # (B*S, H)
    # dropout = identity (eval)

    # -------- encoder layers (no residuals, per the reference Encoder) ------
    for l in range(L):
        qkv = jnp.dot(x, wqkv_ref[l],
                      preferred_element_type=jnp.float32) + bqkv_ref[l]  # (BS,3H)
        q = qkv[:, 0:H]
        k = qkv[:, H:2 * H]
        v = qkv[:, 2 * H:3 * H]

        attn_rows = []
        for b in range(Bk):                                # static loop over B
            r0 = b * Sk
            qb = q[r0:r0 + Sk, :]
            kb = k[r0:r0 + Sk, :]
            vb = v[r0:r0 + Sk, :]
            neg_b = neg[b:b + 1, :]                        # (1, S) key padding
            heads = []
            for hh in range(NUM_HEADS):                    # static loop, heads
                lo = hh * HD
                qh = qb[:, lo:lo + HD]
                kh = kb[:, lo:lo + HD]
                vh = vb[:, lo:lo + HD]
                s = jnp.dot(qh, kh.T,
                            preferred_element_type=jnp.float32) * scale + neg_b
                s = s - jnp.max(s, axis=-1, keepdims=True)
                p = jnp.exp(s)
                p = p / jnp.sum(p, axis=-1, keepdims=True)
                heads.append(jnp.dot(p, vh, preferred_element_type=jnp.float32))
            attn_rows.append(jnp.concatenate(heads, axis=-1))   # (S, H)
        attn = jnp.concatenate(attn_rows, axis=0)               # (B*S, H)

        y = jnp.dot(attn, wo_ref[l],
                    preferred_element_type=jnp.float32) + bo_ref[l]

        lnl = ln_ref[l]                                    # (4, H): g1,b1,g2,b2
        g1 = lnl[0:1, :]
        be1 = lnl[1:2, :]
        g2 = lnl[2:3, :]
        be2 = lnl[3:4, :]

        mu = jnp.mean(y, axis=-1, keepdims=True)
        var = jnp.mean((y - mu) ** 2, axis=-1, keepdims=True)
        y = (y - mu) / jnp.sqrt(var + EPS) * g1 + be1      # LayerNorm1 (eps 1e-12)

        h1 = jnp.maximum(
            jnp.dot(y, w1_ref[l], preferred_element_type=jnp.float32) + c1_ref[l],
            0.0)
        y2 = jnp.dot(h1, w2_ref[l],
                     preferred_element_type=jnp.float32) + c2_ref[l]

        mu2 = jnp.mean(y2, axis=-1, keepdims=True)
        var2 = jnp.mean((y2 - mu2) ** 2, axis=-1, keepdims=True)
        x = (y2 - mu2) / jnp.sqrt(var2 + EPS) * g2 + be2   # LayerNorm2

    # ----------- fc -> tanh -> hidden2tag (feats stay VMEM-resident) --------
    hfc = jnp.tanh(jnp.dot(x, wfc_ref[...],
                           preferred_element_type=jnp.float32) + bfc_ref[...])
    feats = (jnp.dot(hfc, wtag_ref[...],
                     preferred_element_type=jnp.float32) + btag_ref[...])  # (BS,T)
    feats_t = feats.T                                      # (T, B*S), one transpose

    # ------------------- CRF Viterbi decode + backtrack ---------------------
    trans = trans_ref[...]                                 # (T, T) [prev, nxt]
    trans_t = trans.T                                      # (T, T) [nxt, prev]
    start_row = start_ref[...]                             # (1, T)
    end_row = end_ref[...]                                 # (1, T)

    iota_row = lax.broadcasted_iota(jnp.int32, (1, T), 1)
    iota_col = lax.broadcasted_iota(jnp.int32, (T, 1), 0)
    prev_lane = lax.broadcasted_iota(jnp.int32, (T, T), 1)
    prev_sub = lax.broadcasted_iota(jnp.int32, (T, T), 0)
    # "identity" transition used on masked steps: keeps the score unchanged.
    eye_neg = jnp.where(prev_sub == prev_lane, 0.0, NEG_BIG).astype(jnp.float32)
    pos_iota = lax.broadcasted_iota(jnp.int32, (1, Sk), 1)

    tag_rows = []
    for b in range(Bk):                                    # static loop over B
        emis = feats[b * Sk:(b + 1) * Sk, :]               # (S, T)
        emis_t = feats_t[:, b * Sk:(b + 1) * Sk]           # (T, S)
        valid_b = valid2[b:b + 1, :]                       # (1, S) bool

        # forward recursion, alternating row/column score orientation so no
        # per-step transposes are needed.
        score_row = start_row + emis[0:1, :]               # (1, T), by prev tag
        score_col = None
        row_in = True
        bp_list = [None]                                   # t = 0 placeholder
        for t in range(1, Sk):
            on_t = valid_b[0:1, t:t + 1]                   # (1,1) bool
            if row_in:
                # score_row[0, prev]; m[nxt, prev]
                m = score_row + jnp.where(on_t, trans_t, eye_neg)
                best = jnp.max(m, axis=1, keepdims=True)                 # (T,1)
                bp = jnp.min(jnp.where(m == best, prev_lane, T),
                             axis=1, keepdims=True)                      # (T,1)
                score_col = best + jnp.where(on_t, emis_t[:, t:t + 1], 0.0)
                bp_list.append((bp, True))
                row_in = False
            else:
                # score_col[prev, 0]; m[prev, nxt]
                m = score_col + jnp.where(on_t, trans, eye_neg)
                best = jnp.max(m, axis=0, keepdims=True)                 # (1,T)
                bp = jnp.min(jnp.where(m == best, prev_sub, T),
                             axis=0, keepdims=True)                      # (1,T)
                score_row = best + jnp.where(on_t, emis[t:t + 1, :], 0.0)
                bp_list.append((bp, False))
                row_in = True

        # single transpose at the very end (if the score ended column-major)
        final_row = (score_row + end_row) if row_in else (score_col.T + end_row)

        fmax = jnp.max(final_row, axis=-1, keepdims=True)
        best_last = jnp.min(jnp.where(final_row == fmax, iota_row, T),
                            axis=-1, keepdims=True)                      # (1,1)
        seq_end = jnp.sum(valid_b.astype(jnp.int32),
                          axis=-1, keepdims=True) - 1                    # (1,1)

        # backtracking, fully unrolled, one-hot selects (pad positions -> 0)
        cur = jnp.zeros((1, 1), jnp.int32)
        tags_row = jnp.zeros((1, Sk), jnp.int32)
        for t in range(Sk - 1, -1, -1):
            cur = jnp.where(seq_end == t, best_last, cur)
            tags_row = tags_row + jnp.where(pos_iota == t, cur, 0)
            if t >= 1:
                bp, is_col = bp_list[t]
                if is_col:
                    prev = jnp.sum(jnp.where(iota_col == cur, bp, 0),
                                   axis=0, keepdims=True)                # (1,1)
                else:
                    prev = jnp.sum(jnp.where(iota_row == cur, bp, 0),
                                   axis=1, keepdims=True)                # (1,1)
                cur = jnp.where(seq_end >= t, prev, cur)
        tag_rows.append(tags_row)

    tags_ref[...] = jnp.concatenate(tag_rows, axis=0)      # (B, S) int32


# ============================== host-side wrapper ===========================
def _full(shape):
    n = len(shape)
    return pl.BlockSpec(shape, lambda i, _n=n: (0,) * _n)


def transformer_crf_decode(params, input_ids, lengths):
    # `lengths` is only used by the training branch in PyTorch; unused here.
    del lengths
    B_, S_ = input_ids.shape
    ids2d = input_ids.astype(jnp.int32)
    ids_col = ids2d.reshape(B_ * S_, 1)                    # same ids, flat layout

    args = (ids_col, ids2d,
            params["word_emb"], params["pos_emb"],
            params["wqkv"], params["bqkv"], params["wo"], params["bo"],
            params["w1"], params["c1"], params["w2"], params["c2"], params["ln"],
            params["wfc"], params["bfc"], params["wtag"], params["btag"],
            params["crf_start"], params["crf_end"], params["crf_trans"])

    tags = pl.pallas_call(
        fused_kernel,
        grid=(1,),                                         # single fused launch
        in_specs=[_full(a.shape) for a in args],
        out_specs=_full((B_, S_)),
        out_shape=jax.ShapeDtypeStruct((B_, S_), jnp.int32),
        compiler_params=pltpu.CompilerParams(
            dimension_semantics=("arbitrary",)),
    )(*args)

    seq_lens = jnp.sum(ids2d != PAD_ID, axis=1).astype(jnp.int32)
    return tags, seq_lens


# ============================== parameter init ==============================
def init_params(key):
    ks = jax.random.split(key, 3 + NUM_LAYERS)

    def nrm(k, shape, scale=0.02):
        return (scale * jax.random.normal(k, shape)).astype(jnp.float32)

    params = {
        "word_emb": nrm(ks[0], (VOCAB, HIDDEN), 1.0),
        "pos_emb": nrm(ks[1], (MAX_TOKEN_LEN, HIDDEN), 1.0),
    }

    wqkv, bqkv, wo, bo, w1, c1, w2, c2, ln = ([] for _ in range(9))
    for l in range(NUM_LAYERS):
        lk = jax.random.split(ks[2 + l], 6)
        wq = nrm(lk[0], (HIDDEN, HIDDEN))
        wk = nrm(lk[1], (HIDDEN, HIDDEN))
        wv = nrm(lk[2], (HIDDEN, HIDDEN))
        wqkv.append(jnp.concatenate([wq, wk, wv], axis=1))          # (H, 3H)
        bqkv.append(jnp.zeros((1, 3 * HIDDEN), jnp.float32))
        wo.append(nrm(lk[3], (HIDDEN, HIDDEN)))
        bo.append(jnp.zeros((1, HIDDEN), jnp.float32))
        w1.append(nrm(lk[4], (HIDDEN, INTER)))
        c1.append(jnp.zeros((1, INTER), jnp.float32))
        w2.append(nrm(lk[5], (INTER, HIDDEN)))
        c2.append(jnp.zeros((1, HIDDEN), jnp.float32))
        ln.append(jnp.stack([jnp.ones(HIDDEN, jnp.float32),          # gamma1
                             jnp.zeros(HIDDEN, jnp.float32),         # beta1
                             jnp.ones(HIDDEN, jnp.float32),          # gamma2
                             jnp.zeros(HIDDEN, jnp.float32)], axis=0))
    params["wqkv"] = jnp.stack(wqkv)        # (L, H, 3H)
    params["bqkv"] = jnp.stack(bqkv)        # (L, 1, 3H)
    params["wo"] = jnp.stack(wo)            # (L, H, H)
    params["bo"] = jnp.stack(bo)            # (L, 1, H)
    params["w1"] = jnp.stack(w1)            # (L, H, INTER)
    params["c1"] = jnp.stack(c1)            # (L, 1, INTER)
    params["w2"] = jnp.stack(w2)            # (L, INTER, H)
    params["c2"] = jnp.stack(c2)            # (L, 1, H)
    params["ln"] = jnp.stack(ln)            # (L, 4, H)

    k_fc, k_tag, k_s, k_e, k_t = jax.random.split(ks[2 + NUM_LAYERS], 5)
    params["wfc"] = nrm(k_fc, (HIDDEN, HIDDEN), 0.1)
    params["bfc"] = jnp.zeros((1, HIDDEN), jnp.float32)
    params["wtag"] = nrm(k_tag, (HIDDEN, TAG_SIZE), 0.1)
    params["btag"] = jnp.zeros((1, TAG_SIZE), jnp.float32)
    params["crf_start"] = jax.random.uniform(k_s, (1, TAG_SIZE), jnp.float32, -0.1, 0.1)
    params["crf_end"] = jax.random.uniform(k_e, (1, TAG_SIZE), jnp.float32, -0.1, 0.1)
    params["crf_trans"] = jax.random.uniform(k_t, (TAG_SIZE, TAG_SIZE), jnp.float32, -0.1, 0.1)
    return params


# =================================== main ===================================
if __name__ == "__main__":
    key = jax.random.PRNGKey(0)
    pkey, dkey = jax.random.split(key)
    params = init_params(pkey)

    input_ids = jax.random.randint(dkey, (B, S), 1, VOCAB).astype(jnp.int32)
    lengths = jnp.array([S, 5], dtype=jnp.int32)
    pos = jnp.arange(S)[None, :]
    input_ids = jnp.where(pos < lengths[:, None], input_ids, PAD_ID)   # pad tail

    tags, seq_lens = jax.jit(transformer_crf_decode)(params, input_ids, lengths)
    jax.block_until_ready((tags, seq_lens))
    print("KERNEL_OK")
</pallas_src>

<mosaic_0001>
module attributes {stable_mosaic.version = 11 : i64} {
  func.func @fused_kernel(%arg0: i32, %arg1: memref<16x1xi32, #tpu.memory_space<vmem>>, %arg2: memref<2x8xi32, #tpu.memory_space<vmem>>, %arg3: memref<50x32xf32, #tpu.memory_space<vmem>>, %arg4: memref<16x32xf32, #tpu.memory_space<vmem>>, %arg5: memref<2x32x96xf32, #tpu.memory_space<vmem>>, %arg6: memref<2x1x96xf32, #tpu.memory_space<vmem>>, %arg7: memref<2x32x32xf32, #tpu.memory_space<vmem>>, %arg8: memref<2x1x32xf32, #tpu.memory_space<vmem>>, %arg9: memref<2x32x64xf32, #tpu.memory_space<vmem>>, %arg10: memref<2x1x64xf32, #tpu.memory_space<vmem>>, %arg11: memref<2x64x32xf32, #tpu.memory_space<vmem>>, %arg12: memref<2x1x32xf32, #tpu.memory_space<vmem>>, %arg13: memref<2x4x32xf32, #tpu.memory_space<vmem>>, %arg14: memref<32x32xf32, #tpu.memory_space<vmem>>, %arg15: memref<1x32xf32, #tpu.memory_space<vmem>>, %arg16: memref<32x5xf32, #tpu.memory_space<vmem>>, %arg17: memref<1x5xf32, #tpu.memory_space<vmem>>, %arg18: memref<1x5xf32, #tpu.memory_space<vmem>>, %arg19: memref<1x5xf32, #tpu.memory_space<vmem>>, %arg20: memref<5x5xf32, #tpu.memory_space<vmem>>, %arg21: memref<2x8xi32, #tpu.memory_space<vmem>>) attributes {dimension_semantics = [#tpu.dimension_semantics<arbitrary>], iteration_bounds = array<i64: 1>, scalar_prefetch = 0 : i64, scratch_operands = 0 : i64, tpu.core_type = #tpu.core_type<tc>, window_params = [{pipeline_mode = #tpu.pipeline_mode<synchronous>, transform_indices = @transform_0, window_bounds = array<i64: 16, 1>}, {pipeline_mode = #tpu.pipeline_mode<synchronous>, transform_indices = @transform_1, window_bounds = array<i64: 2, 8>}, {pipeline_mode = #tpu.pipeline_mode<synchronous>, transform_indices = @transform_2, window_bounds = array<i64: 50, 32>}, {pipeline_mode = #tpu.pipeline_mode<synchronous>, transform_indices = @transform_3, window_bounds = array<i64: 16, 32>}, {pipeline_mode = #tpu.pipeline_mode<synchronous>, transform_indices = @transform_4, window_bounds = array<i64: 2, 32, 96>}, {pipeline_mode = #tpu.pipeline_mode<synchronous>, transform_indices = @transform_5, window_bounds = array<i64: 2, 1, 96>}, {pipeline_mode = #tpu.pipeline_mode<synchronous>, transform_indices = @transform_6, window_bounds = array<i64: 2, 32, 32>}, {pipeline_mode = #tpu.pipeline_mode<synchronous>, transform_indices = @transform_7, window_bounds = array<i64: 2, 1, 32>}, {pipeline_mode = #tpu.pipeline_mode<synchronous>, transform_indices = @transform_8, window_bounds = array<i64: 2, 32, 64>}, {pipeline_mode = #tpu.pipeline_mode<synchronous>, transform_indices = @transform_9, window_bounds = array<i64: 2, 1, 64>}, {pipeline_mode = #tpu.pipeline_mode<synchronous>, transform_indices = @transform_10, window_bounds = array<i64: 2, 64, 32>}, {pipeline_mode = #tpu.pipeline_mode<synchronous>, transform_indices = @transform_11, window_bounds = array<i64: 2, 1, 32>}, {pipeline_mode = #tpu.pipeline_mode<synchronous>, transform_indices = @transform_12, window_bounds = array<i64: 2, 4, 32>}, {pipeline_mode = #tpu.pipeline_mode<synchronous>, transform_indices = @transform_13, window_bounds = array<i64: 32, 32>}, {pipeline_mode = #tpu.pipeline_mode<synchronous>, transform_indices = @transform_14, window_bounds = array<i64: 1, 32>}, {pipeline_mode = #tpu.pipeline_mode<synchronous>, transform_indices = @transform_15, window_bounds = array<i64: 32, 5>}, {pipeline_mode = #tpu.pipeline_mode<synchronous>, transform_indices = @transform_16, window_bounds = array<i64: 1, 5>}, {pipeline_mode = #tpu.pipeline_mode<synchronous>, transform_indices = @transform_17, window_bounds = array<i64: 1, 5>}, {pipeline_mode = #tpu.pipeline_mode<synchronous>, transform_indices = @transform_18, window_bounds = array<i64: 1, 5>}, {pipeline_mode = #tpu.pipeline_mode<synchronous>, transform_indices = @transform_19, window_bounds = array<i64: 5, 5>}, {pipeline_mode = #tpu.pipeline_mode<synchronous>, transform_indices = @transform_20, window_bounds = array<i64: 2, 8>}]} {
    %c0 = arith.constant 0 : index
    %c0_0 = arith.constant 0 : index
    %0 = vector.load %arg2[%c0, %c0_0] : memref<2x8xi32, #tpu.memory_space<vmem>>, vector<2x8xi32>
    %c0_i32 = arith.constant 0 : i32
    %1 = vector.broadcast %c0_i32 : i32 to vector<2x8xi32>
    %2 = arith.cmpi eq, %0, %1 : vector<2x8xi32>
    %cst = arith.constant -1.000000e+09 : f32
    %cst_1 = arith.constant 0.000000e+00 : f32
    %3 = vector.broadcast %cst : f32 to vector<2x8xf32>
    %4 = vector.broadcast %cst_1 : f32 to vector<2x8xf32>
    %5 = arith.select %2, %3, %4 : vector<2x8xi1>, vector<2x8xf32>
    %cst_2 = arith.constant dense<true> : vector<2x8xi1>
    %6 = arith.xori %2, %cst_2 : vector<2x8xi1>
    %c0_3 = arith.constant 0 : index
    %c0_4 = arith.constant 0 : index
    %7 = vector.load %arg1[%c0_3, %c0_4] : memref<16x1xi32, #tpu.memory_space<vmem>>, vector<16x1xi32>
    %8 = tpu.iota {dimensions = array<i32: 1>} : vector<16x50xi32>
    %9 = vector.broadcast %7 : vector<16x1xi32> to vector<16x50xi32>
    %10 = arith.cmpi eq, %9, %8 : vector<16x50xi32>
    %11 = arith.extui %10 : vector<16x50xi1> to vector<16x50xi32>
    %12 = arith.sitofp %11 : vector<16x50xi32> to vector<16x50xf32>
    %c0_5 = arith.constant 0 : index
    %c0_6 = arith.constant 0 : index
    %13 = vector.load %arg3[%c0_5, %c0_6] : memref<50x32xf32, #tpu.memory_space<vmem>>, vector<50x32xf32>
    %cst_7 = arith.constant dense<0.000000e+00> : vector<16x32xf32>
    %14 = tpu.matmul %12, %13, %cst_7 {dimension_numbers = #tpu.dot_dimension_numbers<[1], [0], [0], [1], [0, 0, 1, 1], [], []>} : vector<16x50xf32>, vector<50x32xf32>, vector<16x32xf32> -> vector<16x32xf32>
    %c0_8 = arith.constant 0 : index
    %c0_9 = arith.constant 0 : index
    %15 = vector.load %arg4[%c0_8, %c0_9] : memref<16x32xf32, #tpu.memory_space<vmem>>, vector<8x32xf32>
    %16 = tpu.concatenate %15, %15 in 0 : vector<8x32xf32>, vector<8x32xf32> -> vector<16x32xf32>
    %17 = arith.addf %14, %16 : vector<16x32xf32>
    %c0_10 = arith.constant 0 : index
    %c0_11 = arith.constant 0 : index
    %c0_12 = arith.constant 0 : index
    %18 = vector.load %arg5[%c0_10, %c0_11, %c0_12] : memref<2x32x96xf32, #tpu.memory_space<vmem>>, vector<1x32x96xf32>
    %19 = vector.shape_cast %18 : vector<1x32x96xf32> to vector<32x96xf32>
    %cst_13 = arith.constant dense<0.000000e+00> : vector<16x96xf32>
    %20 = tpu.matmul %17, %19, %cst_13 {dimension_numbers = #tpu.dot_dimension_numbers<[1], [0], [0], [1], [0, 0, 1, 1], [], []>} : vector<16x32xf32>, vector<32x96xf32>, vector<16x96xf32> -> vector<16x96xf32>
    %c0_14 = arith.constant 0 : index
    %c0_15 = arith.constant 0 : index
    %c0_16 = arith.constant 0 : index
    %21 = vector.load %arg6[%c0_14, %c0_15, %c0_16] : memref<2x1x96xf32, #tpu.memory_space<vmem>>, vector<1x1x96xf32>
    %22 = vector.shape_cast %21 : vector<1x1x96xf32> to vector<1x96xf32>
    %23 = vector.broadcast %22 : vector<1x96xf32> to vector<16x96xf32>
    %24 = arith.addf %20, %23 : vector<16x96xf32>
    %25 = vector.extract_strided_slice %24 {offsets = [0, 0], sizes = [16, 32], strides = [1, 1]} : vector<16x96xf32> to vector<16x32xf32>
    %26 = vector.extract_strided_slice %24 {offsets = [0, 32], sizes = [16, 32], strides = [1, 1]} : vector<16x96xf32> to vector<16x32xf32>
    %27 = vector.extract_strided_slice %24 {offsets = [0, 64], sizes = [16, 32], strides = [1, 1]} : vector<16x96xf32> to vector<16x32xf32>
    %28 = vector.extract_strided_slice %25 {offsets = [0, 0], sizes = [8, 32], strides = [1, 1]} : vector<16x32xf32> to vector<8x32xf32>
    %29 = vector.extract_strided_slice %26 {offsets = [0, 0], sizes = [8, 32], strides = [1, 1]} : vector<16x32xf32> to vector<8x32xf32>
    %30 = vector.extract_strided_slice %27 {offsets = [0, 0], sizes = [8, 32], strides = [1, 1]} : vector<16x32xf32> to vector<8x32xf32>
    %31 = vector.extract_strided_slice %5 {offsets = [0, 0], sizes = [1, 8], strides = [1, 1]} : vector<2x8xf32> to vector<1x8xf32>
    %32 = vector.extract_strided_slice %28 {offsets = [0, 0], sizes = [8, 8], strides = [1, 1]} : vector<8x32xf32> to vector<8x8xf32>
    %33 = vector.extract_strided_slice %29 {offsets = [0, 0], sizes = [8, 8], strides = [1, 1]} : vector<8x32xf32> to vector<8x8xf32>
    %34 = vector.extract_strided_slice %30 {offsets = [0, 0], sizes = [8, 8], strides = [1, 1]} : vector<8x32xf32> to vector<8x8xf32>
    %35 = tpu.transpose %33, [1, 0] : vector<8x8xf32> -> vector<8x8xf32>
    %cst_17 = arith.constant dense<0.000000e+00> : vector<8x8xf32>
    %36 = tpu.matmul %32, %35, %cst_17 {dimension_numbers = #tpu.dot_dimension_numbers<[1], [0], [0], [1], [0, 0, 1, 1], [], []>} : vector<8x8xf32>, vector<8x8xf32>, vector<8x8xf32> -> vector<8x8xf32>
    %cst_18 = arith.constant 0.353553385 : f32
    %37 = vector.broadcast %cst_18 : f32 to vector<8x8xf32>
    %38 = arith.mulf %36, %37 : vector<8x8xf32>
    %39 = vector.broadcast %31 : vector<1x8xf32> to vector<8x8xf32>
    %40 = arith.addf %38, %39 : vector<8x8xf32>
    %cst_19 = arith.constant dense<0xFF800000> : vector<8xf32>
    %41 = vector.multi_reduction <maximumf>, %40, %cst_19 [1] : vector<8x8xf32> to vector<8xf32>
    %42 = vector.shape_cast %41 : vector<8xf32> to vector<8x1xf32>
    %43 = vector.broadcast %42 : vector<8x1xf32> to vector<8x8xf32>
    %44 = arith.subf %40, %43 : vector<8x8xf32>
    %45 = math.exp %44 : vector<8x8xf32>
    %cst_20 = arith.constant dense<0.000000e+00> : vector<8xf32>
    %46 = vector.multi_reduction <add>, %45, %cst_20 [1] : vector<8x8xf32> to vector<8xf32>
    %47 = vector.shape_cast %46 : vector<8xf32> to vector<8x1xf32>
    %48 = vector.broadcast %47 : vector<8x1xf32> to vector<8x8xf32>
    %49 = arith.divf %45, %48 : vector<8x8xf32>
    %cst_21 = arith.constant dense<0.000000e+00> : vector<8x8xf32>
    %50 = tpu.matmul %49, %34, %cst_21 {dimension_numbers = #tpu.dot_dimension_numbers<[1], [0], [0], [1], [0, 0, 1, 1], [], []>} : vector<8x8xf32>, vector<8x8xf32>, vector<8x8xf32> -> vector<8x8xf32>
    %51 = vector.extract_strided_slice %28 {offsets = [0, 8], sizes = [8, 8], strides = [1, 1]} : vector<8x32xf32> to vector<8x8xf32>
    %52 = vector.extract_strided_slice %29 {offsets = [0, 8], sizes = [8, 8], strides = [1, 1]} : vector<8x32xf32> to vector<8x8xf32>
    %53 = vector.extract_strided_slice %30 {offsets = [0, 8], sizes = [8, 8], strides = [1, 1]} : vector<8x32xf32> to vector<8x8xf32>
    %54 = tpu.transpose %52, [1, 0] : vector<8x8xf32> -> vector<8x8xf32>
    %cst_22 = arith.constant dense<0.000000e+00> : vector<8x8xf32>
    %55 = tpu.matmul %51, %54, %cst_22 {dimension_numbers = #tpu.dot_dimension_numbers<[1], [0], [0], [1], [0, 0, 1, 1], [], []>} : vector<8x8xf32>, vector<8x8xf32>, vector<8x8xf32> -> vector<8x8xf32>
    %cst_23 = arith.constant 0.353553385 : f32
    %56 = vector.broadcast %cst_23 : f32 to vector<8x8xf32>
    %57 = arith.mulf %55, %56 : vector<8x8xf32>
    %58 = vector.broadcast %31 : vector<1x8xf32> to vector<8x8xf32>
    %59 = arith.addf %57, %58 : vector<8x8xf32>
    %cst_24 = arith.constant dense<0xFF800000> : vector<8xf32>
    %60 = vector.multi_reduction <maximumf>, %59, %cst_24 [1] : vector<8x8xf32> to vector<8xf32>
    %61 = vector.shape_cast %60 : vector<8xf32> to vector<8x1xf32>
    %62 = vector.broadcast %61 : vector<8x1xf32> to vector<8x8xf32>
    %63 = arith.subf %59, %62 : vector<8x8xf32>
    %64 = math.exp %63 : vector<8x8xf32>
    %cst_25 = arith.constant dense<0.000000e+00> : vector<8xf32>
    %65 = vector.multi_reduction <add>, %64, %cst_25 [1] : vector<8x8xf32> to vector<8xf32>
    %66 = vector.shape_cast %65 : vector<8xf32> to vector<8x1xf32>
    %67 = vector.broadcast %66 : vector<8x1xf32> to vector<8x8xf32>
    %68 = arith.divf %64, %67 : vector<8x8xf32>
    %cst_26 = arith.constant dense<0.000000e+00> : vector<8x8xf32>
    %69 = tpu.matmul %68, %53, %cst_26 {dimension_numbers = #tpu.dot_dimension_numbers<[1], [0], [0], [1], [0, 0, 1, 1], [], []>} : vector<8x8xf32>, vector<8x8xf32>, vector<8x8xf32> -> vector<8x8xf32>
    %70 = vector.extract_strided_slice %28 {offsets = [0, 16], sizes = [8, 8], strides = [1, 1]} : vector<8x32xf32> to vector<8x8xf32>
    %71 = vector.extract_strided_slice %29 {offsets = [0, 16], sizes = [8, 8], strides = [1, 1]} : vector<8x32xf32> to vector<8x8xf32>
    %72 = vector.extract_strided_slice %30 {offsets = [0, 16], sizes = [8, 8], strides = [1, 1]} : vector<8x32xf32> to vector<8x8xf32>
    %73 = tpu.transpose %71, [1, 0] : vector<8x8xf32> -> vector<8x8xf32>
    %cst_27 = arith.constant dense<0.000000e+00> : vector<8x8xf32>
    %74 = tpu.matmul %70, %73, %cst_27 {dimension_numbers = #tpu.dot_dimension_numbers<[1], [0], [0], [1], [0, 0, 1, 1], [], []>} : vector<8x8xf32>, vector<8x8xf32>, vector<8x8xf32> -> vector<8x8xf32>
    %cst_28 = arith.constant 0.353553385 : f32
    %75 = vector.broadcast %cst_28 : f32 to vector<8x8xf32>
    %76 = arith.mulf %74, %75 : vector<8x8xf32>
    %77 = vector.broadcast %31 : vector<1x8xf32> to vector<8x8xf32>
    %78 = arith.addf %76, %77 : vector<8x8xf32>
    %cst_29 = arith.constant dense<0xFF800000> : vector<8xf32>
    %79 = vector.multi_reduction <maximumf>, %78, %cst_29 [1] : vector<8x8xf32> to vector<8xf32>
    %80 = vector.shape_cast %79 : vector<8xf32> to vector<8x1xf32>
    %81 = vector.broadcast %80 : vector<8x1xf32> to vector<8x8xf32>
    %82 = arith.subf %78, %81 : vector<8x8xf32>
    %83 = math.exp %82 : vector<8x8xf32>
    %cst_30 = arith.constant dense<0.000000e+00> : vector<8xf32>
    %84 = vector.multi_reduction <add>, %83, %cst_30 [1] : vector<8x8xf32> to vector<8xf32>
    %85 = vector.shape_cast %84 : vector<8xf32> to vector<8x1xf32>
    %86 = vector.broadcast %85 : vector<8x1xf32> to vector<8x8xf32>
    %87 = arith.divf %83, %86 : vector<8x8xf32>
    %cst_31 = arith.constant dense<0.000000e+00> : vector<8x8xf32>
    %88 = tpu.matmul %87, %72, %cst_31 {dimension_numbers = #tpu.dot_dimension_numbers<[1], [0], [0], [1], [0, 0, 1, 1], [], []>} : vector<8x8xf32>, vector<8x8xf32>, vector<8x8xf32> -> vector<8x8xf32>
    %89 = vector.extract_strided_slice %28 {offsets = [0, 24], sizes = [8, 8], strides = [1, 1]} : vector<8x32xf32> to vector<8x8xf32>
    %90 = vector.extract_strided_slice %29 {offsets = [0, 24], sizes = [8, 8], strides = [1, 1]} : vector<8x32xf32> to vector<8x8xf32>
    %91 = vector.extract_strided_slice %30 {offsets = [0, 24], sizes = [8, 8], strides = [1, 1]} : vector<8x32xf32> to vector<8x8xf32>
    %92 = tpu.transpose %90, [1, 0] : vector<8x8xf32> -> vector<8x8xf32>
    %cst_32 = arith.constant dense<0.000000e+00> : vector<8x8xf32>
    %93 = tpu.matmul %89, %92, %cst_32 {dimension_numbers = #tpu.dot_dimension_numbers<[1], [0], [0], [1], [0, 0, 1, 1], [], []>} : vector<8x8xf32>, vector<8x8xf32>, vector<8x8xf32> -> vector<8x8xf32>
    %cst_33 = arith.constant 0.353553385 : f32
    %94 = vector.broadcast %cst_33 : f32 to vector<8x8xf32>
    %95 = arith.mulf %93, %94 : vector<8x8xf32>
    %96 = vector.broadcast %31 : vector<1x8xf32> to vector<8x8xf32>
    %97 = arith.addf %95, %96 : vector<8x8xf32>
    %cst_34 = arith.constant dense<0xFF800000> : vector<8xf32>
    %98 = vector.multi_reduction <maximumf>, %97, %cst_34 [1] : vector<8x8xf32> to vector<8xf32>
    %99 = vector.shape_cast %98 : vector<8xf32> to vector<8x1xf32>
    %100 = vector.broadcast %99 : vector<8x1xf32> to vector<8x8xf32>
    %101 = arith.subf %97, %100 : vector<8x8xf32>
    %102 = math.exp %101 : vector<8x8xf32>
    %cst_35 = arith.constant dense<0.000000e+00> : vector<8xf32>
    %103 = vector.multi_reduction <add>, %102, %cst_35 [1] : vector<8x8xf32> to vector<8xf32>
    %104 = vector.shape_cast %103 : vector<8xf32> to vector<8x1xf32>
    %105 = vector.broadcast %104 : vector<8x1xf32> to vector<8x8xf32>
    %106 = arith.divf %102, %105 : vector<8x8xf32>
    %cst_36 = arith.constant dense<0.000000e+00> : vector<8x8xf32>
    %107 = tpu.matmul %106, %91, %cst_36 {dimension_numbers = #tpu.dot_dimension_numbers<[1], [0], [0], [1], [0, 0, 1, 1], [], []>} : vector<8x8xf32>, vector<8x8xf32>, vector<8x8xf32> -> vector<8x8xf32>
    %108 = tpu.concatenate %50, %69, %88, %107 in 1 : vector<8x8xf32>, vector<8x8xf32>, vector<8x8xf32>, vector<8x8xf32> -> vector<8x32xf32>
    %109 = vector.extract_strided_slice %25 {offsets = [8, 0], sizes = [8, 32], strides = [1, 1]} : vector<16x32xf32> to vector<8x32xf32>
    %110 = vector.extract_strided_slice %26 {offsets = [8, 0], sizes = [8, 32], strides = [1, 1]} : vector<16x32xf32> to vector<8x32xf32>
    %111 = vector.extract_strided_slice %27 {offsets = [8, 0], sizes = [8, 32], strides = [1, 1]} : vector<16x32xf32> to vector<8x32xf32>
    %112 = vector.extract_strided_slice %5 {offsets = [1, 0], sizes = [1, 8], strides = [1, 1]} : vector<2x8xf32> to vector<1x8xf32>
    %113 = vector.extract_strided_slice %109 {offsets = [0, 0], sizes = [8, 8], strides = [1, 1]} : vector<8x32xf32> to vector<8x8xf32>
    %114 = vector.extract_strided_slice %110 {offsets = [0, 0], sizes = [8, 8], strides = [1, 1]} : vector<8x32xf32> to vector<8x8xf32>
    %115 = vector.extract_strided_slice %111 {offsets = [0, 0], sizes = [8, 8], strides = [1, 1]} : vector<8x32xf32> to vector<8x8xf32>
    %116 = tpu.transpose %114, [1, 0] : vector<8x8xf32> -> vector<8x8xf32>
    %cst_37 = arith.constant dense<0.000000e+00> : vector<8x8xf32>
    %117 = tpu.matmul %113, %116, %cst_37 {dimension_numbers = #tpu.dot_dimension_numbers<[1], [0], [0], [1], [0, 0, 1, 1], [], []>} : vector<8x8xf32>, vector<8x8xf32>, vector<8x8xf32> -> vector<8x8xf32>
    %cst_38 = arith.constant 0.353553385 : f32
    %118 = vector.broadcast %cst_38 : f32 to vector<8x8xf32>
    %119 = arith.mulf %117, %118 : vector<8x8xf32>
    %120 = vector.broadcast %112 : vector<1x8xf32> to vector<8x8xf32>
    %121 = arith.addf %119, %120 : vector<8x8xf32>
    %cst_39 = arith.constant dense<0xFF800000> : vector<8xf32>
    %122 = vector.multi_reduction <maximumf>, %121, %cst_39 [1] : vector<8x8xf32> to vector<8xf32>
    %123 = vector.shape_cast %122 : vector<8xf32> to vector<8x1xf32>
    %124 = vector.broadcast %123 : vector<8x1xf32> to vector<8x8xf32>
    %125 = arith.subf %121, %124 : vector<8x8xf32>
    %126 = math.exp %125 : vector<8x8xf32>
    %cst_40 = arith.constant dense<0.000000e+00> : vector<8xf32>
    %127 = vector.multi_reduction <add>, %126, %cst_40 [1] : vector<8x8xf32> to vector<8xf32>
    %128 = vector.shape_cast %127 : vector<8xf32> to vector<8x1xf32>
    %129 = vector.broadcast %128 : vector<8x1xf32> to vector<8x8xf32>
    %130 = arith.divf %126, %129 : vector<8x8xf32>
    %cst_41 = arith.constant dense<0.000000e+00> : vector<8x8xf32>
    %131 = tpu.matmul %130, %115, %cst_41 {dimension_numbers = #tpu.dot_dimension_numbers<[1], [0], [0], [1], [0, 0, 1, 1], [], []>} : vector<8x8xf32>, vector<8x8xf32>, vector<8x8xf32> -> vector<8x8xf32>
    %132 = vector.extract_strided_slice %109 {offsets = [0, 8], sizes = [8, 8], strides = [1, 1]} : vector<8x32xf32> to vector<8x8xf32>
    %133 = vector.extract_strided_slice %110 {offsets = [0, 8], sizes = [8, 8], strides = [1, 1]} : vector<8x32xf32> to vector<8x8xf32>
    %134 = vector.extract_strided_slice %111 {offsets = [0, 8], sizes = [8, 8], strides = [1, 1]} : vector<8x32xf32> to vector<8x8xf32>
    %135 = tpu.transpose %133, [1, 0] : vector<8x8xf32> -> vector<8x8xf32>
    %cst_42 = arith.constant dense<0.000000e+00> : vector<8x8xf32>
    %136 = tpu.matmul %132, %135, %cst_42 {dimension_numbers = #tpu.dot_dimension_numbers<[1], [0], [0], [1], [0, 0, 1, 1], [], []>} : vector<8x8xf32>, vector<8x8xf32>, vector<8x8xf32> -> vector<8x8xf32>
    %cst_43 = arith.constant 0.353553385 : f32
    %137 = vector.broadcast %cst_43 : f32 to vector<8x8xf32>
    %138 = arith.mulf %136, %137 : vector<8x8xf32>
    %139 = vector.broadcast %112 : vector<1x8xf32> to vector<8x8xf32>
    %140 = arith.addf %138, %139 : vector<8x8xf32>
    %cst_44 = arith.constant dense<0xFF800000> : vector<8xf32>
    %141 = vector.multi_reduction <maximumf>, %140, %cst_44 [1] : vector<8x8xf32> to vector<8xf32>
    %142 = vector.shape_cast %141 : vector<8xf32> to vector<8x1xf32>
    %143 = vector.broadcast %142 : vector<8x1xf32> to vector<8x8xf32>
    %144 = arith.subf %140, %143 : vector<8x8xf32>
    %145 = math.exp %144 : vector<8x8xf32>
    %cst_45 = arith.constant dense<0.000000e+00> : vector<8xf32>
    %146 = vector.multi_reduction <add>, %145, %cst_45 [1] : vector<8x8xf32> to vector<8xf32>
    %147 = vector.shape_cast %146 : vector<8xf32> to vector<8x1xf32>
    %148 = vector.broadcast %147 : vector<8x1xf32> to vector<8x8xf32>
    %149 = arith.divf %145, %148 : vector<8x8xf32>
    %cst_46 = arith.constant dense<0.000000e+00> : vector<8x8xf32>
    %150 = tpu.matmul %149, %134, %cst_46 {dimension_numbers = #tpu.dot_dimension_numbers<[1], [0], [0], [1], [0, 0, 1, 1], [], []>} : vector<8x8xf32>, vector<8x8xf32>, vector<8x8xf32> -> vector<8x8xf32>
    %151 = vector.extract_strided_slice %109 {offsets = [0, 16], sizes = [8, 8], strides = [1, 1]} : vector<8x32xf32> to vector<8x8xf32>
    %152 = vector.extract_strided_slice %110 {offsets = [0, 16], sizes = [8, 8], strides = [1, 1]} : vector<8x32xf32> to vector<8x8xf32>
    %153 = vector.extract_strided_slice %111 {offsets = [0, 16], sizes = [8, 8], strides = [1, 1]} : vector<8x32xf32> to vector<8x8xf32>
    %154 = tpu.transpose %152, [1, 0] : vector<8x8xf32> -> vector<8x8xf32>
    %cst_47 = arith.constant dense<0.000000e+00> : vector<8x8xf32>
    %155 = tpu.matmul %151, %154, %cst_47 {dimension_numbers = #tpu.dot_dimension_numbers<[1], [0], [0], [1], [0, 0, 1, 1], [], []>} : vector<8x8xf32>, vector<8x8xf32>, vector<8x8xf32> -> vector<8x8xf32>
    %cst_48 = arith.constant 0.353553385 : f32
    %156 = vector.broadcast %cst_48 : f32 to vector<8x8xf32>
    %157 = arith.mulf %155, %156 : vector<8x8xf32>
    %158 = vector.broadcast %112 : vector<1x8xf32> to vector<8x8xf32>
    %159 = arith.addf %157, %158 : vector<8x8xf32>
    %cst_49 = arith.constant dense<0xFF800000> : vector<8xf32>
    %160 = vector.multi_reduction <maximumf>, %159, %cst_49 [1] : vector<8x8xf32> to vector<8xf32>
    %161 = vector.shape_cast %160 : vector<8xf32> to vector<8x1xf32>
    %162 = vector.broadcast %161 : vector<8x1xf32> to vector<8x8xf32>
    %163 = arith.subf %159, %162 : vector<8x8xf32>
    %164 = math.exp %163 : vector<8x8xf32>
    %cst_50 = arith.constant dense<0.000000e+00> : vector<8xf32>
    %165 = vector.multi_reduction <add>, %164, %cst_50 [1] : vector<8x8xf32> to vector<8xf32>
    %166 = vector.shape_cast %165 : vector<8xf32> to vector<8x1xf32>
    %167 = vector.broadcast %166 : vector<8x1xf32> to vector<8x8xf32>
    %168 = arith.divf %164, %167 : vector<8x8xf32>
    %cst_51 = arith.constant dense<0.000000e+00> : vector<8x8xf32>
    %169 = tpu.matmul %168, %153, %cst_51 {dimension_numbers = #tpu.dot_dimension_numbers<[1], [0], [0], [1], [0, 0, 1, 1], [], []>} : vector<8x8xf32>, vector<8x8xf32>, vector<8x8xf32> -> vector<8x8xf32>
    %170 = vector.extract_strided_slice %109 {offsets = [0, 24], sizes = [8, 8], strides = [1, 1]} : vector<8x32xf32> to vector<8x8xf32>
    %171 = vector.extract_strided_slice %110 {offsets = [0, 24], sizes = [8, 8], strides = [1, 1]} : vector<8x32xf32> to vector<8x8xf32>
    %172 = vector.extract_strided_slice %111 {offsets = [0, 24], sizes = [8, 8], strides = [1, 1]} : vector<8x32xf32> to vector<8x8xf32>
    %173 = tpu.transpose %171, [1, 0] : vector<8x8xf32> -> vector<8x8xf32>
    %cst_52 = arith.constant dense<0.000000e+00> : vector<8x8xf32>
    %174 = tpu.matmul %170, %173, %cst_52 {dimension_numbers = #tpu.dot_dimension_numbers<[1], [0], [0], [1], [0, 0, 1, 1], [], []>} : vector<8x8xf32>, vector<8x8xf32>, vector<8x8xf32> -> vector<8x8xf32>
    %cst_53 = arith.constant 0.353553385 : f32
    %175 = vector.broadcast %cst_53 : f32 to vector<8x8xf32>
    %176 = arith.mulf %174, %175 : vector<8x8xf32>
    %177 = vector.broadcast %112 : vector<1x8xf32> to vector<8x8xf32>
    %178 = arith.addf %176, %177 : vector<8x8xf32>
    %cst_54 = arith.constant dense<0xFF800000> : vector<8xf32>
    %179 = vector.multi_reduction <maximumf>, %178, %cst_54 [1] : vector<8x8xf32> to vector<8xf32>
    %180 = vector.shape_cast %179 : vector<8xf32> to vector<8x1xf32>
    %181 = vector.broadcast %180 : vector<8x1xf32> to vector<8x8xf32>
    %182 = arith.subf %178, %181 : vector<8x8xf32>
    %183 = math.exp %182 : vector<8x8xf32>
    %cst_55 = arith.constant dense<0.000000e+00> : vector<8xf32>
    %184 = vector.multi_reduction <add>, %183, %cst_55 [1] : vector<8x8xf32> to vector<8xf32>
    %185 = vector.shape_cast %184 : vector<8xf32> to vector<8x1xf32>
    %186 = vector.broadcast %185 : vector<8x1xf32> to vector<8x8xf32>
    %187 = arith.divf %183, %186 : vector<8x8xf32>
    %cst_56 = arith.constant dense<0.000000e+00> : vector<8x8xf32>
    %188 = tpu.matmul %187, %172, %cst_56 {dimension_numbers = #tpu.dot_dimension_numbers<[1], [0], [0], [1], [0, 0, 1, 1], [], []>} : vector<8x8xf32>, vector<8x8xf32>, vector<8x8xf32> -> vector<8x8xf32>
    %189 = tpu.concatenate %131, %150, %169, %188 in 1 : vector<8x8xf32>, vector<8x8xf32>, vector<8x8xf32>, vector<8x8xf32> -> vector<8x32xf32>
    %190 = tpu.concatenate %108, %189 in 0 : vector<8x32xf32>, vector<8x32xf32> -> vector<16x32xf32>
    %c0_57 = arith.constant 0 : index
    %c0_58 = arith.constant 0 : index
    %c0_59 = arith.constant 0 : index
    %191 = vector.load %arg7[%c0_57, %c0_58, %c0_59] : memref<2x32x32xf32, #tpu.memory_space<vmem>>, vector<1x32x32xf32>
    %192 = vector.shape_cast %191 : vector<1x32x32xf32> to vector<32x32xf32>
    %cst_60 = arith.constant dense<0.000000e+00> : vector<16x32xf32>
    %193 = tpu.matmul %190, %192, %cst_60 {dimension_numbers = #tpu.dot_dimension_numbers<[1], [0], [0], [1], [0, 0, 1, 1], [], []>} : vector<16x32xf32>, vector<32x32xf32>, vector<16x32xf32> -> vector<16x32xf32>
    %c0_61 = arith.constant 0 : index
    %c0_62 = arith.constant 0 : index
    %c0_63 = arith.constant 0 : index
    %194 = vector.load %arg8[%c0_61, %c0_62, %c0_63] : memref<2x1x32xf32, #tpu.memory_space<vmem>>, vector<1x1x32xf32>
    %195 = vector.shape_cast %194 : vector<1x1x32xf32> to vector<1x32xf32>
    %196 = vector.broadcast %195 : vector<1x32xf32> to vector<16x32xf32>
    %197 = arith.addf %193, %196 : vector<16x32xf32>
    %c0_64 = arith.constant 0 : index
    %c0_65 = arith.constant 0 : index
    %c0_66 = arith.constant 0 : index
    %198 = vector.load %arg13[%c0_64, %c0_65, %c0_66] : memref<2x4x32xf32, #tpu.memory_space<vmem>>, vector<1x4x32xf32>
    %199 = vector.shape_cast %198 : vector<1x4x32xf32> to vector<4x32xf32>
    %200 = vector.extract_strided_slice %199 {offsets = [0, 0], sizes = [1, 32], strides = [1, 1]} : vector<4x32xf32> to vector<1x32xf32>
    %201 = vector.extract_strided_slice %199 {offsets = [1, 0], sizes = [1, 32], strides = [1, 1]} : vector<4x32xf32> to vector<1x32xf32>
    %202 = vector.extract_strided_slice %199 {offsets = [2, 0], sizes = [1, 32], strides = [1, 1]} : vector<4x32xf32> to vector<1x32xf32>
    %203 = vector.extract_strided_slice %199 {offsets = [3, 0], sizes = [1, 32], strides = [1, 1]} : vector<4x32xf32> to vector<1x32xf32>
    %cst_67 = arith.constant dense<0.000000e+00> : vector<16xf32>
    %204 = vector.multi_reduction <add>, %197, %cst_67 [1] : vector<16x32xf32> to vector<16xf32>
    %205 = vector.shape_cast %204 : vector<16xf32> to vector<16x1xf32>
    %cst_68 = arith.constant 3.200000e+01 : f32
    %206 = vector.broadcast %cst_68 : f32 to vector<16x1xf32>
    %207 = arith.divf %205, %206 : vector<16x1xf32>
    %208 = vector.broadcast %207 : vector<16x1xf32> to vector<16x32xf32>
    %209 = arith.subf %197, %208 : vector<16x32xf32>
    %210 = arith.mulf %209, %209 : vector<16x32xf32>
    %cst_69 = arith.constant dense<0.000000e+00> : vector<16xf32>
    %211 = vector.multi_reduction <add>, %210, %cst_69 [1] : vector<16x32xf32> to vector<16xf32>
    %212 = vector.shape_cast %211 : vector<16xf32> to vector<16x1xf32>
    %cst_70 = arith.constant 3.200000e+01 : f32
    %213 = vector.broadcast %cst_70 : f32 to vector<16x1xf32>
    %214 = arith.divf %212, %213 : vector<16x1xf32>
    %215 = vector.broadcast %207 : vector<16x1xf32> to vector<16x32xf32>
    %216 = arith.subf %197, %215 : vector<16x32xf32>
    %cst_71 = arith.constant 9.99999996E-13 : f32
    %217 = vector.broadcast %cst_71 : f32 to vector<16x1xf32>
    %218 = arith.addf %214, %217 : vector<16x1xf32>
    %219 = math.sqrt %218 : vector<16x1xf32>
    %220 = vector.broadcast %219 : vector<16x1xf32> to vector<16x32xf32>
    %221 = arith.divf %216, %220 : vector<16x32xf32>
    %222 = vector.broadcast %200 : vector<1x32xf32> to vector<16x32xf32>
    %223 = arith.mulf %221, %222 : vector<16x32xf32>
    %224 = vector.broadcast %201 : vector<1x32xf32> to vector<16x32xf32>
    %225 = arith.addf %223, %224 : vector<16x32xf32>
    %c0_72 = arith.constant 0 : index
    %c0_73 = arith.constant 0 : index
    %c0_74 = arith.constant 0 : index
    %226 = vector.load %arg9[%c0_72, %c0_73, %c0_74] : memref<2x32x64xf32, #tpu.memory_space<vmem>>, vector<1x32x64xf32>
    %227 = vector.shape_cast %226 : vector<1x32x64xf32> to vector<32x64xf32>
    %cst_75 = arith.constant dense<0.000000e+00> : vector<16x64xf32>
    %228 = tpu.matmul %225, %227, %cst_75 {dimension_numbers = #tpu.dot_dimension_numbers<[1], [0], [0], [1], [0, 0, 1, 1], [], []>} : vector<16x32xf32>, vector<32x64xf32>, vector<16x64xf32> -> vector<16x64xf32>
    %c0_76 = arith.constant 0 : index
    %c0_77 = arith.constant 0 : index
    %c0_78 = arith.constant 0 : index
    %229 = vector.load %arg10[%c0_76, %c0_77, %c0_78] : memref<2x1x64xf32, #tpu.memory_space<vmem>>, vector<1x1x64xf32>
    %230 = vector.shape_cast %229 : vector<1x1x64xf32> to vector<1x64xf32>
    %231 = vector.broadcast %230 : vector<1x64xf32> to vector<16x64xf32>
    %232 = arith.addf %228, %231 : vector<16x64xf32>
    %cst_79 = arith.constant 0.000000e+00 : f32
    %233 = vector.broadcast %cst_79 : f32 to vector<16x64xf32>
    %234 = arith.maximumf %232, %233 : vector<16x64xf32>
    %c0_80 = arith.constant 0 : index
    %c0_81 = arith.constant 0 : index
    %c0_82 = arith.constant 0 : index
    %235 = vector.load %arg11[%c0_80, %c0_81, %c0_82] : memref<2x64x32xf32, #tpu.memory_space<vmem>>, vector<1x64x32xf32>
    %236 = vector.shape_cast %235 : vector<1x64x32xf32> to vector<64x32xf32>
    %cst_83 = arith.constant dense<0.000000e+00> : vector<16x32xf32>
    %237 = tpu.matmul %234, %236, %cst_83 {dimension_numbers = #tpu.dot_dimension_numbers<[1], [0], [0], [1], [0, 0, 1, 1], [], []>} : vector<16x64xf32>, vector<64x32xf32>, vector<16x32xf32> -> vector<16x32xf32>
    %c0_84 = arith.constant 0 : index
    %c0_85 = arith.constant 0 : index
    %c0_86 = arith.constant 0 : index
    %238 = vector.load %arg12[%c0_84, %c0_85, %c0_86] : memref<2x1x32xf32, #tpu.memory_space<vmem>>, vector<1x1x32xf32>
    %239 = vector.shape_cast %238 : vector<1x1x32xf32> to vector<1x32xf32>
    %240 = vector.broadcast %239 : vector<1x32xf32> to vector<16x32xf32>
    %241 = arith.addf %237, %240 : vector<16x32xf32>
    %cst_87 = arith.constant dense<0.000000e+00> : vector<16xf32>
    %242 = vector.multi_reduction <add>, %241, %cst_87 [1] : vector<16x32xf32> to vector<16xf32>
    %243 = vector.shape_cast %242 : vector<16xf32> to vector<16x1xf32>
    %cst_88 = arith.constant 3.200000e+01 : f32
    %244 = vector.broadcast %cst_88 : f32 to vector<16x1xf32>
    %245 = arith.divf %243, %244 : vector<16x1xf32>
    %246 = vector.broadcast %245 : vector<16x1xf32> to vector<16x32xf32>
    %247 = arith.subf %241, %246 : vector<16x32xf32>
    %248 = arith.mulf %247, %247 : vector<16x32xf32>
    %cst_89 = arith.constant dense<0.000000e+00> : vector<16xf32>
    %249 = vector.multi_reduction <add>, %248, %cst_89 [1] : vector<16x32xf32> to vector<16xf32>
    %250 = vector.shape_cast %249 : vector<16xf32> to vector<16x1xf32>
    %cst_90 = arith.constant 3.200000e+01 : f32
    %251 = vector.broadcast %cst_90 : f32 to vector<16x1xf32>
    %252 = arith.divf %250, %251 : vector<16x1xf32>
    %253 = vector.broadcast %245 : vector<16x1xf32> to vector<16x32xf32>
    %254 = arith.subf %241, %253 : vector<16x32xf32>
    %cst_91 = arith.constant 9.99999996E-13 : f32
    %255 = vector.broadcast %cst_91 : f32 to vector<16x1xf32>
    %256 = arith.addf %252, %255 : vector<16x1xf32>
    %257 = math.sqrt %256 : vector<16x1xf32>
    %258 = vector.broadcast %257 : vector<16x1xf32> to vector<16x32xf32>
    %259 = arith.divf %254, %258 : vector<16x32xf32>
    %260 = vector.broadcast %202 : vector<1x32xf32> to vector<16x32xf32>
    %261 = arith.mulf %259, %260 : vector<16x32xf32>
    %262 = vector.broadcast %203 : vector<1x32xf32> to vector<16x32xf32>
    %263 = arith.addf %261, %262 : vector<16x32xf32>
    %c1 = arith.constant 1 : index
    %c0_92 = arith.constant 0 : index
    %c0_93 = arith.constant 0 : index
    %264 = vector.load %arg5[%c1, %c0_92, %c0_93] : memref<2x32x96xf32, #tpu.memory_space<vmem>>, vector<1x32x96xf32>
    %265 = vector.shape_cast %264 : vector<1x32x96xf32> to vector<32x96xf32>
    %cst_94 = arith.constant dense<0.000000e+00> : vector<16x96xf32>
    %266 = tpu.matmul %263, %265, %cst_94 {dimension_numbers = #tpu.dot_dimension_numbers<[1], [0], [0], [1], [0, 0, 1, 1], [], []>} : vector<16x32xf32>, vector<32x96xf32>, vector<16x96xf32> -> vector<16x96xf32>
    %c1_95 = arith.constant 1 : index
    %c0_96 = arith.constant 0 : index
    %c0_97 = arith.constant 0 : index
    %267 = vector.load %arg6[%c1_95, %c0_96, %c0_97] : memref<2x1x96xf32, #tpu.memory_space<vmem>>, vector<1x1x96xf32>
    %268 = vector.shape_cast %267 : vector<1x1x96xf32> to vector<1x96xf32>
    %269 = vector.broadcast %268 : vector<1x96xf32> to vector<16x96xf32>
    %270 = arith.addf %266, %269 : vector<16x96xf32>
    %271 = vector.extract_strided_slice %270 {offsets = [0, 0], sizes = [16, 32], strides = [1, 1]} : vector<16x96xf32> to vector<16x32xf32>
    %272 = vector.extract_strided_slice %270 {offsets = [0, 32], sizes = [16, 32], strides = [1, 1]} : vector<16x96xf32> to vector<16x32xf32>
    %273 = vector.extract_strided_slice %270 {offsets = [0, 64], sizes = [16, 32], strides = [1, 1]} : vector<16x96xf32> to vector<16x32xf32>
    %274 = vector.extract_strided_slice %271 {offsets = [0, 0], sizes = [8, 32], strides = [1, 1]} : vector<16x32xf32> to vector<8x32xf32>
    %275 = vector.extract_strided_slice %272 {offsets = [0, 0], sizes = [8, 32], strides = [1, 1]} : vector<16x32xf32> to vector<8x32xf32>
    %276 = vector.extract_strided_slice %273 {offsets = [0, 0], sizes = [8, 32], strides = [1, 1]} : vector<16x32xf32> to vector<8x32xf32>
    %277 = vector.extract_strided_slice %5 {offsets = [0, 0], sizes = [1, 8], strides = [1, 1]} : vector<2x8xf32> to vector<1x8xf32>
    %278 = vector.extract_strided_slice %274 {offsets = [0, 0], sizes = [8, 8], strides = [1, 1]} : vector<8x32xf32> to vector<8x8xf32>
    %279 = vector.extract_strided_slice %275 {offsets = [0, 0], sizes = [8, 8], strides = [1, 1]} : vector<8x32xf32> to vector<8x8xf32>
    %280 = vector.extract_strided_slice %276 {offsets = [0, 0], sizes = [8, 8], strides = [1, 1]} : vector<8x32xf32> to vector<8x8xf32>
    %281 = tpu.transpose %279, [1, 0] : vector<8x8xf32> -> vector<8x8xf32>
    %cst_98 = arith.constant dense<0.000000e+00> : vector<8x8xf32>
    %282 = tpu.matmul %278, %281, %cst_98 {dimension_numbers = #tpu.dot_dimension_numbers<[1], [0], [0], [1], [0, 0, 1, 1], [], []>} : vector<8x8xf32>, vector<8x8xf32>, vector<8x8xf32> -> vector<8x8xf32>
    %cst_99 = arith.constant 0.353553385 : f32
    %283 = vector.broadcast %cst_99 : f32 to vector<8x8xf32>
    %284 = arith.mulf %282, %283 : vector<8x8xf32>
    %285 = vector.broadcast %277 : vector<1x8xf32> to vector<8x8xf32>
    %286 = arith.addf %284, %285 : vector<8x8xf32>
    %cst_100 = arith.constant dense<0xFF800000> : vector<8xf32>
    %287 = vector.multi_reduction <maximumf>, %286, %cst_100 [1] : vector<8x8xf32> to vector<8xf32>
    %288 = vector.shape_cast %287 : vector<8xf32> to vector<8x1xf32>
    %289 = vector.broadcast %288 : vector<8x1xf32> to vector<8x8xf32>
    %290 = arith.subf %286, %289 : vector<8x8xf32>
    %291 = math.exp %290 : vector<8x8xf32>
    %cst_101 = arith.constant dense<0.000000e+00> : vector<8xf32>
    %292 = vector.multi_reduction <add>, %291, %cst_101 [1] : vector<8x8xf32> to vector<8xf32>
    %293 = vector.shape_cast %292 : vector<8xf32> to vector<8x1xf32>
    %294 = vector.broadcast %293 : vector<8x1xf32> to vector<8x8xf32>
    %295 = arith.divf %291, %294 : vector<8x8xf32>
    %cst_102 = arith.constant dense<0.000000e+00> : vector<8x8xf32>
    %296 = tpu.matmul %295, %280, %cst_102 {dimension_numbers = #tpu.dot_dimension_numbers<[1], [0], [0], [1], [0, 0, 1, 1], [], []>} : vector<8x8xf32>, vector<8x8xf32>, vector<8x8xf32> -> vector<8x8xf32>
    %297 = vector.extract_strided_slice %274 {offsets = [0, 8], sizes = [8, 8], strides = [1, 1]} : vector<8x32xf32> to vector<8x8xf32>
    %298 = vector.extract_strided_slice %275 {offsets = [0, 8], sizes = [8, 8], strides = [1, 1]} : vector<8x32xf32> to vector<8x8xf32>
    %299 = vector.extract_strided_slice %276 {offsets = [0, 8], sizes = [8, 8], strides = [1, 1]} : vector<8x32xf32> to vector<8x8xf32>
    %300 = tpu.transpose %298, [1, 0] : vector<8x8xf32> -> vector<8x8xf32>
    %cst_103 = arith.constant dense<0.000000e+00> : vector<8x8xf32>
    %301 = tpu.matmul %297, %300, %cst_103 {dimension_numbers = #tpu.dot_dimension_numbers<[1], [0], [0], [1], [0, 0, 1, 1], [], []>} : vector<8x8xf32>, vector<8x8xf32>, vector<8x8xf32> -> vector<8x8xf32>
    %cst_104 = arith.constant 0.353553385 : f32
    %302 = vector.broadcast %cst_104 : f32 to vector<8x8xf32>
    %303 = arith.mulf %301, %302 : vector<8x8xf32>
    %304 = vector.broadcast %277 : vector<1x8xf32> to vector<8x8xf32>
    %305 = arith.addf %303, %304 : vector<8x8xf32>
    %cst_105 = arith.constant dense<0xFF800000> : vector<8xf32>
    %306 = vector.multi_reduction <maximumf>, %305, %cst_105 [1] : vector<8x8xf32> to vector<8xf32>
    %307 = vector.shape_cast %306 : vector<8xf32> to vector<8x1xf32>
    %308 = vector.broadcast %307 : vector<8x1xf32> to vector<8x8xf32>
    %309 = arith.subf %305, %308 : vector<8x8xf32>
    %310 = math.exp %309 : vector<8x8xf32>
    %cst_106 = arith.constant dense<0.000000e+00> : vector<8xf32>
    %311 = vector.multi_reduction <add>, %310, %cst_106 [1] : vector<8x8xf32> to vector<8xf32>
    %312 = vector.shape_cast %311 : vector<8xf32> to vector<8x1xf32>
    %313 = vector.broadcast %312 : vector<8x1xf32> to vector<8x8xf32>
    %314 = arith.divf %310, %313 : vector<8x8xf32>
    %cst_107 = arith.constant dense<0.000000e+00> : vector<8x8xf32>
    %315 = tpu.matmul %314, %299, %cst_107 {dimension_numbers = #tpu.dot_dimension_numbers<[1], [0], [0], [1], [0, 0, 1, 1], [], []>} : vector<8x8xf32>, vector<8x8xf32>, vector<8x8xf32> -> vector<8x8xf32>
    %316 = vector.extract_strided_slice %274 {offsets = [0, 16], sizes = [8, 8], strides = [1, 1]} : vector<8x32xf32> to vector<8x8xf32>
    %317 = vector.extract_strided_slice %275 {offsets = [0, 16], sizes = [8, 8], strides = [1, 1]} : vector<8x32xf32> to vector<8x8xf32>
    %318 = vector.extract_strided_slice %276 {offsets = [0, 16], sizes = [8, 8], strides = [1, 1]} : vector<8x32xf32> to vector<8x8xf32>
    %319 = tpu.transpose %317, [1, 0] : vector<8x8xf32> -> vector<8x8xf32>
    %cst_108 = arith.constant dense<0.000000e+00> : vector<8x8xf32>
    %320 = tpu.matmul %316, %319, %cst_108 {dimension_numbers = #tpu.dot_dimension_numbers<[1], [0], [0], [1], [0, 0, 1, 1], [], []>} : vector<8x8xf32>, vector<8x8xf32>, vector<8x8xf32> -> vector<8x8xf32>
    %cst_109 = arith.constant 0.353553385 : f32
    %321 = vector.broadcast %cst_109 : f32 to vector<8x8xf32>
    %322 = arith.mulf %320, %321 : vector<8x8xf32>
    %323 = vector.broadcast %277 : vector<1x8xf32> to vector<8x8xf32>
    %324 = arith.addf %322, %323 : vector<8x8xf32>
    %cst_110 = arith.constant dense<0xFF800000> : vector<8xf32>
    %325 = vector.multi_reduction <maximumf>, %324, %cst_110 [1] : vector<8x8xf32> to vector<8xf32>
    %326 = vector.shape_cast %325 : vector<8xf32> to vector<8x1xf32>
    %327 = vector.broadcast %326 : vector<8x1xf32> to vector<8x8xf32>
    %328 = arith.subf %324, %327 : vector<8x8xf32>
    %329 = math.exp %328 : vector<8x8xf32>
    %cst_111 = arith.constant dense<0.000000e+00> : vector<8xf32>
    %330 = vector.multi_reduction <add>, %329, %cst_111 [1] : vector<8x8xf32> to vector<8xf32>
    %331 = vector.shape_cast %330 : vector<8xf32> to vector<8x1xf32>
    %332 = vector.broadcast %331 : vector<8x1xf32> to vector<8x8xf32>
    %333 = arith.divf %329, %332 : vector<8x8xf32>
    %cst_112 = arith.constant dense<0.000000e+00> : vector<8x8xf32>
    %334 = tpu.matmul %333, %318, %cst_112 {dimension_numbers = #tpu.dot_dimension_numbers<[1], [0], [0], [1], [0, 0, 1, 1], [], []>} : vector<8x8xf32>, vector<8x8xf32>, vector<8x8xf32> -> vector<8x8xf32>
    %335 = vector.extract_strided_slice %274 {offsets = [0, 24], sizes = [8, 8], strides = [1, 1]} : vector<8x32xf32> to vector<8x8xf32>
    %336 = vector.extract_strided_slice %275 {offsets = [0, 24], sizes = [8, 8], strides = [1, 1]} : vector<8x32xf32> to vector<8x8xf32>
    %337 = vector.extract_strided_slice %276 {offsets = [0, 24], sizes = [8, 8], strides = [1, 1]} : vector<8x32xf32> to vector<8x8xf32>
    %338 = tpu.transpose %336, [1, 0] : vector<8x8xf32> -> vector<8x8xf32>
    %cst_113 = arith.constant dense<0.000000e+00> : vector<8x8xf32>
    %339 = tpu.matmul %335, %338, %cst_113 {dimension_numbers = #tpu.dot_dimension_numbers<[1], [0], [0], [1], [0, 0, 1, 1], [], []>} : vector<8x8xf32>, vector<8x8xf32>, vector<8x8xf32> -> vector<8x8xf32>
    %cst_114 = arith.constant 0.353553385 : f32
    %340 = vector.broadcast %cst_114 : f32 to vector<8x8xf32>
    %341 = arith.mulf %339, %340 : vector<8x8xf32>
    %342 = vector.broadcast %277 : vector<1x8xf32> to vector<8x8xf32>
    %343 = arith.addf %341, %342 : vector<8x8xf32>
    %cst_115 = arith.constant dense<0xFF800000> : vector<8xf32>
    %344 = vector.multi_reduction <maximumf>, %343, %cst_115 [1] : vector<8x8xf32> to vector<8xf32>
    %345 = vector.shape_cast %344 : vector<8xf32> to vector<8x1xf32>
    %346 = vector.broadcast %345 : vector<8x1xf32> to vector<8x8xf32>
    %347 = arith.subf %343, %346 : vector<8x8xf32>
    %348 = math.exp %347 : vector<8x8xf32>
    %cst_116 = arith.constant dense<0.000000e+00> : vector<8xf32>
    %349 = vector.multi_reduction <add>, %348, %cst_116 [1] : vector<8x8xf32> to vector<8xf32>
    %350 = vector.shape_cast %349 : vector<8xf32> to vector<8x1xf32>
    %351 = vector.broadcast %350 : vector<8x1xf32> to vector<8x8xf32>
    %352 = arith.divf %348, %351 : vector<8x8xf32>
    %cst_117 = arith.constant dense<0.000000e+00> : vector<8x8xf32>
    %353 = tpu.matmul %352, %337, %cst_117 {dimension_numbers = #tpu.dot_dimension_numbers<[1], [0], [0], [1], [0, 0, 1, 1], [], []>} : vector<8x8xf32>, vector<8x8xf32>, vector<8x8xf32> -> vector<8x8xf32>
    %354 = tpu.concatenate %296, %315, %334, %353 in 1 : vector<8x8xf32>, vector<8x8xf32>, vector<8x8xf32>, vector<8x8xf32> -> vector<8x32xf32>
    %355 = vector.extract_strided_slice %271 {offsets = [8, 0], sizes = [8, 32], strides = [1, 1]} : vector<16x32xf32> to vector<8x32xf32>
    %356 = vector.extract_strided_slice %272 {offsets = [8, 0], sizes = [8, 32], strides = [1, 1]} : vector<16x32xf32> to vector<8x32xf32>
    %357 = vector.extract_strided_slice %273 {offsets = [8, 0], sizes = [8, 32], strides = [1, 1]} : vector<16x32xf32> to vector<8x32xf32>
    %358 = vector.extract_strided_slice %5 {offsets = [1, 0], sizes = [1, 8], strides = [1, 1]} : vector<2x8xf32> to vector<1x8xf32>
    %359 = vector.extract_strided_slice %355 {offsets = [0, 0], sizes = [8, 8], strides = [1, 1]} : vector<8x32xf32> to vector<8x8xf32>
    %360 = vector.extract_strided_slice %356 {offsets = [0, 0], sizes = [8, 8], strides = [1, 1]} : vector<8x32xf32> to vector<8x8xf32>
    %361 = vector.extract_strided_slice %357 {offsets = [0, 0], sizes = [8, 8], strides = [1, 1]} : vector<8x32xf32> to vector<8x8xf32>
    %362 = tpu.transpose %360, [1, 0] : vector<8x8xf32> -> vector<8x8xf32>
    %cst_118 = arith.constant dense<0.000000e+00> : vector<8x8xf32>
    %363 = tpu.matmul %359, %362, %cst_118 {dimension_numbers = #tpu.dot_dimension_numbers<[1], [0], [0], [1], [0, 0, 1, 1], [], []>} : vector<8x8xf32>, vector<8x8xf32>, vector<8x8xf32> -> vector<8x8xf32>
    %cst_119 = arith.constant 0.353553385 : f32
    %364 = vector.broadcast %cst_119 : f32 to vector<8x8xf32>
    %365 = arith.mulf %363, %364 : vector<8x8xf32>
    %366 = vector.broadcast %358 : vector<1x8xf32> to vector<8x8xf32>
    %367 = arith.addf %365, %366 : vector<8x8xf32>
    %cst_120 = arith.constant dense<0xFF800000> : vector<8xf32>
    %368 = vector.multi_reduction <maximumf>, %367, %cst_120 [1] : vector<8x8xf32> to vector<8xf32>
    %369 = vector.shape_cast %368 : vector<8xf32> to vector<8x1xf32>
    %370 = vector.broadcast %369 : vector<8x1xf32> to vector<8x8xf32>
    %371 = arith.subf %367, %370 : vector<8x8xf32>
    %372 = math.exp %371 : vector<8x8xf32>
    %cst_121 = arith.constant dense<0.000000e+00> : vector<8xf32>
    %373 = vector.multi_reduction <add>, %372, %cst_121 [1] : vector<8x8xf32> to vector<8xf32>
    %374 = vector.shape_cast %373 : vector<8xf32> to vector<8x1xf32>
    %375 = vector.broadcast %374 : vector<8x1xf32> to vector<8x8xf32>
    %376 = arith.divf %372, %375 : vector<8x8xf32>
    %cst_122 = arith.constant dense<0.000000e+00> : vector<8x8xf32>
    %377 = tpu.matmul %376, %361, %cst_122 {dimension_numbers = #tpu.dot_dimension_numbers<[1], [0], [0], [1], [0, 0, 1, 1], [], []>} : vector<8x8xf32>, vector<8x8xf32>, vector<8x8xf32> -> vector<8x8xf32>
    %378 = vector.extract_strided_slice %355 {offsets = [0, 8], sizes = [8, 8], strides = [1, 1]} : vector<8x32xf32> to vector<8x8xf32>
    %379 = vector.extract_strided_slice %356 {offsets = [0, 8], sizes = [8, 8], strides = [1, 1]} : vector<8x32xf32> to vector<8x8xf32>
    %380 = vector.extract_strided_slice %357 {offsets = [0, 8], sizes = [8, 8], strides = [1, 1]} : vector<8x32xf32> to vector<8x8xf32>
    %381 = tpu.transpose %379, [1, 0] : vector<8x8xf32> -> vector<8x8xf32>
    %cst_123 = arith.constant dense<0.000000e+00> : vector<8x8xf32>
    %382 = tpu.matmul %378, %381, %cst_123 {dimension_numbers = #tpu.dot_dimension_numbers<[1], [0], [0], [1], [0, 0, 1, 1], [], []>} : vector<8x8xf32>, vector<8x8xf32>, vector<8x8xf32> -> vector<8x8xf32>
    %cst_124 = arith.constant 0.353553385 : f32
    %383 = vector.broadcast %cst_124 : f32 to vector<8x8xf32>
    %384 = arith.mulf %382, %383 : vector<8x8xf32>
    %385 = vector.broadcast %358 : vector<1x8xf32> to vector<8x8xf32>
    %386 = arith.addf %384, %385 : vector<8x8xf32>
    %cst_125 = arith.constant dense<0xFF800000> : vector<8xf32>
    %387 = vector.multi_reduction <maximumf>, %386, %cst_125 [1] : vector<8x8xf32> to vector<8xf32>
    %388 = vector.shape_cast %387 : vector<8xf32> to vector<8x1xf32>
    %389 = vector.broadcast %388 : vector<8x1xf32> to vector<8x8xf32>
    %390 = arith.subf %386, %389 : vector<8x8xf32>
    %391 = math.exp %390 : vector<8x8xf32>
    %cst_126 = arith.constant dense<0.000000e+00> : vector<8xf32>
    %392 = vector.multi_reduction <add>, %391, %cst_126 [1] : vector<8x8xf32> to vector<8xf32>
    %393 = vector.shape_cast %392 : vector<8xf32> to vector<8x1xf32>
    %394 = vector.broadcast %393 : vector<8x1xf32> to vector<8x8xf32>
    %395 = arith.divf %391, %394 : vector<8x8xf32>
    %cst_127 = arith.constant dense<0.000000e+00> : vector<8x8xf32>
    %396 = tpu.matmul %395, %380, %cst_127 {dimension_numbers = #tpu.dot_dimension_numbers<[1], [0], [0], [1], [0, 0, 1, 1], [], []>} : vector<8x8xf32>, vector<8x8xf32>, vector<8x8xf32> -> vector<8x8xf32>
    %397 = vector.extract_strided_slice %355 {offsets = [0, 16], sizes = [8, 8], strides = [1, 1]} : vector<8x32xf32> to vector<8x8xf32>
    %398 = vector.extract_strided_slice %356 {offsets = [0, 16], sizes = [8, 8], strides = [1, 1]} : vector<8x32xf32> to vector<8x8xf32>
    %399 = vector.extract_strided_slice %357 {offsets = [0, 16], sizes = [8, 8], strides = [1, 1]} : vector<8x32xf32> to vector<8x8xf32>
    %400 = tpu.transpose %398, [1, 0] : vector<8x8xf32> -> vector<8x8xf32>
    %cst_128 = arith.constant dense<0.000000e+00> : vector<8x8xf32>
    %401 = tpu.matmul %397, %400, %cst_128 {dimension_numbers = #tpu.dot_dimension_numbers<[1], [0], [0], [1], [0, 0, 1, 1], [], []>} : vector<8x8xf32>, vector<8x8xf32>, vector<8x8xf32> -> vector<8x8xf32>
    %cst_129 = arith.constant 0.353553385 : f32
    %402 = vector.broadcast %cst_129 : f32 to vector<8x8xf32>
    %403 = arith.mulf %401, %402 : vector<8x8xf32>
    %404 = vector.broadcast %358 : vector<1x8xf32> to vector<8x8xf32>
    %405 = arith.addf %403, %404 : vector<8x8xf32>
    %cst_130 = arith.constant dense<0xFF800000> : vector<8xf32>
    %406 = vector.multi_reduction <maximumf>, %405, %cst_130 [1] : vector<8x8xf32> to vector<8xf32>
    %407 = vector.shape_cast %406 : vector<8xf32> to vector<8x1xf32>
    %408 = vector.broadcast %407 : vector<8x1xf32> to vector<8x8xf32>
    %409 = arith.subf %405, %408 : vector<8x8xf32>
    %410 = math.exp %409 : vector<8x8xf32>
    %cst_131 = arith.constant dense<0.000000e+00> : vector<8xf32>
    %411 = vector.multi_reduction <add>, %410, %cst_131 [1] : vector<8x8xf32> to vector<8xf32>
    %412 = vector.shape_cast %411 : vector<8xf32> to vector<8x1xf32>
    %413 = vector.broadcast %412 : vector<8x1xf32> to vector<8x8xf32>
    %414 = arith.divf %410, %413 : vector<8x8xf32>
    %cst_132 = arith.constant dense<0.000000e+00> : vector<8x8xf32>
    %415 = tpu.matmul %414, %399, %cst_132 {dimension_numbers = #tpu.dot_dimension_numbers<[1], [0], [0], [1], [0, 0, 1, 1], [], []>} : vector<8x8xf32>, vector<8x8xf32>, vector<8x8xf32> -> vector<8x8xf32>
    %416 = vector.extract_strided_slice %355 {offsets = [0, 24], sizes = [8, 8], strides = [1, 1]} : vector<8x32xf32> to vector<8x8xf32>
    %417 = vector.extract_strided_slice %356 {offsets = [0, 24], sizes = [8, 8], strides = [1, 1]} : vector<8x32xf32> to vector<8x8xf32>
    %418 = vector.extract_strided_slice %357 {offsets = [0, 24], sizes = [8, 8], strides = [1, 1]} : vector<8x32xf32> to vector<8x8xf32>
    %419 = tpu.transpose %417, [1, 0] : vector<8x8xf32> -> vector<8x8xf32>
    %cst_133 = arith.constant dense<0.000000e+00> : vector<8x8xf32>
    %420 = tpu.matmul %416, %419, %cst_133 {dimension_numbers = #tpu.dot_dimension_numbers<[1], [0], [0], [1], [0, 0, 1, 1], [], []>} : vector<8x8xf32>, vector<8x8xf32>, vector<8x8xf32> -> vector<8x8xf32>
    %cst_134 = arith.constant 0.353553385 : f32
    %421 = vector.broadcast %cst_134 : f32 to vector<8x8xf32>
    %422 = arith.mulf %420, %421 : vector<8x8xf32>
    %423 = vector.broadcast %358 : vector<1x8xf32> to vector<8x8xf32>
    %424 = arith.addf %422, %423 : vector<8x8xf32>
    %cst_135 = arith.constant dense<0xFF800000> : vector<8xf32>
    %425 = vector.multi_reduction <maximumf>, %424, %cst_135 [1] : vector<8x8xf32> to vector<8xf32>
    %426 = vector.shape_cast %425 : vector<8xf32> to vector<8x1xf32>
    %427 = vector.broadcast %426 : vector<8x1xf32> to vector<8x8xf32>
    %428 = arith.subf %424, %427 : vector<8x8xf32>
    %429 = math.exp %428 : vector<8x8xf32>
    %cst_136 = arith.constant dense<0.000000e+00> : vector<8xf32>
    %430 = vector.multi_reduction <add>, %429, %cst_136 [1] : vector<8x8xf32> to vector<8xf32>
    %431 = vector.shape_cast %430 : vector<8xf32> to vector<8x1xf32>
    %432 = vector.broadcast %431 : vector<8x1xf32> to vector<8x8xf32>
    %433 = arith.divf %429, %432 : vector<8x8xf32>
    %cst_137 = arith.constant dense<0.000000e+00> : vector<8x8xf32>
    %434 = tpu.matmul %433, %418, %cst_137 {dimension_numbers = #tpu.dot_dimension_numbers<[1], [0], [0], [1], [0, 0, 1, 1], [], []>} : vector<8x8xf32>, vector<8x8xf32>, vector<8x8xf32> -> vector<8x8xf32>
    %435 = tpu.concatenate %377, %396, %415, %434 in 1 : vector<8x8xf32>, vector<8x8xf32>, vector<8x8xf32>, vector<8x8xf32> -> vector<8x32xf32>
    %436 = tpu.concatenate %354, %435 in 0 : vector<8x32xf32>, vector<8x32xf32> -> vector<16x32xf32>
    %c1_138 = arith.constant 1 : index
    %c0_139 = arith.constant 0 : index
    %c0_140 = arith.constant 0 : index
    %437 = vector.load %arg7[%c1_138, %c0_139, %c0_140] : memref<2x32x32xf32, #tpu.memory_space<vmem>>, vector<1x32x32xf32>
    %438 = vector.shape_cast %437 : vector<1x32x32xf32> to vector<32x32xf32>
    %cst_141 = arith.constant dense<0.000000e+00> : vector<16x32xf32>
    %439 = tpu.matmul %436, %438, %cst_141 {dimension_numbers = #tpu.dot_dimension_numbers<[1], [0], [0], [1], [0, 0, 1, 1], [], []>} : vector<16x32xf32>, vector<32x32xf32>, vector<16x32xf32> -> vector<16x32xf32>
    %c1_142 = arith.constant 1 : index
    %c0_143 = arith.constant 0 : index
    %c0_144 = arith.constant 0 : index
    %440 = vector.load %arg8[%c1_142, %c0_143, %c0_144] : memref<2x1x32xf32, #tpu.memory_space<vmem>>, vector<1x1x32xf32>
    %441 = vector.shape_cast %440 : vector<1x1x32xf32> to vector<1x32xf32>
    %442 = vector.broadcast %441 : vector<1x32xf32> to vector<16x32xf32>
    %443 = arith.addf %439, %442 : vector<16x32xf32>
    %c1_145 = arith.constant 1 : index
    %c0_146 = arith.constant 0 : index
    %c0_147 = arith.constant 0 : index
    %444 = vector.load %arg13[%c1_145, %c0_146, %c0_147] : memref<2x4x32xf32, #tpu.memory_space<vmem>>, vector<1x4x32xf32>
    %445 = vector.shape_cast %444 : vector<1x4x32xf32> to vector<4x32xf32>
    %446 = vector.extract_strided_slice %445 {offsets = [0, 0], sizes = [1, 32], strides = [1, 1]} : vector<4x32xf32> to vector<1x32xf32>
    %447 = vector.extract_strided_slice %445 {offsets = [1, 0], sizes = [1, 32], strides = [1, 1]} : vector<4x32xf32> to vector<1x32xf32>
    %448 = vector.extract_strided_slice %445 {offsets = [2, 0], sizes = [1, 32], strides = [1, 1]} : vector<4x32xf32> to vector<1x32xf32>
    %449 = vector.extract_strided_slice %445 {offsets = [3, 0], sizes = [1, 32], strides = [1, 1]} : vector<4x32xf32> to vector<1x32xf32>
    %cst_148 = arith.constant dense<0.000000e+00> : vector<16xf32>
    %450 = vector.multi_reduction <add>, %443, %cst_148 [1] : vector<16x32xf32> to vector<16xf32>
    %451 = vector.shape_cast %450 : vector<16xf32> to vector<16x1xf32>
    %cst_149 = arith.constant 3.200000e+01 : f32
    %452 = vector.broadcast %cst_149 : f32 to vector<16x1xf32>
    %453 = arith.divf %451, %452 : vector<16x1xf32>
    %454 = vector.broadcast %453 : vector<16x1xf32> to vector<16x32xf32>
    %455 = arith.subf %443, %454 : vector<16x32xf32>
    %456 = arith.mulf %455, %455 : vector<16x32xf32>
    %cst_150 = arith.constant dense<0.000000e+00> : vector<16xf32>
    %457 = vector.multi_reduction <add>, %456, %cst_150 [1] : vector<16x32xf32> to vector<16xf32>
    %458 = vector.shape_cast %457 : vector<16xf32> to vector<16x1xf32>
    %cst_151 = arith.constant 3.200000e+01 : f32
    %459 = vector.broadcast %cst_151 : f32 to vector<16x1xf32>
    %460 = arith.divf %458, %459 : vector<16x1xf32>
    %461 = vector.broadcast %453 : vector<16x1xf32> to vector<16x32xf32>
    %462 = arith.subf %443, %461 : vector<16x32xf32>
    %cst_152 = arith.constant 9.99999996E-13 : f32
    %463 = vector.broadcast %cst_152 : f32 to vector<16x1xf32>
    %464 = arith.addf %460, %463 : vector<16x1xf32>
    %465 = math.sqrt %464 : vector<16x1xf32>
    %466 = vector.broadcast %465 : vector<16x1xf32> to vector<16x32xf32>
    %467 = arith.divf %462, %466 : vector<16x32xf32>
    %468 = vector.broadcast %446 : vector<1x32xf32> to vector<16x32xf32>
    %469 = arith.mulf %467, %468 : vector<16x32xf32>
    %470 = vector.broadcast %447 : vector<1x32xf32> to vector<16x32xf32>
    %471 = arith.addf %469, %470 : vector<16x32xf32>
    %c1_153 = arith.constant 1 : index
    %c0_154 = arith.constant 0 : index
    %c0_155 = arith.constant 0 : index
    %472 = vector.load %arg9[%c1_153, %c0_154, %c0_155] : memref<2x32x64xf32, #tpu.memory_space<vmem>>, vector<1x32x64xf32>
    %473 = vector.shape_cast %472 : vector<1x32x64xf32> to vector<32x64xf32>
    %cst_156 = arith.constant dense<0.000000e+00> : vector<16x64xf32>
    %474 = tpu.matmul %471, %473, %cst_156 {dimension_numbers = #tpu.dot_dimension_numbers<[1], [0], [0], [1], [0, 0, 1, 1], [], []>} : vector<16x32xf32>, vector<32x64xf32>, vector<16x64xf32> -> vector<16x64xf32>
    %c1_157 = arith.constant 1 : index
    %c0_158 = arith.constant 0 : index
    %c0_159 = arith.constant 0 : index
    %475 = vector.load %arg10[%c1_157, %c0_158, %c0_159] : memref<2x1x64xf32, #tpu.memory_space<vmem>>, vector<1x1x64xf32>
    %476 = vector.shape_cast %475 : vector<1x1x64xf32> to vector<1x64xf32>
    %477 = vector.broadcast %476 : vector<1x64xf32> to vector<16x64xf32>
    %478 = arith.addf %474, %477 : vector<16x64xf32>
    %cst_160 = arith.constant 0.000000e+00 : f32
    %479 = vector.broadcast %cst_160 : f32 to vector<16x64xf32>
    %480 = arith.maximumf %478, %479 : vector<16x64xf32>
    %c1_161 = arith.constant 1 : index
    %c0_162 = arith.constant 0 : index
    %c0_163 = arith.constant 0 : index
    %481 = vector.load %arg11[%c1_161, %c0_162, %c0_163] : memref<2x64x32xf32, #tpu.memory_space<vmem>>, vector<1x64x32xf32>
    %482 = vector.shape_cast %481 : vector<1x64x32xf32> to vector<64x32xf32>
    %cst_164 = arith.constant dense<0.000000e+00> : vector<16x32xf32>
    %483 = tpu.matmul %480, %482, %cst_164 {dimension_numbers = #tpu.dot_dimension_numbers<[1], [0], [0], [1], [0, 0, 1, 1], [], []>} : vector<16x64xf32>, vector<64x32xf32>, vector<16x32xf32> -> vector<16x32xf32>
    %c1_165 = arith.constant 1 : index
    %c0_166 = arith.constant 0 : index
    %c0_167 = arith.constant 0 : index
    %484 = vector.load %arg12[%c1_165, %c0_166, %c0_167] : memref<2x1x32xf32, #tpu.memory_space<vmem>>, vector<1x1x32xf32>
    %485 = vector.shape_cast %484 : vector<1x1x32xf32> to vector<1x32xf32>
    %486 = vector.broadcast %485 : vector<1x32xf32> to vector<16x32xf32>
    %487 = arith.addf %483, %486 : vector<16x32xf32>
    %cst_168 = arith.constant dense<0.000000e+00> : vector<16xf32>
    %488 = vector.multi_reduction <add>, %487, %cst_168 [1] : vector<16x32xf32> to vector<16xf32>
    %489 = vector.shape_cast %488 : vector<16xf32> to vector<16x1xf32>
    %cst_169 = arith.constant 3.200000e+01 : f32
    %490 = vector.broadcast %cst_169 : f32 to vector<16x1xf32>
    %491 = arith.divf %489, %490 : vector<16x1xf32>
    %492 = vector.broadcast %491 : vector<16x1xf32> to vector<16x32xf32>
    %493 = arith.subf %487, %492 : vector<16x32xf32>
    %494 = arith.mulf %493, %493 : vector<16x32xf32>
    %cst_170 = arith.constant dense<0.000000e+00> : vector<16xf32>
    %495 = vector.multi_reduction <add>, %494, %cst_170 [1] : vector<16x32xf32> to vector<16xf32>
    %496 = vector.shape_cast %495 : vector<16xf32> to vector<16x1xf32>
    %cst_171 = arith.constant 3.200000e+01 : f32
    %497 = vector.broadcast %cst_171 : f32 to vector<16x1xf32>
    %498 = arith.divf %496, %497 : vector<16x1xf32>
    %499 = vector.broadcast %491 : vector<16x1xf32> to vector<16x32xf32>
    %500 = arith.subf %487, %499 : vector<16x32xf32>
    %cst_172 = arith.constant 9.99999996E-13 : f32
    %501 = vector.broadcast %cst_172 : f32 to vector<16x1xf32>
    %502 = arith.addf %498, %501 : vector<16x1xf32>
    %503 = math.sqrt %502 : vector<16x1xf32>
    %504 = vector.broadcast %503 : vector<16x1xf32> to vector<16x32xf32>
    %505 = arith.divf %500, %504 : vector<16x32xf32>
    %506 = vector.broadcast %448 : vector<1x32xf32> to vector<16x32xf32>
    %507 = arith.mulf %505, %506 : vector<16x32xf32>
    %508 = vector.broadcast %449 : vector<1x32xf32> to vector<16x32xf32>
    %509 = arith.addf %507, %508 : vector<16x32xf32>
    %c0_173 = arith.constant 0 : index
    %c0_174 = arith.constant 0 : index
    %510 = vector.load %arg14[%c0_173, %c0_174] : memref<32x32xf32, #tpu.memory_space<vmem>>, vector<32x32xf32>
    %cst_175 = arith.constant dense<0.000000e+00> : vector<16x32xf32>
    %511 = tpu.matmul %509, %510, %cst_175 {dimension_numbers = #tpu.dot_dimension_numbers<[1], [0], [0], [1], [0, 0, 1, 1], [], []>} : vector<16x32xf32>, vector<32x32xf32>, vector<16x32xf32> -> vector<16x32xf32>
    %c0_176 = arith.constant 0 : index
    %c0_177 = arith.constant 0 : index
    %512 = vector.load %arg15[%c0_176, %c0_177] : memref<1x32xf32, #tpu.memory_space<vmem>>, vector<1x32xf32>
    %513 = vector.broadcast %512 : vector<1x32xf32> to vector<16x32xf32>
    %514 = arith.addf %511, %513 : vector<16x32xf32>
    %515 = math.tanh %514 : vector<16x32xf32>
    %c0_178 = arith.constant 0 : index
    %c0_179 = arith.constant 0 : index
    %516 = vector.load %arg16[%c0_178, %c0_179] : memref<32x5xf32, #tpu.memory_space<vmem>>, vector<32x5xf32>
    %cst_180 = arith.constant dense<0.000000e+00> : vector<16x5xf32>
    %517 = tpu.matmul %515, %516, %cst_180 {dimension_numbers = #tpu.dot_dimension_numbers<[1], [0], [0], [1], [0, 0, 1, 1], [], []>} : vector<16x32xf32>, vector<32x5xf32>, vector<16x5xf32> -> vector<16x5xf32>
    %c0_181 = arith.constant 0 : index
    %c0_182 = arith.constant 0 : index
    %518 = vector.load %arg17[%c0_181, %c0_182] : memref<1x5xf32, #tpu.memory_space<vmem>>, vector<1x5xf32>
    %519 = vector.broadcast %518 : vector<1x5xf32> to vector<16x5xf32>
    %520 = arith.addf %517, %519 : vector<16x5xf32>
    %521 = tpu.transpose %520, [1, 0] : vector<16x5xf32> -> vector<5x16xf32>
    %c0_183 = arith.constant 0 : index
    %c0_184 = arith.constant 0 : index
    %522 = vector.load %arg20[%c0_183, %c0_184] : memref<5x5xf32, #tpu.memory_space<vmem>>, vector<5x5xf32>
    %523 = tpu.transpose %522, [1, 0] : vector<5x5xf32> -> vector<5x5xf32>
    %c0_185 = arith.constant 0 : index
    %c0_186 = arith.constant 0 : index
    %524 = vector.load %arg18[%c0_185, %c0_186] : memref<1x5xf32, #tpu.memory_space<vmem>>, vector<1x5xf32>
    %c0_187 = arith.constant 0 : index
    %c0_188 = arith.constant 0 : index
    %525 = vector.load %arg19[%c0_187, %c0_188] : memref<1x5xf32, #tpu.memory_space<vmem>>, vector<1x5xf32>
    %526 = tpu.iota {dimensions = array<i32: 1>} : vector<1x5xi32>
    %527 = tpu.iota {dimensions = array<i32: 0>} : vector<5x1xi32>
    %528 = tpu.iota {dimensions = array<i32: 1>} : vector<5x5xi32>
    %529 = tpu.iota {dimensions = array<i32: 0>} : vector<5x5xi32>
    %530 = arith.cmpi eq, %529, %528 : vector<5x5xi32>
    %cst_189 = arith.constant 0.000000e+00 : f32
    %cst_190 = arith.constant -1.000000e+09 : f32
    %531 = vector.broadcast %cst_189 : f32 to vector<5x5xf32>
    %532 = vector.broadcast %cst_190 : f32 to vector<5x5xf32>
    %533 = arith.select %530, %531, %532 : vector<5x5xi1>, vector<5x5xf32>
    %534 = tpu.iota {dimensions = array<i32: 1>} : vector<1x8xi32>
    %535 = vector.extract_strided_slice %520 {offsets = [0, 0], sizes = [8, 5], strides = [1, 1]} : vector<16x5xf32> to vector<8x5xf32>
    %536 = vector.extract_strided_slice %521 {offsets = [0, 0], sizes = [5, 8], strides = [1, 1]} : vector<5x16xf32> to vector<5x8xf32>
    %537 = vector.extract_strided_slice %6 {offsets = [0, 0], sizes = [1, 8], strides = [1, 1]} : vector<2x8xi1> to vector<1x8xi1>
    %538 = vector.extract_strided_slice %535 {offsets = [0, 0], sizes = [1, 5], strides = [1, 1]} : vector<8x5xf32> to vector<1x5xf32>
    %539 = arith.addf %524, %538 : vector<1x5xf32>
    %540 = vector.extract_strided_slice %537 {offsets = [0, 1], sizes = [1, 1], strides = [1, 1]} : vector<1x8xi1> to vector<1x1xi1>
    %541 = vector.shape_cast %540 : vector<1x1xi1> to vector<1x1xi1>
    %542 = vector.broadcast %541 : vector<1x1xi1> to vector<5x5xi1>
    %543 = arith.select %542, %523, %533 : vector<5x5xi1>, vector<5x5xf32>
    %544 = vector.broadcast %539 : vector<1x5xf32> to vector<5x5xf32>
    %545 = arith.addf %544, %543 : vector<5x5xf32>
    %cst_191 = arith.constant dense<0xFF800000> : vector<5xf32>
    %546 = vector.multi_reduction <maximumf>, %545, %cst_191 [1] : vector<5x5xf32> to vector<5xf32>
    %547 = vector.shape_cast %546 : vector<5xf32> to vector<5x1xf32>
    %548 = vector.broadcast %547 : vector<5x1xf32> to vector<5x5xf32>
    %549 = arith.cmpf oeq, %545, %548 : vector<5x5xf32>
    %c5_i32 = arith.constant 5 : i32
    %550 = vector.broadcast %c5_i32 : i32 to vector<5x5xi32>
    %551 = arith.select %549, %528, %550 : vector<5x5xi1>, vector<5x5xi32>
    %cst_192 = arith.constant dense<2147483647> : vector<5xi32>
    %552 = vector.multi_reduction <minsi>, %551, %cst_192 [1] : vector<5x5xi32> to vector<5xi32>
    %553 = vector.shape_cast %552 : vector<5xi32> to vector<5x1xi32>
    %554 = vector.extract_strided_slice %536 {offsets = [0, 1], sizes = [5, 1], strides = [1, 1]} : vector<5x8xf32> to vector<5x1xf32>
    %cst_193 = arith.constant 0.000000e+00 : f32
    %555 = vector.shape_cast %540 : vector<1x1xi1> to vector<1x1xi1>
    %556 = vector.broadcast %555 : vector<1x1xi1> to vector<5x1xi1>
    %557 = vector.broadcast %cst_193 : f32 to vector<5x1xf32>
    %558 = arith.select %556, %554, %557 : vector<5x1xi1>, vector<5x1xf32>
    %559 = arith.addf %547, %558 : vector<5x1xf32>
    %560 = vector.extract_strided_slice %537 {offsets = [0, 2], sizes = [1, 1], strides = [1, 1]} : vector<1x8xi1> to vector<1x1xi1>
    %561 = vector.shape_cast %560 : vector<1x1xi1> to vector<1x1xi1>
    %562 = vector.broadcast %561 : vector<1x1xi1> to vector<5x5xi1>
    %563 = arith.select %562, %522, %533 : vector<5x5xi1>, vector<5x5xf32>
    %564 = vector.broadcast %559 : vector<5x1xf32> to vector<5x5xf32>
    %565 = arith.addf %564, %563 : vector<5x5xf32>
    %cst_194 = arith.constant dense<0xFF800000> : vector<5xf32>
    %566 = vector.multi_reduction <maximumf>, %565, %cst_194 [0] : vector<5x5xf32> to vector<5xf32>
    %567 = vector.shape_cast %566 : vector<5xf32> to vector<1x5xf32>
    %568 = vector.broadcast %567 : vector<1x5xf32> to vector<5x5xf32>
    %569 = arith.cmpf oeq, %565, %568 : vector<5x5xf32>
    %c5_i32_195 = arith.constant 5 : i32
    %570 = vector.broadcast %c5_i32_195 : i32 to vector<5x5xi32>
    %571 = arith.select %569, %529, %570 : vector<5x5xi1>, vector<5x5xi32>
    %cst_196 = arith.constant dense<2147483647> : vector<5xi32>
    %572 = vector.multi_reduction <minsi>, %571, %cst_196 [0] : vector<5x5xi32> to vector<5xi32>
    %573 = vector.shape_cast %572 : vector<5xi32> to vector<1x5xi32>
    %574 = vector.extract_strided_slice %535 {offsets = [2, 0], sizes = [1, 5], strides = [1, 1]} : vector<8x5xf32> to vector<1x5xf32>
    %cst_197 = arith.constant 0.000000e+00 : f32
    %575 = vector.shape_cast %560 : vector<1x1xi1> to vector<1x1xi1>
    %576 = vector.broadcast %575 : vector<1x1xi1> to vector<1x5xi1>
    %577 = vector.broadcast %cst_197 : f32 to vector<1x5xf32>
    %578 = arith.select %576, %574, %577 : vector<1x5xi1>, vector<1x5xf32>
    %579 = arith.addf %567, %578 : vector<1x5xf32>
    %580 = vector.extract_strided_slice %537 {offsets = [0, 3], sizes = [1, 1], strides = [1, 1]} : vector<1x8xi1> to vector<1x1xi1>
    %581 = vector.shape_cast %580 : vector<1x1xi1> to vector<1x1xi1>
    %582 = vector.broadcast %581 : vector<1x1xi1> to vector<5x5xi1>
    %583 = arith.select %582, %523, %533 : vector<5x5xi1>, vector<5x5xf32>
    %584 = vector.broadcast %579 : vector<1x5xf32> to vector<5x5xf32>
    %585 = arith.addf %584, %583 : vector<5x5xf32>
    %cst_198 = arith.constant dense<0xFF800000> : vector<5xf32>
    %586 = vector.multi_reduction <maximumf>, %585, %cst_198 [1] : vector<5x5xf32> to vector<5xf32>
    %587 = vector.shape_cast %586 : vector<5xf32> to vector<5x1xf32>
    %588 = vector.broadcast %587 : vector<5x1xf32> to vector<5x5xf32>
    %589 = arith.cmpf oeq, %585, %588 : vector<5x5xf32>
    %c5_i32_199 = arith.constant 5 : i32
    %590 = vector.broadcast %c5_i32_199 : i32 to vector<5x5xi32>
    %591 = arith.select %589, %528, %590 : vector<5x5xi1>, vector<5x5xi32>
    %cst_200 = arith.constant dense<2147483647> : vector<5xi32>
    %592 = vector.multi_reduction <minsi>, %591, %cst_200 [1] : vector<5x5xi32> to vector<5xi32>
    %593 = vector.shape_cast %592 : vector<5xi32> to vector<5x1xi32>
    %594 = vector.extract_strided_slice %536 {offsets = [0, 3], sizes = [5, 1], strides = [1, 1]} : vector<5x8xf32> to vector<5x1xf32>
    %cst_201 = arith.constant 0.000000e+00 : f32
    %595 = vector.shape_cast %580 : vector<1x1xi1> to vector<1x1xi1>
    %596 = vector.broadcast %595 : vector<1x1xi1> to vector<5x1xi1>
    %597 = vector.broadcast %cst_201 : f32 to vector<5x1xf32>
    %598 = arith.select %596, %594, %597 : vector<5x1xi1>, vector<5x1xf32>
    %599 = arith.addf %587, %598 : vector<5x1xf32>
    %600 = vector.extract_strided_slice %537 {offsets = [0, 4], sizes = [1, 1], strides = [1, 1]} : vector<1x8xi1> to vector<1x1xi1>
    %601 = vector.shape_cast %600 : vector<1x1xi1> to vector<1x1xi1>
    %602 = vector.broadcast %601 : vector<1x1xi1> to vector<5x5xi1>
    %603 = arith.select %602, %522, %533 : vector<5x5xi1>, vector<5x5xf32>
    %604 = vector.broadcast %599 : vector<5x1xf32> to vector<5x5xf32>
    %605 = arith.addf %604, %603 : vector<5x5xf32>
    %cst_202 = arith.constant dense<0xFF800000> : vector<5xf32>
    %606 = vector.multi_reduction <maximumf>, %605, %cst_202 [0] : vector<5x5xf32> to vector<5xf32>
    %607 = vector.shape_cast %606 : vector<5xf32> to vector<1x5xf32>
    %608 = vector.broadcast %607 : vector<1x5xf32> to vector<5x5xf32>
    %609 = arith.cmpf oeq, %605, %608 : vector<5x5xf32>
    %c5_i32_203 = arith.constant 5 : i32
    %610 = vector.broadcast %c5_i32_203 : i32 to vector<5x5xi32>
    %611 = arith.select %609, %529, %610 : vector<5x5xi1>, vector<5x5xi32>
    %cst_204 = arith.constant dense<2147483647> : vector<5xi32>
    %612 = vector.multi_reduction <minsi>, %611, %cst_204 [0] : vector<5x5xi32> to vector<5xi32>
    %613 = vector.shape_cast %612 : vector<5xi32> to vector<1x5xi32>
    %614 = vector.extract_strided_slice %535 {offsets = [4, 0], sizes = [1, 5], strides = [1, 1]} : vector<8x5xf32> to vector<1x5xf32>
    %cst_205 = arith.constant 0.000000e+00 : f32
    %615 = vector.shape_cast %600 : vector<1x1xi1> to vector<1x1xi1>
    %616 = vector.broadcast %615 : vector<1x1xi1> to vector<1x5xi1>
    %617 = vector.broadcast %cst_205 : f32 to vector<1x5xf32>
    %618 = arith.select %616, %614, %617 : vector<1x5xi1>, vector<1x5xf32>
    %619 = arith.addf %607, %618 : vector<1x5xf32>
    %620 = vector.extract_strided_slice %537 {offsets = [0, 5], sizes = [1, 1], strides = [1, 1]} : vector<1x8xi1> to vector<1x1xi1>
    %621 = vector.shape_cast %620 : vector<1x1xi1> to vector<1x1xi1>
    %622 = vector.broadcast %621 : vector<1x1xi1> to vector<5x5xi1>
    %623 = arith.select %622, %523, %533 : vector<5x5xi1>, vector<5x5xf32>
    %624 = vector.broadcast %619 : vector<1x5xf32> to vector<5x5xf32>
    %625 = arith.addf %624, %623 : vector<5x5xf32>
    %cst_206 = arith.constant dense<0xFF800000> : vector<5xf32>
    %626 = vector.multi_reduction <maximumf>, %625, %cst_206 [1] : vector<5x5xf32> to vector<5xf32>
    %627 = vector.shape_cast %626 : vector<5xf32> to vector<5x1xf32>
    %628 = vector.broadcast %627 : vector<5x1xf32> to vector<5x5xf32>
    %629 = arith.cmpf oeq, %625, %628 : vector<5x5xf32>
    %c5_i32_207 = arith.constant 5 : i32
    %630 = vector.broadcast %c5_i32_207 : i32 to vector<5x5xi32>
    %631 = arith.select %629, %528, %630 : vector<5x5xi1>, vector<5x5xi32>
    %cst_208 = arith.constant dense<2147483647> : vector<5xi32>
    %632 = vector.multi_reduction <minsi>, %631, %cst_208 [1] : vector<5x5xi32> to vector<5xi32>
    %633 = vector.shape_cast %632 : vector<5xi32> to vector<5x1xi32>
    %634 = vector.extract_strided_slice %536 {offsets = [0, 5], sizes = [5, 1], strides = [1, 1]} : vector<5x8xf32> to vector<5x1xf32>
    %cst_209 = arith.constant 0.000000e+00 : f32
    %635 = vector.shape_cast %620 : vector<1x1xi1> to vector<1x1xi1>
    %636 = vector.broadcast %635 : vector<1x1xi1> to vector<5x1xi1>
    %637 = vector.broadcast %cst_209 : f32 to vector<5x1xf32>
    %638 = arith.select %636, %634, %637 : vector<5x1xi1>, vector<5x1xf32>
    %639 = arith.addf %627, %638 : vector<5x1xf32>
    %640 = vector.extract_strided_slice %537 {offsets = [0, 6], sizes = [1, 1], strides = [1, 1]} : vector<1x8xi1> to vector<1x1xi1>
    %641 = vector.shape_cast %640 : vector<1x1xi1> to vector<1x1xi1>
    %642 = vector.broadcast %641 : vector<1x1xi1> to vector<5x5xi1>
    %643 = arith.select %642, %522, %533 : vector<5x5xi1>, vector<5x5xf32>
    %644 = vector.broadcast %639 : vector<5x1xf32> to vector<5x5xf32>
    %645 = arith.addf %644, %643 : vector<5x5xf32>
    %cst_210 = arith.constant dense<0xFF800000> : vector<5xf32>
    %646 = vector.multi_reduction <maximumf>, %645, %cst_210 [0] : vector<5x5xf32> to vector<5xf32>
    %647 = vector.shape_cast %646 : vector<5xf32> to vector<1x5xf32>
    %648 = vector.broadcast %647 : vector<1x5xf32> to vector<5x5xf32>
    %649 = arith.cmpf oeq, %645, %648 : vector<5x5xf32>
    %c5_i32_211 = arith.constant 5 : i32
    %650 = vector.broadcast %c5_i32_211 : i32 to vector<5x5xi32>
    %651 = arith.select %649, %529, %650 : vector<5x5xi1>, vector<5x5xi32>
    %cst_212 = arith.constant dense<2147483647> : vector<5xi32>
    %652 = vector.multi_reduction <minsi>, %651, %cst_212 [0] : vector<5x5xi32> to vector<5xi32>
    %653 = vector.shape_cast %652 : vector<5xi32> to vector<1x5xi32>
    %654 = vector.extract_strided_slice %535 {offsets = [6, 0], sizes = [1, 5], strides = [1, 1]} : vector<8x5xf32> to vector<1x5xf32>
    %cst_213 = arith.constant 0.000000e+00 : f32
    %655 = vector.shape_cast %640 : vector<1x1xi1> to vector<1x1xi1>
    %656 = vector.broadcast %655 : vector<1x1xi1> to vector<1x5xi1>
    %657 = vector.broadcast %cst_213 : f32 to vector<1x5xf32>
    %658 = arith.select %656, %654, %657 : vector<1x5xi1>, vector<1x5xf32>
    %659 = arith.addf %647, %658 : vector<1x5xf32>
    %660 = vector.extract_strided_slice %537 {offsets = [0, 7], sizes = [1, 1], strides = [1, 1]} : vector<1x8xi1> to vector<1x1xi1>
    %661 = vector.shape_cast %660 : vector<1x1xi1> to vector<1x1xi1>
    %662 = vector.broadcast %661 : vector<1x1xi1> to vector<5x5xi1>
    %663 = arith.select %662, %523, %533 : vector<5x5xi1>, vector<5x5xf32>
    %664 = vector.broadcast %659 : vector<1x5xf32> to vector<5x5xf32>
    %665 = arith.addf %664, %663 : vector<5x5xf32>
    %cst_214 = arith.constant dense<0xFF800000> : vector<5xf32>
    %666 = vector.multi_reduction <maximumf>, %665, %cst_214 [1] : vector<5x5xf32> to vector<5xf32>
    %667 = vector.shape_cast %666 : vector<5xf32> to vector<5x1xf32>
    %668 = vector.broadcast %667 : vector<5x1xf32> to vector<5x5xf32>
    %669 = arith.cmpf oeq, %665, %668 : vector<5x5xf32>
    %c5_i32_215 = arith.constant 5 : i32
    %670 = vector.broadcast %c5_i32_215 : i32 to vector<5x5xi32>
    %671 = arith.select %669, %528, %670 : vector<5x5xi1>, vector<5x5xi32>
    %cst_216 = arith.constant dense<2147483647> : vector<5xi32>
    %672 = vector.multi_reduction <minsi>, %671, %cst_216 [1] : vector<5x5xi32> to vector<5xi32>
    %673 = vector.shape_cast %672 : vector<5xi32> to vector<5x1xi32>
    %674 = vector.extract_strided_slice %536 {offsets = [0, 7], sizes = [5, 1], strides = [1, 1]} : vector<5x8xf32> to vector<5x1xf32>
    %cst_217 = arith.constant 0.000000e+00 : f32
    %675 = vector.shape_cast %660 : vector<1x1xi1> to vector<1x1xi1>
    %676 = vector.broadcast %675 : vector<1x1xi1> to vector<5x1xi1>
    %677 = vector.broadcast %cst_217 : f32 to vector<5x1xf32>
    %678 = arith.select %676, %674, %677 : vector<5x1xi1>, vector<5x1xf32>
    %679 = arith.addf %667, %678 : vector<5x1xf32>
    %680 = tpu.transpose %679, [1, 0] : vector<5x1xf32> -> vector<1x5xf32>
    %681 = arith.addf %680, %525 : vector<1x5xf32>
    %cst_218 = arith.constant dense<0xFF800000> : vector<1xf32>
    %682 = vector.multi_reduction <maximumf>, %681, %cst_218 [1] : vector<1x5xf32> to vector<1xf32>
    %683 = vector.shape_cast %682 : vector<1xf32> to vector<1x1xf32>
    %684 = vector.broadcast %683 : vector<1x1xf32> to vector<1x5xf32>
    %685 = arith.cmpf oeq, %681, %684 : vector<1x5xf32>
    %c5_i32_219 = arith.constant 5 : i32
    %686 = vector.broadcast %c5_i32_219 : i32 to vector<1x5xi32>
    %687 = arith.select %685, %526, %686 : vector<1x5xi1>, vector<1x5xi32>
    %cst_220 = arith.constant dense<2147483647> : vector<1xi32>
    %688 = vector.multi_reduction <minsi>, %687, %cst_220 [1] : vector<1x5xi32> to vector<1xi32>
    %689 = vector.shape_cast %688 : vector<1xi32> to vector<1x1xi32>
    %690 = arith.extui %537 : vector<1x8xi1> to vector<1x8xi32>
    %cst_221 = arith.constant dense<0> : vector<1xi32>
    %691 = vector.multi_reduction <add>, %690, %cst_221 [1] : vector<1x8xi32> to vector<1xi32>
    %692 = vector.shape_cast %691 : vector<1xi32> to vector<1x1xi32>
    %c1_i32 = arith.constant 1 : i32
    %693 = vector.broadcast %c1_i32 : i32 to vector<1x1xi32>
    %694 = arith.subi %692, %693 : vector<1x1xi32>
    %c0_i32_222 = arith.constant 0 : i32
    %695 = vector.broadcast %c0_i32_222 : i32 to vector<1x1xi32>
    %c0_i32_223 = arith.constant 0 : i32
    %696 = vector.broadcast %c0_i32_223 : i32 to vector<1x8xi32>
    %c7_i32 = arith.constant 7 : i32
    %697 = vector.broadcast %c7_i32 : i32 to vector<1x1xi32>
    %698 = arith.cmpi eq, %694, %697 : vector<1x1xi32>
    %699 = arith.select %698, %689, %695 : vector<1x1xi1>, vector<1x1xi32>
    %c7_i32_224 = arith.constant 7 : i32
    %700 = vector.broadcast %c7_i32_224 : i32 to vector<1x8xi32>
    %701 = arith.cmpi eq, %534, %700 : vector<1x8xi32>
    %c0_i32_225 = arith.constant 0 : i32
    %702 = vector.shape_cast %699 : vector<1x1xi32> to vector<1x1xi32>
    %703 = vector.broadcast %702 : vector<1x1xi32> to vector<1x8xi32>
    %704 = vector.broadcast %c0_i32_225 : i32 to vector<1x8xi32>
    %705 = arith.select %701, %703, %704 : vector<1x8xi1>, vector<1x8xi32>
    %706 = arith.addi %696, %705 : vector<1x8xi32>
    %707 = vector.broadcast %699 : vector<1x1xi32> to vector<5x1xi32>
    %708 = arith.cmpi eq, %527, %707 : vector<5x1xi32>
    %c0_i32_226 = arith.constant 0 : i32
    %709 = vector.broadcast %c0_i32_226 : i32 to vector<5x1xi32>
    %710 = arith.select %708, %673, %709 : vector<5x1xi1>, vector<5x1xi32>
    %cst_227 = arith.constant dense<0> : vector<1xi32>
    %711 = vector.multi_reduction <add>, %710, %cst_227 [0] : vector<5x1xi32> to vector<1xi32>
    %712 = vector.shape_cast %711 : vector<1xi32> to vector<1x1xi32>
    %c7_i32_228 = arith.constant 7 : i32
    %713 = vector.broadcast %c7_i32_228 : i32 to vector<1x1xi32>
    %714 = arith.cmpi sge, %694, %713 : vector<1x1xi32>
    %715 = arith.select %714, %712, %699 : vector<1x1xi1>, vector<1x1xi32>
    %c6_i32 = arith.constant 6 : i32
    %716 = vector.broadcast %c6_i32 : i32 to vector<1x1xi32>
    %717 = arith.cmpi eq, %694, %716 : vector<1x1xi32>
    %718 = arith.select %717, %689, %715 : vector<1x1xi1>, vector<1x1xi32>
    %c6_i32_229 = arith.constant 6 : i32
    %719 = vector.broadcast %c6_i32_229 : i32 to vector<1x8xi32>
    %720 = arith.cmpi eq, %534, %719 : vector<1x8xi32>
    %c0_i32_230 = arith.constant 0 : i32
    %721 = vector.shape_cast %718 : vector<1x1xi32> to vector<1x1xi32>
    %722 = vector.broadcast %721 : vector<1x1xi32> to vector<1x8xi32>
    %723 = vector.broadcast %c0_i32_230 : i32 to vector<1x8xi32>
    %724 = arith.select %720, %722, %723 : vector<1x8xi1>, vector<1x8xi32>
    %725 = arith.addi %706, %724 : vector<1x8xi32>
    %726 = vector.broadcast %718 : vector<1x1xi32> to vector<1x5xi32>
    %727 = arith.cmpi eq, %526, %726 : vector<1x5xi32>
    %c0_i32_231 = arith.constant 0 : i32
    %728 = vector.broadcast %c0_i32_231 : i32 to vector<1x5xi32>
    %729 = arith.select %727, %653, %728 : vector<1x5xi1>, vector<1x5xi32>
    %cst_232 = arith.constant dense<0> : vector<1xi32>
    %730 = vector.multi_reduction <add>, %729, %cst_232 [1] : vector<1x5xi32> to vector<1xi32>
    %731 = vector.shape_cast %730 : vector<1xi32> to vector<1x1xi32>
    %c6_i32_233 = arith.constant 6 : i32
    %732 = vector.broadcast %c6_i32_233 : i32 to vector<1x1xi32>
    %733 = arith.cmpi sge, %694, %732 : vector<1x1xi32>
    %734 = arith.select %733, %731, %718 : vector<1x1xi1>, vector<1x1xi32>
    %c5_i32_234 = arith.constant 5 : i32
    %735 = vector.broadcast %c5_i32_234 : i32 to vector<1x1xi32>
    %736 = arith.cmpi eq, %694, %735 : vector<1x1xi32>
    %737 = arith.select %736, %689, %734 : vector<1x1xi1>, vector<1x1xi32>
    %c5_i32_235 = arith.constant 5 : i32
    %738 = vector.broadcast %c5_i32_235 : i32 to vector<1x8xi32>
    %739 = arith.cmpi eq, %534, %738 : vector<1x8xi32>
    %c0_i32_236 = arith.constant 0 : i32
    %740 = vector.shape_cast %737 : vector<1x1xi32> to vector<1x1xi32>
    %741 = vector.broadcast %740 : vector<1x1xi32> to vector<1x8xi32>
    %742 = vector.broadcast %c0_i32_236 : i32 to vector<1x8xi32>
    %743 = arith.select %739, %741, %742 : vector<1x8xi1>, vector<1x8xi32>
    %744 = arith.addi %725, %743 : vector<1x8xi32>
    %745 = vector.broadcast %737 : vector<1x1xi32> to vector<5x1xi32>
    %746 = arith.cmpi eq, %527, %745 : vector<5x1xi32>
    %c0_i32_237 = arith.constant 0 : i32
    %747 = vector.broadcast %c0_i32_237 : i32 to vector<5x1xi32>
    %748 = arith.select %746, %633, %747 : vector<5x1xi1>, vector<5x1xi32>
    %cst_238 = arith.constant dense<0> : vector<1xi32>
    %749 = vector.multi_reduction <add>, %748, %cst_238 [0] : vector<5x1xi32> to vector<1xi32>
    %750 = vector.shape_cast %749 : vector<1xi32> to vector<1x1xi32>
    %c5_i32_239 = arith.constant 5 : i32
    %751 = vector.broadcast %c5_i32_239 : i32 to vector<1x1xi32>
    %752 = arith.cmpi sge, %694, %751 : vector<1x1xi32>
    %753 = arith.select %752, %750, %737 : vector<1x1xi1>, vector<1x1xi32>
    %c4_i32 = arith.constant 4 : i32
    %754 = vector.broadcast %c4_i32 : i32 to vector<1x1xi32>
    %755 = arith.cmpi eq, %694, %754 : vector<1x1xi32>
    %756 = arith.select %755, %689, %753 : vector<1x1xi1>, vector<1x1xi32>
    %c4_i32_240 = arith.constant 4 : i32
    %757 = vector.broadcast %c4_i32_240 : i32 to vector<1x8xi32>
    %758 = arith.cmpi eq, %534, %757 : vector<1x8xi32>
    %c0_i32_241 = arith.constant 0 : i32
    %759 = vector.shape_cast %756 : vector<1x1xi32> to vector<1x1xi32>
    %760 = vector.broadcast %759 : vector<1x1xi32> to vector<1x8xi32>
    %761 = vector.broadcast %c0_i32_241 : i32 to vector<1x8xi32>
    %762 = arith.select %758, %760, %761 : vector<1x8xi1>, vector<1x8xi32>
    %763 = arith.addi %744, %762 : vector<1x8xi32>
    %764 = vector.broadcast %756 : vector<1x1xi32> to vector<1x5xi32>
    %765 = arith.cmpi eq, %526, %764 : vector<1x5xi32>
    %c0_i32_242 = arith.constant 0 : i32
    %766 = vector.broadcast %c0_i32_242 : i32 to vector<1x5xi32>
    %767 = arith.select %765, %613, %766 : vector<1x5xi1>, vector<1x5xi32>
    %cst_243 = arith.constant dense<0> : vector<1xi32>
    %768 = vector.multi_reduction <add>, %767, %cst_243 [1] : vector<1x5xi32> to vector<1xi32>
    %769 = vector.shape_cast %768 : vector<1xi32> to vector<1x1xi32>
    %c4_i32_244 = arith.constant 4 : i32
    %770 = vector.broadcast %c4_i32_244 : i32 to vector<1x1xi32>
    %771 = arith.cmpi sge, %694, %770 : vector<1x1xi32>
    %772 = arith.select %771, %769, %756 : vector<1x1xi1>, vector<1x1xi32>
    %c3_i32 = arith.constant 3 : i32
    %773 = vector.broadcast %c3_i32 : i32 to vector<1x1xi32>
    %774 = arith.cmpi eq, %694, %773 : vector<1x1xi32>
    %775 = arith.select %774, %689, %772 : vector<1x1xi1>, vector<1x1xi32>
    %c3_i32_245 = arith.constant 3 : i32
    %776 = vector.broadcast %c3_i32_245 : i32 to vector<1x8xi32>
    %777 = arith.cmpi eq, %534, %776 : vector<1x8xi32>
    %c0_i32_246 = arith.constant 0 : i32
    %778 = vector.shape_cast %775 : vector<1x1xi32> to vector<1x1xi32>
    %779 = vector.broadcast %778 : vector<1x1xi32> to vector<1x8xi32>
    %780 = vector.broadcast %c0_i32_246 : i32 to vector<1x8xi32>
    %781 = arith.select %777, %779, %780 : vector<1x8xi1>, vector<1x8xi32>
    %782 = arith.addi %763, %781 : vector<1x8xi32>
    %783 = vector.broadcast %775 : vector<1x1xi32> to vector<5x1xi32>
    %784 = arith.cmpi eq, %527, %783 : vector<5x1xi32>
    %c0_i32_247 = arith.constant 0 : i32
    %785 = vector.broadcast %c0_i32_247 : i32 to vector<5x1xi32>
    %786 = arith.select %784, %593, %785 : vector<5x1xi1>, vector<5x1xi32>
    %cst_248 = arith.constant dense<0> : vector<1xi32>
    %787 = vector.multi_reduction <add>, %786, %cst_248 [0] : vector<5x1xi32> to vector<1xi32>
    %788 = vector.shape_cast %787 : vector<1xi32> to vector<1x1xi32>
    %c3_i32_249 = arith.constant 3 : i32
    %789 = vector.broadcast %c3_i32_249 : i32 to vector<1x1xi32>
    %790 = arith.cmpi sge, %694, %789 : vector<1x1xi32>
    %791 = arith.select %790, %788, %775 : vector<1x1xi1>, vector<1x1xi32>
    %c2_i32 = arith.constant 2 : i32
    %792 = vector.broadcast %c2_i32 : i32 to vector<1x1xi32>
    %793 = arith.cmpi eq, %694, %792 : vector<1x1xi32>
    %794 = arith.select %793, %689, %791 : vector<1x1xi1>, vector<1x1xi32>
    %c2_i32_250 = arith.constant 2 : i32
    %795 = vector.broadcast %c2_i32_250 : i32 to vector<1x8xi32>
    %796 = arith.cmpi eq, %534, %795 : vector<1x8xi32>
    %c0_i32_251 = arith.constant 0 : i32
    %797 = vector.shape_cast %794 : vector<1x1xi32> to vector<1x1xi32>
    %798 = vector.broadcast %797 : vector<1x1xi32> to vector<1x8xi32>
    %799 = vector.broadcast %c0_i32_251 : i32 to vector<1x8xi32>
    %800 = arith.select %796, %798, %799 : vector<1x8xi1>, vector<1x8xi32>
    %801 = arith.addi %782, %800 : vector<1x8xi32>
    %802 = vector.broadcast %794 : vector<1x1xi32> to vector<1x5xi32>
    %803 = arith.cmpi eq, %526, %802 : vector<1x5xi32>
    %c0_i32_252 = arith.constant 0 : i32
    %804 = vector.broadcast %c0_i32_252 : i32 to vector<1x5xi32>
    %805 = arith.select %803, %573, %804 : vector<1x5xi1>, vector<1x5xi32>
    %cst_253 = arith.constant dense<0> : vector<1xi32>
    %806 = vector.multi_reduction <add>, %805, %cst_253 [1] : vector<1x5xi32> to vector<1xi32>
    %807 = vector.shape_cast %806 : vector<1xi32> to vector<1x1xi32>
    %c2_i32_254 = arith.constant 2 : i32
    %808 = vector.broadcast %c2_i32_254 : i32 to vector<1x1xi32>
    %809 = arith.cmpi sge, %694, %808 : vector<1x1xi32>
    %810 = arith.select %809, %807, %794 : vector<1x1xi1>, vector<1x1xi32>
    %c1_i32_255 = arith.constant 1 : i32
    %811 = vector.broadcast %c1_i32_255 : i32 to vector<1x1xi32>
    %812 = arith.cmpi eq, %694, %811 : vector<1x1xi32>
    %813 = arith.select %812, %689, %810 : vector<1x1xi1>, vector<1x1xi32>
    %c1_i32_256 = arith.constant 1 : i32
    %814 = vector.broadcast %c1_i32_256 : i32 to vector<1x8xi32>
    %815 = arith.cmpi eq, %534, %814 : vector<1x8xi32>
    %c0_i32_257 = arith.constant 0 : i32
    %816 = vector.shape_cast %813 : vector<1x1xi32> to vector<1x1xi32>
    %817 = vector.broadcast %816 : vector<1x1xi32> to vector<1x8xi32>
    %818 = vector.broadcast %c0_i32_257 : i32 to vector<1x8xi32>
    %819 = arith.select %815, %817, %818 : vector<1x8xi1>, vector<1x8xi32>
    %820 = arith.addi %801, %819 : vector<1x8xi32>
    %821 = vector.broadcast %813 : vector<1x1xi32> to vector<5x1xi32>
    %822 = arith.cmpi eq, %527, %821 : vector<5x1xi32>
    %c0_i32_258 = arith.constant 0 : i32
    %823 = vector.broadcast %c0_i32_258 : i32 to vector<5x1xi32>
    %824 = arith.select %822, %553, %823 : vector<5x1xi1>, vector<5x1xi32>
    %cst_259 = arith.constant dense<0> : vector<1xi32>
    %825 = vector.multi_reduction <add>, %824, %cst_259 [0] : vector<5x1xi32> to vector<1xi32>
    %826 = vector.shape_cast %825 : vector<1xi32> to vector<1x1xi32>
    %c1_i32_260 = arith.constant 1 : i32
    %827 = vector.broadcast %c1_i32_260 : i32 to vector<1x1xi32>
    %828 = arith.cmpi sge, %694, %827 : vector<1x1xi32>
    %829 = arith.select %828, %826, %813 : vector<1x1xi1>, vector<1x1xi32>
    %c0_i32_261 = arith.constant 0 : i32
    %830 = vector.broadcast %c0_i32_261 : i32 to vector<1x1xi32>
    %831 = arith.cmpi eq, %694, %830 : vector<1x1xi32>
    %832 = arith.select %831, %689, %829 : vector<1x1xi1>, vector<1x1xi32>
    %c0_i32_262 = arith.constant 0 : i32
    %833 = vector.broadcast %c0_i32_262 : i32 to vector<1x8xi32>
    %834 = arith.cmpi eq, %534, %833 : vector<1x8xi32>
    %c0_i32_263 = arith.constant 0 : i32
    %835 = vector.shape_cast %832 : vector<1x1xi32> to vector<1x1xi32>
    %836 = vector.broadcast %835 : vector<1x1xi32> to vector<1x8xi32>
    %837 = vector.broadcast %c0_i32_263 : i32 to vector<1x8xi32>
    %838 = arith.select %834, %836, %837 : vector<1x8xi1>, vector<1x8xi32>
    %839 = arith.addi %820, %838 : vector<1x8xi32>
    %840 = vector.extract_strided_slice %520 {offsets = [8, 0], sizes = [8, 5], strides = [1, 1]} : vector<16x5xf32> to vector<8x5xf32>
    %841 = vector.extract_strided_slice %521 {offsets = [0, 8], sizes = [5, 8], strides = [1, 1]} : vector<5x16xf32> to vector<5x8xf32>
    %842 = vector.extract_strided_slice %6 {offsets = [1, 0], sizes = [1, 8], strides = [1, 1]} : vector<2x8xi1> to vector<1x8xi1>
    %843 = vector.extract_strided_slice %840 {offsets = [0, 0], sizes = [1, 5], strides = [1, 1]} : vector<8x5xf32> to vector<1x5xf32>
    %844 = arith.addf %524, %843 : vector<1x5xf32>
    %845 = vector.extract_strided_slice %842 {offsets = [0, 1], sizes = [1, 1], strides = [1, 1]} : vector<1x8xi1> to vector<1x1xi1>
    %846 = vector.shape_cast %845 : vector<1x1xi1> to vector<1x1xi1>
    %847 = vector.broadcast %846 : vector<1x1xi1> to vector<5x5xi1>
    %848 = arith.select %847, %523, %533 : vector<5x5xi1>, vector<5x5xf32>
    %849 = vector.broadcast %844 : vector<1x5xf32> to vector<5x5xf32>
    %850 = arith.addf %849, %848 : vector<5x5xf32>
    %cst_264 = arith.constant dense<0xFF800000> : vector<5xf32>
    %851 = vector.multi_reduction <maximumf>, %850, %cst_264 [1] : vector<5x5xf32> to vector<5xf32>
    %852 = vector.shape_cast %851 : vector<5xf32> to vector<5x1xf32>
    %853 = vector.broadcast %852 : vector<5x1xf32> to vector<5x5xf32>
    %854 = arith.cmpf oeq, %850, %853 : vector<5x5xf32>
    %c5_i32_265 = arith.constant 5 : i32
    %855 = vector.broadcast %c5_i32_265 : i32 to vector<5x5xi32>
    %856 = arith.select %854, %528, %855 : vector<5x5xi1>, vector<5x5xi32>
    %cst_266 = arith.constant dense<2147483647> : vector<5xi32>
    %857 = vector.multi_reduction <minsi>, %856, %cst_266 [1] : vector<5x5xi32> to vector<5xi32>
    %858 = vector.shape_cast %857 : vector<5xi32> to vector<5x1xi32>
    %859 = vector.extract_strided_slice %841 {offsets = [0, 1], sizes = [5, 1], strides = [1, 1]} : vector<5x8xf32> to vector<5x1xf32>
    %cst_267 = arith.constant 0.000000e+00 : f32
    %860 = vector.shape_cast %845 : vector<1x1xi1> to vector<1x1xi1>
    %861 = vector.broadcast %860 : vector<1x1xi1> to vector<5x1xi1>
    %862 = vector.broadcast %cst_267 : f32 to vector<5x1xf32>
    %863 = arith.select %861, %859, %862 : vector<5x1xi1>, vector<5x1xf32>
    %864 = arith.addf %852, %863 : vector<5x1xf32>
    %865 = vector.extract_strided_slice %842 {offsets = [0, 2], sizes = [1, 1], strides = [1, 1]} : vector<1x8xi1> to vector<1x1xi1>
    %866 = vector.shape_cast %865 : vector<1x1xi1> to vector<1x1xi1>
    %867 = vector.broadcast %866 : vector<1x1xi1> to vector<5x5xi1>
    %868 = arith.select %867, %522, %533 : vector<5x5xi1>, vector<5x5xf32>
    %869 = vector.broadcast %864 : vector<5x1xf32> to vector<5x5xf32>
    %870 = arith.addf %869, %868 : vector<5x5xf32>
    %cst_268 = arith.constant dense<0xFF800000> : vector<5xf32>
    %871 = vector.multi_reduction <maximumf>, %870, %cst_268 [0] : vector<5x5xf32> to vector<5xf32>
    %872 = vector.shape_cast %871 : vector<5xf32> to vector<1x5xf32>
    %873 = vector.broadcast %872 : vector<1x5xf32> to vector<5x5xf32>
    %874 = arith.cmpf oeq, %870, %873 : vector<5x5xf32>
    %c5_i32_269 = arith.constant 5 : i32
    %875 = vector.broadcast %c5_i32_269 : i32 to vector<5x5xi32>
    %876 = arith.select %874, %529, %875 : vector<5x5xi1>, vector<5x5xi32>
    %cst_270 = arith.constant dense<2147483647> : vector<5xi32>
    %877 = vector.multi_reduction <minsi>, %876, %cst_270 [0] : vector<5x5xi32> to vector<5xi32>
    %878 = vector.shape_cast %877 : vector<5xi32> to vector<1x5xi32>
    %879 = vector.extract_strided_slice %840 {offsets = [2, 0], sizes = [1, 5], strides = [1, 1]} : vector<8x5xf32> to vector<1x5xf32>
    %cst_271 = arith.constant 0.000000e+00 : f32
    %880 = vector.shape_cast %865 : vector<1x1xi1> to vector<1x1xi1>
    %881 = vector.broadcast %880 : vector<1x1xi1> to vector<1x5xi1>
    %882 = vector.broadcast %cst_271 : f32 to vector<1x5xf32>
    %883 = arith.select %881, %879, %882 : vector<1x5xi1>, vector<1x5xf32>
    %884 = arith.addf %872, %883 : vector<1x5xf32>
    %885 = vector.extract_strided_slice %842 {offsets = [0, 3], sizes = [1, 1], strides = [1, 1]} : vector<1x8xi1> to vector<1x1xi1>
    %886 = vector.shape_cast %885 : vector<1x1xi1> to vector<1x1xi1>
    %887 = vector.broadcast %886 : vector<1x1xi1> to vector<5x5xi1>
    %888 = arith.select %887, %523, %533 : vector<5x5xi1>, vector<5x5xf32>
    %889 = vector.broadcast %884 : vector<1x5xf32> to vector<5x5xf32>
    %890 = arith.addf %889, %888 : vector<5x5xf32>
    %cst_272 = arith.constant dense<0xFF800000> : vector<5xf32>
    %891 = vector.multi_reduction <maximumf>, %890, %cst_272 [1] : vector<5x5xf32> to vector<5xf32>
    %892 = vector.shape_cast %891 : vector<5xf32> to vector<5x1xf32>
    %893 = vector.broadcast %892 : vector<5x1xf32> to vector<5x5xf32>
    %894 = arith.cmpf oeq, %890, %893 : vector<5x5xf32>
    %c5_i32_273 = arith.constant 5 : i32
    %895 = vector.broadcast %c5_i32_273 : i32 to vector<5x5xi32>
    %896 = arith.select %894, %528, %895 : vector<5x5xi1>, vector<5x5xi32>
    %cst_274 = arith.constant dense<2147483647> : vector<5xi32>
    %897 = vector.multi_reduction <minsi>, %896, %cst_274 [1] : vector<5x5xi32> to vector<5xi32>
    %898 = vector.shape_cast %897 : vector<5xi32> to vector<5x1xi32>
    %899 = vector.extract_strided_slice %841 {offsets = [0, 3], sizes = [5, 1], strides = [1, 1]} : vector<5x8xf32> to vector<5x1xf32>
    %cst_275 = arith.constant 0.000000e+00 : f32
    %900 = vector.shape_cast %885 : vector<1x1xi1> to vector<1x1xi1>
    %901 = vector.broadcast %900 : vector<1x1xi1> to vector<5x1xi1>
    %902 = vector.broadcast %cst_275 : f32 to vector<5x1xf32>
    %903 = arith.select %901, %899, %902 : vector<5x1xi1>, vector<5x1xf32>
    %904 = arith.addf %892, %903 : vector<5x1xf32>
    %905 = vector.extract_strided_slice %842 {offsets = [0, 4], sizes = [1, 1], strides = [1, 1]} : vector<1x8xi1> to vector<1x1xi1>
    %906 = vector.shape_cast %905 : vector<1x1xi1> to vector<1x1xi1>
    %907 = vector.broadcast %906 : vector<1x1xi1> to vector<5x5xi1>
    %908 = arith.select %907, %522, %533 : vector<5x5xi1>, vector<5x5xf32>
    %909 = vector.broadcast %904 : vector<5x1xf32> to vector<5x5xf32>
    %910 = arith.addf %909, %908 : vector<5x5xf32>
    %cst_276 = arith.constant dense<0xFF800000> : vector<5xf32>
    %911 = vector.multi_reduction <maximumf>, %910, %cst_276 [0] : vector<5x5xf32> to vector<5xf32>
    %912 = vector.shape_cast %911 : vector<5xf32> to vector<1x5xf32>
    %913 = vector.broadcast %912 : vector<1x5xf32> to vector<5x5xf32>
    %914 = arith.cmpf oeq, %910, %913 : vector<5x5xf32>
    %c5_i32_277 = arith.constant 5 : i32
    %915 = vector.broadcast %c5_i32_277 : i32 to vector<5x5xi32>
    %916 = arith.select %914, %529, %915 : vector<5x5xi1>, vector<5x5xi32>
    %cst_278 = arith.constant dense<2147483647> : vector<5xi32>
    %917 = vector.multi_reduction <minsi>, %916, %cst_278 [0] : vector<5x5xi32> to vector<5xi32>
    %918 = vector.shape_cast %917 : vector<5xi32> to vector<1x5xi32>
    %919 = vector.extract_strided_slice %840 {offsets = [4, 0], sizes = [1, 5], strides = [1, 1]} : vector<8x5xf32> to vector<1x5xf32>
    %cst_279 = arith.constant 0.000000e+00 : f32
    %920 = vector.shape_cast %905 : vector<1x1xi1> to vector<1x1xi1>
    %921 = vector.broadcast %920 : vector<1x1xi1> to vector<1x5xi1>
    %922 = vector.broadcast %cst_279 : f32 to vector<1x5xf32>
    %923 = arith.select %921, %919, %922 : vector<1x5xi1>, vector<1x5xf32>
    %924 = arith.addf %912, %923 : vector<1x5xf32>
    %925 = vector.extract_strided_slice %842 {offsets = [0, 5], sizes = [1, 1], strides = [1, 1]} : vector<1x8xi1> to vector<1x1xi1>
    %926 = vector.shape_cast %925 : vector<1x1xi1> to vector<1x1xi1>
    %927 = vector.broadcast %926 : vector<1x1xi1> to vector<5x5xi1>
    %928 = arith.select %927, %523, %533 : vector<5x5xi1>, vector<5x5xf32>
    %929 = vector.broadcast %924 : vector<1x5xf32> to vector<5x5xf32>
    %930 = arith.addf %929, %928 : vector<5x5xf32>
    %cst_280 = arith.constant dense<0xFF800000> : vector<5xf32>
    %931 = vector.multi_reduction <maximumf>, %930, %cst_280 [1] : vector<5x5xf32> to vector<5xf32>
    %932 = vector.shape_cast %931 : vector<5xf32> to vector<5x1xf32>
    %933 = vector.broadcast %932 : vector<5x1xf32> to vector<5x5xf32>
    %934 = arith.cmpf oeq, %930, %933 : vector<5x5xf32>
    %c5_i32_281 = arith.constant 5 : i32
    %935 = vector.broadcast %c5_i32_281 : i32 to vector<5x5xi32>
    %936 = arith.select %934, %528, %935 : vector<5x5xi1>, vector<5x5xi32>
    %cst_282 = arith.constant dense<2147483647> : vector<5xi32>
    %937 = vector.multi_reduction <minsi>, %936, %cst_282 [1] : vector<5x5xi32> to vector<5xi32>
    %938 = vector.shape_cast %937 : vector<5xi32> to vector<5x1xi32>
    %939 = vector.extract_strided_slice %841 {offsets = [0, 5], sizes = [5, 1], strides = [1, 1]} : vector<5x8xf32> to vector<5x1xf32>
    %cst_283 = arith.constant 0.000000e+00 : f32
    %940 = vector.shape_cast %925 : vector<1x1xi1> to vector<1x1xi1>
    %941 = vector.broadcast %940 : vector<1x1xi1> to vector<5x1xi1>
    %942 = vector.broadcast %cst_283 : f32 to vector<5x1xf32>
    %943 = arith.select %941, %939, %942 : vector<5x1xi1>, vector<5x1xf32>
    %944 = arith.addf %932, %943 : vector<5x1xf32>
    %945 = vector.extract_strided_slice %842 {offsets = [0, 6], sizes = [1, 1], strides = [1, 1]} : vector<1x8xi1> to vector<1x1xi1>
    %946 = vector.shape_cast %945 : vector<1x1xi1> to vector<1x1xi1>
    %947 = vector.broadcast %946 : vector<1x1xi1> to vector<5x5xi1>
    %948 = arith.select %947, %522, %533 : vector<5x5xi1>, vector<5x5xf32>
    %949 = vector.broadcast %944 : vector<5x1xf32> to vector<5x5xf32>
    %950 = arith.addf %949, %948 : vector<5x5xf32>
    %cst_284 = arith.constant dense<0xFF800000> : vector<5xf32>
    %951 = vector.multi_reduction <maximumf>, %950, %cst_284 [0] : vector<5x5xf32> to vector<5xf32>
    %952 = vector.shape_cast %951 : vector<5xf32> to vector<1x5xf32>
    %953 = vector.broadcast %952 : vector<1x5xf32> to vector<5x5xf32>
    %954 = arith.cmpf oeq, %950, %953 : vector<5x5xf32>
    %c5_i32_285 = arith.constant 5 : i32
    %955 = vector.broadcast %c5_i32_285 : i32 to vector<5x5xi32>
    %956 = arith.select %954, %529, %955 : vector<5x5xi1>, vector<5x5xi32>
    %cst_286 = arith.constant dense<2147483647> : vector<5xi32>
    %957 = vector.multi_reduction <minsi>, %956, %cst_286 [0] : vector<5x5xi32> to vector<5xi32>
    %958 = vector.shape_cast %957 : vector<5xi32> to vector<1x5xi32>
    %959 = vector.extract_strided_slice %840 {offsets = [6, 0], sizes = [1, 5], strides = [1, 1]} : vector<8x5xf32> to vector<1x5xf32>
    %cst_287 = arith.constant 0.000000e+00 : f32
    %960 = vector.shape_cast %945 : vector<1x1xi1> to vector<1x1xi1>
    %961 = vector.broadcast %960 : vector<1x1xi1> to vector<1x5xi1>
    %962 = vector.broadcast %cst_287 : f32 to vector<1x5xf32>
    %963 = arith.select %961, %959, %962 : vector<1x5xi1>, vector<1x5xf32>
    %964 = arith.addf %952, %963 : vector<1x5xf32>
    %965 = vector.extract_strided_slice %842 {offsets = [0, 7], sizes = [1, 1], strides = [1, 1]} : vector<1x8xi1> to vector<1x1xi1>
    %966 = vector.shape_cast %965 : vector<1x1xi1> to vector<1x1xi1>
    %967 = vector.broadcast %966 : vector<1x1xi1> to vector<5x5xi1>
    %968 = arith.select %967, %523, %533 : vector<5x5xi1>, vector<5x5xf32>
    %969 = vector.broadcast %964 : vector<1x5xf32> to vector<5x5xf32>
    %970 = arith.addf %969, %968 : vector<5x5xf32>
    %cst_288 = arith.constant dense<0xFF800000> : vector<5xf32>
    %971 = vector.multi_reduction <maximumf>, %970, %cst_288 [1] : vector<5x5xf32> to vector<5xf32>
    %972 = vector.shape_cast %971 : vector<5xf32> to vector<5x1xf32>
    %973 = vector.broadcast %972 : vector<5x1xf32> to vector<5x5xf32>
    %974 = arith.cmpf oeq, %970, %973 : vector<5x5xf32>
    %c5_i32_289 = arith.constant 5 : i32
    %975 = vector.broadcast %c5_i32_289 : i32 to vector<5x5xi32>
    %976 = arith.select %974, %528, %975 : vector<5x5xi1>, vector<5x5xi32>
    %cst_290 = arith.constant dense<2147483647> : vector<5xi32>
    %977 = vector.multi_reduction <minsi>, %976, %cst_290 [1] : vector<5x5xi32> to vector<5xi32>
    %978 = vector.shape_cast %977 : vector<5xi32> to vector<5x1xi32>
    %979 = vector.extract_strided_slice %841 {offsets = [0, 7], sizes = [5, 1], strides = [1, 1]} : vector<5x8xf32> to vector<5x1xf32>
    %cst_291 = arith.constant 0.000000e+00 : f32
    %980 = vector.shape_cast %965 : vector<1x1xi1> to vector<1x1xi1>
    %981 = vector.broadcast %980 : vector<1x1xi1> to vector<5x1xi1>
    %982 = vector.broadcast %cst_291 : f32 to vector<5x1xf32>
    %983 = arith.select %981, %979, %982 : vector<5x1xi1>, vector<5x1xf32>
    %984 = arith.addf %972, %983 : vector<5x1xf32>
    %985 = tpu.transpose %984, [1, 0] : vector<5x1xf32> -> vector<1x5xf32>
    %986 = arith.addf %985, %525 : vector<1x5xf32>
    %cst_292 = arith.constant dense<0xFF800000> : vector<1xf32>
    %987 = vector.multi_reduction <maximumf>, %986, %cst_292 [1] : vector<1x5xf32> to vector<1xf32>
    %988 = vector.shape_cast %987 : vector<1xf32> to vector<1x1xf32>
    %989 = vector.broadcast %988 : vector<1x1xf32> to vector<1x5xf32>
    %990 = arith.cmpf oeq, %986, %989 : vector<1x5xf32>
    %c5_i32_293 = arith.constant 5 : i32
    %991 = vector.broadcast %c5_i32_293 : i32 to vector<1x5xi32>
    %992 = arith.select %990, %526, %991 : vector<1x5xi1>, vector<1x5xi32>
    %cst_294 = arith.constant dense<2147483647> : vector<1xi32>
    %993 = vector.multi_reduction <minsi>, %992, %cst_294 [1] : vector<1x5xi32> to vector<1xi32>
    %994 = vector.shape_cast %993 : vector<1xi32> to vector<1x1xi32>
    %995 = arith.extui %842 : vector<1x8xi1> to vector<1x8xi32>
    %cst_295 = arith.constant dense<0> : vector<1xi32>
    %996 = vector.multi_reduction <add>, %995, %cst_295 [1] : vector<1x8xi32> to vector<1xi32>
    %997 = vector.shape_cast %996 : vector<1xi32> to vector<1x1xi32>
    %c1_i32_296 = arith.constant 1 : i32
    %998 = vector.broadcast %c1_i32_296 : i32 to vector<1x1xi32>
    %999 = arith.subi %997, %998 : vector<1x1xi32>
    %c0_i32_297 = arith.constant 0 : i32
    %1000 = vector.broadcast %c0_i32_297 : i32 to vector<1x1xi32>
    %c0_i32_298 = arith.constant 0 : i32
    %1001 = vector.broadcast %c0_i32_298 : i32 to vector<1x8xi32>
    %c7_i32_299 = arith.constant 7 : i32
    %1002 = vector.broadcast %c7_i32_299 : i32 to vector<1x1xi32>
    %1003 = arith.cmpi eq, %999, %1002 : vector<1x1xi32>
    %1004 = arith.select %1003, %994, %1000 : vector<1x1xi1>, vector<1x1xi32>
    %c7_i32_300 = arith.constant 7 : i32
    %1005 = vector.broadcast %c7_i32_300 : i32 to vector<1x8xi32>
    %1006 = arith.cmpi eq, %534, %1005 : vector<1x8xi32>
    %c0_i32_301 = arith.constant 0 : i32
    %1007 = vector.shape_cast %1004 : vector<1x1xi32> to vector<1x1xi32>
    %1008 = vector.broadcast %1007 : vector<1x1xi32> to vector<1x8xi32>
    %1009 = vector.broadcast %c0_i32_301 : i32 to vector<1x8xi32>
    %1010 = arith.select %1006, %1008, %1009 : vector<1x8xi1>, vector<1x8xi32>
    %1011 = arith.addi %1001, %1010 : vector<1x8xi32>
    %1012 = vector.broadcast %1004 : vector<1x1xi32> to vector<5x1xi32>
    %1013 = arith.cmpi eq, %527, %1012 : vector<5x1xi32>
    %c0_i32_302 = arith.constant 0 : i32
    %1014 = vector.broadcast %c0_i32_302 : i32 to vector<5x1xi32>
    %1015 = arith.select %1013, %978, %1014 : vector<5x1xi1>, vector<5x1xi32>
    %cst_303 = arith.constant dense<0> : vector<1xi32>
    %1016 = vector.multi_reduction <add>, %1015, %cst_303 [0] : vector<5x1xi32> to vector<1xi32>
    %1017 = vector.shape_cast %1016 : vector<1xi32> to vector<1x1xi32>
    %c7_i32_304 = arith.constant 7 : i32
    %1018 = vector.broadcast %c7_i32_304 : i32 to vector<1x1xi32>
    %1019 = arith.cmpi sge, %999, %1018 : vector<1x1xi32>
    %1020 = arith.select %1019, %1017, %1004 : vector<1x1xi1>, vector<1x1xi32>
    %c6_i32_305 = arith.constant 6 : i32
    %1021 = vector.broadcast %c6_i32_305 : i32 to vector<1x1xi32>
    %1022 = arith.cmpi eq, %999, %1021 : vector<1x1xi32>
    %1023 = arith.select %1022, %994, %1020 : vector<1x1xi1>, vector<1x1xi32>
    %c6_i32_306 = arith.constant 6 : i32
    %1024 = vector.broadcast %c6_i32_306 : i32 to vector<1x8xi32>
    %1025 = arith.cmpi eq, %534, %1024 : vector<1x8xi32>
    %c0_i32_307 = arith.constant 0 : i32
    %1026 = vector.shape_cast %1023 : vector<1x1xi32> to vector<1x1xi32>
    %1027 = vector.broadcast %1026 : vector<1x1xi32> to vector<1x8xi32>
    %1028 = vector.broadcast %c0_i32_307 : i32 to vector<1x8xi32>
    %1029 = arith.select %1025, %1027, %1028 : vector<1x8xi1>, vector<1x8xi32>
    %1030 = arith.addi %1011, %1029 : vector<1x8xi32>
    %1031 = vector.broadcast %1023 : vector<1x1xi32> to vector<1x5xi32>
    %1032 = arith.cmpi eq, %526, %1031 : vector<1x5xi32>
    %c0_i32_308 = arith.constant 0 : i32
    %1033 = vector.broadcast %c0_i32_308 : i32 to vector<1x5xi32>
    %1034 = arith.select %1032, %958, %1033 : vector<1x5xi1>, vector<1x5xi32>
    %cst_309 = arith.constant dense<0> : vector<1xi32>
    %1035 = vector.multi_reduction <add>, %1034, %cst_309 [1] : vector<1x5xi32> to vector<1xi32>
    %1036 = vector.shape_cast %1035 : vector<1xi32> to vector<1x1xi32>
    %c6_i32_310 = arith.constant 6 : i32
    %1037 = vector.broadcast %c6_i32_310 : i32 to vector<1x1xi32>
    %1038 = arith.cmpi sge, %999, %1037 : vector<1x1xi32>
    %1039 = arith.select %1038, %1036, %1023 : vector<1x1xi1>, vector<1x1xi32>
    %c5_i32_311 = arith.constant 5 : i32
    %1040 = vector.broadcast %c5_i32_311 : i32 to vector<1x1xi32>
    %1041 = arith.cmpi eq, %999, %1040 : vector<1x1xi32>
    %1042 = arith.select %1041, %994, %1039 : vector<1x1xi1>, vector<1x1xi32>
    %c5_i32_312 = arith.constant 5 : i32
    %1043 = vector.broadcast %c5_i32_312 : i32 to vector<1x8xi32>
    %1044 = arith.cmpi eq, %534, %1043 : vector<1x8xi32>
    %c0_i32_313 = arith.constant 0 : i32
    %1045 = vector.shape_cast %1042 : vector<1x1xi32> to vector<1x1xi32>
    %1046 = vector.broadcast %1045 : vector<1x1xi32> to vector<1x8xi32>
    %1047 = vector.broadcast %c0_i32_313 : i32 to vector<1x8xi32>
    %1048 = arith.select %1044, %1046, %1047 : vector<1x8xi1>, vector<1x8xi32>
    %1049 = arith.addi %1030, %1048 : vector<1x8xi32>
    %1050 = vector.broadcast %1042 : vector<1x1xi32> to vector<5x1xi32>
    %1051 = arith.cmpi eq, %527, %1050 : vector<5x1xi32>
    %c0_i32_314 = arith.constant 0 : i32
    %1052 = vector.broadcast %c0_i32_314 : i32 to vector<5x1xi32>
    %1053 = arith.select %1051, %938, %1052 : vector<5x1xi1>, vector<5x1xi32>
    %cst_315 = arith.constant dense<0> : vector<1xi32>
    %1054 = vector.multi_reduction <add>, %1053, %cst_315 [0] : vector<5x1xi32> to vector<1xi32>
    %1055 = vector.shape_cast %1054 : vector<1xi32> to vector<1x1xi32>
    %c5_i32_316 = arith.constant 5 : i32
    %1056 = vector.broadcast %c5_i32_316 : i32 to vector<1x1xi32>
    %1057 = arith.cmpi sge, %999, %1056 : vector<1x1xi32>
    %1058 = arith.select %1057, %1055, %1042 : vector<1x1xi1>, vector<1x1xi32>
    %c4_i32_317 = arith.constant 4 : i32
    %1059 = vector.broadcast %c4_i32_317 : i32 to vector<1x1xi32>
    %1060 = arith.cmpi eq, %999, %1059 : vector<1x1xi32>
    %1061 = arith.select %1060, %994, %1058 : vector<1x1xi1>, vector<1x1xi32>
    %c4_i32_318 = arith.constant 4 : i32
    %1062 = vector.broadcast %c4_i32_318 : i32 to vector<1x8xi32>
    %1063 = arith.cmpi eq, %534, %1062 : vector<1x8xi32>
    %c0_i32_319 = arith.constant 0 : i32
    %1064 = vector.shape_cast %1061 : vector<1x1xi32> to vector<1x1xi32>
    %1065 = vector.broadcast %1064 : vector<1x1xi32> to vector<1x8xi32>
    %1066 = vector.broadcast %c0_i32_319 : i32 to vector<1x8xi32>
    %1067 = arith.select %1063, %1065, %1066 : vector<1x8xi1>, vector<1x8xi32>
    %1068 = arith.addi %1049, %1067 : vector<1x8xi32>
    %1069 = vector.broadcast %1061 : vector<1x1xi32> to vector<1x5xi32>
    %1070 = arith.cmpi eq, %526, %1069 : vector<1x5xi32>
    %c0_i32_320 = arith.constant 0 : i32
    %1071 = vector.broadcast %c0_i32_320 : i32 to vector<1x5xi32>
    %1072 = arith.select %1070, %918, %1071 : vector<1x5xi1>, vector<1x5xi32>
    %cst_321 = arith.constant dense<0> : vector<1xi32>
    %1073 = vector.multi_reduction <add>, %1072, %cst_321 [1] : vector<1x5xi32> to vector<1xi32>
    %1074 = vector.shape_cast %1073 : vector<1xi32> to vector<1x1xi32>
    %c4_i32_322 = arith.constant 4 : i32
    %1075 = vector.broadcast %c4_i32_322 : i32 to vector<1x1xi32>
    %1076 = arith.cmpi sge, %999, %1075 : vector<1x1xi32>
    %1077 = arith.select %1076, %1074, %1061 : vector<1x1xi1>, vector<1x1xi32>
    %c3_i32_323 = arith.constant 3 : i32
    %1078 = vector.broadcast %c3_i32_323 : i32 to vector<1x1xi32>
    %1079 = arith.cmpi eq, %999, %1078 : vector<1x1xi32>
    %1080 = arith.select %1079, %994, %1077 : vector<1x1xi1>, vector<1x1xi32>
    %c3_i32_324 = arith.constant 3 : i32
    %1081 = vector.broadcast %c3_i32_324 : i32 to vector<1x8xi32>
    %1082 = arith.cmpi eq, %534, %1081 : vector<1x8xi32>
    %c0_i32_325 = arith.constant 0 : i32
    %1083 = vector.shape_cast %1080 : vector<1x1xi32> to vector<1x1xi32>
    %1084 = vector.broadcast %1083 : vector<1x1xi32> to vector<1x8xi32>
    %1085 = vector.broadcast %c0_i32_325 : i32 to vector<1x8xi32>
    %1086 = arith.select %1082, %1084, %1085 : vector<1x8xi1>, vector<1x8xi32>
    %1087 = arith.addi %1068, %1086 : vector<1x8xi32>
    %1088 = vector.broadcast %1080 : vector<1x1xi32> to vector<5x1xi32>
    %1089 = arith.cmpi eq, %527, %1088 : vector<5x1xi32>
    %c0_i32_326 = arith.constant 0 : i32
    %1090 = vector.broadcast %c0_i32_326 : i32 to vector<5x1xi32>
    %1091 = arith.select %1089, %898, %1090 : vector<5x1xi1>, vector<5x1xi32>
    %cst_327 = arith.constant dense<0> : vector<1xi32>
    %1092 = vector.multi_reduction <add>, %1091, %cst_327 [0] : vector<5x1xi32> to vector<1xi32>
    %1093 = vector.shape_cast %1092 : vector<1xi32> to vector<1x1xi32>
    %c3_i32_328 = arith.constant 3 : i32
    %1094 = vector.broadcast %c3_i32_328 : i32 to vector<1x1xi32>
    %1095 = arith.cmpi sge, %999, %1094 : vector<1x1xi32>
    %1096 = arith.select %1095, %1093, %1080 : vector<1x1xi1>, vector<1x1xi32>
    %c2_i32_329 = arith.constant 2 : i32
    %1097 = vector.broadcast %c2_i32_329 : i32 to vector<1x1xi32>
    %1098 = arith.cmpi eq, %999, %1097 : vector<1x1xi32>
    %1099 = arith.select %1098, %994, %1096 : vector<1x1xi1>, vector<1x1xi32>
    %c2_i32_330 = arith.constant 2 : i32
    %1100 = vector.broadcast %c2_i32_330 : i32 to vector<1x8xi32>
    %1101 = arith.cmpi eq, %534, %1100 : vector<1x8xi32>
    %c0_i32_331 = arith.constant 0 : i32
    %1102 = vector.shape_cast %1099 : vector<1x1xi32> to vector<1x1xi32>
    %1103 = vector.broadcast %1102 : vector<1x1xi32> to vector<1x8xi32>
    %1104 = vector.broadcast %c0_i32_331 : i32 to vector<1x8xi32>
    %1105 = arith.select %1101, %1103, %1104 : vector<1x8xi1>, vector<1x8xi32>
    %1106 = arith.addi %1087, %1105 : vector<1x8xi32>
    %1107 = vector.broadcast %1099 : vector<1x1xi32> to vector<1x5xi32>
    %1108 = arith.cmpi eq, %526, %1107 : vector<1x5xi32>
    %c0_i32_332 = arith.constant 0 : i32
    %1109 = vector.broadcast %c0_i32_332 : i32 to vector<1x5xi32>
    %1110 = arith.select %1108, %878, %1109 : vector<1x5xi1>, vector<1x5xi32>
    %cst_333 = arith.constant dense<0> : vector<1xi32>
    %1111 = vector.multi_reduction <add>, %1110, %cst_333 [1] : vector<1x5xi32> to vector<1xi32>
    %1112 = vector.shape_cast %1111 : vector<1xi32> to vector<1x1xi32>
    %c2_i32_334 = arith.constant 2 : i32
    %1113 = vector.broadcast %c2_i32_334 : i32 to vector<1x1xi32>
    %1114 = arith.cmpi sge, %999, %1113 : vector<1x1xi32>
    %1115 = arith.select %1114, %1112, %1099 : vector<1x1xi1>, vector<1x1xi32>
    %c1_i32_335 = arith.constant 1 : i32
    %1116 = vector.broadcast %c1_i32_335 : i32 to vector<1x1xi32>
    %1117 = arith.cmpi eq, %999, %1116 : vector<1x1xi32>
    %1118 = arith.select %1117, %994, %1115 : vector<1x1xi1>, vector<1x1xi32>
    %c1_i32_336 = arith.constant 1 : i32
    %1119 = vector.broadcast %c1_i32_336 : i32 to vector<1x8xi32>
    %1120 = arith.cmpi eq, %534, %1119 : vector<1x8xi32>
    %c0_i32_337 = arith.constant 0 : i32
    %1121 = vector.shape_cast %1118 : vector<1x1xi32> to vector<1x1xi32>
    %1122 = vector.broadcast %1121 : vector<1x1xi32> to vector<1x8xi32>
    %1123 = vector.broadcast %c0_i32_337 : i32 to vector<1x8xi32>
    %1124 = arith.select %1120, %1122, %1123 : vector<1x8xi1>, vector<1x8xi32>
    %1125 = arith.addi %1106, %1124 : vector<1x8xi32>
    %1126 = vector.broadcast %1118 : vector<1x1xi32> to vector<5x1xi32>
    %1127 = arith.cmpi eq, %527, %1126 : vector<5x1xi32>
    %c0_i32_338 = arith.constant 0 : i32
    %1128 = vector.broadcast %c0_i32_338 : i32 to vector<5x1xi32>
    %1129 = arith.select %1127, %858, %1128 : vector<5x1xi1>, vector<5x1xi32>
    %cst_339 = arith.constant dense<0> : vector<1xi32>
    %1130 = vector.multi_reduction <add>, %1129, %cst_339 [0] : vector<5x1xi32> to vector<1xi32>
    %1131 = vector.shape_cast %1130 : vector<1xi32> to vector<1x1xi32>
    %c1_i32_340 = arith.constant 1 : i32
    %1132 = vector.broadcast %c1_i32_340 : i32 to vector<1x1xi32>
    %1133 = arith.cmpi sge, %999, %1132 : vector<1x1xi32>
    %1134 = arith.select %1133, %1131, %1118 : vector<1x1xi1>, vector<1x1xi32>
    %c0_i32_341 = arith.constant 0 : i32
    %1135 = vector.broadcast %c0_i32_341 : i32 to vector<1x1xi32>
    %1136 = arith.cmpi eq, %999, %1135 : vector<1x1xi32>
    %1137 = arith.select %1136, %994, %1134 : vector<1x1xi1>, vector<1x1xi32>
    %c0_i32_342 = arith.constant 0 : i32
    %1138 = vector.broadcast %c0_i32_342 : i32 to vector<1x8xi32>
    %1139 = arith.cmpi eq, %534, %1138 : vector<1x8xi32>
    %c0_i32_343 = arith.constant 0 : i32
    %1140 = vector.shape_cast %1137 : vector<1x1xi32> to vector<1x1xi32>
    %1141 = vector.broadcast %1140 : vector<1x1xi32> to vector<1x8xi32>
    %1142 = vector.broadcast %c0_i32_343 : i32 to vector<1x8xi32>
    %1143 = arith.select %1139, %1141, %1142 : vector<1x8xi1>, vector<1x8xi32>
    %1144 = arith.addi %1125, %1143 : vector<1x8xi32>
    %1145 = tpu.concatenate %839, %1144 in 0 : vector<1x8xi32>, vector<1x8xi32> -> vector<2x8xi32>
    %c0_344 = arith.constant 0 : index
    %c0_345 = arith.constant 0 : index
    %1146 = vector.load %arg21[%c0_344, %c0_345] : memref<2x8xi32, #tpu.memory_space<vmem>>, vector<2x8xi32>
    tpu.vector_store %arg21[%c0_344, %c0_345], %1145 {strides = array<i32>} : memref<2x8xi32, #tpu.memory_space<vmem>>, vector<2x8xi32>,
    return
  }
  func.func @transform_0(%arg0: i32) -> (i32, i32) {
    %c0_i32 = arith.constant 0 : i32
    %c0_i32_0 = arith.constant 0 : i32
    %c0_i32_1 = arith.constant 0 : i32
    return %c0_i32, %c0_i32_0 : i32, i32
  }
  func.func @transform_1(%arg0: i32) -> (i32, i32) {
    %c0_i32 = arith.constant 0 : i32
    %c0_i32_0 = arith.constant 0 : i32
    %c0_i32_1 = arith.constant 0 : i32
    return %c0_i32, %c0_i32_0 : i32, i32
  }
  func.func @transform_2(%arg0: i32) -> (i32, i32) {
    %c0_i32 = arith.constant 0 : i32
    %c0_i32_0 = arith.constant 0 : i32
    %c0_i32_1 = arith.constant 0 : i32
    return %c0_i32, %c0_i32_0 : i32, i32
  }
  func.func @transform_3(%arg0: i32) -> (i32, i32) {
    %c0_i32 = arith.constant 0 : i32
    %c0_i32_0 = arith.constant 0 : i32
    %c0_i32_1 = arith.constant 0 : i32
    return %c0_i32, %c0_i32_0 : i32, i32
  }
  func.func @transform_4(%arg0: i32) -> (i32, i32, i32) {
    %c0_i32 = arith.constant 0 : i32
    %c0_i32_0 = arith.constant 0 : i32
    %c0_i32_1 = arith.constant 0 : i32
    %c0_i32_2 = arith.constant 0 : i32
    return %c0_i32, %c0_i32_0, %c0_i32_1 : i32, i32, i32
  }
  func.func @transform_5(%arg0: i32) -> (i32, i32, i32) {
    %c0_i32 = arith.constant 0 : i32
    %c0_i32_0 = arith.constant 0 : i32
    %c0_i32_1 = arith.constant 0 : i32
    %c0_i32_2 = arith.constant 0 : i32
    return %c0_i32, %c0_i32_0, %c0_i32_1 : i32, i32, i32
  }
  func.func @transform_6(%arg0: i32) -> (i32, i32, i32) {
    %c0_i32 = arith.constant 0 : i32
    %c0_i32_0 = arith.constant 0 : i32
    %c0_i32_1 = arith.constant 0 : i32
    %c0_i32_2 = arith.constant 0 : i32
    return %c0_i32, %c0_i32_0, %c0_i32_1 : i32, i32, i32
  }
  func.func @transform_7(%arg0: i32) -> (i32, i32, i32) {
    %c0_i32 = arith.constant 0 : i32
    %c0_i32_0 = arith.constant 0 : i32
    %c0_i32_1 = arith.constant 0 : i32
    %c0_i32_2 = arith.constant 0 : i32
    return %c0_i32, %c0_i32_0, %c0_i32_1 : i32, i32, i32
  }
  func.func @transform_8(%arg0: i32) -> (i32, i32, i32) {
    %c0_i32 = arith.constant 0 : i32
    %c0_i32_0 = arith.constant 0 : i32
    %c0_i32_1 = arith.constant 0 : i32
    %c0_i32_2 = arith.constant 0 : i32
    return %c0_i32, %c0_i32_0, %c0_i32_1 : i32, i32, i32
  }
  func.func @transform_9(%arg0: i32) -> (i32, i32, i32) {
    %c0_i32 = arith.constant 0 : i32
    %c0_i32_0 = arith.constant 0 : i32
    %c0_i32_1 = arith.constant 0 : i32
    %c0_i32_2 = arith.constant 0 : i32
    return %c0_i32, %c0_i32_0, %c0_i32_1 : i32, i32, i32
  }
  func.func @transform_10(%arg0: i32) -> (i32, i32, i32) {
    %c0_i32 = arith.constant 0 : i32
    %c0_i32_0 = arith.constant 0 : i32
    %c0_i32_1 = arith.constant 0 : i32
    %c0_i32_2 = arith.constant 0 : i32
    return %c0_i32, %c0_i32_0, %c0_i32_1 : i32, i32, i32
  }
  func.func @transform_11(%arg0: i32) -> (i32, i32, i32) {
    %c0_i32 = arith.constant 0 : i32
    %c0_i32_0 = arith.constant 0 : i32
    %c0_i32_1 = arith.constant 0 : i32
    %c0_i32_2 = arith.constant 0 : i32
    return %c0_i32, %c0_i32_0, %c0_i32_1 : i32, i32, i32
  }
  func.func @transform_12(%arg0: i32) -> (i32, i32, i32) {
    %c0_i32 = arith.constant 0 : i32
    %c0_i32_0 = arith.constant 0 : i32
    %c0_i32_1 = arith.constant 0 : i32
    %c0_i32_2 = arith.constant 0 : i32
    return %c0_i32, %c0_i32_0, %c0_i32_1 : i32, i32, i32
  }
  func.func @transform_13(%arg0: i32) -> (i32, i32) {
    %c0_i32 = arith.constant 0 : i32
    %c0_i32_0 = arith.constant 0 : i32
    %c0_i32_1 = arith.constant 0 : i32
    return %c0_i32, %c0_i32_0 : i32, i32
  }
  func.func @transform_14(%arg0: i32) -> (i32, i32) {
    %c0_i32 = arith.constant 0 : i32
    %c0_i32_0 = arith.constant 0 : i32
    %c0_i32_1 = arith.constant 0 : i32
    return %c0_i32, %c0_i32_0 : i32, i32
  }
  func.func @transform_15(%arg0: i32) -> (i32, i32) {
    %c0_i32 = arith.constant 0 : i32
    %c0_i32_0 = arith.constant 0 : i32
    %c0_i32_1 = arith.constant 0 : i32
    return %c0_i32, %c0_i32_0 : i32, i32
  }
  func.func @transform_16(%arg0: i32) -> (i32, i32) {
    %c0_i32 = arith.constant 0 : i32
    %c0_i32_0 = arith.constant 0 : i32
    %c0_i32_1 = arith.constant 0 : i32
    return %c0_i32, %c0_i32_0 : i32, i32
  }
  func.func @transform_17(%arg0: i32) -> (i32, i32) {
    %c0_i32 = arith.constant 0 : i32
    %c0_i32_0 = arith.constant 0 : i32
    %c0_i32_1 = arith.constant 0 : i32
    return %c0_i32, %c0_i32_0 : i32, i32
  }
  func.func @transform_18(%arg0: i32) -> (i32, i32) {
    %c0_i32 = arith.constant 0 : i32
    %c0_i32_0 = arith.constant 0 : i32
    %c0_i32_1 = arith.constant 0 : i32
    return %c0_i32, %c0_i32_0 : i32, i32
  }
  func.func @transform_19(%arg0: i32) -> (i32, i32) {
    %c0_i32 = arith.constant 0 : i32
    %c0_i32_0 = arith.constant 0 : i32
    %c0_i32_1 = arith.constant 0 : i32
    return %c0_i32, %c0_i32_0 : i32, i32
  }
  func.func @transform_20(%arg0: i32) -> (i32, i32) {
    %c0_i32 = arith.constant 0 : i32
    %c0_i32_0 = arith.constant 0 : i32
    %c0_i32_1 = arith.constant 0 : i32
    return %c0_i32, %c0_i32_0 : i32, i32
  }
}

</mosaic_0001>

<llo_original>
// kernel: transformer_crf_decode.1
$region0: #{transformer_crf_decode.1}
  #allocation0 [shape = 'u32[]', space=smem, size = 0x4, offset = 0x4, fixed_abs, tag = 'smem constant byte address 0x4 - core index']
  #allocation1 [shape = 'u32[144,128]{1,0:T(1,128)}', space=vmem, size = 0x12000, scoped, tag = 'internal scratch']
  %s0 = inlined_call_operand.vmem [shape: s32[16,1], index: 0, kind: input, shape index: {}]
  %s1 = inlined_call_operand.vmem [shape: s32[2,8], index: 1, kind: input, shape index: {}]
  %s2 = inlined_call_operand.vmem [shape: f32[50,32], index: 2, kind: input, shape index: {}]
  %s3 = inlined_call_operand.vmem [shape: f32[16,32], index: 3, kind: input, shape index: {}]
  %s4 = inlined_call_operand.vmem [shape: f32[2,32,96], index: 4, kind: input, shape index: {}]
  %s5 = inlined_call_operand.vmem [shape: f32[2,1,96], index: 5, kind: input, shape index: {}]
  %s6 = inlined_call_operand.vmem [shape: f32[2,32,32], index: 6, kind: input, shape index: {}]
  %s7 = inlined_call_operand.vmem [shape: f32[2,1,32], index: 7, kind: input, shape index: {}]
  %s8 = inlined_call_operand.vmem [shape: f32[2,32,64], index: 8, kind: input, shape index: {}]
  %s9 = inlined_call_operand.vmem [shape: f32[2,1,64], index: 9, kind: input, shape index: {}]
  %s10 = inlined_call_operand.vmem [shape: f32[2,64,32], index: 10, kind: input, shape index: {}]
  %s11 = inlined_call_operand.vmem [shape: f32[2,1,32], index: 11, kind: input, shape index: {}]
  %s12 = inlined_call_operand.vmem [shape: f32[2,4,32], index: 12, kind: input, shape index: {}]
  %s13 = inlined_call_operand.vmem [shape: f32[32,32], index: 13, kind: input, shape index: {}]
  %s14 = inlined_call_operand.vmem [shape: f32[1,32], index: 14, kind: input, shape index: {}]
  %s15 = inlined_call_operand.vmem [shape: f32[32,5], index: 15, kind: input, shape index: {}]
  %s16 = inlined_call_operand.vmem [shape: f32[1,5], index: 16, kind: input, shape index: {}]
  %s17 = inlined_call_operand.vmem [shape: f32[1,5], index: 17, kind: input, shape index: {}]
  %s18 = inlined_call_operand.vmem [shape: f32[1,5], index: 18, kind: input, shape index: {}]
  %s19 = inlined_call_operand.vmem [shape: f32[5,5], index: 19, kind: input, shape index: {}]
  %s20 = inlined_call_operand.hbm [shape: s32[2,8], index: 20, kind: output, shape index: {}]
  %s21 = sld [smem:[#allocation0]]
  $region90: #{transformer_crf_decode.1} parent=0
    _
  %s23 = ssub.s32 1, %s21
  %s24 = scalar_select 0, %s23, %s21
  $region1: #{transformer_crf_decode.1} parent=0
    #allocation2 [shape = 'u8[1024]{0}', space=vmem, size = 0x400, scoped, tag = 'output window, operand 0, single buffered']
    #allocation3 [shape = 's32[1]{0}', space=sflag, size = 0x4, scoped, tag = 'scoped memory for transformer_crf_decode.1']
    %25 = vsyncpa [#allocation3], 0
    // Predicated region
    $region2: #{transformer_crf_decode.1} parent=1 // pred_check
      _
    $region3: #{transformer_crf_decode.1} parent=1 // pred_check_branch
      %27 = sbr.rel (0) target = $region5
    $region4: #{transformer_crf_decode.1} parent=1 // pred_region
      _
    $region5: #{transformer_crf_decode.1} parent=1 // pred_fallthru
      _
    // Predicated region
    $region6: #{transformer_crf_decode.1} parent=1 // pred_check
      _
    $region7: #{transformer_crf_decode.1} parent=1 // pred_check_branch
      %29 = sbr.rel (0) target = $region9
    $region8: #{transformer_crf_decode.1} parent=1 // pred_region
      _
    $region9: #{transformer_crf_decode.1} parent=1 // pred_fallthru
      _
    // Predicated region
    $region10: #{transformer_crf_decode.1} parent=1 // pred_check
      _
    $region11: #{transformer_crf_decode.1} parent=1 // pred_check_branch
      %31 = sbr.rel (0) target = $region13
    $region12: #{transformer_crf_decode.1} parent=1 // pred_region
      _
    $region13: #{transformer_crf_decode.1} parent=1 // pred_fallthru
      _
    // Predicated region
    $region14: #{transformer_crf_decode.1} parent=1 // pred_check
      _
    $region15: #{transformer_crf_decode.1} parent=1 // pred_check_branch
      %33 = sbr.rel (0) target = $region17
    $region16: #{transformer_crf_decode.1} parent=1 // pred_region
      _
    $region17: #{transformer_crf_decode.1} parent=1 // pred_fallthru
      _
    // Predicated region
    $region18: #{transformer_crf_decode.1} parent=1 // pred_check
      _
    $region19: #{transformer_crf_decode.1} parent=1 // pred_check_branch
      %35 = sbr.rel (0) target = $region21
    $region20: #{transformer_crf_decode.1} parent=1 // pred_region
      _
    $region21: #{transformer_crf_decode.1} parent=1 // pred_fallthru
      _
    // Predicated region
    $region22: #{transformer_crf_decode.1} parent=1 // pred_check
      _
    $region23: #{transformer_crf_decode.1} parent=1 // pred_check_branch
      %37 = sbr.rel (0) target = $region25
    $region24: #{transformer_crf_decode.1} parent=1 // pred_region
      _
    $region25: #{transformer_crf_decode.1} parent=1 // pred_fallthru
      _
    // Predicated region
    $region26: #{transformer_crf_decode.1} parent=1 // pred_check
      _
    $region27: #{transformer_crf_decode.1} parent=1 // pred_check_branch
      %39 = sbr.rel (0) target = $region29
    $region28: #{transformer_crf_decode.1} parent=1 // pred_region
      _
    $region29: #{transformer_crf_decode.1} parent=1 // pred_fallthru
      _
    // Predicated region
    $region30: #{transformer_crf_decode.1} parent=1 // pred_check
      _
    $region31: #{transformer_crf_decode.1} parent=1 // pred_check_branch
      %41 = sbr.rel (0) target = $region33
    $region32: #{transformer_crf_decode.1} parent=1 // pred_region
      _
    $region33: #{transformer_crf_decode.1} parent=1 // pred_fallthru
      _
    // Predicated region
    $region34: #{transformer_crf_decode.1} parent=1 // pred_check
      _
    $region35: #{transformer_crf_decode.1} parent=1 // pred_check_branch
      %43 = sbr.rel (0) target = $region37
    $region36: #{transformer_crf_decode.1} parent=1 // pred_region
      _
    $region37: #{transformer_crf_decode.1} parent=1 // pred_fallthru
      _
    // Predicated region
    $region38: #{transformer_crf_decode.1} parent=1 // pred_check
      _
    $region39: #{transformer_crf_decode.1} parent=1 // pred_check_branch
      %45 = sbr.rel (0) target = $region41
    $region40: #{transformer_crf_decode.1} parent=1 // pred_region
      _
    $region41: #{transformer_crf_decode.1} parent=1 // pred_fallthru
      _
    // Predicated region
    $region42: #{transformer_crf_decode.1} parent=1 // pred_check
      _
    $region43: #{transformer_crf_decode.1} parent=1 // pred_check_branch
      %47 = sbr.rel (0) target = $region45
    $region44: #{transformer_crf_decode.1} parent=1 // pred_region
      _
    $region45: #{transformer_crf_decode.1} parent=1 // pred_fallthru
      _
    // Predicated region
    $region46: #{transformer_crf_decode.1} parent=1 // pred_check
      _
    $region47: #{transformer_crf_decode.1} parent=1 // pred_check_branch
      %49 = sbr.rel (0) target = $region49
    $region48: #{transformer_crf_decode.1} parent=1 // pred_region
      _
    $region49: #{transformer_crf_decode.1} parent=1 // pred_fallthru
      _
    // Predicated region
    $region50: #{transformer_crf_decode.1} parent=1 // pred_check
      _
    $region51: #{transformer_crf_decode.1} parent=1 // pred_check_branch
      %51 = sbr.rel (0) target = $region53
    $region52: #{transformer_crf_decode.1} parent=1 // pred_region
      _
    $region53: #{transformer_crf_decode.1} parent=1 // pred_fallthru
      _
    // Predicated region
    $region54: #{transformer_crf_decode.1} parent=1 // pred_check
      _
    $region55: #{transformer_crf_decode.1} parent=1 // pred_check_branch
      %53 = sbr.rel (0) target = $region57
    $region56: #{transformer_crf_decode.1} parent=1 // pred_region
      _
    $region57: #{transformer_crf_decode.1} parent=1 // pred_fallthru
      _
    // Predicated region
    $region58: #{transformer_crf_decode.1} parent=1 // pred_check
      _
    $region59: #{transformer_crf_decode.1} parent=1 // pred_check_branch
      %55 = sbr.rel (0) target = $region61
    $region60: #{transformer_crf_decode.1} parent=1 // pred_region
      _
    $region61: #{transformer_crf_decode.1} parent=1 // pred_fallthru
      _
    // Predicated region
    $region62: #{transformer_crf_decode.1} parent=1 // pred_check
      _
    $region63: #{transformer_crf_decode.1} parent=1 // pred_check_branch
      %57 = sbr.rel (0) target = $region65
    $region64: #{transformer_crf_decode.1} parent=1 // pred_region
      _
    $region65: #{transformer_crf_decode.1} parent=1 // pred_fallthru
      _
    // Predicated region
    $region66: #{transformer_crf_decode.1} parent=1 // pred_check
      _
    $region67: #{transformer_crf_decode.1} parent=1 // pred_check_branch
      %59 = sbr.rel (0) target = $region69
    $region68: #{transformer_crf_decode.1} parent=1 // pred_region
      _
    $region69: #{transformer_crf_decode.1} parent=1 // pred_fallthru
      _
    // Predicated region
    $region70: #{transformer_crf_decode.1} parent=1 // pred_check
      _
    $region71: #{transformer_crf_decode.1} parent=1 // pred_check_branch
      %61 = sbr.rel (0) target = $region73
    $region72: #{transformer_crf_decode.1} parent=1 // pred_region
      _
    $region73: #{transformer_crf_decode.1} parent=1 // pred_fallthru
      _
    // Predicated region
    $region74: #{transformer_crf_decode.1} parent=1 // pred_check
      _
    $region75: #{transformer_crf_decode.1} parent=1 // pred_check_branch
      %63 = sbr.rel (0) target = $region77
    $region76: #{transformer_crf_decode.1} parent=1 // pred_region
      _
    $region77: #{transformer_crf_decode.1} parent=1 // pred_fallthru
      _
    // Predicated region
    $region78: #{transformer_crf_decode.1} parent=1 // pred_check
      _
    $region79: #{transformer_crf_decode.1} parent=1 // pred_check_branch
      %65 = sbr.rel (0) target = $region81
    $region80: #{transformer_crf_decode.1} parent=1 // pred_region
      _
    $region81: #{transformer_crf_decode.1} parent=1 // pred_fallthru
      _
    %v66 = vld [vmem:[%s1] sm:$0x3]
    %vm67 = vcmp.eq.s32.totalorder %v66, 0
    %v68 = vsel %vm67, -1e+09, 0.0
    %vm69 = vmxor %vm67, 1
    %v70 = vld [vmem:[%s0] sm:$0xff]
    %v71 = vld [vmem:[%s0 + $0x8] sm:$0xff]
    %v72 = vlaneseq
    %v73 = vand.u32 %v72, 127
    %74 = vset.pattern.permute.xlu0 0
    %75 = vperm.xlu0 %74, %v70
    %v76 = vpop.permute.xlu0 %75
    %77 = vset.pattern.permute.xlu0 0
    %78 = vperm.xlu0 %77, %v71
    %v79 = vpop.permute.xlu0 %78
    %vm80 = vcmp.eq.s32.totalorder %v76, %v73
    %vm81 = vcmp.eq.s32.totalorder %v79, %v73
    %v82 = vsel %vm80, 1, 0
    %v83 = vsel %vm81, 1, 0
    %v84 = vcvt.s32.f32 %v82
    %v85 = vcvt.s32.f32 %v83
    %v86 = vld [vmem:[%s2] sm:$0xff]
    %v87 = vld [vmem:[%s2 + $0x8] sm:$0xff]
    %v88 = vld [vmem:[%s2 + $0x10] sm:$0xff]
    %v89 = vld [vmem:[%s2 + $0x18] sm:$0xff]
    %v90 = vld [vmem:[%s2 + $0x20] sm:$0xff]
    %v91 = vld [vmem:[%s2 + $0x28] sm:$0xff]
    %v92 = vld [vmem:[%s2 + $0x30] sm:$0x3]
    %v93 = vld [vmem:[%s3] sm:$0xff]
    %vm94 = vcmask 408576
    %v96 = vsel %vm94, %v84, 0
    %v99 = vsel %vm94, %v85, 0
    %vm101 = vcmask 1041408
    %v103 = vsel %vm101, %v92, 0
    %105 = vmatprep.subr.mxu0 0.0
    %106 = vmatpush1.msra.mxu0 0.0
    %107 = vmatprep.subr.mxu0 0.0
    %108 = vmatpush1.msra.mxu0 0.0
    %109 = vmatprep.subr.mxu0 0.0
    %110 = vmatpush1.msra.mxu0 0.0
    %111 = vmatprep.subr.mxu0 0.0
    %112 = vmatpush1.msra.mxu0 0.0
    %113 = vmatprep.subr.mxu0 0.0
    %114 = vmatpush1.msra.mxu0 0.0
    %115 = vmatprep.subr.mxu0 0.0
    %116 = vmatpush1.msra.mxu0 0.0
    %117 = vmatprep.subr.mxu0 0.0
    %118 = vmatpush1.msra.mxu0 0.0
    %119 = vmatprep.subr.mxu0 0.0
    %120 = vmatpush1.msra.mxu0 0.0
    %121 = vmatprep.subr.mxu0 0.0
    %122 = vmatpush1.msra.mxu0 0.0
    %123 = vmatprep.subr.mxu0 0.0
    %124 = vmatpush1.msra.mxu0 %v103
    %125 = vmatprep.subr.mxu0 0.0
    %126 = vmatpush1.msra.mxu0 %v91
    %127 = vmatprep.subr.mxu0 0.0
    %128 = vmatpush1.msra.mxu0 %v90
    %129 = vmatprep.subr.mxu0 0.0
    %130 = vmatpush1.msra.mxu0 %v89
    %131 = vmatprep.subr.mxu0 0.0
    %132 = vmatpush1.msra.mxu0 %v88
    %133 = vmatprep.subr.mxu0 0.0
    %134 = vmatpush1.msra.mxu0 %v87
    %135 = vmatprep.subr.mxu0 0.0
    %136 = vmatpush1.msra.mxu0 %v86
    %137 = vmatprep.subr.mxu0 0.0
    %138 = vmatpush2.msra.mxu0 0.0
    %139 = vmatprep.subr.mxu0 0.0
    %140 = vmatpush2.msra.mxu0 0.0
    %141 = vmatprep.subr.mxu0 0.0
    %142 = vmatpush2.msra.mxu0 0.0
    %143 = vmatprep.subr.mxu0 0.0
    %144 = vmatpush2.msra.mxu0 0.0
    %145 = vmatprep.subr.mxu0 0.0
    %146 = vmatpush2.msra.mxu0 0.0
    %147 = vmatprep.subr.mxu0 0.0
    %148 = vmatpush2.msra.mxu0 0.0
    %149 = vmatprep.subr.mxu0 0.0
    %150 = vmatpush2.msra.mxu0 0.0
    %151 = vmatprep.subr.mxu0 0.0
    %152 = vmatpush2.msra.mxu0 0.0
    %153 = vmatprep.subr.mxu0 0.0
    %154 = vmatpush2.msra.mxu0 0.0
    %155 = vmatprep.subr.mxu0 0.0
    %156 = vmatpush2.msra.mxu0 0.0
    %157 = vmatprep.subr.mxu0 0.0
    %158 = vmatpush2.msra.mxu0 0.0
    %159 = vmatprep.subr.mxu0 0.0
    %160 = vmatpush2.msra.mxu0 0.0
    %161 = vmatprep.subr.mxu0 0.0
    %162 = vmatpush2.msra.mxu0 0.0
    %163 = vmatprep.subr.mxu0 0.0
    %164 = vmatpush2.msra.mxu0 0.0
    %165 = vmatprep.subr.mxu0 0.0
    %166 = vmatpush2.msra.mxu0 0.0
    %167 = vmatprep.subr.mxu0 0.0
    %168 = vmatpush2.msra.mxu0 0.0
    %169 = vmatprep.mubr.f32.mxu0 0.0
    %170 = vmatmul.mubr.f32.gmra.mxu0 %v96
    %v171 = vpop.f32.mrf.mxu0
    %v172 = vadd.f32 %v93, %v171
    %v173 = vpop.f32.mrf.mxu0
    %174 = vmatprep.mubr.f32.mxu0 0.0
    %175 = vmatmul.mubr.f32.gmra.mxu0 %v99
    %v176 = vpop.f32.mrf.mxu0
    %v177 = vadd.f32 %v93, %v176
    %v178 = vpop.f32.mrf.mxu0
    %179 = vdwg.mxu0
    %v180 = vld [vmem:[%s4] sm:$0xff]
    %v181 = vld [vmem:[%s4 + $0x8] sm:$0xff]
    %v182 = vld [vmem:[%s4 + $0x10] sm:$0xff]
    %v183 = vld [vmem:[%s4 + $0x18] sm:$0xff]
    %v184 = vld [vmem:[%s5] sm:$0x1]
    %v186 = vlaneseq
    %v187 = vshrl.u32 %v186, 7
    %v188 = vsub.s32 0, %v187
    %v189 = vrot.slane %v184, %v188
    %vm191 = vcmask 261120
    %v193 = vsel %vm191, %v172, 0
    %v196 = vsel %vm191, %v177, 0
    %198 = vmatprep.subr.mxu0 0.0
    %199 = vmatpush1.msra.mxu0 0.0
    %200 = vmatprep.subr.mxu0 0.0
    %201 = vmatpush1.msra.mxu0 0.0
    %202 = vmatprep.subr.mxu0 0.0
    %203 = vmatpush1.msra.mxu0 0.0
    %204 = vmatprep.subr.mxu0 0.0
    %205 = vmatpush1.msra.mxu0 0.0
    %206 = vmatprep.subr.mxu0 0.0
    %207 = vmatpush1.msra.mxu0 0.0
    %208 = vmatprep.subr.mxu0 0.0
    %209 = vmatpush1.msra.mxu0 0.0
    %210 = vmatprep.subr.mxu0 0.0
    %211 = vmatpush1.msra.mxu0 0.0
    %212 = vmatprep.subr.mxu0 0.0
    %213 = vmatpush1.msra.mxu0 0.0
    %214 = vmatprep.subr.mxu0 0.0
    %215 = vmatpush1.msra.mxu0 0.0
    %216 = vmatprep.subr.mxu0 0.0
    %217 = vmatpush1.msra.mxu0 0.0
    %218 = vmatprep.subr.mxu0 0.0
    %219 = vmatpush1.msra.mxu0 0.0
    %220 = vmatprep.subr.mxu0 0.0
    %221 = vmatpush1.msra.mxu0 0.0
    %222 = vmatprep.subr.mxu0 0.0
    %223 = vmatpush1.msra.mxu0 %v183
    %224 = vmatprep.subr.mxu0 0.0
    %225 = vmatpush1.msra.mxu0 %v182
    %226 = vmatprep.subr.mxu0 0.0
    %227 = vmatpush1.msra.mxu0 %v181
    %228 = vmatprep.subr.mxu0 0.0
    %229 = vmatpush1.msra.mxu0 %v180
    %230 = vmatprep.subr.mxu0 0.0
    %231 = vmatpush2.msra.mxu0 0.0
    %232 = vmatprep.subr.mxu0 0.0
    %233 = vmatpush2.msra.mxu0 0.0
    %234 = vmatprep.subr.mxu0 0.0
    %235 = vmatpush2.msra.mxu0 0.0
    %236 = vmatprep.subr.mxu0 0.0
    %237 = vmatpush2.msra.mxu0 0.0
    %238 = vmatprep.subr.mxu0 0.0
    %239 = vmatpush2.msra.mxu0 0.0
    %240 = vmatprep.subr.mxu0 0.0
    %241 = vmatpush2.msra.mxu0 0.0
    %242 = vmatprep.subr.mxu0 0.0
    %243 = vmatpush2.msra.mxu0 0.0
    %244 = vmatprep.subr.mxu0 0.0
    %245 = vmatpush2.msra.mxu0 0.0
    %246 = vmatprep.subr.mxu0 0.0
    %247 = vmatpush2.msra.mxu0 0.0
    %248 = vmatprep.subr.mxu0 0.0
    %249 = vmatpush2.msra.mxu0 0.0
    %250 = vmatprep.subr.mxu0 0.0
    %251 = vmatpush2.msra.mxu0 0.0
    %252 = vmatprep.subr.mxu0 0.0
    %253 = vmatpush2.msra.mxu0 0.0
    %254 = vmatprep.subr.mxu0 0.0
    %255 = vmatpush2.msra.mxu0 0.0
    %256 = vmatprep.subr.mxu0 0.0
    %257 = vmatpush2.msra.mxu0 0.0
    %258 = vmatprep.subr.mxu0 0.0
    %259 = vmatpush2.msra.mxu0 0.0
    %260 = vmatprep.subr.mxu0 0.0
    %261 = vmatpush2.msra.mxu0 0.0
    %262 = vmatprep.mubr.f32.mxu0 0.0
    %263 = vmatmul.mubr.f32.gmra.mxu0 %v193
    %v264 = vpop.f32.mrf.mxu0
    %v265 = vadd.f32 %v189, %v264
    %v266 = vpop.f32.mrf.mxu0
    %267 = vmatprep.mubr.f32.mxu0 0.0
    %268 = vmatmul.mubr.f32.gmra.mxu0 %v196
    %v269 = vpop.f32.mrf.mxu0
    %v270 = vadd.f32 %v189, %v269
    %v271 = vpop.f32.mrf.mxu0
    %272 = vdwg.mxu0
    %274 = vrot.lane.b32.xlu0 %v265, 96
    %v275 = vpop.permute.xlu0 %274
    %vm276 = vcmask 64512
    %v277 = vsel %vm276, %v265, 0
    %v279 = vsel %vm276, %v275, 0
    %281 = vmatprep.subr.mxu0 0.0
    %282 = vmatpush1.xpose.msra.mxu0 0.0
    %283 = vmatprep.subr.mxu0 0.0
    %284 = vmatpush1.xpose.msra.mxu0 0.0
    %285 = vmatprep.subr.mxu0 0.0
    %286 = vmatpush1.xpose.msra.mxu0 0.0
    %287 = vmatprep.subr.mxu0 0.0
    %288 = vmatpush1.xpose.msra.mxu0 0.0
    %289 = vmatprep.subr.mxu0 0.0
    %290 = vmatpush1.xpose.msra.mxu0 0.0
    %291 = vmatprep.subr.mxu0 0.0
    %292 = vmatpush1.xpose.msra.mxu0 0.0
    %293 = vmatprep.subr.mxu0 0.0
    %294 = vmatpush1.xpose.msra.mxu0 0.0
    %295 = vmatprep.subr.mxu0 0.0
    %296 = vmatpush1.xpose.msra.mxu0 0.0
    %297 = vmatprep.subr.mxu0 0.0
    %298 = vmatpush1.xpose.msra.mxu0 0.0
    %299 = vmatprep.subr.mxu0 0.0
    %300 = vmatpush1.xpose.msra.mxu0 0.0
    %301 = vmatprep.subr.mxu0 0.0
    %302 = vmatpush1.xpose.msra.mxu0 0.0
    %303 = vmatprep.subr.mxu0 0.0
    %304 = vmatpush1.xpose.msra.mxu0 0.0
    %305 = vmatprep.subr.mxu0 0.0
    %306 = vmatpush1.xpose.msra.mxu0 0.0
    %307 = vmatprep.subr.mxu0 0.0
    %308 = vmatpush1.xpose.msra.mxu0 0.0
    %309 = vmatprep.subr.mxu0 0.0
    %310 = vmatpush1.xpose.msra.mxu0 0.0
    %311 = vmatprep.subr.mxu0 0.0
    %312 = vmatpush1.xpose.msra.mxu0 %v279
    %313 = vmatprep.subr.mxu0 0.0
    %314 = vmatpush2.xpose.msra.mxu0 0.0
    %315 = vmatprep.subr.mxu0 0.0
    %316 = vmatpush2.xpose.msra.mxu0 0.0
    %317 = vmatprep.subr.mxu0 0.0
    %318 = vmatpush2.xpose.msra.mxu0 0.0
    %319 = vmatprep.subr.mxu0 0.0
    %320 = vmatpush2.xpose.msra.mxu0 0.0
    %321 = vmatprep.subr.mxu0 0.0
    %322 = vmatpush2.xpose.msra.mxu0 0.0
    %323 = vmatprep.subr.mxu0 0.0
    %324 = vmatpush2.xpose.msra.mxu0 0.0
    %325 = vmatprep.subr.mxu0 0.0
    %326 = vmatpush2.xpose.msra.mxu0 0.0
    %327 = vmatprep.subr.mxu0 0.0
    %328 = vmatpush2.xpose.msra.mxu0 0.0
    %329 = vmatprep.subr.mxu0 0.0
    %330 = vmatpush2.xpose.msra.mxu0 0.0
    %331 = vmatprep.subr.mxu0 0.0
    %332 = vmatpush2.xpose.msra.mxu0 0.0
    %333 = vmatprep.subr.mxu0 0.0
    %334 = vmatpush2.xpose.msra.mxu0 0.0
    %335 = vmatprep.subr.mxu0 0.0
    %336 = vmatpush2.xpose.msra.mxu0 0.0
    %337 = vmatprep.subr.mxu0 0.0
    %338 = vmatpush2.xpose.msra.mxu0 0.0
    %339 = vmatprep.subr.mxu0 0.0
    %340 = vmatpush2.xpose.msra.mxu0 0.0
    %341 = vmatprep.subr.mxu0 0.0
    %342 = vmatpush2.xpose.msra.mxu0 0.0
    %343 = vmatprep.subr.mxu0 0.0
    %344 = vmatpush2.xpose.msra.mxu0 0.0
    %345 = vmatprep.mubr.f32.mxu0 0.0
    %346 = vmatmul.mubr.f32.gmra.mxu0 %v277
    %v347 = vpop.f32.mrf.mxu0
    %v348 = vadd.f32 0.0, %v347
    %v349 = vpop.f32.mrf.mxu0
    %350 = vdwg.mxu0
    %v351 = vmul.f32 %v348, 0.35355338
    %v352 = vlaneseq
    %v353 = vshrl.u32 %v352, 7
    %v354 = vsub.s32 0, %v353
    %v355 = vrot.slane %v68, %v354
    %v356 = vadd.f32 %v351, %v355
    %v357 = vsel %vm276, %v356, -inf
    %358 = vmax.xlane.f32.xlu0 %v357
    %v359 = vpop.xlane.xlu0 %358
    %v360 = vsub.f32 %v356, %v359
    %v361 = vmul.f32 %v360, 1.442695
    %v362 = vpow.pop %v361
    %v363 = vsel %vm276, %v362, 0.0
    %364 = vadd.xlane.f32.xlu0 %v363
    %v365 = vpop.xlane.xlu0 %364
    %v366 = vrcp.pop %v365
    %v367 = vmul.f32 %v362, %v366
    %368 = vrot.lane.b32.xlu0 %v265, 64
    %v369 = vpop.permute.xlu0 %368
    %v372 = vsel %vm276, %v367, 0
    %374 = vmatprep.subr.mxu0 0.0
    %375 = vmatpush1.msra.mxu0 0.0
    %376 = vmatprep.subr.mxu0 0.0
    %377 = vmatpush1.msra.mxu0 0.0
    %378 = vmatprep.subr.mxu0 0.0
    %379 = vmatpush1.msra.mxu0 0.0
    %380 = vmatprep.subr.mxu0 0.0
    %381 = vmatpush1.msra.mxu0 0.0
    %382 = vmatprep.subr.mxu0 0.0
    %383 = vmatpush1.msra.mxu0 0.0
    %384 = vmatprep.subr.mxu0 0.0
    %385 = vmatpush1.msra.mxu0 0.0
    %386 = vmatprep.subr.mxu0 0.0
    %387 = vmatpush1.msra.mxu0 0.0
    %388 = vmatprep.subr.mxu0 0.0
    %389 = vmatpush1.msra.mxu0 0.0
    %390 = vmatprep.subr.mxu0 0.0
    %391 = vmatpush1.msra.mxu0 0.0
    %392 = vmatprep.subr.mxu0 0.0
    %393 = vmatpush1.msra.mxu0 0.0
    %394 = vmatprep.subr.mxu0 0.0
    %395 = vmatpush1.msra.mxu0 0.0
    %396 = vmatprep.subr.mxu0 0.0
    %397 = vmatpush1.msra.mxu0 0.0
    %398 = vmatprep.subr.mxu0 0.0
    %399 = vmatpush1.msra.mxu0 0.0
    %400 = vmatprep.subr.mxu0 0.0
    %401 = vmatpush1.msra.mxu0 0.0
    %402 = vmatprep.subr.mxu0 0.0
    %403 = vmatpush1.msra.mxu0 0.0
    %404 = vmatprep.subr.mxu0 0.0
    %405 = vmatpush1.msra.mxu0 %v369
    %406 = vmatprep.subr.mxu0 0.0
    %407 = vmatpush2.msra.mxu0 0.0
    %408 = vmatprep.subr.mxu0 0.0
    %409 = vmatpush2.msra.mxu0 0.0
    %410 = vmatprep.subr.mxu0 0.0
    %411 = vmatpush2.msra.mxu0 0.0
    %412 = vmatprep.subr.mxu0 0.0
    %413 = vmatpush2.msra.mxu0 0.0
    %414 = vmatprep.subr.mxu0 0.0
    %415 = vmatpush2.msra.mxu0 0.0
    %416 = vmatprep.subr.mxu0 0.0
    %417 = vmatpush2.msra.mxu0 0.0
    %418 = vmatprep.subr.mxu0 0.0
    %419 = vmatpush2.msra.mxu0 0.0
    %420 = vmatprep.subr.mxu0 0.0
    %421 = vmatpush2.msra.mxu0 0.0
    %422 = vmatprep.subr.mxu0 0.0
    %423 = vmatpush2.msra.mxu0 0.0
    %424 = vmatprep.subr.mxu0 0.0
    %425 = vmatpush2.msra.mxu0 0.0
    %426 = vmatprep.subr.mxu0 0.0
    %427 = vmatpush2.msra.mxu0 0.0
    %428 = vmatprep.subr.mxu0 0.0
    %429 = vmatpush2.msra.mxu0 0.0
    %430 = vmatprep.subr.mxu0 0.0
    %431 = vmatpush2.msra.mxu0 0.0
    %432 = vmatprep.subr.mxu0 0.0
    %433 = vmatpush2.msra.mxu0 0.0
    %434 = vmatprep.subr.mxu0 0.0
    %435 = vmatpush2.msra.mxu0 0.0
    %436 = vmatprep.subr.mxu0 0.0
    %437 = vmatpush2.msra.mxu0 0.0
    %438 = vmatprep.mubr.f32.mxu0 0.0
    %439 = vmatmul.mubr.f32.gmra.mxu0 %v372
    %v440 = vpop.f32.mrf.mxu0
    %v441 = vadd.f32 0.0, %v440
    %v442 = vpop.f32.mrf.mxu0
    %443 = vdwg.mxu0
    %444 = vrot.lane.b32.xlu0 %v265, 120
    %v445 = vpop.permute.xlu0 %444
    %446 = vrot.lane.b32.xlu0 %v265, 88
    %v447 = vpop.permute.xlu0 %446
    %v448 = vsel %vm276, %v445, 0
    %v450 = vsel %vm276, %v447, 0
    %452 = vmatprep.subr.mxu0 0.0
    %453 = vmatpush1.xpose.msra.mxu0 0.0
    %454 = vmatprep.subr.mxu0 0.0
    %455 = vmatpush1.xpose.msra.mxu0 0.0
    %456 = vmatprep.subr.mxu0 0.0
    %457 = vmatpush1.xpose.msra.mxu0 0.0
    %458 = vmatprep.subr.mxu0 0.0
    %459 = vmatpush1.xpose.msra.mxu0 0.0
    %460 = vmatprep.subr.mxu0 0.0
    %461 = vmatpush1.xpose.msra.mxu0 0.0
    %462 = vmatprep.subr.mxu0 0.0
    %463 = vmatpush1.xpose.msra.mxu0 0.0
    %464 = vmatprep.subr.mxu0 0.0
    %465 = vmatpush1.xpose.msra.mxu0 0.0
    %466 = vmatprep.subr.mxu0 0.0
    %467 = vmatpush1.xpose.msra.mxu0 0.0
    %468 = vmatprep.subr.mxu0 0.0
    %469 = vmatpush1.xpose.msra.mxu0 0.0
    %470 = vmatprep.subr.mxu0 0.0
    %471 = vmatpush1.xpose.msra.mxu0 0.0
    %472 = vmatprep.subr.mxu0 0.0
    %473 = vmatpush1.xpose.msra.mxu0 0.0
    %474 = vmatprep.subr.mxu0 0.0
    %475 = vmatpush1.xpose.msra.mxu0 0.0
    %476 = vmatprep.subr.mxu0 0.0
    %477 = vmatpush1.xpose.msra.mxu0 0.0
    %478 = vmatprep.subr.mxu0 0.0
    %479 = vmatpush1.xpose.msra.mxu0 0.0
    %480 = vmatprep.subr.mxu0 0.0
    %481 = vmatpush1.xpose.msra.mxu0 0.0
    %482 = vmatprep.subr.mxu0 0.0
    %483 = vmatpush1.xpose.msra.mxu0 %v450
    %484 = vmatprep.subr.mxu0 0.0
    %485 = vmatpush2.xpose.msra.mxu0 0.0
    %486 = vmatprep.subr.mxu0 0.0
    %487 = vmatpush2.xpose.msra.mxu0 0.0
    %488 = vmatprep.subr.mxu0 0.0
    %489 = vmatpush2.xpose.msra.mxu0 0.0
    %490 = vmatprep.subr.mxu0 0.0
    %491 = vmatpush2.xpose.msra.mxu0 0.0
    %492 = vmatprep.subr.mxu0 0.0
    %493 = vmatpush2.xpose.msra.mxu0 0.0
    %494 = vmatprep.subr.mxu0 0.0
    %495 = vmatpush2.xpose.msra.mxu0 0.0
    %496 = vmatprep.subr.mxu0 0.0
    %497 = vmatpush2.xpose.msra.mxu0 0.0
    %498 = vmatprep.subr.mxu0 0.0
    %499 = vmatpush2.xpose.msra.mxu0 0.0
    %500 = vmatprep.subr.mxu0 0.0
    %501 = vmatpush2.xpose.msra.mxu0 0.0
    %502 = vmatprep.subr.mxu0 0.0
    %503 = vmatpush2.xpose.msra.mxu0 0.0
    %504 = vmatprep.subr.mxu0 0.0
    %505 = vmatpush2.xpose.msra.mxu0 0.0
    %506 = vmatprep.subr.mxu0 0.0
    %507 = vmatpush2.xpose.msra.mxu0 0.0
    %508 = vmatprep.subr.mxu0 0.0
    %509 = vmatpush2.xpose.msra.mxu0 0.0
    %510 = vmatprep.subr.mxu0 0.0
    %511 = vmatpush2.xpose.msra.mxu0 0.0
    %512 = vmatprep.subr.mxu0 0.0
    %513 = vmatpush2.xpose.msra.mxu0 0.0
    %514 = vmatprep.subr.mxu0 0.0
    %515 = vmatpush2.xpose.msra.mxu0 0.0
    %516 = vmatprep.mubr.f32.mxu0 0.0
    %517 = vmatmul.mubr.f32.gmra.mxu0 %v448
    %v518 = vpop.f32.mrf.mxu0
    %v519 = vadd.f32 0.0, %v518
    %v520 = vpop.f32.mrf.mxu0
    %521 = vdwg.mxu0
    %v522 = vmul.f32 %v519, 0.35355338
    %v523 = vadd.f32 %v522, %v355
    %v524 = vsel %vm276, %v523, -inf
    %525 = vmax.xlane.f32.xlu0 %v524
    %v526 = vpop.xlane.xlu0 %525
    %v527 = vsub.f32 %v523, %v526
    %v528 = vmul.f32 %v527, 1.442695
    %v529 = vpow.pop %v528
    %v530 = vsel %vm276, %v529, 0.0
    %531 = vadd.xlane.f32.xlu0 %v530
    %v532 = vpop.xlane.xlu0 %531
    %v533 = vrcp.pop %v532
    %v534 = vmul.f32 %v529, %v533
    %535 = vrot.lane.b32.xlu0 %v265, 56
    %v536 = vpop.permute.xlu0 %535
    %v539 = vsel %vm276, %v534, 0
    %541 = vmatprep.subr.mxu0 0.0
    %542 = vmatpush1.msra.mxu0 0.0
    %543 = vmatprep.subr.mxu0 0.0
    %544 = vmatpush1.msra.mxu0 0.0
    %545 = vmatprep.subr.mxu0 0.0
    %546 = vmatpush1.msra.mxu0 0.0
    %547 = vmatprep.subr.mxu0 0.0
    %548 = vmatpush1.msra.mxu0 0.0
    %549 = vmatprep.subr.mxu0 0.0
    %550 = vmatpush1.msra.mxu0 0.0
    %551 = vmatprep.subr.mxu0 0.0
    %552 = vmatpush1.msra.mxu0 0.0
    %553 = vmatprep.subr.mxu0 0.0
    %554 = vmatpush1.msra.mxu0 0.0
    %555 = vmatprep.subr.mxu0 0.0
    %556 = vmatpush1.msra.mxu0 0.0
    %557 = vmatprep.subr.mxu0 0.0
    %558 = vmatpush1.msra.mxu0 0.0
    %559 = vmatprep.subr.mxu0 0.0
    %560 = vmatpush1.msra.mxu0 0.0
    %561 = vmatprep.subr.mxu0 0.0
    %562 = vmatpush1.msra.mxu0 0.0
    %563 = vmatprep.subr.mxu0 0.0
    %564 = vmatpush1.msra.mxu0 0.0
    %565 = vmatprep.subr.mxu0 0.0
    %566 = vmatpush1.msra.mxu0 0.0
    %567 = vmatprep.subr.mxu0 0.0
    %568 = vmatpush1.msra.mxu0 0.0
    %569 = vmatprep.subr.mxu0 0.0
    %570 = vmatpush1.msra.mxu0 0.0
    %571 = vmatprep.subr.mxu0 0.0
    %572 = vmatpush1.msra.mxu0 %v536
    %573 = vmatprep.subr.mxu0 0.0
    %574 = vmatpush2.msra.mxu0 0.0
    %575 = vmatprep.subr.mxu0 0.0
    %576 = vmatpush2.msra.mxu0 0.0
    %577 = vmatprep.subr.mxu0 0.0
    %578 = vmatpush2.msra.mxu0 0.0
    %579 = vmatprep.subr.mxu0 0.0
    %580 = vmatpush2.msra.mxu0 0.0
    %581 = vmatprep.subr.mxu0 0.0
    %582 = vmatpush2.msra.mxu0 0.0
    %583 = vmatprep.subr.mxu0 0.0
    %584 = vmatpush2.msra.mxu0 0.0
    %585 = vmatprep.subr.mxu0 0.0
    %586 = vmatpush2.msra.mxu0 0.0
    %587 = vmatprep.subr.mxu0 0.0
    %588 = vmatpush2.msra.mxu0 0.0
    %589 = vmatprep.subr.mxu0 0.0
    %590 = vmatpush2.msra.mxu0 0.0
    %591 = vmatprep.subr.mxu0 0.0
    %592 = vmatpush2.msra.mxu0 0.0
    %593 = vmatprep.subr.mxu0 0.0
    %594 = vmatpush2.msra.mxu0 0.0
    %595 = vmatprep.subr.mxu0 0.0
    %596 = vmatpush2.msra.mxu0 0.0
    %597 = vmatprep.subr.mxu0 0.0
    %598 = vmatpush2.msra.mxu0 0.0
    %599 = vmatprep.subr.mxu0 0.0
    %600 = vmatpush2.msra.mxu0 0.0
    %601 = vmatprep.subr.mxu0 0.0
    %602 = vmatpush2.msra.mxu0 0.0
    %603 = vmatprep.subr.mxu0 0.0
    %604 = vmatpush2.msra.mxu0 0.0
    %605 = vmatprep.mubr.f32.mxu0 0.0
    %606 = vmatmul.mubr.f32.gmra.mxu0 %v539
    %v607 = vpop.f32.mrf.mxu0
    %v608 = vadd.f32 0.0, %v607
    %v609 = vpop.f32.mrf.mxu0
    %610 = vdwg.mxu0
    %611 = vrot.lane.b32.xlu0 %v265, 112
    %v612 = vpop.permute.xlu0 %611
    %613 = vrot.lane.b32.xlu0 %v265, 80
    %v614 = vpop.permute.xlu0 %613
    %v615 = vsel %vm276, %v612, 0
    %v617 = vsel %vm276, %v614, 0
    %619 = vmatprep.subr.mxu0 0.0
    %620 = vmatpush1.xpose.msra.mxu0 0.0
    %621 = vmatprep.subr.mxu0 0.0
    %622 = vmatpush1.xpose.msra.mxu0 0.0
    %623 = vmatprep.subr.mxu0 0.0
    %624 = vmatpush1.xpose.msra.mxu0 0.0
    %625 = vmatprep.subr.mxu0 0.0
    %626 = vmatpush1.xpose.msra.mxu0 0.0
    %627 = vmatprep.subr.mxu0 0.0
    %628 = vmatpush1.xpose.msra.mxu0 0.0
    %629 = vmatprep.subr.mxu0 0.0
    %630 = vmatpush1.xpose.msra.mxu0 0.0
    %631 = vmatprep.subr.mxu0 0.0
    %632 = vmatpush1.xpose.msra.mxu0 0.0
    %633 = vmatprep.subr.mxu0 0.0
    %634 = vmatpush1.xpose.msra.mxu0 0.0
    %635 = vmatprep.subr.mxu0 0.0
    %636 = vmatpush1.xpose.msra.mxu0 0.0
    %637 = vmatprep.subr.mxu0 0.0
    %638 = vmatpush1.xpose.msra.mxu0 0.0
    %639 = vmatprep.subr.mxu0 0.0
    %640 = vmatpush1.xpose.msra.mxu0 0.0
    %641 = vmatprep.subr.mxu0 0.0
    %642 = vmatpush1.xpose.msra.mxu0 0.0
    %643 = vmatprep.subr.mxu0 0.0
    %644 = vmatpush1.xpose.msra.mxu0 0.0
    %645 = vmatprep.subr.mxu0 0.0
    %646 = vmatpush1.xpose.msra.mxu0 0.0
    %647 = vmatprep.subr.mxu0 0.0
    %648 = vmatpush1.xpose.msra.mxu0 0.0
    %649 = vmatprep.subr.mxu0 0.0
    %650 = vmatpush1.xpose.msra.mxu0 %v617
    %651 = vmatprep.subr.mxu0 0.0
    %652 = vmatpush2.xpose.msra.mxu0 0.0
    %653 = vmatprep.subr.mxu0 0.0
    %654 = vmatpush2.xpose.msra.mxu0 0.0
    %655 = vmatprep.subr.mxu0 0.0
    %656 = vmatpush2.xpose.msra.mxu0 0.0
    %657 = vmatprep.subr.mxu0 0.0
    %658 = vmatpush2.xpose.msra.mxu0 0.0
    %659 = vmatprep.subr.mxu0 0.0
    %660 = vmatpush2.xpose.msra.mxu0 0.0
    %661 = vmatprep.subr.mxu0 0.0
    %662 = vmatpush2.xpose.msra.mxu0 0.0
    %663 = vmatprep.subr.mxu0 0.0
    %664 = vmatpush2.xpose.msra.mxu0 0.0
    %665 = vmatprep.subr.mxu0 0.0
    %666 = vmatpush2.xpose.msra.mxu0 0.0
    %667 = vmatprep.subr.mxu0 0.0
    %668 = vmatpush2.xpose.msra.mxu0 0.0
    %669 = vmatprep.subr.mxu0 0.0
    %670 = vmatpush2.xpose.msra.mxu0 0.0
    %671 = vmatprep.subr.mxu0 0.0
    %672 = vmatpush2.xpose.msra.mxu0 0.0
    %673 = vmatprep.subr.mxu0 0.0
    %674 = vmatpush2.xpose.msra.mxu0 0.0
    %675 = vmatprep.subr.mxu0 0.0
    %676 = vmatpush2.xpose.msra.mxu0 0.0
    %677 = vmatprep.subr.mxu0 0.0
    %678 = vmatpush2.xpose.msra.mxu0 0.0
    %679 = vmatprep.subr.mxu0 0.0
    %680 = vmatpush2.xpose.msra.mxu0 0.0
    %681 = vmatprep.subr.mxu0 0.0
    %682 = vmatpush2.xpose.msra.mxu0 0.0
    %683 = vmatprep.mubr.f32.mxu0 0.0
    %684 = vmatmul.mubr.f32.gmra.mxu0 %v615
    %v685 = vpop.f32.mrf.mxu0
    %v686 = vadd.f32 0.0, %v685
    %v687 = vpop.f32.mrf.mxu0
    %688 = vdwg.mxu0
    %v689 = vmul.f32 %v686, 0.35355338
    %v690 = vadd.f32 %v689, %v355
    %v691 = vsel %vm276, %v690, -inf
    %692 = vmax.xlane.f32.xlu0 %v691
    %v693 = vpop.xlane.xlu0 %692
    %v694 = vsub.f32 %v690, %v693
    %v695 = vmul.f32 %v694, 1.442695
    %v696 = vpow.pop %v695
    %v697 = vsel %vm276, %v696, 0.0
    %698 = vadd.xlane.f32.xlu0 %v697
    %v699 = vpop.xlane.xlu0 %698
    %v700 = vrcp.pop %v699
    %v701 = vmul.f32 %v696, %v700
    %702 = vrot.lane.b32.xlu0 %v265, 48
    %v703 = vpop.permute.xlu0 %702
    %v706 = vsel %vm276, %v701, 0
    %708 = vmatprep.subr.mxu0 0.0
    %709 = vmatpush1.msra.mxu0 0.0
    %710 = vmatprep.subr.mxu0 0.0
    %711 = vmatpush1.msra.mxu0 0.0
    %712 = vmatprep.subr.mxu0 0.0
    %713 = vmatpush1.msra.mxu0 0.0
    %714 = vmatprep.subr.mxu0 0.0
    %715 = vmatpush1.msra.mxu0 0.0
    %716 = vmatprep.subr.mxu0 0.0
    %717 = vmatpush1.msra.mxu0 0.0
    %718 = vmatprep.subr.mxu0 0.0
    %719 = vmatpush1.msra.mxu0 0.0
    %720 = vmatprep.subr.mxu0 0.0
    %721 = vmatpush1.msra.mxu0 0.0
    %722 = vmatprep.subr.mxu0 0.0
    %723 = vmatpush1.msra.mxu0 0.0
    %724 = vmatprep.subr.mxu0 0.0
    %725 = vmatpush1.msra.mxu0 0.0
    %726 = vmatprep.subr.mxu0 0.0
    %727 = vmatpush1.msra.mxu0 0.0
    %728 = vmatprep.subr.mxu0 0.0
    %729 = vmatpush1.msra.mxu0 0.0
    %730 = vmatprep.subr.mxu0 0.0
    %731 = vmatpush1.msra.mxu0 0.0
    %732 = vmatprep.subr.mxu0 0.0
    %733 = vmatpush1.msra.mxu0 0.0
    %734 = vmatprep.subr.mxu0 0.0
    %735 = vmatpush1.msra.mxu0 0.0
    %736 = vmatprep.subr.mxu0 0.0
    %737 = vmatpush1.msra.mxu0 0.0
    %738 = vmatprep.subr.mxu0 0.0
    %739 = vmatpush1.msra.mxu0 %v703
    %740 = vmatprep.subr.mxu0 0.0
    %741 = vmatpush2.msra.mxu0 0.0
    %742 = vmatprep.subr.mxu0 0.0
    %743 = vmatpush2.msra.mxu0 0.0
    %744 = vmatprep.subr.mxu0 0.0
    %745 = vmatpush2.msra.mxu0 0.0
    %746 = vmatprep.subr.mxu0 0.0
    %747 = vmatpush2.msra.mxu0 0.0
    %748 = vmatprep.subr.mxu0 0.0
    %749 = vmatpush2.msra.mxu0 0.0
    %750 = vmatprep.subr.mxu0 0.0
    %751 = vmatpush2.msra.mxu0 0.0
    %752 = vmatprep.subr.mxu0 0.0
    %753 = vmatpush2.msra.mxu0 0.0
    %754 = vmatprep.subr.mxu0 0.0
    %755 = vmatpush2.msra.mxu0 0.0
    %756 = vmatprep.subr.mxu0 0.0
    %757 = vmatpush2.msra.mxu0 0.0
    %758 = vmatprep.subr.mxu0 0.0
    %759 = vmatpush2.msra.mxu0 0.0
    %760 = vmatprep.subr.mxu0 0.0
    %761 = vmatpush2.msra.mxu0 0.0
    %762 = vmatprep.subr.mxu0 0.0
    %763 = vmatpush2.msra.mxu0 0.0
    %764 = vmatprep.subr.mxu0 0.0
    %765 = vmatpush2.msra.mxu0 0.0
    %766 = vmatprep.subr.mxu0 0.0
    %767 = vmatpush2.msra.mxu0 0.0
    %768 = vmatprep.subr.mxu0 0.0
    %769 = vmatpush2.msra.mxu0 0.0
    %770 = vmatprep.subr.mxu0 0.0
    %771 = vmatpush2.msra.mxu0 0.0
    %772 = vmatprep.mubr.f32.mxu0 0.0
    %773 = vmatmul.mubr.f32.gmra.mxu0 %v706
    %v774 = vpop.f32.mrf.mxu0
    %v775 = vadd.f32 0.0, %v774
    %v776 = vpop.f32.mrf.mxu0
    %777 = vdwg.mxu0
    %778 = vrot.lane.b32.xlu0 %v265, 104
    %v779 = vpop.permute.xlu0 %778
    %780 = vrot.lane.b32.xlu0 %v265, 72
    %v781 = vpop.permute.xlu0 %780
    %v782 = vsel %vm276, %v779, 0
    %v784 = vsel %vm276, %v781, 0
    %786 = vmatprep.subr.mxu0 0.0
    %787 = vmatpush1.xpose.msra.mxu0 0.0
    %788 = vmatprep.subr.mxu0 0.0
    %789 = vmatpush1.xpose.msra.mxu0 0.0
    %790 = vmatprep.subr.mxu0 0.0
    %791 = vmatpush1.xpose.msra.mxu0 0.0
    %792 = vmatprep.subr.mxu0 0.0
    %793 = vmatpush1.xpose.msra.mxu0 0.0
    %794 = vmatprep.subr.mxu0 0.0
    %795 = vmatpush1.xpose.msra.mxu0 0.0
    %796 = vmatprep.subr.mxu0 0.0
    %797 = vmatpush1.xpose.msra.mxu0 0.0
    %798 = vmatprep.subr.mxu0 0.0
    %799 = vmatpush1.xpose.msra.mxu0 0.0
    %800 = vmatprep.subr.mxu0 0.0
    %801 = vmatpush1.xpose.msra.mxu0 0.0
    %802 = vmatprep.subr.mxu0 0.0
    %803 = vmatpush1.xpose.msra.mxu0 0.0
    %804 = vmatprep.subr.mxu0 0.0
    %805 = vmatpush1.xpose.msra.mxu0 0.0
    %806 = vmatprep.subr.mxu0 0.0
    %807 = vmatpush1.xpose.msra.mxu0 0.0
    %808 = vmatprep.subr.mxu0 0.0
    %809 = vmatpush1.xpose.msra.mxu0 0.0
    %810 = vmatprep.subr.mxu0 0.0
    %811 = vmatpush1.xpose.msra.mxu0 0.0
    %812 = vmatprep.subr.mxu0 0.0
    %813 = vmatpush1.xpose.msra.mxu0 0.0
    %814 = vmatprep.subr.mxu0 0.0
    %815 = vmatpush1.xpose.msra.mxu0 0.0
    %816 = vmatprep.subr.mxu0 0.0
    %817 = vmatpush1.xpose.msra.mxu0 %v784
    %818 = vmatprep.subr.mxu0 0.0
    %819 = vmatpush2.xpose.msra.mxu0 0.0
    %820 = vmatprep.subr.mxu0 0.0
    %821 = vmatpush2.xpose.msra.mxu0 0.0
    %822 = vmatprep.subr.mxu0 0.0
    %823 = vmatpush2.xpose.msra.mxu0 0.0
    %824 = vmatprep.subr.mxu0 0.0
    %825 = vmatpush2.xpose.msra.mxu0 0.0
    %826 = vmatprep.subr.mxu0 0.0
    %827 = vmatpush2.xpose.msra.mxu0 0.0
    %828 = vmatprep.subr.mxu0 0.0
    %829 = vmatpush2.xpose.msra.mxu0 0.0
    %830 = vmatprep.subr.mxu0 0.0
    %831 = vmatpush2.xpose.msra.mxu0 0.0
    %832 = vmatprep.subr.mxu0 0.0
    %833 = vmatpush2.xpose.msra.mxu0 0.0
    %834 = vmatprep.subr.mxu0 0.0
    %835 = vmatpush2.xpose.msra.mxu0 0.0
    %836 = vmatprep.subr.mxu0 0.0
    %837 = vmatpush2.xpose.msra.mxu0 0.0
    %838 = vmatprep.subr.mxu0 0.0
    %839 = vmatpush2.xpose.msra.mxu0 0.0
    %840 = vmatprep.subr.mxu0 0.0
    %841 = vmatpush2.xpose.msra.mxu0 0.0
    %842 = vmatprep.subr.mxu0 0.0
    %843 = vmatpush2.xpose.msra.mxu0 0.0
    %844 = vmatprep.subr.mxu0 0.0
    %845 = vmatpush2.xpose.msra.mxu0 0.0
    %846 = vmatprep.subr.mxu0 0.0
    %847 = vmatpush2.xpose.msra.mxu0 0.0
    %848 = vmatprep.subr.mxu0 0.0
    %849 = vmatpush2.xpose.msra.mxu0 0.0
    %850 = vmatprep.mubr.f32.mxu0 0.0
    %851 = vmatmul.mubr.f32.gmra.mxu0 %v782
    %v852 = vpop.f32.mrf.mxu0
    %v853 = vadd.f32 0.0, %v852
    %v854 = vpop.f32.mrf.mxu0
    %855 = vdwg.mxu0
    %v856 = vmul.f32 %v853, 0.35355338
    %v857 = vadd.f32 %v856, %v355
    %v858 = vsel %vm276, %v857, -inf
    %859 = vmax.xlane.f32.xlu0 %v858
    %v860 = vpop.xlane.xlu0 %859
    %v861 = vsub.f32 %v857, %v860
    %v862 = vmul.f32 %v861, 1.442695
    %v863 = vpow.pop %v862
    %v864 = vsel %vm276, %v863, 0.0
    %865 = vadd.xlane.f32.xlu0 %v864
    %v866 = vpop.xlane.xlu0 %865
    %v867 = vrcp.pop %v866
    %v868 = vmul.f32 %v863, %v867
    %869 = vrot.lane.b32.xlu0 %v265, 40
    %v870 = vpop.permute.xlu0 %869
    %v873 = vsel %vm276, %v868, 0
    %875 = vmatprep.subr.mxu0 0.0
    %876 = vmatpush1.msra.mxu0 0.0
    %877 = vmatprep.subr.mxu0 0.0
    %878 = vmatpush1.msra.mxu0 0.0
    %879 = vmatprep.subr.mxu0 0.0
    %880 = vmatpush1.msra.mxu0 0.0
    %881 = vmatprep.subr.mxu0 0.0
    %882 = vmatpush1.msra.mxu0 0.0
    %883 = vmatprep.subr.mxu0 0.0
    %884 = vmatpush1.msra.mxu0 0.0
    %885 = vmatprep.subr.mxu0 0.0
    %886 = vmatpush1.msra.mxu0 0.0
    %887 = vmatprep.subr.mxu0 0.0
    %888 = vmatpush1.msra.mxu0 0.0
    %889 = vmatprep.subr.mxu0 0.0
    %890 = vmatpush1.msra.mxu0 0.0
    %891 = vmatprep.subr.mxu0 0.0
    %892 = vmatpush1.msra.mxu0 0.0
    %893 = vmatprep.subr.mxu0 0.0
    %894 = vmatpush1.msra.mxu0 0.0
    %895 = vmatprep.subr.mxu0 0.0
    %896 = vmatpush1.msra.mxu0 0.0
    %897 = vmatprep.subr.mxu0 0.0
    %898 = vmatpush1.msra.mxu0 0.0
    %899 = vmatprep.subr.mxu0 0.0
    %900 = vmatpush1.msra.mxu0 0.0
    %901 = vmatprep.subr.mxu0 0.0
    %902 = vmatpush1.msra.mxu0 0.0
    %903 = vmatprep.subr.mxu0 0.0
    %904 = vmatpush1.msra.mxu0 0.0
    %905 = vmatprep.subr.mxu0 0.0
    %906 = vmatpush1.msra.mxu0 %v870
    %907 = vmatprep.subr.mxu0 0.0
    %908 = vmatpush2.msra.mxu0 0.0
    %909 = vmatprep.subr.mxu0 0.0
    %910 = vmatpush2.msra.mxu0 0.0
    %911 = vmatprep.subr.mxu0 0.0
    %912 = vmatpush2.msra.mxu0 0.0
    %913 = vmatprep.subr.mxu0 0.0
    %914 = vmatpush2.msra.mxu0 0.0
    %915 = vmatprep.subr.mxu0 0.0
    %916 = vmatpush2.msra.mxu0 0.0
    %917 = vmatprep.subr.mxu0 0.0
    %918 = vmatpush2.msra.mxu0 0.0
    %919 = vmatprep.subr.mxu0 0.0
    %920 = vmatpush2.msra.mxu0 0.0
    %921 = vmatprep.subr.mxu0 0.0
    %922 = vmatpush2.msra.mxu0 0.0
    %923 = vmatprep.subr.mxu0 0.0
    %924 = vmatpush2.msra.mxu0 0.0
    %925 = vmatprep.subr.mxu0 0.0
    %926 = vmatpush2.msra.mxu0 0.0
    %927 = vmatprep.subr.mxu0 0.0
    %928 = vmatpush2.msra.mxu0 0.0
    %929 = vmatprep.subr.mxu0 0.0
    %930 = vmatpush2.msra.mxu0 0.0
    %931 = vmatprep.subr.mxu0 0.0
    %932 = vmatpush2.msra.mxu0 0.0
    %933 = vmatprep.subr.mxu0 0.0
    %934 = vmatpush2.msra.mxu0 0.0
    %935 = vmatprep.subr.mxu0 0.0
    %936 = vmatpush2.msra.mxu0 0.0
    %937 = vmatprep.subr.mxu0 0.0
    %938 = vmatpush2.msra.mxu0 0.0
    %939 = vmatprep.mubr.f32.mxu0 0.0
    %940 = vmatmul.mubr.f32.gmra.mxu0 %v873
    %v941 = vpop.f32.mrf.mxu0
    %v942 = vadd.f32 0.0, %v941
    %v943 = vpop.f32.mrf.mxu0
    %944 = vdwg.mxu0
    %946 = vrot.lane.b32.xlu0 %v608, 8
    %v947 = vpop.permute.xlu0 %946
    %950 = vrot.lane.b32.xlu0 %v775, 16
    %v951 = vpop.permute.xlu0 %950
    %954 = vrot.lane.b32.xlu0 %v942, 24
    %v955 = vpop.permute.xlu0 %954
    %v957 = vsel %vm276, %v441, %v947
    %vm958 = vcmask 130048
    %v959 = vsel %vm958, %v957, %v951
    %vm960 = vcmask 195584
    %v961 = vsel %vm960, %v959, %v955
    %963 = vrot.lane.b32.xlu0 %v270, 96
    %v964 = vpop.permute.xlu0 %963
    %v965 = vsel %vm276, %v270, 0
    %v967 = vsel %vm276, %v964, 0
    %969 = vmatprep.subr.mxu0 0.0
    %970 = vmatpush1.xpose.msra.mxu0 0.0
    %971 = vmatprep.subr.mxu0 0.0
    %972 = vmatpush1.xpose.msra.mxu0 0.0
    %973 = vmatprep.subr.mxu0 0.0
    %974 = vmatpush1.xpose.msra.mxu0 0.0
    %975 = vmatprep.subr.mxu0 0.0
    %976 = vmatpush1.xpose.msra.mxu0 0.0
    %977 = vmatprep.subr.mxu0 0.0
    %978 = vmatpush1.xpose.msra.mxu0 0.0
    %979 = vmatprep.subr.mxu0 0.0
    %980 = vmatpush1.xpose.msra.mxu0 0.0
    %981 = vmatprep.subr.mxu0 0.0
    %982 = vmatpush1.xpose.msra.mxu0 0.0
    %983 = vmatprep.subr.mxu0 0.0
    %984 = vmatpush1.xpose.msra.mxu0 0.0
    %985 = vmatprep.subr.mxu0 0.0
    %986 = vmatpush1.xpose.msra.mxu0 0.0
    %987 = vmatprep.subr.mxu0 0.0
    %988 = vmatpush1.xpose.msra.mxu0 0.0
    %989 = vmatprep.subr.mxu0 0.0
    %990 = vmatpush1.xpose.msra.mxu0 0.0
    %991 = vmatprep.subr.mxu0 0.0
    %992 = vmatpush1.xpose.msra.mxu0 0.0
    %993 = vmatprep.subr.mxu0 0.0
    %994 = vmatpush1.xpose.msra.mxu0 0.0
    %995 = vmatprep.subr.mxu0 0.0
    %996 = vmatpush1.xpose.msra.mxu0 0.0
    %997 = vmatprep.subr.mxu0 0.0
    %998 = vmatpush1.xpose.msra.mxu0 0.0
    %999 = vmatprep.subr.mxu0 0.0
    %1000 = vmatpush1.xpose.msra.mxu0 %v967
    %1001 = vmatprep.subr.mxu0 0.0
    %1002 = vmatpush2.xpose.msra.mxu0 0.0
    %1003 = vmatprep.subr.mxu0 0.0
    %1004 = vmatpush2.xpose.msra.mxu0 0.0
    %1005 = vmatprep.subr.mxu0 0.0
    %1006 = vmatpush2.xpose.msra.mxu0 0.0
    %1007 = vmatprep.subr.mxu0 0.0
    %1008 = vmatpush2.xpose.msra.mxu0 0.0
    %1009 = vmatprep.subr.mxu0 0.0
    %1010 = vmatpush2.xpose.msra.mxu0 0.0
    %1011 = vmatprep.subr.mxu0 0.0
    %1012 = vmatpush2.xpose.msra.mxu0 0.0
    %1013 = vmatprep.subr.mxu0 0.0
    %1014 = vmatpush2.xpose.msra.mxu0 0.0
    %1015 = vmatprep.subr.mxu0 0.0
    %1016 = vmatpush2.xpose.msra.mxu0 0.0
    %1017 = vmatprep.subr.mxu0 0.0
    %1018 = vmatpush2.xpose.msra.mxu0 0.0
    %1019 = vmatprep.subr.mxu0 0.0
    %1020 = vmatpush2.xpose.msra.mxu0 0.0
    %1021 = vmatprep.subr.mxu0 0.0
    %1022 = vmatpush2.xpose.msra.mxu0 0.0
    %1023 = vmatprep.subr.mxu0 0.0
    %1024 = vmatpush2.xpose.msra.mxu0 0.0
    %1025 = vmatprep.subr.mxu0 0.0
    %1026 = vmatpush2.xpose.msra.mxu0 0.0
    %1027 = vmatprep.subr.mxu0 0.0
    %1028 = vmatpush2.xpose.msra.mxu0 0.0
    %1029 = vmatprep.subr.mxu0 0.0
    %1030 = vmatpush2.xpose.msra.mxu0 0.0
    %1031 = vmatprep.subr.mxu0 0.0
    %1032 = vmatpush2.xpose.msra.mxu0 0.0
    %1033 = vmatprep.mubr.f32.mxu0 0.0
    %1034 = vmatmul.mubr.f32.gmra.mxu0 %v965
    %v1035 = vpop.f32.mrf.mxu0
    %v1036 = vadd.f32 0.0, %v1035
    %v1037 = vpop.f32.mrf.mxu0
    %1038 = vdwg.mxu0
    %v1039 = vmul.f32 %v1036, 0.35355338
    %v1040 = vlaneseq
    %v1041 = vshrl.u32 %v1040, 7
    %v1042 = vsub.s32 1, %v1041
    %v1043 = vrot.slane %v68, %v1042
    %v1044 = vadd.f32 %v1039, %v1043
    %v1045 = vsel %vm276, %v1044, -inf
    %1046 = vmax.xlane.f32.xlu0 %v1045
    %v1047 = vpop.xlane.xlu0 %1046
    %v1048 = vsub.f32 %v1044, %v1047
    %v1049 = vmul.f32 %v1048, 1.442695
    %v1050 = vpow.pop %v1049
    %v1051 = vsel %vm276, %v1050, 0.0
    %1052 = vadd.xlane.f32.xlu0 %v1051
    %v1053 = vpop.xlane.xlu0 %1052
    %v1054 = vrcp.pop %v1053
    %v1055 = vmul.f32 %v1050, %v1054
    %1056 = vrot.lane.b32.xlu0 %v270, 64
    %v1057 = vpop.permute.xlu0 %1056
    %v1060 = vsel %vm276, %v1055, 0
    %1062 = vmatprep.subr.mxu0 0.0
    %1063 = vmatpush1.msra.mxu0 0.0
    %1064 = vmatprep.subr.mxu0 0.0
    %1065 = vmatpush1.msra.mxu0 0.0
    %1066 = vmatprep.subr.mxu0 0.0
    %1067 = vmatpush1.msra.mxu0 0.0
    %1068 = vmatprep.subr.mxu0 0.0
    %1069 = vmatpush1.msra.mxu0 0.0
    %1070 = vmatprep.subr.mxu0 0.0
    %1071 = vmatpush1.msra.mxu0 0.0
    %1072 = vmatprep.subr.mxu0 0.0
    %1073 = vmatpush1.msra.mxu0 0.0
    %1074 = vmatprep.subr.mxu0 0.0
    %1075 = vmatpush1.msra.mxu0 0.0
    %1076 = vmatprep.subr.mxu0 0.0
    %1077 = vmatpush1.msra.mxu0 0.0
    %1078 = vmatprep.subr.mxu0 0.0
    %1079 = vmatpush1.msra.mxu0 0.0
    %1080 = vmatprep.subr.mxu0 0.0
    %1081 = vmatpush1.msra.mxu0 0.0
    %1082 = vmatprep.subr.mxu0 0.0
    %1083 = vmatpush1.msra.mxu0 0.0
    %1084 = vmatprep.subr.mxu0 0.0
    %1085 = vmatpush1.msra.mxu0 0.0
    %1086 = vmatprep.subr.mxu0 0.0
    %1087 = vmatpush1.msra.mxu0 0.0
    %1088 = vmatprep.subr.mxu0 0.0
    %1089 = vmatpush1.msra.mxu0 0.0
    %1090 = vmatprep.subr.mxu0 0.0
    %1091 = vmatpush1.msra.mxu0 0.0
    %1092 = vmatprep.subr.mxu0 0.0
    %1093 = vmatpush1.msra.mxu0 %v1057
    %1094 = vmatprep.subr.mxu0 0.0
    %1095 = vmatpush2.msra.mxu0 0.0
    %1096 = vmatprep.subr.mxu0 0.0
    %1097 = vmatpush2.msra.mxu0 0.0
    %1098 = vmatprep.subr.mxu0 0.0
    %1099 = vmatpush2.msra.mxu0 0.0
    %1100 = vmatprep.subr.mxu0 0.0
    %1101 = vmatpush2.msra.mxu0 0.0
    %1102 = vmatprep.subr.mxu0 0.0
    %1103 = vmatpush2.msra.mxu0 0.0
    %1104 = vmatprep.subr.mxu0 0.0
    %1105 = vmatpush2.msra.mxu0 0.0
    %1106 = vmatprep.subr.mxu0 0.0
    %1107 = vmatpush2.msra.mxu0 0.0
    %1108 = vmatprep.subr.mxu0 0.0
    %1109 = vmatpush2.msra.mxu0 0.0
    %1110 = vmatprep.subr.mxu0 0.0
    %1111 = vmatpush2.msra.mxu0 0.0
    %1112 = vmatprep.subr.mxu0 0.0
    %1113 = vmatpush2.msra.mxu0 0.0
    %1114 = vmatprep.subr.mxu0 0.0
    %1115 = vmatpush2.msra.mxu0 0.0
    %1116 = vmatprep.subr.mxu0 0.0
    %1117 = vmatpush2.msra.mxu0 0.0
    %1118 = vmatprep.subr.mxu0 0.0
    %1119 = vmatpush2.msra.mxu0 0.0
    %1120 = vmatprep.subr.mxu0 0.0
    %1121 = vmatpush2.msra.mxu0 0.0
    %1122 = vmatprep.subr.mxu0 0.0
    %1123 = vmatpush2.msra.mxu0 0.0
    %1124 = vmatprep.subr.mxu0 0.0
    %1125 = vmatpush2.msra.mxu0 0.0
    %1126 = vmatprep.mubr.f32.mxu0 0.0
    %1127 = vmatmul.mubr.f32.gmra.mxu0 %v1060
    %v1128 = vpop.f32.mrf.mxu0
    %v1129 = vadd.f32 0.0, %v1128
    %v1130 = vpop.f32.mrf.mxu0
    %1131 = vdwg.mxu0
    %1132 = vrot.lane.b32.xlu0 %v270, 120
    %v1133 = vpop.permute.xlu0 %1132
    %1134 = vrot.lane.b32.xlu0 %v270, 88
    %v1135 = vpop.permute.xlu0 %1134
    %v1136 = vsel %vm276, %v1133, 0
    %v1138 = vsel %vm276, %v1135, 0
    %1140 = vmatprep.subr.mxu0 0.0
    %1141 = vmatpush1.xpose.msra.mxu0 0.0
    %1142 = vmatprep.subr.mxu0 0.0
    %1143 = vmatpush1.xpose.msra.mxu0 0.0
    %1144 = vmatprep.subr.mxu0 0.0
    %1145 = vmatpush1.xpose.msra.mxu0 0.0
    %1146 = vmatprep.subr.mxu0 0.0
    %1147 = vmatpush1.xpose.msra.mxu0 0.0
    %1148 = vmatprep.subr.mxu0 0.0
    %1149 = vmatpush1.xpose.msra.mxu0 0.0
    %1150 = vmatprep.subr.mxu0 0.0
    %1151 = vmatpush1.xpose.msra.mxu0 0.0
    %1152 = vmatprep.subr.mxu0 0.0
    %1153 = vmatpush1.xpose.msra.mxu0 0.0
    %1154 = vmatprep.subr.mxu0 0.0
    %1155 = vmatpush1.xpose.msra.mxu0 0.0
    %1156 = vmatprep.subr.mxu0 0.0
    %1157 = vmatpush1.xpose.msra.mxu0 0.0
    %1158 = vmatprep.subr.mxu0 0.0
    %1159 = vmatpush1.xpose.msra.mxu0 0.0
    %1160 = vmatprep.subr.mxu0 0.0
    %1161 = vmatpush1.xpose.msra.mxu0 0.0
    %1162 = vmatprep.subr.mxu0 0.0
    %1163 = vmatpush1.xpose.msra.mxu0 0.0
    %1164 = vmatprep.subr.mxu0 0.0
    %1165 = vmatpush1.xpose.msra.mxu0 0.0
    %1166 = vmatprep.subr.mxu0 0.0
    %1167 = vmatpush1.xpose.msra.mxu0 0.0
    %1168 = vmatprep.subr.mxu0 0.0
    %1169 = vmatpush1.xpose.msra.mxu0 0.0
    %1170 = vmatprep.subr.mxu0 0.0
    %1171 = vmatpush1.xpose.msra.mxu0 %v1138
    %1172 = vmatprep.subr.mxu0 0.0
    %1173 = vmatpush2.xpose.msra.mxu0 0.0
    %1174 = vmatprep.subr.mxu0 0.0
    %1175 = vmatpush2.xpose.msra.mxu0 0.0
    %1176 = vmatprep.subr.mxu0 0.0
    %1177 = vmatpush2.xpose.msra.mxu0 0.0
    %1178 = vmatprep.subr.mxu0 0.0
    %1179 = vmatpush2.xpose.msra.mxu0 0.0
    %1180 = vmatprep.subr.mxu0 0.0
    %1181 = vmatpush2.xpose.msra.mxu0 0.0
    %1182 = vmatprep.subr.mxu0 0.0
    %1183 = vmatpush2.xpose.msra.mxu0 0.0
    %1184 = vmatprep.subr.mxu0 0.0
    %1185 = vmatpush2.xpose.msra.mxu0 0.0
    %1186 = vmatprep.subr.mxu0 0.0
    %1187 = vmatpush2.xpose.msra.mxu0 0.0
    %1188 = vmatprep.subr.mxu0 0.0
    %1189 = vmatpush2.xpose.msra.mxu0 0.0
    %1190 = vmatprep.subr.mxu0 0.0
    %1191 = vmatpush2.xpose.msra.mxu0 0.0
    %1192 = vmatprep.subr.mxu0 0.0
    %1193 = vmatpush2.xpose.msra.mxu0 0.0
    %1194 = vmatprep.subr.mxu0 0.0
    %1195 = vmatpush2.xpose.msra.mxu0 0.0
    %1196 = vmatprep.subr.mxu0 0.0
    %1197 = vmatpush2.xpose.msra.mxu0 0.0
    %1198 = vmatprep.subr.mxu0 0.0
    %1199 = vmatpush2.xpose.msra.mxu0 0.0
    %1200 = vmatprep.subr.mxu0 0.0
    %1201 = vmatpush2.xpose.msra.mxu0 0.0
    %1202 = vmatprep.subr.mxu0 0.0
    %1203 = vmatpush2.xpose.msra.mxu0 0.0
    %1204 = vmatprep.mubr.f32.mxu0 0.0
    %1205 = vmatmul.mubr.f32.gmra.mxu0 %v1136
    %v1206 = vpop.f32.mrf.mxu0
    %v1207 = vadd.f32 0.0, %v1206
    %v1208 = vpop.f32.mrf.mxu0
    %1209 = vdwg.mxu0
    %v1210 = vmul.f32 %v1207, 0.35355338
    %v1211 = vadd.f32 %v1210, %v1043
    %v1212 = vsel %vm276, %v1211, -inf
    %1213 = vmax.xlane.f32.xlu0 %v1212
    %v1214 = vpop.xlane.xlu0 %1213
    %v1215 = vsub.f32 %v1211, %v1214
    %v1216 = vmul.f32 %v1215, 1.442695
    %v1217 = vpow.pop %v1216
    %v1218 = vsel %vm276, %v1217, 0.0
    %1219 = vadd.xlane.f32.xlu0 %v1218
    %v1220 = vpop.xlane.xlu0 %1219
    %v1221 = vrcp.pop %v1220
    %v1222 = vmul.f32 %v1217, %v1221
    %1223 = vrot.lane.b32.xlu0 %v270, 56
    %v1224 = vpop.permute.xlu0 %1223
    %v1227 = vsel %vm276, %v1222, 0
    %1229 = vmatprep.subr.mxu0 0.0
    %1230 = vmatpush1.msra.mxu0 0.0
    %1231 = vmatprep.subr.mxu0 0.0
    %1232 = vmatpush1.msra.mxu0 0.0
    %1233 = vmatprep.subr.mxu0 0.0
    %1234 = vmatpush1.msra.mxu0 0.0
    %1235 = vmatprep.subr.mxu0 0.0
    %1236 = vmatpush1.msra.mxu0 0.0
    %1237 = vmatprep.subr.mxu0 0.0
    %1238 = vmatpush1.msra.mxu0 0.0
    %1239 = vmatprep.subr.mxu0 0.0
    %1240 = vmatpush1.msra.mxu0 0.0
    %1241 = vmatprep.subr.mxu0 0.0
    %1242 = vmatpush1.msra.mxu0 0.0
    %1243 = vmatprep.subr.mxu0 0.0
    %1244 = vmatpush1.msra.mxu0 0.0
    %1245 = vmatprep.subr.mxu0 0.0
    %1246 = vmatpush1.msra.mxu0 0.0
    %1247 = vmatprep.subr.mxu0 0.0
    %1248 = vmatpush1.msra.mxu0 0.0
    %1249 = vmatprep.subr.mxu0 0.0
    %1250 = vmatpush1.msra.mxu0 0.0
    %1251 = vmatprep.subr.mxu0 0.0
    %1252 = vmatpush1.msra.mxu0 0.0
    %1253 = vmatprep.subr.mxu0 0.0
    %1254 = vmatpush1.msra.mxu0 0.0
    %1255 = vmatprep.subr.mxu0 0.0
    %1256 = vmatpush1.msra.mxu0 0.0
    %1257 = vmatprep.subr.mxu0 0.0
    %1258 = vmatpush1.msra.mxu0 0.0
    %1259 = vmatprep.subr.mxu0 0.0
    %1260 = vmatpush1.msra.mxu0 %v1224
    %1261 = vmatprep.subr.mxu0 0.0
    %1262 = vmatpush2.msra.mxu0 0.0
    %1263 = vmatprep.subr.mxu0 0.0
    %1264 = vmatpush2.msra.mxu0 0.0
    %1265 = vmatprep.subr.mxu0 0.0
    %1266 = vmatpush2.msra.mxu0 0.0
    %1267 = vmatprep.subr.mxu0 0.0
    %1268 = vmatpush2.msra.mxu0 0.0
    %1269 = vmatprep.subr.mxu0 0.0
    %1270 = vmatpush2.msra.mxu0 0.0
    %1271 = vmatprep.subr.mxu0 0.0
    %1272 = vmatpush2.msra.mxu0 0.0
    %1273 = vmatprep.subr.mxu0 0.0
    %1274 = vmatpush2.msra.mxu0 0.0
    %1275 = vmatprep.subr.mxu0 0.0
    %1276 = vmatpush2.msra.mxu0 0.0
    %1277 = vmatprep.subr.mxu0 0.0
    %1278 = vmatpush2.msra.mxu0 0.0
    %1279 = vmatprep.subr.mxu0 0.0
    %1280 = vmatpush2.msra.mxu0 0.0
    %1281 = vmatprep.subr.mxu0 0.0
    %1282 = vmatpush2.msra.mxu0 0.0
    %1283 = vmatprep.subr.mxu0 0.0
    %1284 = vmatpush2.msra.mxu0 0.0
    %1285 = vmatprep.subr.mxu0 0.0
    %1286 = vmatpush2.msra.mxu0 0.0
    %1287 = vmatprep.subr.mxu0 0.0
    %1288 = vmatpush2.msra.mxu0 0.0
    %1289 = vmatprep.subr.mxu0 0.0
    %1290 = vmatpush2.msra.mxu0 0.0
    %1291 = vmatprep.subr.mxu0 0.0
    %1292 = vmatpush2.msra.mxu0 0.0
    %1293 = vmatprep.mubr.f32.mxu0 0.0
    %1294 = vmatmul.mubr.f32.gmra.mxu0 %v1227
    %v1295 = vpop.f32.mrf.mxu0
    %v1296 = vadd.f32 0.0, %v1295
    %v1297 = vpop.f32.mrf.mxu0
    %1298 = vdwg.mxu0
    %1299 = vrot.lane.b32.xlu0 %v270, 112
    %v1300 = vpop.permute.xlu0 %1299
    %1301 = vrot.lane.b32.xlu0 %v270, 80
    %v1302 = vpop.permute.xlu0 %1301
    %v1303 = vsel %vm276, %v1300, 0
    %v1305 = vsel %vm276, %v1302, 0
    %1307 = vmatprep.subr.mxu0 0.0
    %1308 = vmatpush1.xpose.msra.mxu0 0.0
    %1309 = vmatprep.subr.mxu0 0.0
    %1310 = vmatpush1.xpose.msra.mxu0 0.0
    %1311 = vmatprep.subr.mxu0 0.0
    %1312 = vmatpush1.xpose.msra.mxu0 0.0
    %1313 = vmatprep.subr.mxu0 0.0
    %1314 = vmatpush1.xpose.msra.mxu0 0.0
    %1315 = vmatprep.subr.mxu0 0.0
    %1316 = vmatpush1.xpose.msra.mxu0 0.0
    %1317 = vmatprep.subr.mxu0 0.0
    %1318 = vmatpush1.xpose.msra.mxu0 0.0
    %1319 = vmatprep.subr.mxu0 0.0
    %1320 = vmatpush1.xpose.msra.mxu0 0.0
    %1321 = vmatprep.subr.mxu0 0.0
    %1322 = vmatpush1.xpose.msra.mxu0 0.0
    %1323 = vmatprep.subr.mxu0 0.0
    %1324 = vmatpush1.xpose.msra.mxu0 0.0
    %1325 = vmatprep.subr.mxu0 0.0
    %1326 = vmatpush1.xpose.msra.mxu0 0.0
    %1327 = vmatprep.subr.mxu0 0.0
    %1328 = vmatpush1.xpose.msra.mxu0 0.0
    %1329 = vmatprep.subr.mxu0 0.0
    %1330 = vmatpush1.xpose.msra.mxu0 0.0
    %1331 = vmatprep.subr.mxu0 0.0
    %1332 = vmatpush1.xpose.msra.mxu0 0.0
    %1333 = vmatprep.subr.mxu0 0.0
    %1334 = vmatpush1.xpose.msra.mxu0 0.0
    %1335 = vmatprep.subr.mxu0 0.0
    %1336 = vmatpush1.xpose.msra.mxu0 0.0
    %1337 = vmatprep.subr.mxu0 0.0
    %1338 = vmatpush1.xpose.msra.mxu0 %v1305
    %1339 = vmatprep.subr.mxu0 0.0
    %1340 = vmatpush2.xpose.msra.mxu0 0.0
    %1341 = vmatprep.subr.mxu0 0.0
    %1342 = vmatpush2.xpose.msra.mxu0 0.0
    %1343 = vmatprep.subr.mxu0 0.0
    %1344 = vmatpush2.xpose.msra.mxu0 0.0
    %1345 = vmatprep.subr.mxu0 0.0
    %1346 = vmatpush2.xpose.msra.mxu0 0.0
    %1347 = vmatprep.subr.mxu0 0.0
    %1348 = vmatpush2.xpose.msra.mxu0 0.0
    %1349 = vmatprep.subr.mxu0 0.0
    %1350 = vmatpush2.xpose.msra.mxu0 0.0
    %1351 = vmatprep.subr.mxu0 0.0
    %1352 = vmatpush2.xpose.msra.mxu0 0.0
    %1353 = vmatprep.subr.mxu0 0.0
    %1354 = vmatpush2.xpose.msra.mxu0 0.0
    %1355 = vmatprep.subr.mxu0 0.0
    %1356 = vmatpush2.xpose.msra.mxu0 0.0
    %1357 = vmatprep.subr.mxu0 0.0
    %1358 = vmatpush2.xpose.msra.mxu0 0.0
    %1359 = vmatprep.subr.mxu0 0.0
    %1360 = vmatpush2.xpose.msra.mxu0 0.0
    %1361 = vmatprep.subr.mxu0 0.0
    %1362 = vmatpush2.xpose.msra.mxu0 0.0
    %1363 = vmatprep.subr.mxu0 0.0
    %1364 = vmatpush2.xpose.msra.mxu0 0.0
    %1365 = vmatprep.subr.mxu0 0.0
    %1366 = vmatpush2.xpose.msra.mxu0 0.0
    %1367 = vmatprep.subr.mxu0 0.0
    %1368 = vmatpush2.xpose.msra.mxu0 0.0
    %1369 = vmatprep.subr.mxu0 0.0
    %1370 = vmatpush2.xpose.msra.mxu0 0.0
    %1371 = vmatprep.mubr.f32.mxu0 0.0
    %1372 = vmatmul.mubr.f32.gmra.mxu0 %v1303
    %v1373 = vpop.f32.mrf.mxu0
    %v1374 = vadd.f32 0.0, %v1373
    %v1375 = vpop.f32.mrf.mxu0
    %1376 = vdwg.mxu0
    %v1377 = vmul.f32 %v1374, 0.35355338
    %v1378 = vadd.f32 %v1377, %v1043
    %v1379 = vsel %vm276, %v1378, -inf
    %1380 = vmax.xlane.f32.xlu0 %v1379
    %v1381 = vpop.xlane.xlu0 %1380
    %v1382 = vsub.f32 %v1378, %v1381
    %v1383 = vmul.f32 %v1382, 1.442695
    %v1384 = vpow.pop %v1383
    %v1385 = vsel %vm276, %v1384, 0.0
    %1386 = vadd.xlane.f32.xlu0 %v1385
    %v1387 = vpop.xlane.xlu0 %1386
    %v1388 = vrcp.pop %v1387
    %v1389 = vmul.f32 %v1384, %v1388
    %1390 = vrot.lane.b32.xlu0 %v270, 48
    %v1391 = vpop.permute.xlu0 %1390
    %v1394 = vsel %vm276, %v1389, 0
    %1396 = vmatprep.subr.mxu0 0.0
    %1397 = vmatpush1.msra.mxu0 0.0
    %1398 = vmatprep.subr.mxu0 0.0
    %1399 = vmatpush1.msra.mxu0 0.0
    %1400 = vmatprep.subr.mxu0 0.0
    %1401 = vmatpush1.msra.mxu0 0.0
    %1402 = vmatprep.subr.mxu0 0.0
    %1403 = vmatpush1.msra.mxu0 0.0
    %1404 = vmatprep.subr.mxu0 0.0
    %1405 = vmatpush1.msra.mxu0 0.0
    %1406 = vmatprep.subr.mxu0 0.0
    %1407 = vmatpush1.msra.mxu0 0.0
    %1408 = vmatprep.subr.mxu0 0.0
    %1409 = vmatpush1.msra.mxu0 0.0
    %1410 = vmatprep.subr.mxu0 0.0
    %1411 = vmatpush1.msra.mxu0 0.0
    %1412 = vmatprep.subr.mxu0 0.0
    %1413 = vmatpush1.msra.mxu0 0.0
    %1414 = vmatprep.subr.mxu0 0.0
    %1415 = vmatpush1.msra.mxu0 0.0
    %1416 = vmatprep.subr.mxu0 0.0
    %1417 = vmatpush1.msra.mxu0 0.0
    %1418 = vmatprep.subr.mxu0 0.0
    %1419 = vmatpush1.msra.mxu0 0.0
    %1420 = vmatprep.subr.mxu0 0.0
    %1421 = vmatpush1.msra.mxu0 0.0
    %1422 = vmatprep.subr.mxu0 0.0
    %1423 = vmatpush1.msra.mxu0 0.0
    %1424 = vmatprep.subr.mxu0 0.0
    %1425 = vmatpush1.msra.mxu0 0.0
    %1426 = vmatprep.subr.mxu0 0.0
    %1427 = vmatpush1.msra.mxu0 %v1391
    %1428 = vmatprep.subr.mxu0 0.0
    %1429 = vmatpush2.msra.mxu0 0.0
    %1430 = vmatprep.subr.mxu0 0.0
    %1431 = vmatpush2.msra.mxu0 0.0
    %1432 = vmatprep.subr.mxu0 0.0
    %1433 = vmatpush2.msra.mxu0 0.0
    %1434 = vmatprep.subr.mxu0 0.0
    %1435 = vmatpush2.msra.mxu0 0.0
    %1436 = vmatprep.subr.mxu0 0.0
    %1437 = vmatpush2.msra.mxu0 0.0
    %1438 = vmatprep.subr.mxu0 0.0
    %1439 = vmatpush2.msra.mxu0 0.0
    %1440 = vmatprep.subr.mxu0 0.0
    %1441 = vmatpush2.msra.mxu0 0.0
    %1442 = vmatprep.subr.mxu0 0.0
    %1443 = vmatpush2.msra.mxu0 0.0
    %1444 = vmatprep.subr.mxu0 0.0
    %1445 = vmatpush2.msra.mxu0 0.0
    %1446 = vmatprep.subr.mxu0 0.0
    %1447 = vmatpush2.msra.mxu0 0.0
    %1448 = vmatprep.subr.mxu0 0.0
    %1449 = vmatpush2.msra.mxu0 0.0
    %1450 = vmatprep.subr.mxu0 0.0
    %1451 = vmatpush2.msra.mxu0 0.0
    %1452 = vmatprep.subr.mxu0 0.0
    %1453 = vmatpush2.msra.mxu0 0.0
    %1454 = vmatprep.subr.mxu0 0.0
    %1455 = vmatpush2.msra.mxu0 0.0
    %1456 = vmatprep.subr.mxu0 0.0
    %1457 = vmatpush2.msra.mxu0 0.0
    %1458 = vmatprep.subr.mxu0 0.0
    %1459 = vmatpush2.msra.mxu0 0.0
    %1460 = vmatprep.mubr.f32.mxu0 0.0
    %1461 = vmatmul.mubr.f32.gmra.mxu0 %v1394
    %v1462 = vpop.f32.mrf.mxu0
    %v1463 = vadd.f32 0.0, %v1462
    %v1464 = vpop.f32.mrf.mxu0
    %1465 = vdwg.mxu0
    %1466 = vrot.lane.b32.xlu0 %v270, 104
    %v1467 = vpop.permute.xlu0 %1466
    %1468 = vrot.lane.b32.xlu0 %v270, 72
    %v1469 = vpop.permute.xlu0 %1468
    %v1470 = vsel %vm276, %v1467, 0
    %v1472 = vsel %vm276, %v1469, 0
    %1474 = vmatprep.subr.mxu0 0.0
    %1475 = vmatpush1.xpose.msra.mxu0 0.0
    %1476 = vmatprep.subr.mxu0 0.0
    %1477 = vmatpush1.xpose.msra.mxu0 0.0
    %1478 = vmatprep.subr.mxu0 0.0
    %1479 = vmatpush1.xpose.msra.mxu0 0.0
    %1480 = vmatprep.subr.mxu0 0.0
    %1481 = vmatpush1.xpose.msra.mxu0 0.0
    %1482 = vmatprep.subr.mxu0 0.0
    %1483 = vmatpush1.xpose.msra.mxu0 0.0
    %1484 = vmatprep.subr.mxu0 0.0
    %1485 = vmatpush1.xpose.msra.mxu0 0.0
    %1486 = vmatprep.subr.mxu0 0.0
    %1487 = vmatpush1.xpose.msra.mxu0 0.0
    %1488 = vmatprep.subr.mxu0 0.0
    %1489 = vmatpush1.xpose.msra.mxu0 0.0
    %1490 = vmatprep.subr.mxu0 0.0
    %1491 = vmatpush1.xpose.msra.mxu0 0.0
    %1492 = vmatprep.subr.mxu0 0.0
    %1493 = vmatpush1.xpose.msra.mxu0 0.0
    %1494 = vmatprep.subr.mxu0 0.0
    %1495 = vmatpush1.xpose.msra.mxu0 0.0
    %1496 = vmatprep.subr.mxu0 0.0
    %1497 = vmatpush1.xpose.msra.mxu0 0.0
    %1498 = vmatprep.subr.mxu0 0.0
    %1499 = vmatpush1.xpose.msra.mxu0 0.0
    %1500 = vmatprep.subr.mxu0 0.0
    %1501 = vmatpush1.xpose.msra.mxu0 0.0
    %1502 = vmatprep.subr.mxu0 0.0
    %1503 = vmatpush1.xpose.msra.mxu0 0.0
    %1504 = vmatprep.subr.mxu0 0.0
    %1505 = vmatpush1.xpose.msra.mxu0 %v1472
    %1506 = vmatprep.subr.mxu0 0.0
    %1507 = vmatpush2.xpose.msra.mxu0 0.0
    %1508 = vmatprep.subr.mxu0 0.0
    %1509 = vmatpush2.xpose.msra.mxu0 0.0
    %1510 = vmatprep.subr.mxu0 0.0
    %1511 = vmatpush2.xpose.msra.mxu0 0.0
    %1512 = vmatprep.subr.mxu0 0.0
    %1513 = vmatpush2.xpose.msra.mxu0 0.0
    %1514 = vmatprep.subr.mxu0 0.0
    %1515 = vmatpush2.xpose.msra.mxu0 0.0
    %1516 = vmatprep.subr.mxu0 0.0
    %1517 = vmatpush2.xpose.msra.mxu0 0.0
    %1518 = vmatprep.subr.mxu0 0.0
    %1519 = vmatpush2.xpose.msra.mxu0 0.0
    %1520 = vmatprep.subr.mxu0 0.0
    %1521 = vmatpush2.xpose.msra.mxu0 0.0
    %1522 = vmatprep.subr.mxu0 0.0
    %1523 = vmatpush2.xpose.msra.mxu0 0.0
    %1524 = vmatprep.subr.mxu0 0.0
    %1525 = vmatpush2.xpose.msra.mxu0 0.0
    %1526 = vmatprep.subr.mxu0 0.0
    %1527 = vmatpush2.xpose.msra.mxu0 0.0
    %1528 = vmatprep.subr.mxu0 0.0
    %1529 = vmatpush2.xpose.msra.mxu0 0.0
    %1530 = vmatprep.subr.mxu0 0.0
    %1531 = vmatpush2.xpose.msra.mxu0 0.0
    %1532 = vmatprep.subr.mxu0 0.0
    %1533 = vmatpush2.xpose.msra.mxu0 0.0
    %1534 = vmatprep.subr.mxu0 0.0
    %1535 = vmatpush2.xpose.msra.mxu0 0.0
    %1536 = vmatprep.subr.mxu0 0.0
    %1537 = vmatpush2.xpose.msra.mxu0 0.0
    %1538 = vmatprep.mubr.f32.mxu0 0.0
    %1539 = vmatmul.mubr.f32.gmra.mxu0 %v1470
    %v1540 = vpop.f32.mrf.mxu0
    %v1541 = vadd.f32 0.0, %v1540
    %v1542 = vpop.f32.mrf.mxu0
    %1543 = vdwg.mxu0
    %v1544 = vmul.f32 %v1541, 0.35355338
    %v1545 = vadd.f32 %v1544, %v1043
    %v1546 = vsel %vm276, %v1545, -inf
    %1547 = vmax.xlane.f32.xlu0 %v1546
    %v1548 = vpop.xlane.xlu0 %1547
    %v1549 = vsub.f32 %v1545, %v1548
    %v1550 = vmul.f32 %v1549, 1.442695
    %v1551 = vpow.pop %v1550
    %v1552 = vsel %vm276, %v1551, 0.0
    %1553 = vadd.xlane.f32.xlu0 %v1552
    %v1554 = vpop.xlane.xlu0 %1553
    %v1555 = vrcp.pop %v1554
    %v1556 = vmul.f32 %v1551, %v1555
    %1557 = vrot.lane.b32.xlu0 %v270, 40
    %v1558 = vpop.permute.xlu0 %1557
    %v1561 = vsel %vm276, %v1556, 0
    %1563 = vmatprep.subr.mxu0 0.0
    %1564 = vmatpush1.msra.mxu0 0.0
    %1565 = vmatprep.subr.mxu0 0.0
    %1566 = vmatpush1.msra.mxu0 0.0
    %1567 = vmatprep.subr.mxu0 0.0
    %1568 = vmatpush1.msra.mxu0 0.0
    %1569 = vmatprep.subr.mxu0 0.0
    %1570 = vmatpush1.msra.mxu0 0.0
    %1571 = vmatprep.subr.mxu0 0.0
    %1572 = vmatpush1.msra.mxu0 0.0
    %1573 = vmatprep.subr.mxu0 0.0
    %1574 = vmatpush1.msra.mxu0 0.0
    %1575 = vmatprep.subr.mxu0 0.0
    %1576 = vmatpush1.msra.mxu0 0.0
    %1577 = vmatprep.subr.mxu0 0.0
    %1578 = vmatpush1.msra.mxu0 0.0
    %1579 = vmatprep.subr.mxu0 0.0
    %1580 = vmatpush1.msra.mxu0 0.0
    %1581 = vmatprep.subr.mxu0 0.0
    %1582 = vmatpush1.msra.mxu0 0.0
    %1583 = vmatprep.subr.mxu0 0.0
    %1584 = vmatpush1.msra.mxu0 0.0
    %1585 = vmatprep.subr.mxu0 0.0
    %1586 = vmatpush1.msra.mxu0 0.0
    %1587 = vmatprep.subr.mxu0 0.0
    %1588 = vmatpush1.msra.mxu0 0.0
    %1589 = vmatprep.subr.mxu0 0.0
    %1590 = vmatpush1.msra.mxu0 0.0
    %1591 = vmatprep.subr.mxu0 0.0
    %1592 = vmatpush1.msra.mxu0 0.0
    %1593 = vmatprep.subr.mxu0 0.0
    %1594 = vmatpush1.msra.mxu0 %v1558
    %1595 = vmatprep.subr.mxu0 0.0
    %1596 = vmatpush2.msra.mxu0 0.0
    %1597 = vmatprep.subr.mxu0 0.0
    %1598 = vmatpush2.msra.mxu0 0.0
    %1599 = vmatprep.subr.mxu0 0.0
    %1600 = vmatpush2.msra.mxu0 0.0
    %1601 = vmatprep.subr.mxu0 0.0
    %1602 = vmatpush2.msra.mxu0 0.0
    %1603 = vmatprep.subr.mxu0 0.0
    %1604 = vmatpush2.msra.mxu0 0.0
    %1605 = vmatprep.subr.mxu0 0.0
    %1606 = vmatpush2.msra.mxu0 0.0
    %1607 = vmatprep.subr.mxu0 0.0
    %1608 = vmatpush2.msra.mxu0 0.0
    %1609 = vmatprep.subr.mxu0 0.0
    %1610 = vmatpush2.msra.mxu0 0.0
    %1611 = vmatprep.subr.mxu0 0.0
    %1612 = vmatpush2.msra.mxu0 0.0
    %1613 = vmatprep.subr.mxu0 0.0
    %1614 = vmatpush2.msra.mxu0 0.0
    %1615 = vmatprep.subr.mxu0 0.0
    %1616 = vmatpush2.msra.mxu0 0.0
    %1617 = vmatprep.subr.mxu0 0.0
    %1618 = vmatpush2.msra.mxu0 0.0
    %1619 = vmatprep.subr.mxu0 0.0
    %1620 = vmatpush2.msra.mxu0 0.0
    %1621 = vmatprep.subr.mxu0 0.0
    %1622 = vmatpush2.msra.mxu0 0.0
    %1623 = vmatprep.subr.mxu0 0.0
    %1624 = vmatpush2.msra.mxu0 0.0
    %1625 = vmatprep.subr.mxu0 0.0
    %1626 = vmatpush2.msra.mxu0 0.0
    %1627 = vmatprep.mubr.f32.mxu0 0.0
    %1628 = vmatmul.mubr.f32.gmra.mxu0 %v1561
    %v1629 = vpop.f32.mrf.mxu0
    %v1630 = vadd.f32 0.0, %v1629
    %v1631 = vpop.f32.mrf.mxu0
    %1632 = vdwg.mxu0
    %1634 = vrot.lane.b32.xlu0 %v1296, 8
    %v1635 = vpop.permute.xlu0 %1634
    %1638 = vrot.lane.b32.xlu0 %v1463, 16
    %v1639 = vpop.permute.xlu0 %1638
    %1642 = vrot.lane.b32.xlu0 %v1630, 24
    %v1643 = vpop.permute.xlu0 %1642
    %v1645 = vsel %vm276, %v1129, %v1635
    %v1646 = vsel %vm958, %v1645, %v1639
    %v1647 = vsel %vm960, %v1646, %v1643
    %v1648 = vld [vmem:[%s6] sm:$0xff]
    %v1649 = vld [vmem:[%s6 + $0x8] sm:$0xff]
    %v1650 = vld [vmem:[%s6 + $0x10] sm:$0xff]
    %v1651 = vld [vmem:[%s6 + $0x18] sm:$0xff]
    %v1652 = vld [vmem:[%s7] sm:$0x1]
    %v1654 = vlaneseq
    %v1655 = vshrl.u32 %v1654, 7
    %v1656 = vsub.s32 0, %v1655
    %v1657 = vrot.slane %v1652, %v1656
    %v1660 = vsel %vm191, %v961, 0
    %v1663 = vsel %vm191, %v1647, 0
    %1665 = vmatprep.subr.mxu0 0.0
    %1666 = vmatpush1.msra.mxu0 0.0
    %1667 = vmatprep.subr.mxu0 0.0
    %1668 = vmatpush1.msra.mxu0 0.0
    %1669 = vmatprep.subr.mxu0 0.0
    %1670 = vmatpush1.msra.mxu0 0.0
    %1671 = vmatprep.subr.mxu0 0.0
    %1672 = vmatpush1.msra.mxu0 0.0
    %1673 = vmatprep.subr.mxu0 0.0
    %1674 = vmatpush1.msra.mxu0 0.0
    %1675 = vmatprep.subr.mxu0 0.0
    %1676 = vmatpush1.msra.mxu0 0.0
    %1677 = vmatprep.subr.mxu0 0.0
    %1678 = vmatpush1.msra.mxu0 0.0
    %1679 = vmatprep.subr.mxu0 0.0
    %1680 = vmatpush1.msra.mxu0 0.0
    %1681 = vmatprep.subr.mxu0 0.0
    %1682 = vmatpush1.msra.mxu0 0.0
    %1683 = vmatprep.subr.mxu0 0.0
    %1684 = vmatpush1.msra.mxu0 0.0
    %1685 = vmatprep.subr.mxu0 0.0
    %1686 = vmatpush1.msra.mxu0 0.0
    %1687 = vmatprep.subr.mxu0 0.0
    %1688 = vmatpush1.msra.mxu0 0.0
    %1689 = vmatprep.subr.mxu0 0.0
    %1690 = vmatpush1.msra.mxu0 %v1651
    %1691 = vmatprep.subr.mxu0 0.0
    %1692 = vmatpush1.msra.mxu0 %v1650
    %1693 = vmatprep.subr.mxu0 0.0
    %1694 = vmatpush1.msra.mxu0 %v1649
    %1695 = vmatprep.subr.mxu0 0.0
    %1696 = vmatpush1.msra.mxu0 %v1648
    %1697 = vmatprep.subr.mxu0 0.0
    %1698 = vmatpush2.msra.mxu0 0.0
    %1699 = vmatprep.subr.mxu0 0.0
    %1700 = vmatpush2.msra.mxu0 0.0
    %1701 = vmatprep.subr.mxu0 0.0
    %1702 = vmatpush2.msra.mxu0 0.0
    %1703 = vmatprep.subr.mxu0 0.0
    %1704 = vmatpush2.msra.mxu0 0.0
    %1705 = vmatprep.subr.mxu0 0.0
    %1706 = vmatpush2.msra.mxu0 0.0
    %1707 = vmatprep.subr.mxu0 0.0
    %1708 = vmatpush2.msra.mxu0 0.0
    %1709 = vmatprep.subr.mxu0 0.0
    %1710 = vmatpush2.msra.mxu0 0.0
    %1711 = vmatprep.subr.mxu0 0.0
    %1712 = vmatpush2.msra.mxu0 0.0
    %1713 = vmatprep.subr.mxu0 0.0
    %1714 = vmatpush2.msra.mxu0 0.0
    %1715 = vmatprep.subr.mxu0 0.0
    %1716 = vmatpush2.msra.mxu0 0.0
    %1717 = vmatprep.subr.mxu0 0.0
    %1718 = vmatpush2.msra.mxu0 0.0
    %1719 = vmatprep.subr.mxu0 0.0
    %1720 = vmatpush2.msra.mxu0 0.0
    %1721 = vmatprep.subr.mxu0 0.0
    %1722 = vmatpush2.msra.mxu0 0.0
    %1723 = vmatprep.subr.mxu0 0.0
    %1724 = vmatpush2.msra.mxu0 0.0
    %1725 = vmatprep.subr.mxu0 0.0
    %1726 = vmatpush2.msra.mxu0 0.0
    %1727 = vmatprep.subr.mxu0 0.0
    %1728 = vmatpush2.msra.mxu0 0.0
    %1729 = vmatprep.mubr.f32.mxu0 0.0
    %1730 = vmatmul.mubr.f32.gmra.mxu0 %v1660
    %v1731 = vpop.f32.mrf.mxu0
    %v1732 = vadd.f32 %v1657, %v1731
    %v1733 = vpop.f32.mrf.mxu0
    %1734 = vmatprep.mubr.f32.mxu0 0.0
    %1735 = vmatmul.mubr.f32.gmra.mxu0 %v1663
    %v1736 = vpop.f32.mrf.mxu0
    %v1737 = vadd.f32 %v1657, %v1736
    %v1738 = vpop.f32.mrf.mxu0
    %1739 = vdwg.mxu0
    %v1740 = vld [vmem:[%s12] sm:$0xf]
    %v1741 = vsel %vm191, %v1732, 0.0
    %1742 = vadd.xlane.f32.xlu0 %v1741
    %v1743 = vpop.xlane.xlu0 %1742
    %v1744 = vsel %vm191, %v1737, 0.0
    %1745 = vadd.xlane.f32.xlu0 %v1744
    %v1746 = vpop.xlane.xlu0 %1745
    %v1747 = vrcp.pop 32.0
    %v1748 = vmul.f32 %v1743, %v1747
    %v1749 = vmul.f32 %v1746, %v1747
    %v1750 = vsub.f32 %v1732, %v1748
    %v1751 = vsub.f32 %v1737, %v1749
    %v1752 = vmul.f32 %v1750, %v1750
    %v1753 = vmul.f32 %v1751, %v1751
    %v1754 = vsel %vm191, %v1752, 0.0
    %1755 = vadd.xlane.f32.xlu0 %v1754
    %v1756 = vpop.xlane.xlu0 %1755
    %v1757 = vsel %vm191, %v1753, 0.0
    %1758 = vadd.xlane.f32.xlu0 %v1757
    %v1759 = vpop.xlane.xlu0 %1758
    %v1760 = vmul.f32 %v1756, %v1747
    %v1761 = vmul.f32 %v1759, %v1747
    %v1762 = vadd.f32 %v1760, 1e-12
    %v1763 = vadd.f32 %v1761, 1e-12
    %v1764 = vrsqrt.pop %v1762
    %v1765 = vmul.f32 %v1762, %v1764
    %vm1766 = vcmp.eq.f32.partialorder %v1762, inf
    %v1767 = vsel %vm1766, %v1762, %v1765
    %vm1768 = vcmp.eq.f32.partialorder %v1762, 0.0
    %v1769 = vand.u32 %v1762, 2147483648
    %v1770 = vsel %vm1768, %v1769, %v1767
    %v1771 = vrsqrt.pop %v1763
    %v1772 = vmul.f32 %v1763, %v1771
    %vm1773 = vcmp.eq.f32.partialorder %v1763, inf
    %v1774 = vsel %vm1773, %v1763, %v1772
    %vm1775 = vcmp.eq.f32.partialorder %v1763, 0.0
    %v1776 = vand.u32 %v1763, 2147483648
    %v1777 = vsel %vm1775, %v1776, %v1774
    %v1778 = vrcp.pop %v1770
    %v1779 = vmul.f32 %v1750, %v1778
    %v1780 = vrcp.pop %v1777
    %v1781 = vmul.f32 %v1751, %v1780
    %v1782 = vlaneseq
    %v1783 = vshrl.u32 %v1782, 7
    %v1784 = vsub.s32 0, %v1783
    %v1785 = vrot.slane %v1740, %v1784
    %v1786 = vmul.f32 %v1779, %v1785
    %v1787 = vmul.f32 %v1781, %v1785
    %v1788 = vlaneseq
    %v1789 = vshrl.u32 %v1788, 7
    %v1790 = vsub.s32 1, %v1789
    %v1791 = vrot.slane %v1740, %v1790
    %v1792 = vadd.f32 %v1786, %v1791
    %v1793 = vadd.f32 %v1787, %v1791
    %v1794 = vld [vmem:[%s8] sm:$0xff]
    %v1795 = vld [vmem:[%s8 + $0x8] sm:$0xff]
    %v1796 = vld [vmem:[%s8 + $0x10] sm:$0xff]
    %v1797 = vld [vmem:[%s8 + $0x18] sm:$0xff]
    %v1798 = vld [vmem:[%s9] sm:$0x1]
    %v1800 = vlaneseq
    %v1801 = vshrl.u32 %v1800, 7
    %v1802 = vsub.s32 0, %v1801
    %v1803 = vrot.slane %v1798, %v1802
    %v1806 = vsel %vm191, %v1792, 0
    %v1809 = vsel %vm191, %v1793, 0
    %1811 = vmatprep.subr.mxu0 0.0
    %1812 = vmatpush1.msra.mxu0 0.0
    %1813 = vmatprep.subr.mxu0 0.0
    %1814 = vmatpush1.msra.mxu0 0.0
    %1815 = vmatprep.subr.mxu0 0.0
    %1816 = vmatpush1.msra.mxu0 0.0
    %1817 = vmatprep.subr.mxu0 0.0
    %1818 = vmatpush1.msra.mxu0 0.0
    %1819 = vmatprep.subr.mxu0 0.0
    %1820 = vmatpush1.msra.mxu0 0.0
    %1821 = vmatprep.subr.mxu0 0.0
    %1822 = vmatpush1.msra.mxu0 0.0
    %1823 = vmatprep.subr.mxu0 0.0
    %1824 = vmatpush1.msra.mxu0 0.0
    %1825 = vmatprep.subr.mxu0 0.0
    %1826 = vmatpush1.msra.mxu0 0.0
    %1827 = vmatprep.subr.mxu0 0.0
    %1828 = vmatpush1.msra.mxu0 0.0
    %1829 = vmatprep.subr.mxu0 0.0
    %1830 = vmatpush1.msra.mxu0 0.0
    %1831 = vmatprep.subr.mxu0 0.0
    %1832 = vmatpush1.msra.mxu0 0.0
    %1833 = vmatprep.subr.mxu0 0.0
    %1834 = vmatpush1.msra.mxu0 0.0
    %1835 = vmatprep.subr.mxu0 0.0
    %1836 = vmatpush1.msra.mxu0 %v1797
    %1837 = vmatprep.subr.mxu0 0.0
    %1838 = vmatpush1.msra.mxu0 %v1796
    %1839 = vmatprep.subr.mxu0 0.0
    %1840 = vmatpush1.msra.mxu0 %v1795
    %1841 = vmatprep.subr.mxu0 0.0
    %1842 = vmatpush1.msra.mxu0 %v1794
    %1843 = vmatprep.subr.mxu0 0.0
    %1844 = vmatpush2.msra.mxu0 0.0
    %1845 = vmatprep.subr.mxu0 0.0
    %1846 = vmatpush2.msra.mxu0 0.0
    %1847 = vmatprep.subr.mxu0 0.0
    %1848 = vmatpush2.msra.mxu0 0.0
    %1849 = vmatprep.subr.mxu0 0.0
    %1850 = vmatpush2.msra.mxu0 0.0
    %1851 = vmatprep.subr.mxu0 0.0
    %1852 = vmatpush2.msra.mxu0 0.0
    %1853 = vmatprep.subr.mxu0 0.0
    %1854 = vmatpush2.msra.mxu0 0.0
    %1855 = vmatprep.subr.mxu0 0.0
    %1856 = vmatpush2.msra.mxu0 0.0
    %1857 = vmatprep.subr.mxu0 0.0
    %1858 = vmatpush2.msra.mxu0 0.0
    %1859 = vmatprep.subr.mxu0 0.0
    %1860 = vmatpush2.msra.mxu0 0.0
    %1861 = vmatprep.subr.mxu0 0.0
    %1862 = vmatpush2.msra.mxu0 0.0
    %1863 = vmatprep.subr.mxu0 0.0
    %1864 = vmatpush2.msra.mxu0 0.0
    %1865 = vmatprep.subr.mxu0 0.0
    %1866 = vmatpush2.msra.mxu0 0.0
    %1867 = vmatprep.subr.mxu0 0.0
    %1868 = vmatpush2.msra.mxu0 0.0
    %1869 = vmatprep.subr.mxu0 0.0
    %1870 = vmatpush2.msra.mxu0 0.0
    %1871 = vmatprep.subr.mxu0 0.0
    %1872 = vmatpush2.msra.mxu0 0.0
    %1873 = vmatprep.subr.mxu0 0.0
    %1874 = vmatpush2.msra.mxu0 0.0
    %1875 = vmatprep.mubr.f32.mxu0 0.0
    %1876 = vmatmul.mubr.f32.gmra.mxu0 %v1806
    %v1877 = vpop.f32.mrf.mxu0
    %v1878 = vadd.f32 %v1803, %v1877
    %v1879 = vpop.f32.mrf.mxu0
    %1880 = vmatprep.mubr.f32.mxu0 0.0
    %1881 = vmatmul.mubr.f32.gmra.mxu0 %v1809
    %v1882 = vpop.f32.mrf.mxu0
    %v1883 = vadd.f32 %v1803, %v1882
    %v1884 = vpop.f32.mrf.mxu0
    %1885 = vdwg.mxu0
    %v1886 = vmax.f32 %v1878, 0.0
    %v1887 = vmax.f32 %v1883, 0.0
    %v1888 = vld [vmem:[%s10] sm:$0xff]
    %v1889 = vld [vmem:[%s10 + $0x8] sm:$0xff]
    %v1890 = vld [vmem:[%s10 + $0x10] sm:$0xff]
    %v1891 = vld [vmem:[%s10 + $0x18] sm:$0xff]
    %v1892 = vld [vmem:[%s10 + $0x20] sm:$0xff]
    %v1893 = vld [vmem:[%s10 + $0x28] sm:$0xff]
    %v1894 = vld [vmem:[%s10 + $0x30] sm:$0xff]
    %v1895 = vld [vmem:[%s10 + $0x38] sm:$0xff]
    %v1896 = vld [vmem:[%s11] sm:$0x1]
    %v1898 = vlaneseq
    %v1899 = vshrl.u32 %v1898, 7
    %v1900 = vsub.s32 0, %v1899
    %v1901 = vrot.slane %v1896, %v1900
    %vm1903 = vcmask 523264
    %v1905 = vsel %vm1903, %v1886, 0
    %v1908 = vsel %vm1903, %v1887, 0
    %1910 = vmatprep.subr.mxu0 0.0
    %1911 = vmatpush1.msra.mxu0 0.0
    %1912 = vmatprep.subr.mxu0 0.0
    %1913 = vmatpush1.msra.mxu0 0.0
    %1914 = vmatprep.subr.mxu0 0.0
    %1915 = vmatpush1.msra.mxu0 0.0
    %1916 = vmatprep.subr.mxu0 0.0
    %1917 = vmatpush1.msra.mxu0 0.0
    %1918 = vmatprep.subr.mxu0 0.0
    %1919 = vmatpush1.msra.mxu0 0.0
    %1920 = vmatprep.subr.mxu0 0.0
    %1921 = vmatpush1.msra.mxu0 0.0
    %1922 = vmatprep.subr.mxu0 0.0
    %1923 = vmatpush1.msra.mxu0 0.0
    %1924 = vmatprep.subr.mxu0 0.0
    %1925 = vmatpush1.msra.mxu0 0.0
    %1926 = vmatprep.subr.mxu0 0.0
    %1927 = vmatpush1.msra.mxu0 %v1895
    %1928 = vmatprep.subr.mxu0 0.0
    %1929 = vmatpush1.msra.mxu0 %v1894
    %1930 = vmatprep.subr.mxu0 0.0
    %1931 = vmatpush1.msra.mxu0 %v1893
    %1932 = vmatprep.subr.mxu0 0.0
    %1933 = vmatpush1.msra.mxu0 %v1892
    %1934 = vmatprep.subr.mxu0 0.0
    %1935 = vmatpush1.msra.mxu0 %v1891
    %1936 = vmatprep.subr.mxu0 0.0
    %1937 = vmatpush1.msra.mxu0 %v1890
    %1938 = vmatprep.subr.mxu0 0.0
    %1939 = vmatpush1.msra.mxu0 %v1889
    %1940 = vmatprep.subr.mxu0 0.0
    %1941 = vmatpush1.msra.mxu0 %v1888
    %1942 = vmatprep.subr.mxu0 0.0
    %1943 = vmatpush2.msra.mxu0 0.0
    %1944 = vmatprep.subr.mxu0 0.0
    %1945 = vmatpush2.msra.mxu0 0.0
    %1946 = vmatprep.subr.mxu0 0.0
    %1947 = vmatpush2.msra.mxu0 0.0
    %1948 = vmatprep.subr.mxu0 0.0
    %1949 = vmatpush2.msra.mxu0 0.0
    %1950 = vmatprep.subr.mxu0 0.0
    %1951 = vmatpush2.msra.mxu0 0.0
    %1952 = vmatprep.subr.mxu0 0.0
    %1953 = vmatpush2.msra.mxu0 0.0
    %1954 = vmatprep.subr.mxu0 0.0
    %1955 = vmatpush2.msra.mxu0 0.0
    %1956 = vmatprep.subr.mxu0 0.0
    %1957 = vmatpush2.msra.mxu0 0.0
    %1958 = vmatprep.subr.mxu0 0.0
    %1959 = vmatpush2.msra.mxu0 0.0
    %1960 = vmatprep.subr.mxu0 0.0
    %1961 = vmatpush2.msra.mxu0 0.0
    %1962 = vmatprep.subr.mxu0 0.0
    %1963 = vmatpush2.msra.mxu0 0.0
    %1964 = vmatprep.subr.mxu0 0.0
    %1965 = vmatpush2.msra.mxu0 0.0
    %1966 = vmatprep.subr.mxu0 0.0
    %1967 = vmatpush2.msra.mxu0 0.0
    %1968 = vmatprep.subr.mxu0 0.0
    %1969 = vmatpush2.msra.mxu0 0.0
    %1970 = vmatprep.subr.mxu0 0.0
    %1971 = vmatpush2.msra.mxu0 0.0
    %1972 = vmatprep.subr.mxu0 0.0
    %1973 = vmatpush2.msra.mxu0 0.0
    %1974 = vmatprep.mubr.f32.mxu0 0.0
    %1975 = vmatmul.mubr.f32.gmra.mxu0 %v1905
    %v1976 = vpop.f32.mrf.mxu0
    %v1977 = vadd.f32 %v1901, %v1976
    %v1978 = vpop.f32.mrf.mxu0
    %1979 = vmatprep.mubr.f32.mxu0 0.0
    %1980 = vmatmul.mubr.f32.gmra.mxu0 %v1908
    %v1981 = vpop.f32.mrf.mxu0
    %v1982 = vadd.f32 %v1901, %v1981
    %v1983 = vpop.f32.mrf.mxu0
    %1984 = vdwg.mxu0
    %v1985 = vsel %vm191, %v1977, 0.0
    %1986 = vadd.xlane.f32.xlu0 %v1985
    %v1987 = vpop.xlane.xlu0 %1986
    %v1988 = vsel %vm191, %v1982, 0.0
    %1989 = vadd.xlane.f32.xlu0 %v1988
    %v1990 = vpop.xlane.xlu0 %1989
    %v1991 = vmul.f32 %v1987, %v1747
    %v1992 = vmul.f32 %v1990, %v1747
    %v1993 = vsub.f32 %v1977, %v1991
    %v1994 = vsub.f32 %v1982, %v1992
    %v1995 = vmul.f32 %v1993, %v1993
    %v1996 = vmul.f32 %v1994, %v1994
    %v1997 = vsel %vm191, %v1995, 0.0
    %1998 = vadd.xlane.f32.xlu0 %v1997
    %v1999 = vpop.xlane.xlu0 %1998
    %v2000 = vsel %vm191, %v1996, 0.0
    %2001 = vadd.xlane.f32.xlu0 %v2000
    %v2002 = vpop.xlane.xlu0 %2001
    %v2003 = vmul.f32 %v1999, %v1747
    %v2004 = vmul.f32 %v2002, %v1747
    %v2005 = vadd.f32 %v2003, 1e-12
    %v2006 = vadd.f32 %v2004, 1e-12
    %v2007 = vrsqrt.pop %v2005
    %v2008 = vmul.f32 %v2005, %v2007
    %vm2009 = vcmp.eq.f32.partialorder %v2005, inf
    %v2010 = vsel %vm2009, %v2005, %v2008
    %vm2011 = vcmp.eq.f32.partialorder %v2005, 0.0
    %v2012 = vand.u32 %v2005, 2147483648
    %v2013 = vsel %vm2011, %v2012, %v2010
    %v2014 = vrsqrt.pop %v2006
    %v2015 = vmul.f32 %v2006, %v2014
    %vm2016 = vcmp.eq.f32.partialorder %v2006, inf
    %v2017 = vsel %vm2016, %v2006, %v2015
    %vm2018 = vcmp.eq.f32.partialorder %v2006, 0.0
    %v2019 = vand.u32 %v2006, 2147483648
    %v2020 = vsel %vm2018, %v2019, %v2017
    %v2021 = vrcp.pop %v2013
    %v2022 = vmul.f32 %v1993, %v2021
    %v2023 = vrcp.pop %v2020
    %v2024 = vmul.f32 %v1994, %v2023
    %v2025 = vlaneseq
    %v2026 = vshrl.u32 %v2025, 7
    %v2027 = vsub.s32 2, %v2026
    %v2028 = vrot.slane %v1740, %v2027
    %v2029 = vmul.f32 %v2022, %v2028
    %v2030 = vmul.f32 %v2024, %v2028
    %v2031 = vlaneseq
    %v2032 = vshrl.u32 %v2031, 7
    %v2033 = vsub.s32 3, %v2032
    %v2034 = vrot.slane %v1740, %v2033
    %v2035 = vadd.f32 %v2029, %v2034
    %v2036 = vadd.f32 %v2030, %v2034
    %s2037 = scalar_lea.vmem %s4, 32
    %v2038 = vld [vmem:[%s2037] sm:$0xff]
    %v2039 = vld [vmem:[%s2037 + $0x8] sm:$0xff]
    %v2040 = vld [vmem:[%s2037 + $0x10] sm:$0xff]
    %v2041 = vld [vmem:[%s2037 + $0x18] sm:$0xff]
    %s2042 = scalar_lea.vmem %s5, 1
    %v2043 = vld [vmem:[%s2042] sm:$0x1]
    %v2045 = vlaneseq
    %v2046 = vshrl.u32 %v2045, 7
    %v2047 = vsub.s32 0, %v2046
    %v2048 = vrot.slane %v2043, %v2047
    %v2051 = vsel %vm191, %v2035, 0
    %v2054 = vsel %vm191, %v2036, 0
    %2056 = vmatprep.subr.mxu0 0.0
    %2057 = vmatpush1.msra.mxu0 0.0
    %2058 = vmatprep.subr.mxu0 0.0
    %2059 = vmatpush1.msra.mxu0 0.0
    %2060 = vmatprep.subr.mxu0 0.0
    %2061 = vmatpush1.msra.mxu0 0.0
    %2062 = vmatprep.subr.mxu0 0.0
    %2063 = vmatpush1.msra.mxu0 0.0
    %2064 = vmatprep.subr.mxu0 0.0
    %2065 = vmatpush1.msra.mxu0 0.0
    %2066 = vmatprep.subr.mxu0 0.0
    %2067 = vmatpush1.msra.mxu0 0.0
    %2068 = vmatprep.subr.mxu0 0.0
    %2069 = vmatpush1.msra.mxu0 0.0
    %2070 = vmatprep.subr.mxu0 0.0
    %2071 = vmatpush1.msra.mxu0 0.0
    %2072 = vmatprep.subr.mxu0 0.0
    %2073 = vmatpush1.msra.mxu0 0.0
    %2074 = vmatprep.subr.mxu0 0.0
    %2075 = vmatpush1.msra.mxu0 0.0
    %2076 = vmatprep.subr.mxu0 0.0
    %2077 = vmatpush1.msra.mxu0 0.0
    %2078 = vmatprep.subr.mxu0 0.0
    %2079 = vmatpush1.msra.mxu0 0.0
    %2080 = vmatprep.subr.mxu0 0.0
    %2081 = vmatpush1.msra.mxu0 %v2041
    %2082 = vmatprep.subr.mxu0 0.0
    %2083 = vmatpush1.msra.mxu0 %v2040
    %2084 = vmatprep.subr.mxu0 0.0
    %2085 = vmatpush1.msra.mxu0 %v2039
    %2086 = vmatprep.subr.mxu0 0.0
    %2087 = vmatpush1.msra.mxu0 %v2038
    %2088 = vmatprep.subr.mxu0 0.0
    %2089 = vmatpush2.msra.mxu0 0.0
    %2090 = vmatprep.subr.mxu0 0.0
    %2091 = vmatpush2.msra.mxu0 0.0
    %2092 = vmatprep.subr.mxu0 0.0
    %2093 = vmatpush2.msra.mxu0 0.0
    %2094 = vmatprep.subr.mxu0 0.0
    %2095 = vmatpush2.msra.mxu0 0.0
    %2096 = vmatprep.subr.mxu0 0.0
    %2097 = vmatpush2.msra.mxu0 0.0
    %2098 = vmatprep.subr.mxu0 0.0
    %2099 = vmatpush2.msra.mxu0 0.0
    %2100 = vmatprep.subr.mxu0 0.0
    %2101 = vmatpush2.msra.mxu0 0.0
    %2102 = vmatprep.subr.mxu0 0.0
    %2103 = vmatpush2.msra.mxu0 0.0
    %2104 = vmatprep.subr.mxu0 0.0
    %2105 = vmatpush2.msra.mxu0 0.0
    %2106 = vmatprep.subr.mxu0 0.0
    %2107 = vmatpush2.msra.mxu0 0.0
    %2108 = vmatprep.subr.mxu0 0.0
    %2109 = vmatpush2.msra.mxu0 0.0
    %2110 = vmatprep.subr.mxu0 0.0
    %2111 = vmatpush2.msra.mxu0 0.0
    %2112 = vmatprep.subr.mxu0 0.0
    %2113 = vmatpush2.msra.mxu0 0.0
    %2114 = vmatprep.subr.mxu0 0.0
    %2115 = vmatpush2.msra.mxu0 0.0
    %2116 = vmatprep.subr.mxu0 0.0
    %2117 = vmatpush2.msra.mxu0 0.0
    %2118 = vmatprep.subr.mxu0 0.0
    %2119 = vmatpush2.msra.mxu0 0.0
    %2120 = vmatprep.mubr.f32.mxu0 0.0
    %2121 = vmatmul.mubr.f32.gmra.mxu0 %v2051
    %v2122 = vpop.f32.mrf.mxu0
    %v2123 = vadd.f32 %v2048, %v2122
    %v2124 = vpop.f32.mrf.mxu0
    %2125 = vmatprep.mubr.f32.mxu0 0.0
    %2126 = vmatmul.mubr.f32.gmra.mxu0 %v2054
    %v2127 = vpop.f32.mrf.mxu0
    %v2128 = vadd.f32 %v2048, %v2127
    %v2129 = vpop.f32.mrf.mxu0
    %2130 = vdwg.mxu0
    %2132 = vrot.lane.b32.xlu0 %v2123, 96
    %v2133 = vpop.permute.xlu0 %2132
    %v2134 = vsel %vm276, %v2123, 0
    %v2136 = vsel %vm276, %v2133, 0
    %2138 = vmatprep.subr.mxu0 0.0
    %2139 = vmatpush1.xpose.msra.mxu0 0.0
    %2140 = vmatprep.subr.mxu0 0.0
    %2141 = vmatpush1.xpose.msra.mxu0 0.0
    %2142 = vmatprep.subr.mxu0 0.0
    %2143 = vmatpush1.xpose.msra.mxu0 0.0
    %2144 = vmatprep.subr.mxu0 0.0
    %2145 = vmatpush1.xpose.msra.mxu0 0.0
    %2146 = vmatprep.subr.mxu0 0.0
    %2147 = vmatpush1.xpose.msra.mxu0 0.0
    %2148 = vmatprep.subr.mxu0 0.0
    %2149 = vmatpush1.xpose.msra.mxu0 0.0
    %2150 = vmatprep.subr.mxu0 0.0
    %2151 = vmatpush1.xpose.msra.mxu0 0.0
    %2152 = vmatprep.subr.mxu0 0.0
    %2153 = vmatpush1.xpose.msra.mxu0 0.0
    %2154 = vmatprep.subr.mxu0 0.0
    %2155 = vmatpush1.xpose.msra.mxu0 0.0
    %2156 = vmatprep.subr.mxu0 0.0
    %2157 = vmatpush1.xpose.msra.mxu0 0.0
    %2158 = vmatprep.subr.mxu0 0.0
    %2159 = vmatpush1.xpose.msra.mxu0 0.0
    %2160 = vmatprep.subr.mxu0 0.0
    %2161 = vmatpush1.xpose.msra.mxu0 0.0
    %2162 = vmatprep.subr.mxu0 0.0
    %2163 = vmatpush1.xpose.msra.mxu0 0.0
    %2164 = vmatprep.subr.mxu0 0.0
    %2165 = vmatpush1.xpose.msra.mxu0 0.0
    %2166 = vmatprep.subr.mxu0 0.0
    %2167 = vmatpush1.xpose.msra.mxu0 0.0
    %2168 = vmatprep.subr.mxu0 0.0
    %2169 = vmatpush1.xpose.msra.mxu0 %v2136
    %2170 = vmatprep.subr.mxu0 0.0
    %2171 = vmatpush2.xpose.msra.mxu0 0.0
    %2172 = vmatprep.subr.mxu0 0.0
    %2173 = vmatpush2.xpose.msra.mxu0 0.0
    %2174 = vmatprep.subr.mxu0 0.0
    %2175 = vmatpush2.xpose.msra.mxu0 0.0
    %2176 = vmatprep.subr.mxu0 0.0
    %2177 = vmatpush2.xpose.msra.mxu0 0.0
    %2178 = vmatprep.subr.mxu0 0.0
    %2179 = vmatpush2.xpose.msra.mxu0 0.0
    %2180 = vmatprep.subr.mxu0 0.0
    %2181 = vmatpush2.xpose.msra.mxu0 0.0
    %2182 = vmatprep.subr.mxu0 0.0
    %2183 = vmatpush2.xpose.msra.mxu0 0.0
    %2184 = vmatprep.subr.mxu0 0.0
    %2185 = vmatpush2.xpose.msra.mxu0 0.0
    %2186 = vmatprep.subr.mxu0 0.0
    %2187 = vmatpush2.xpose.msra.mxu0 0.0
    %2188 = vmatprep.subr.mxu0 0.0
    %2189 = vmatpush2.xpose.msra.mxu0 0.0
    %2190 = vmatprep.subr.mxu0 0.0
    %2191 = vmatpush2.xpose.msra.mxu0 0.0
    %2192 = vmatprep.subr.mxu0 0.0
    %2193 = vmatpush2.xpose.msra.mxu0 0.0
    %2194 = vmatprep.subr.mxu0 0.0
    %2195 = vmatpush2.xpose.msra.mxu0 0.0
    %2196 = vmatprep.subr.mxu0 0.0
    %2197 = vmatpush2.xpose.msra.mxu0 0.0
    %2198 = vmatprep.subr.mxu0 0.0
    %2199 = vmatpush2.xpose.msra.mxu0 0.0
    %2200 = vmatprep.subr.mxu0 0.0
    %2201 = vmatpush2.xpose.msra.mxu0 0.0
    %2202 = vmatprep.mubr.f32.mxu0 0.0
    %2203 = vmatmul.mubr.f32.gmra.mxu0 %v2134
    %v2204 = vpop.f32.mrf.mxu0
    %v2205 = vadd.f32 0.0, %v2204
    %v2206 = vpop.f32.mrf.mxu0
    %2207 = vdwg.mxu0
    %v2208 = vmul.f32 %v2205, 0.35355338
    %v2209 = vadd.f32 %v2208, %v355
    %v2210 = vsel %vm276, %v2209, -inf
    %2211 = vmax.xlane.f32.xlu0 %v2210
    %v2212 = vpop.xlane.xlu0 %2211
    %v2213 = vsub.f32 %v2209, %v2212
    %v2214 = vmul.f32 %v2213, 1.442695
    %v2215 = vpow.pop %v2214
    %v2216 = vsel %vm276, %v2215, 0.0
    %2217 = vadd.xlane.f32.xlu0 %v2216
    %v2218 = vpop.xlane.xlu0 %2217
    %v2219 = vrcp.pop %v2218
    %v2220 = vmul.f32 %v2215, %v2219
    %2221 = vrot.lane.b32.xlu0 %v2123, 64
    %v2222 = vpop.permute.xlu0 %2221
    %v2225 = vsel %vm276, %v2220, 0
    %2227 = vmatprep.subr.mxu0 0.0
    %2228 = vmatpush1.msra.mxu0 0.0
    %2229 = vmatprep.subr.mxu0 0.0
    %2230 = vmatpush1.msra.mxu0 0.0
    %2231 = vmatprep.subr.mxu0 0.0
    %2232 = vmatpush1.msra.mxu0 0.0
    %2233 = vmatprep.subr.mxu0 0.0
    %2234 = vmatpush1.msra.mxu0 0.0
    %2235 = vmatprep.subr.mxu0 0.0
    %2236 = vmatpush1.msra.mxu0 0.0
    %2237 = vmatprep.subr.mxu0 0.0
    %2238 = vmatpush1.msra.mxu0 0.0
    %2239 = vmatprep.subr.mxu0 0.0
    %2240 = vmatpush1.msra.mxu0 0.0
    %2241 = vmatprep.subr.mxu0 0.0
    %2242 = vmatpush1.msra.mxu0 0.0
    %2243 = vmatprep.subr.mxu0 0.0
    %2244 = vmatpush1.msra.mxu0 0.0
    %2245 = vmatprep.subr.mxu0 0.0
    %2246 = vmatpush1.msra.mxu0 0.0
    %2247 = vmatprep.subr.mxu0 0.0
    %2248 = vmatpush1.msra.mxu0 0.0
    %2249 = vmatprep.subr.mxu0 0.0
    %2250 = vmatpush1.msra.mxu0 0.0
    %2251 = vmatprep.subr.mxu0 0.0
    %2252 = vmatpush1.msra.mxu0 0.0
    %2253 = vmatprep.subr.mxu0 0.0
    %2254 = vmatpush1.msra.mxu0 0.0
    %2255 = vmatprep.subr.mxu0 0.0
    %2256 = vmatpush1.msra.mxu0 0.0
    %2257 = vmatprep.subr.mxu0 0.0
    %2258 = vmatpush1.msra.mxu0 %v2222
    %2259 = vmatprep.subr.mxu0 0.0
    %2260 = vmatpush2.msra.mxu0 0.0
    %2261 = vmatprep.subr.mxu0 0.0
    %2262 = vmatpush2.msra.mxu0 0.0
    %2263 = vmatprep.subr.mxu0 0.0
    %2264 = vmatpush2.msra.mxu0 0.0
    %2265 = vmatprep.subr.mxu0 0.0
    %2266 = vmatpush2.msra.mxu0 0.0
    %2267 = vmatprep.subr.mxu0 0.0
    %2268 = vmatpush2.msra.mxu0 0.0
    %2269 = vmatprep.subr.mxu0 0.0
    %2270 = vmatpush2.msra.mxu0 0.0
    %2271 = vmatprep.subr.mxu0 0.0
    %2272 = vmatpush2.msra.mxu0 0.0
    %2273 = vmatprep.subr.mxu0 0.0
    %2274 = vmatpush2.msra.mxu0 0.0
    %2275 = vmatprep.subr.mxu0 0.0
    %2276 = vmatpush2.msra.mxu0 0.0
    %2277 = vmatprep.subr.mxu0 0.0
    %2278 = vmatpush2.msra.mxu0 0.0
    %2279 = vmatprep.subr.mxu0 0.0
    %2280 = vmatpush2.msra.mxu0 0.0
    %2281 = vmatprep.subr.mxu0 0.0
    %2282 = vmatpush2.msra.mxu0 0.0
    %2283 = vmatprep.subr.mxu0 0.0
    %2284 = vmatpush2.msra.mxu0 0.0
    %2285 = vmatprep.subr.mxu0 0.0
    %2286 = vmatpush2.msra.mxu0 0.0
    %2287 = vmatprep.subr.mxu0 0.0
    %2288 = vmatpush2.msra.mxu0 0.0
    %2289 = vmatprep.subr.mxu0 0.0
    %2290 = vmatpush2.msra.mxu0 0.0
    %2291 = vmatprep.mubr.f32.mxu0 0.0
    %2292 = vmatmul.mubr.f32.gmra.mxu0 %v2225
    %v2293 = vpop.f32.mrf.mxu0
    %v2294 = vadd.f32 0.0, %v2293
    %v2295 = vpop.f32.mrf.mxu0
    %2296 = vdwg.mxu0
    %2297 = vrot.lane.b32.xlu0 %v2123, 120
    %v2298 = vpop.permute.xlu0 %2297
    %2299 = vrot.lane.b32.xlu0 %v2123, 88
    %v2300 = vpop.permute.xlu0 %2299
    %v2301 = vsel %vm276, %v2298, 0
    %v2303 = vsel %vm276, %v2300, 0
    %2305 = vmatprep.subr.mxu0 0.0
    %2306 = vmatpush1.xpose.msra.mxu0 0.0
    %2307 = vmatprep.subr.mxu0 0.0
    %2308 = vmatpush1.xpose.msra.mxu0 0.0
    %2309 = vmatprep.subr.mxu0 0.0
    %2310 = vmatpush1.xpose.msra.mxu0 0.0
    %2311 = vmatprep.subr.mxu0 0.0
    %2312 = vmatpush1.xpose.msra.mxu0 0.0
    %2313 = vmatprep.subr.mxu0 0.0
    %2314 = vmatpush1.xpose.msra.mxu0 0.0
    %2315 = vmatprep.subr.mxu0 0.0
    %2316 = vmatpush1.xpose.msra.mxu0 0.0
    %2317 = vmatprep.subr.mxu0 0.0
    %2318 = vmatpush1.xpose.msra.mxu0 0.0
    %2319 = vmatprep.subr.mxu0 0.0
    %2320 = vmatpush1.xpose.msra.mxu0 0.0
    %2321 = vmatprep.subr.mxu0 0.0
    %2322 = vmatpush1.xpose.msra.mxu0 0.0
    %2323 = vmatprep.subr.mxu0 0.0
    %2324 = vmatpush1.xpose.msra.mxu0 0.0
    %2325 = vmatprep.subr.mxu0 0.0
    %2326 = vmatpush1.xpose.msra.mxu0 0.0
    %2327 = vmatprep.subr.mxu0 0.0
    %2328 = vmatpush1.xpose.msra.mxu0 0.0
    %2329 = vmatprep.subr.mxu0 0.0
    %2330 = vmatpush1.xpose.msra.mxu0 0.0
    %2331 = vmatprep.subr.mxu0 0.0
    %2332 = vmatpush1.xpose.msra.mxu0 0.0
    %2333 = vmatprep.subr.mxu0 0.0
    %2334 = vmatpush1.xpose.msra.mxu0 0.0
    %2335 = vmatprep.subr.mxu0 0.0
    %2336 = vmatpush1.xpose.msra.mxu0 %v2303
    %2337 = vmatprep.subr.mxu0 0.0
    %2338 = vmatpush2.xpose.msra.mxu0 0.0
    %2339 = vmatprep.subr.mxu0 0.0
    %2340 = vmatpush2.xpose.msra.mxu0 0.0
    %2341 = vmatprep.subr.mxu0 0.0
    %2342 = vmatpush2.xpose.msra.mxu0 0.0
    %2343 = vmatprep.subr.mxu0 0.0
    %2344 = vmatpush2.xpose.msra.mxu0 0.0
    %2345 = vmatprep.subr.mxu0 0.0
    %2346 = vmatpush2.xpose.msra.mxu0 0.0
    %2347 = vmatprep.subr.mxu0 0.0
    %2348 = vmatpush2.xpose.msra.mxu0 0.0
    %2349 = vmatprep.subr.mxu0 0.0
    %2350 = vmatpush2.xpose.msra.mxu0 0.0
    %2351 = vmatprep.subr.mxu0 0.0
    %2352 = vmatpush2.xpose.msra.mxu0 0.0
    %2353 = vmatprep.subr.mxu0 0.0
    %2354 = vmatpush2.xpose.msra.mxu0 0.0
    %2355 = vmatprep.subr.mxu0 0.0
    %2356 = vmatpush2.xpose.msra.mxu0 0.0
    %2357 = vmatprep.subr.mxu0 0.0
    %2358 = vmatpush2.xpose.msra.mxu0 0.0
    %2359 = vmatprep.subr.mxu0 0.0
    %2360 = vmatpush2.xpose.msra.mxu0 0.0
    %2361 = vmatprep.subr.mxu0 0.0
    %2362 = vmatpush2.xpose.msra.mxu0 0.0
    %2363 = vmatprep.subr.mxu0 0.0
    %2364 = vmatpush2.xpose.msra.mxu0 0.0
    %2365 = vmatprep.subr.mxu0 0.0
    %2366 = vmatpush2.xpose.msra.mxu0 0.0
    %2367 = vmatprep.subr.mxu0 0.0
    %2368 = vmatpush2.xpose.msra.mxu0 0.0
    %2369 = vmatprep.mubr.f32.mxu0 0.0
    %2370 = vmatmul.mubr.f32.gmra.mxu0 %v2301
    %v2371 = vpop.f32.mrf.mxu0
    %v2372 = vadd.f32 0.0, %v2371
    %v2373 = vpop.f32.mrf.mxu0
    %2374 = vdwg.mxu0
    %v2375 = vmul.f32 %v2372, 0.35355338
    %v2376 = vadd.f32 %v2375, %v355
    %v2377 = vsel %vm276, %v2376, -inf
    %2378 = vmax.xlane.f32.xlu0 %v2377
    %v2379 = vpop.xlane.xlu0 %2378
    %v2380 = vsub.f32 %v2376, %v2379
    %v2381 = vmul.f32 %v2380, 1.442695
    %v2382 = vpow.pop %v2381
    %v2383 = vsel %vm276, %v2382, 0.0
    %2384 = vadd.xlane.f32.xlu0 %v2383
    %v2385 = vpop.xlane.xlu0 %2384
    %v2386 = vrcp.pop %v2385
    %v2387 = vmul.f32 %v2382, %v2386
    %2388 = vrot.lane.b32.xlu0 %v2123, 56
    %v2389 = vpop.permute.xlu0 %2388
    %v2392 = vsel %vm276, %v2387, 0
    %2394 = vmatprep.subr.mxu0 0.0
    %2395 = vmatpush1.msra.mxu0 0.0
    %2396 = vmatprep.subr.mxu0 0.0
    %2397 = vmatpush1.msra.mxu0 0.0
    %2398 = vmatprep.subr.mxu0 0.0
    %2399 = vmatpush1.msra.mxu0 0.0
    %2400 = vmatprep.subr.mxu0 0.0
    %2401 = vmatpush1.msra.mxu0 0.0
    %2402 = vmatprep.subr.mxu0 0.0
    %2403 = vmatpush1.msra.mxu0 0.0
    %2404 = vmatprep.subr.mxu0 0.0
    %2405 = vmatpush1.msra.mxu0 0.0
    %2406 = vmatprep.subr.mxu0 0.0
    %2407 = vmatpush1.msra.mxu0 0.0
    %2408 = vmatprep.subr.mxu0 0.0
    %2409 = vmatpush1.msra.mxu0 0.0
    %2410 = vmatprep.subr.mxu0 0.0
    %2411 = vmatpush1.msra.mxu0 0.0
    %2412 = vmatprep.subr.mxu0 0.0
    %2413 = vmatpush1.msra.mxu0 0.0
    %2414 = vmatprep.subr.mxu0 0.0
    %2415 = vmatpush1.msra.mxu0 0.0
    %2416 = vmatprep.subr.mxu0 0.0
    %2417 = vmatpush1.msra.mxu0 0.0
    %2418 = vmatprep.subr.mxu0 0.0
    %2419 = vmatpush1.msra.mxu0 0.0
    %2420 = vmatprep.subr.mxu0 0.0
    %2421 = vmatpush1.msra.mxu0 0.0
    %2422 = vmatprep.subr.mxu0 0.0
    %2423 = vmatpush1.msra.mxu0 0.0
    %2424 = vmatprep.subr.mxu0 0.0
    %2425 = vmatpush1.msra.mxu0 %v2389
    %2426 = vmatprep.subr.mxu0 0.0
    %2427 = vmatpush2.msra.mxu0 0.0
    %2428 = vmatprep.subr.mxu0 0.0
    %2429 = vmatpush2.msra.mxu0 0.0
    %2430 = vmatprep.subr.mxu0 0.0
    %2431 = vmatpush2.msra.mxu0 0.0
    %2432 = vmatprep.subr.mxu0 0.0
    %2433 = vmatpush2.msra.mxu0 0.0
    %2434 = vmatprep.subr.mxu0 0.0
    %2435 = vmatpush2.msra.mxu0 0.0
    %2436 = vmatprep.subr.mxu0 0.0
    %2437 = vmatpush2.msra.mxu0 0.0
    %2438 = vmatprep.subr.mxu0 0.0
    %2439 = vmatpush2.msra.mxu0 0.0
    %2440 = vmatprep.subr.mxu0 0.0
    %2441 = vmatpush2.msra.mxu0 0.0
    %2442 = vmatprep.subr.mxu0 0.0
    %2443 = vmatpush2.msra.mxu0 0.0
    %2444 = vmatprep.subr.mxu0 0.0
    %2445 = vmatpush2.msra.mxu0 0.0
    %2446 = vmatprep.subr.mxu0 0.0
    %2447 = vmatpush2.msra.mxu0 0.0
    %2448 = vmatprep.subr.mxu0 0.0
    %2449 = vmatpush2.msra.mxu0 0.0
    %2450 = vmatprep.subr.mxu0 0.0
    %2451 = vmatpush2.msra.mxu0 0.0
    %2452 = vmatprep.subr.mxu0 0.0
    %2453 = vmatpush2.msra.mxu0 0.0
    %2454 = vmatprep.subr.mxu0 0.0
    %2455 = vmatpush2.msra.mxu0 0.0
    %2456 = vmatprep.subr.mxu0 0.0
    %2457 = vmatpush2.msra.mxu0 0.0
    %2458 = vmatprep.mubr.f32.mxu0 0.0
    %2459 = vmatmul.mubr.f32.gmra.mxu0 %v2392
    %v2460 = vpop.f32.mrf.mxu0
    %v2461 = vadd.f32 0.0, %v2460
    %v2462 = vpop.f32.mrf.mxu0
    %2463 = vdwg.mxu0
    %2464 = vrot.lane.b32.xlu0 %v2123, 112
    %v2465 = vpop.permute.xlu0 %2464
    %2466 = vrot.lane.b32.xlu0 %v2123, 80
    %v2467 = vpop.permute.xlu0 %2466
    %v2468 = vsel %vm276, %v2465, 0
    %v2470 = vsel %vm276, %v2467, 0
    %2472 = vmatprep.subr.mxu0 0.0
    %2473 = vmatpush1.xpose.msra.mxu0 0.0
    %2474 = vmatprep.subr.mxu0 0.0
    %2475 = vmatpush1.xpose.msra.mxu0 0.0
    %2476 = vmatprep.subr.mxu0 0.0
    %2477 = vmatpush1.xpose.msra.mxu0 0.0
    %2478 = vmatprep.subr.mxu0 0.0
    %2479 = vmatpush1.xpose.msra.mxu0 0.0
    %2480 = vmatprep.subr.mxu0 0.0
    %2481 = vmatpush1.xpose.msra.mxu0 0.0
    %2482 = vmatprep.subr.mxu0 0.0
    %2483 = vmatpush1.xpose.msra.mxu0 0.0
    %2484 = vmatprep.subr.mxu0 0.0
    %2485 = vmatpush1.xpose.msra.mxu0 0.0
    %2486 = vmatprep.subr.mxu0 0.0
    %2487 = vmatpush1.xpose.msra.mxu0 0.0
    %2488 = vmatprep.subr.mxu0 0.0
    %2489 = vmatpush1.xpose.msra.mxu0 0.0
    %2490 = vmatprep.subr.mxu0 0.0
    %2491 = vmatpush1.xpose.msra.mxu0 0.0
    %2492 = vmatprep.subr.mxu0 0.0
    %2493 = vmatpush1.xpose.msra.mxu0 0.0
    %2494 = vmatprep.subr.mxu0 0.0
    %2495 = vmatpush1.xpose.msra.mxu0 0.0
    %2496 = vmatprep.subr.mxu0 0.0
    %2497 = vmatpush1.xpose.msra.mxu0 0.0
    %2498 = vmatprep.subr.mxu0 0.0
    %2499 = vmatpush1.xpose.msra.mxu0 0.0
    %2500 = vmatprep.subr.mxu0 0.0
    %2501 = vmatpush1.xpose.msra.mxu0 0.0
    %2502 = vmatprep.subr.mxu0 0.0
    %2503 = vmatpush1.xpose.msra.mxu0 %v2470
    %2504 = vmatprep.subr.mxu0 0.0
    %2505 = vmatpush2.xpose.msra.mxu0 0.0
    %2506 = vmatprep.subr.mxu0 0.0
    %2507 = vmatpush2.xpose.msra.mxu0 0.0
    %2508 = vmatprep.subr.mxu0 0.0
    %2509 = vmatpush2.xpose.msra.mxu0 0.0
    %2510 = vmatprep.subr.mxu0 0.0
    %2511 = vmatpush2.xpose.msra.mxu0 0.0
    %2512 = vmatprep.subr.mxu0 0.0
    %2513 = vmatpush2.xpose.msra.mxu0 0.0
    %2514 = vmatprep.subr.mxu0 0.0
    %2515 = vmatpush2.xpose.msra.mxu0 0.0
    %2516 = vmatprep.subr.mxu0 0.0
    %2517 = vmatpush2.xpose.msra.mxu0 0.0
    %2518 = vmatprep.subr.mxu0 0.0
    %2519 = vmatpush2.xpose.msra.mxu0 0.0
    %2520 = vmatprep.subr.mxu0 0.0
    %2521 = vmatpush2.xpose.msra.mxu0 0.0
    %2522 = vmatprep.subr.mxu0 0.0
    %2523 = vmatpush2.xpose.msra.mxu0 0.0
    %2524 = vmatprep.subr.mxu0 0.0
    %2525 = vmatpush2.xpose.msra.mxu0 0.0
    %2526 = vmatprep.subr.mxu0 0.0
    %2527 = vmatpush2.xpose.msra.mxu0 0.0
    %2528 = vmatprep.subr.mxu0 0.0
    %2529 = vmatpush2.xpose.msra.mxu0 0.0
    %2530 = vmatprep.subr.mxu0 0.0
    %2531 = vmatpush2.xpose.msra.mxu0 0.0
    %2532 = vmatprep.subr.mxu0 0.0
    %2533 = vmatpush2.xpose.msra.mxu0 0.0
    %2534 = vmatprep.subr.mxu0 0.0
    %2535 = vmatpush2.xpose.msra.mxu0 0.0
    %2536 = vmatprep.mubr.f32.mxu0 0.0
    %2537 = vmatmul.mubr.f32.gmra.mxu0 %v2468
    %v2538 = vpop.f32.mrf.mxu0
    %v2539 = vadd.f32 0.0, %v2538
    %v2540 = vpop.f32.mrf.mxu0
    %2541 = vdwg.mxu0
    %v2542 = vmul.f32 %v2539, 0.35355338
    %v2543 = vadd.f32 %v2542, %v355
    %v2544 = vsel %vm276, %v2543, -inf
    %2545 = vmax.xlane.f32.xlu0 %v2544
    %v2546 = vpop.xlane.xlu0 %2545
    %v2547 = vsub.f32 %v2543, %v2546
    %v2548 = vmul.f32 %v2547, 1.442695
    %v2549 = vpow.pop %v2548
    %v2550 = vsel %vm276, %v2549, 0.0
    %2551 = vadd.xlane.f32.xlu0 %v2550
    %v2552 = vpop.xlane.xlu0 %2551
    %v2553 = vrcp.pop %v2552
    %v2554 = vmul.f32 %v2549, %v2553
    %2555 = vrot.lane.b32.xlu0 %v2123, 48
    %v2556 = vpop.permute.xlu0 %2555
    %v2559 = vsel %vm276, %v2554, 0
    %2561 = vmatprep.subr.mxu0 0.0
    %2562 = vmatpush1.msra.mxu0 0.0
    %2563 = vmatprep.subr.mxu0 0.0
    %2564 = vmatpush1.msra.mxu0 0.0
    %2565 = vmatprep.subr.mxu0 0.0
    %2566 = vmatpush1.msra.mxu0 0.0
    %2567 = vmatprep.subr.mxu0 0.0
    %2568 = vmatpush1.msra.mxu0 0.0
    %2569 = vmatprep.subr.mxu0 0.0
    %2570 = vmatpush1.msra.mxu0 0.0
    %2571 = vmatprep.subr.mxu0 0.0
    %2572 = vmatpush1.msra.mxu0 0.0
    %2573 = vmatprep.subr.mxu0 0.0
    %2574 = vmatpush1.msra.mxu0 0.0
    %2575 = vmatprep.subr.mxu0 0.0
    %2576 = vmatpush1.msra.mxu0 0.0
    %2577 = vmatprep.subr.mxu0 0.0
    %2578 = vmatpush1.msra.mxu0 0.0
    %2579 = vmatprep.subr.mxu0 0.0
    %2580 = vmatpush1.msra.mxu0 0.0
    %2581 = vmatprep.subr.mxu0 0.0
    %2582 = vmatpush1.msra.mxu0 0.0
    %2583 = vmatprep.subr.mxu0 0.0
    %2584 = vmatpush1.msra.mxu0 0.0
    %2585 = vmatprep.subr.mxu0 0.0
    %2586 = vmatpush1.msra.mxu0 0.0
    %2587 = vmatprep.subr.mxu0 0.0
    %2588 = vmatpush1.msra.mxu0 0.0
    %2589 = vmatprep.subr.mxu0 0.0
    %2590 = vmatpush1.msra.mxu0 0.0
    %2591 = vmatprep.subr.mxu0 0.0
    %2592 = vmatpush1.msra.mxu0 %v2556
    %2593 = vmatprep.subr.mxu0 0.0
    %2594 = vmatpush2.msra.mxu0 0.0
    %2595 = vmatprep.subr.mxu0 0.0
    %2596 = vmatpush2.msra.mxu0 0.0
    %2597 = vmatprep.subr.mxu0 0.0
    %2598 = vmatpush2.msra.mxu0 0.0
    %2599 = vmatprep.subr.mxu0 0.0
    %2600 = vmatpush2.msra.mxu0 0.0
    %2601 = vmatprep.subr.mxu0 0.0
    %2602 = vmatpush2.msra.mxu0 0.0
    %2603 = vmatprep.subr.mxu0 0.0
    %2604 = vmatpush2.msra.mxu0 0.0
    %2605 = vmatprep.subr.mxu0 0.0
    %2606 = vmatpush2.msra.mxu0 0.0
    %2607 = vmatprep.subr.mxu0 0.0
    %2608 = vmatpush2.msra.mxu0 0.0
    %2609 = vmatprep.subr.mxu0 0.0
    %2610 = vmatpush2.msra.mxu0 0.0
    %2611 = vmatprep.subr.mxu0 0.0
    %2612 = vmatpush2.msra.mxu0 0.0
    %2613 = vmatprep.subr.mxu0 0.0
    %2614 = vmatpush2.msra.mxu0 0.0
    %2615 = vmatprep.subr.mxu0 0.0
    %2616 = vmatpush2.msra.mxu0 0.0
    %2617 = vmatprep.subr.mxu0 0.0
    %2618 = vmatpush2.msra.mxu0 0.0
    %2619 = vmatprep.subr.mxu0 0.0
    %2620 = vmatpush2.msra.mxu0 0.0
    %2621 = vmatprep.subr.mxu0 0.0
    %2622 = vmatpush2.msra.mxu0 0.0
    %2623 = vmatprep.subr.mxu0 0.0
    %2624 = vmatpush2.msra.mxu0 0.0
    %2625 = vmatprep.mubr.f32.mxu0 0.0
    %2626 = vmatmul.mubr.f32.gmra.mxu0 %v2559
    %v2627 = vpop.f32.mrf.mxu0
    %v2628 = vadd.f32 0.0, %v2627
    %v2629 = vpop.f32.mrf.mxu0
    %2630 = vdwg.mxu0
    %2631 = vrot.lane.b32.xlu0 %v2123, 104
    %v2632 = vpop.permute.xlu0 %2631
    %2633 = vrot.lane.b32.xlu0 %v2123, 72
    %v2634 = vpop.permute.xlu0 %2633
    %v2635 = vsel %vm276, %v2632, 0
    %v2637 = vsel %vm276, %v2634, 0
    %2639 = vmatprep.subr.mxu0 0.0
    %2640 = vmatpush1.xpose.msra.mxu0 0.0
    %2641 = vmatprep.subr.mxu0 0.0
    %2642 = vmatpush1.xpose.msra.mxu0 0.0
    %2643 = vmatprep.subr.mxu0 0.0
    %2644 = vmatpush1.xpose.msra.mxu0 0.0
    %2645 = vmatprep.subr.mxu0 0.0
    %2646 = vmatpush1.xpose.msra.mxu0 0.0
    %2647 = vmatprep.subr.mxu0 0.0
    %2648 = vmatpush1.xpose.msra.mxu0 0.0
    %2649 = vmatprep.subr.mxu0 0.0
    %2650 = vmatpush1.xpose.msra.mxu0 0.0
    %2651 = vmatprep.subr.mxu0 0.0
    %2652 = vmatpush1.xpose.msra.mxu0 0.0
    %2653 = vmatprep.subr.mxu0 0.0
    %2654 = vmatpush1.xpose.msra.mxu0 0.0
    %2655 = vmatprep.subr.mxu0 0.0
    %2656 = vmatpush1.xpose.msra.mxu0 0.0
    %2657 = vmatprep.subr.mxu0 0.0
    %2658 = vmatpush1.xpose.msra.mxu0 0.0
    %2659 = vmatprep.subr.mxu0 0.0
    %2660 = vmatpush1.xpose.msra.mxu0 0.0
    %2661 = vmatprep.subr.mxu0 0.0
    %2662 = vmatpush1.xpose.msra.mxu0 0.0
    %2663 = vmatprep.subr.mxu0 0.0
    %2664 = vmatpush1.xpose.msra.mxu0 0.0
    %2665 = vmatprep.subr.mxu0 0.0
    %2666 = vmatpush1.xpose.msra.mxu0 0.0
    %2667 = vmatprep.subr.mxu0 0.0
    %2668 = vmatpush1.xpose.msra.mxu0 0.0
    %2669 = vmatprep.subr.mxu0 0.0
    %2670 = vmatpush1.xpose.msra.mxu0 %v2637
    %2671 = vmatprep.subr.mxu0 0.0
    %2672 = vmatpush2.xpose.msra.mxu0 0.0
    %2673 = vmatprep.subr.mxu0 0.0
    %2674 = vmatpush2.xpose.msra.mxu0 0.0
    %2675 = vmatprep.subr.mxu0 0.0
    %2676 = vmatpush2.xpose.msra.mxu0 0.0
    %2677 = vmatprep.subr.mxu0 0.0
    %2678 = vmatpush2.xpose.msra.mxu0 0.0
    %2679 = vmatprep.subr.mxu0 0.0
    %2680 = vmatpush2.xpose.msra.mxu0 0.0
    %2681 = vmatprep.subr.mxu0 0.0
    %2682 = vmatpush2.xpose.msra.mxu0 0.0
    %2683 = vmatprep.subr.mxu0 0.0
    %2684 = vmatpush2.xpose.msra.mxu0 0.0
    %2685 = vmatprep.subr.mxu0 0.0
    %2686 = vmatpush2.xpose.msra.mxu0 0.0
    %2687 = vmatprep.subr.mxu0 0.0
    %2688 = vmatpush2.xpose.msra.mxu0 0.0
    %2689 = vmatprep.subr.mxu0 0.0
    %2690 = vmatpush2.xpose.msra.mxu0 0.0
    %2691 = vmatprep.subr.mxu0 0.0
    %2692 = vmatpush2.xpose.msra.mxu0 0.0
    %2693 = vmatprep.subr.mxu0 0.0
    %2694 = vmatpush2.xpose.msra.mxu0 0.0
    %2695 = vmatprep.subr.mxu0 0.0
    %2696 = vmatpush2.xpose.msra.mxu0 0.0
    %2697 = vmatprep.subr.mxu0 0.0
    %2698 = vmatpush2.xpose.msra.mxu0 0.0
    %2699 = vmatprep.subr.mxu0 0.0
    %2700 = vmatpush2.xpose.msra.mxu0 0.0
    %2701 = vmatprep.subr.mxu0 0.0
    %2702 = vmatpush2.xpose.msra.mxu0 0.0
    %2703 = vmatprep.mubr.f32.mxu0 0.0
    %2704 = vmatmul.mubr.f32.gmra.mxu0 %v2635
    %v2705 = vpop.f32.mrf.mxu0
    %v2706 = vadd.f32 0.0, %v2705
    %v2707 = vpop.f32.mrf.mxu0
    %2708 = vdwg.mxu0
    %v2709 = vmul.f32 %v2706, 0.35355338
    %v2710 = vadd.f32 %v2709, %v355
    %v2711 = vsel %vm276, %v2710, -inf
    %2712 = vmax.xlane.f32.xlu0 %v2711
    %v2713 = vpop.xlane.xlu0 %2712
    %v2714 = vsub.f32 %v2710, %v2713
    %v2715 = vmul.f32 %v2714, 1.442695
    %v2716 = vpow.pop %v2715
    %v2717 = vsel %vm276, %v2716, 0.0
    %2718 = vadd.xlane.f32.xlu0 %v2717
    %v2719 = vpop.xlane.xlu0 %2718
    %v2720 = vrcp.pop %v2719
    %v2721 = vmul.f32 %v2716, %v2720
    %2722 = vrot.lane.b32.xlu0 %v2123, 40
    %v2723 = vpop.permute.xlu0 %2722
    %v2726 = vsel %vm276, %v2721, 0
    %2728 = vmatprep.subr.mxu0 0.0
    %2729 = vmatpush1.msra.mxu0 0.0
    %2730 = vmatprep.subr.mxu0 0.0
    %2731 = vmatpush1.msra.mxu0 0.0
    %2732 = vmatprep.subr.mxu0 0.0
    %2733 = vmatpush1.msra.mxu0 0.0
    %2734 = vmatprep.subr.mxu0 0.0
    %2735 = vmatpush1.msra.mxu0 0.0
    %2736 = vmatprep.subr.mxu0 0.0
    %2737 = vmatpush1.msra.mxu0 0.0
    %2738 = vmatprep.subr.mxu0 0.0
    %2739 = vmatpush1.msra.mxu0 0.0
    %2740 = vmatprep.subr.mxu0 0.0
    %2741 = vmatpush1.msra.mxu0 0.0
    %2742 = vmatprep.subr.mxu0 0.0
    %2743 = vmatpush1.msra.mxu0 0.0
    %2744 = vmatprep.subr.mxu0 0.0
    %2745 = vmatpush1.msra.mxu0 0.0
    %2746 = vmatprep.subr.mxu0 0.0
    %2747 = vmatpush1.msra.mxu0 0.0
    %2748 = vmatprep.subr.mxu0 0.0
    %2749 = vmatpush1.msra.mxu0 0.0
    %2750 = vmatprep.subr.mxu0 0.0
    %2751 = vmatpush1.msra.mxu0 0.0
    %2752 = vmatprep.subr.mxu0 0.0
    %2753 = vmatpush1.msra.mxu0 0.0
    %2754 = vmatprep.subr.mxu0 0.0
    %2755 = vmatpush1.msra.mxu0 0.0
    %2756 = vmatprep.subr.mxu0 0.0
    %2757 = vmatpush1.msra.mxu0 0.0
    %2758 = vmatprep.subr.mxu0 0.0
    %2759 = vmatpush1.msra.mxu0 %v2723
    %2760 = vmatprep.subr.mxu0 0.0
    %2761 = vmatpush2.msra.mxu0 0.0
    %2762 = vmatprep.subr.mxu0 0.0
    %2763 = vmatpush2.msra.mxu0 0.0
    %2764 = vmatprep.subr.mxu0 0.0
    %2765 = vmatpush2.msra.mxu0 0.0
    %2766 = vmatprep.subr.mxu0 0.0
    %2767 = vmatpush2.msra.mxu0 0.0
    %2768 = vmatprep.subr.mxu0 0.0
    %2769 = vmatpush2.msra.mxu0 0.0
    %2770 = vmatprep.subr.mxu0 0.0
    %2771 = vmatpush2.msra.mxu0 0.0
    %2772 = vmatprep.subr.mxu0 0.0
    %2773 = vmatpush2.msra.mxu0 0.0
    %2774 = vmatprep.subr.mxu0 0.0
    %2775 = vmatpush2.msra.mxu0 0.0
    %2776 = vmatprep.subr.mxu0 0.0
    %2777 = vmatpush2.msra.mxu0 0.0
    %2778 = vmatprep.subr.mxu0 0.0
    %2779 = vmatpush2.msra.mxu0 0.0
    %2780 = vmatprep.subr.mxu0 0.0
    %2781 = vmatpush2.msra.mxu0 0.0
    %2782 = vmatprep.subr.mxu0 0.0
    %2783 = vmatpush2.msra.mxu0 0.0
    %2784 = vmatprep.subr.mxu0 0.0
    %2785 = vmatpush2.msra.mxu0 0.0
    %2786 = vmatprep.subr.mxu0 0.0
    %2787 = vmatpush2.msra.mxu0 0.0
    %2788 = vmatprep.subr.mxu0 0.0
    %2789 = vmatpush2.msra.mxu0 0.0
    %2790 = vmatprep.subr.mxu0 0.0
    %2791 = vmatpush2.msra.mxu0 0.0
    %2792 = vmatprep.mubr.f32.mxu0 0.0
    %2793 = vmatmul.mubr.f32.gmra.mxu0 %v2726
    %v2794 = vpop.f32.mrf.mxu0
    %v2795 = vadd.f32 0.0, %v2794
    %v2796 = vpop.f32.mrf.mxu0
    %2797 = vdwg.mxu0
    %2799 = vrot.lane.b32.xlu0 %v2461, 8
    %v2800 = vpop.permute.xlu0 %2799
    %2803 = vrot.lane.b32.xlu0 %v2628, 16
    %v2804 = vpop.permute.xlu0 %2803
    %2807 = vrot.lane.b32.xlu0 %v2795, 24
    %v2808 = vpop.permute.xlu0 %2807
    %v2810 = vsel %vm276, %v2294, %v2800
    %v2811 = vsel %vm958, %v2810, %v2804
    %v2812 = vsel %vm960, %v2811, %v2808
    %2814 = vrot.lane.b32.xlu0 %v2128, 96
    %v2815 = vpop.permute.xlu0 %2814
    %v2816 = vsel %vm276, %v2128, 0
    %v2818 = vsel %vm276, %v2815, 0
    %2820 = vmatprep.subr.mxu0 0.0
    %2821 = vmatpush1.xpose.msra.mxu0 0.0
    %2822 = vmatprep.subr.mxu0 0.0
    %2823 = vmatpush1.xpose.msra.mxu0 0.0
    %2824 = vmatprep.subr.mxu0 0.0
    %2825 = vmatpush1.xpose.msra.mxu0 0.0
    %2826 = vmatprep.subr.mxu0 0.0
    %2827 = vmatpush1.xpose.msra.mxu0 0.0
    %2828 = vmatprep.subr.mxu0 0.0
    %2829 = vmatpush1.xpose.msra.mxu0 0.0
    %2830 = vmatprep.subr.mxu0 0.0
    %2831 = vmatpush1.xpose.msra.mxu0 0.0
    %2832 = vmatprep.subr.mxu0 0.0
    %2833 = vmatpush1.xpose.msra.mxu0 0.0
    %2834 = vmatprep.subr.mxu0 0.0
    %2835 = vmatpush1.xpose.msra.mxu0 0.0
    %2836 = vmatprep.subr.mxu0 0.0
    %2837 = vmatpush1.xpose.msra.mxu0 0.0
    %2838 = vmatprep.subr.mxu0 0.0
    %2839 = vmatpush1.xpose.msra.mxu0 0.0
    %2840 = vmatprep.subr.mxu0 0.0
    %2841 = vmatpush1.xpose.msra.mxu0 0.0
    %2842 = vmatprep.subr.mxu0 0.0
    %2843 = vmatpush1.xpose.msra.mxu0 0.0
    %2844 = vmatprep.subr.mxu0 0.0
    %2845 = vmatpush1.xpose.msra.mxu0 0.0
    %2846 = vmatprep.subr.mxu0 0.0
    %2847 = vmatpush1.xpose.msra.mxu0 0.0
    %2848 = vmatprep.subr.mxu0 0.0
    %2849 = vmatpush1.xpose.msra.mxu0 0.0
    %2850 = vmatprep.subr.mxu0 0.0
    %2851 = vmatpush1.xpose.msra.mxu0 %v2818
    %2852 = vmatprep.subr.mxu0 0.0
    %2853 = vmatpush2.xpose.msra.mxu0 0.0
    %2854 = vmatprep.subr.mxu0 0.0
    %2855 = vmatpush2.xpose.msra.mxu0 0.0
    %2856 = vmatprep.subr.mxu0 0.0
    %2857 = vmatpush2.xpose.msra.mxu0 0.0
    %2858 = vmatprep.subr.mxu0 0.0
    %2859 = vmatpush2.xpose.msra.mxu0 0.0
    %2860 = vmatprep.subr.mxu0 0.0
    %2861 = vmatpush2.xpose.msra.mxu0 0.0
    %2862 = vmatprep.subr.mxu0 0.0
    %2863 = vmatpush2.xpose.msra.mxu0 0.0
    %2864 = vmatprep.subr.mxu0 0.0
    %2865 = vmatpush2.xpose.msra.mxu0 0.0
    %2866 = vmatprep.subr.mxu0 0.0
    %2867 = vmatpush2.xpose.msra.mxu0 0.0
    %2868 = vmatprep.subr.mxu0 0.0
    %2869 = vmatpush2.xpose.msra.mxu0 0.0
    %2870 = vmatprep.subr.mxu0 0.0
    %2871 = vmatpush2.xpose.msra.mxu0 0.0
    %2872 = vmatprep.subr.mxu0 0.0
    %2873 = vmatpush2.xpose.msra.mxu0 0.0
    %2874 = vmatprep.subr.mxu0 0.0
    %2875 = vmatpush2.xpose.msra.mxu0 0.0
    %2876 = vmatprep.subr.mxu0 0.0
    %2877 = vmatpush2.xpose.msra.mxu0 0.0
    %2878 = vmatprep.subr.mxu0 0.0
    %2879 = vmatpush2.xpose.msra.mxu0 0.0
    %2880 = vmatprep.subr.mxu0 0.0
    %2881 = vmatpush2.xpose.msra.mxu0 0.0
    %2882 = vmatprep.subr.mxu0 0.0
    %2883 = vmatpush2.xpose.msra.mxu0 0.0
    %2884 = vmatprep.mubr.f32.mxu0 0.0
    %2885 = vmatmul.mubr.f32.gmra.mxu0 %v2816
    %v2886 = vpop.f32.mrf.mxu0
    %v2887 = vadd.f32 0.0, %v2886
    %v2888 = vpop.f32.mrf.mxu0
    %2889 = vdwg.mxu0
    %v2890 = vmul.f32 %v2887, 0.35355338
    %v2891 = vadd.f32 %v2890, %v1043
    %v2892 = vsel %vm276, %v2891, -inf
    %2893 = vmax.xlane.f32.xlu0 %v2892
    %v2894 = vpop.xlane.xlu0 %2893
    %v2895 = vsub.f32 %v2891, %v2894
    %v2896 = vmul.f32 %v2895, 1.442695
    %v2897 = vpow.pop %v2896
    %v2898 = vsel %vm276, %v2897, 0.0
    %2899 = vadd.xlane.f32.xlu0 %v2898
    %v2900 = vpop.xlane.xlu0 %2899
    %v2901 = vrcp.pop %v2900
    %v2902 = vmul.f32 %v2897, %v2901
    %2903 = vrot.lane.b32.xlu0 %v2128, 64
    %v2904 = vpop.permute.xlu0 %2903
    %v2907 = vsel %vm276, %v2902, 0
    %2909 = vmatprep.subr.mxu0 0.0
    %2910 = vmatpush1.msra.mxu0 0.0
    %2911 = vmatprep.subr.mxu0 0.0
    %2912 = vmatpush1.msra.mxu0 0.0
    %2913 = vmatprep.subr.mxu0 0.0
    %2914 = vmatpush1.msra.mxu0 0.0
    %2915 = vmatprep.subr.mxu0 0.0
    %2916 = vmatpush1.msra.mxu0 0.0
    %2917 = vmatprep.subr.mxu0 0.0
    %2918 = vmatpush1.msra.mxu0 0.0
    %2919 = vmatprep.subr.mxu0 0.0
    %2920 = vmatpush1.msra.mxu0 0.0
    %2921 = vmatprep.subr.mxu0 0.0
    %2922 = vmatpush1.msra.mxu0 0.0
    %2923 = vmatprep.subr.mxu0 0.0
    %2924 = vmatpush1.msra.mxu0 0.0
    %2925 = vmatprep.subr.mxu0 0.0
    %2926 = vmatpush1.msra.mxu0 0.0
    %2927 = vmatprep.subr.mxu0 0.0
    %2928 = vmatpush1.msra.mxu0 0.0
    %2929 = vmatprep.subr.mxu0 0.0
    %2930 = vmatpush1.msra.mxu0 0.0
    %2931 = vmatprep.subr.mxu0 0.0
    %2932 = vmatpush1.msra.mxu0 0.0
    %2933 = vmatprep.subr.mxu0 0.0
    %2934 = vmatpush1.msra.mxu0 0.0
    %2935 = vmatprep.subr.mxu0 0.0
    %2936 = vmatpush1.msra.mxu0 0.0
    %2937 = vmatprep.subr.mxu0 0.0
    %2938 = vmatpush1.msra.mxu0 0.0
    %2939 = vmatprep.subr.mxu0 0.0
    %2940 = vmatpush1.msra.mxu0 %v2904
    %2941 = vmatprep.subr.mxu0 0.0
    %2942 = vmatpush2.msra.mxu0 0.0
    %2943 = vmatprep.subr.mxu0 0.0
    %2944 = vmatpush2.msra.mxu0 0.0
    %2945 = vmatprep.subr.mxu0 0.0
    %2946 = vmatpush2.msra.mxu0 0.0
    %2947 = vmatprep.subr.mxu0 0.0
    %2948 = vmatpush2.msra.mxu0 0.0
    %2949 = vmatprep.subr.mxu0 0.0
    %2950 = vmatpush2.msra.mxu0 0.0
    %2951 = vmatprep.subr.mxu0 0.0
    %2952 = vmatpush2.msra.mxu0 0.0
    %2953 = vmatprep.subr.mxu0 0.0
    %2954 = vmatpush2.msra.mxu0 0.0
    %2955 = vmatprep.subr.mxu0 0.0
    %2956 = vmatpush2.msra.mxu0 0.0
    %2957 = vmatprep.subr.mxu0 0.0
    %2958 = vmatpush2.msra.mxu0 0.0
    %2959 = vmatprep.subr.mxu0 0.0
    %2960 = vmatpush2.msra.mxu0 0.0
    %2961 = vmatprep.subr.mxu0 0.0
    %2962 = vmatpush2.msra.mxu0 0.0
    %2963 = vmatprep.subr.mxu0 0.0
    %2964 = vmatpush2.msra.mxu0 0.0
    %2965 = vmatprep.subr.mxu0 0.0
    %2966 = vmatpush2.msra.mxu0 0.0
    %2967 = vmatprep.subr.mxu0 0.0
    %2968 = vmatpush2.msra.mxu0 0.0
    %2969 = vmatprep.subr.mxu0 0.0
    %2970 = vmatpush2.msra.mxu0 0.0
    %2971 = vmatprep.subr.mxu0 0.0
    %2972 = vmatpush2.msra.mxu0 0.0
    %2973 = vmatprep.mubr.f32.mxu0 0.0
    %2974 = vmatmul.mubr.f32.gmra.mxu0 %v2907
    %v2975 = vpop.f32.mrf.mxu0
    %v2976 = vadd.f32 0.0, %v2975
    %v2977 = vpop.f32.mrf.mxu0
    %2978 = vdwg.mxu0
    %2979 = vrot.lane.b32.xlu0 %v2128, 120
    %v2980 = vpop.permute.xlu0 %2979
    %2981 = vrot.lane.b32.xlu0 %v2128, 88
    %v2982 = vpop.permute.xlu0 %2981
    %v2983 = vsel %vm276, %v2980, 0
    %v2985 = vsel %vm276, %v2982, 0
    %2987 = vmatprep.subr.mxu0 0.0
    %2988 = vmatpush1.xpose.msra.mxu0 0.0
    %2989 = vmatprep.subr.mxu0 0.0
    %2990 = vmatpush1.xpose.msra.mxu0 0.0
    %2991 = vmatprep.subr.mxu0 0.0
    %2992 = vmatpush1.xpose.msra.mxu0 0.0
    %2993 = vmatprep.subr.mxu0 0.0
    %2994 = vmatpush1.xpose.msra.mxu0 0.0
    %2995 = vmatprep.subr.mxu0 0.0
    %2996 = vmatpush1.xpose.msra.mxu0 0.0
    %2997 = vmatprep.subr.mxu0 0.0
    %2998 = vmatpush1.xpose.msra.mxu0 0.0
    %2999 = vmatprep.subr.mxu0 0.0
    %3000 = vmatpush1.xpose.msra.mxu0 0.0
    %3001 = vmatprep.subr.mxu0 0.0
    %3002 = vmatpush1.xpose.msra.mxu0 0.0
    %3003 = vmatprep.subr.mxu0 0.0
    %3004 = vmatpush1.xpose.msra.mxu0 0.0
    %3005 = vmatprep.subr.mxu0 0.0
    %3006 = vmatpush1.xpose.msra.mxu0 0.0
    %3007 = vmatprep.subr.mxu0 0.0
    %3008 = vmatpush1.xpose.msra.mxu0 0.0
    %3009 = vmatprep.subr.mxu0 0.0
    %3010 = vmatpush1.xpose.msra.mxu0 0.0
    %3011 = vmatprep.subr.mxu0 0.0
    %3012 = vmatpush1.xpose.msra.mxu0 0.0
    %3013 = vmatprep.subr.mxu0 0.0
    %3014 = vmatpush1.xpose.msra.mxu0 0.0
    %3015 = vmatprep.subr.mxu0 0.0
    %3016 = vmatpush1.xpose.msra.mxu0 0.0
    %3017 = vmatprep.subr.mxu0 0.0
    %3018 = vmatpush1.xpose.msra.mxu0 %v2985
    %3019 = vmatprep.subr.mxu0 0.0
    %3020 = vmatpush2.xpose.msra.mxu0 0.0
    %3021 = vmatprep.subr.mxu0 0.0
    %3022 = vmatpush2.xpose.msra.mxu0 0.0
    %3023 = vmatprep.subr.mxu0 0.0
    %3024 = vmatpush2.xpose.msra.mxu0 0.0
    %3025 = vmatprep.subr.mxu0 0.0
    %3026 = vmatpush2.xpose.msra.mxu0 0.0
    %3027 = vmatprep.subr.mxu0 0.0
    %3028 = vmatpush2.xpose.msra.mxu0 0.0
    %3029 = vmatprep.subr.mxu0 0.0
    %3030 = vmatpush2.xpose.msra.mxu0 0.0
    %3031 = vmatprep.subr.mxu0 0.0
    %3032 = vmatpush2.xpose.msra.mxu0 0.0
    %3033 = vmatprep.subr.mxu0 0.0
    %3034 = vmatpush2.xpose.msra.mxu0 0.0
    %3035 = vmatprep.subr.mxu0 0.0
    %3036 = vmatpush2.xpose.msra.mxu0 0.0
    %3037 = vmatprep.subr.mxu0 0.0
    %3038 = vmatpush2.xpose.msra.mxu0 0.0
    %3039 = vmatprep.subr.mxu0 0.0
    %3040 = vmatpush2.xpose.msra.mxu0 0.0
    %3041 = vmatprep.subr.mxu0 0.0
    %3042 = vmatpush2.xpose.msra.mxu0 0.0
    %3043 = vmatprep.subr.mxu0 0.0
    %3044 = vmatpush2.xpose.msra.mxu0 0.0
    %3045 = vmatprep.subr.mxu0 0.0
    %3046 = vmatpush2.xpose.msra.mxu0 0.0
    %3047 = vmatprep.subr.mxu0 0.0
    %3048 = vmatpush2.xpose.msra.mxu0 0.0
    %3049 = vmatprep.subr.mxu0 0.0
    %3050 = vmatpush2.xpose.msra.mxu0 0.0
    %3051 = vmatprep.mubr.f32.mxu0 0.0
    %3052 = vmatmul.mubr.f32.gmra.mxu0 %v2983
    %v3053 = vpop.f32.mrf.mxu0
    %v3054 = vadd.f32 0.0, %v3053
    %v3055 = vpop.f32.mrf.mxu0
    %3056 = vdwg.mxu0
    %v3057 = vmul.f32 %v3054, 0.35355338
    %v3058 = vadd.f32 %v3057, %v1043
    %v3059 = vsel %vm276, %v3058, -inf
    %3060 = vmax.xlane.f32.xlu0 %v3059
    %v3061 = vpop.xlane.xlu0 %3060
    %v3062 = vsub.f32 %v3058, %v3061
    %v3063 = vmul.f32 %v3062, 1.442695
    %v3064 = vpow.pop %v3063
    %v3065 = vsel %vm276, %v3064, 0.0
    %3066 = vadd.xlane.f32.xlu0 %v3065
    %v3067 = vpop.xlane.xlu0 %3066
    %v3068 = vrcp.pop %v3067
    %v3069 = vmul.f32 %v3064, %v3068
    %3070 = vrot.lane.b32.xlu0 %v2128, 56
    %v3071 = vpop.permute.xlu0 %3070
    %v3074 = vsel %vm276, %v3069, 0
    %3076 = vmatprep.subr.mxu0 0.0
    %3077 = vmatpush1.msra.mxu0 0.0
    %3078 = vmatprep.subr.mxu0 0.0
    %3079 = vmatpush1.msra.mxu0 0.0
    %3080 = vmatprep.subr.mxu0 0.0
    %3081 = vmatpush1.msra.mxu0 0.0
    %3082 = vmatprep.subr.mxu0 0.0
    %3083 = vmatpush1.msra.mxu0 0.0
    %3084 = vmatprep.subr.mxu0 0.0
    %3085 = vmatpush1.msra.mxu0 0.0
    %3086 = vmatprep.subr.mxu0 0.0
    %3087 = vmatpush1.msra.mxu0 0.0
    %3088 = vmatprep.subr.mxu0 0.0
    %3089 = vmatpush1.msra.mxu0 0.0
    %3090 = vmatprep.subr.mxu0 0.0
    %3091 = vmatpush1.msra.mxu0 0.0
    %3092 = vmatprep.subr.mxu0 0.0
    %3093 = vmatpush1.msra.mxu0 0.0
    %3094 = vmatprep.subr.mxu0 0.0
    %3095 = vmatpush1.msra.mxu0 0.0
    %3096 = vmatprep.subr.mxu0 0.0
    %3097 = vmatpush1.msra.mxu0 0.0
    %3098 = vmatprep.subr.mxu0 0.0
    %3099 = vmatpush1.msra.mxu0 0.0
    %3100 = vmatprep.subr.mxu0 0.0
    %3101 = vmatpush1.msra.mxu0 0.0
    %3102 = vmatprep.subr.mxu0 0.0
    %3103 = vmatpush1.msra.mxu0 0.0
    %3104 = vmatprep.subr.mxu0 0.0
    %3105 = vmatpush1.msra.mxu0 0.0
    %3106 = vmatprep.subr.mxu0 0.0
    %3107 = vmatpush1.msra.mxu0 %v3071
    %3108 = vmatprep.subr.mxu0 0.0
    %3109 = vmatpush2.msra.mxu0 0.0
    %3110 = vmatprep.subr.mxu0 0.0
    %3111 = vmatpush2.msra.mxu0 0.0
    %3112 = vmatprep.subr.mxu0 0.0
    %3113 = vmatpush2.msra.mxu0 0.0
    %3114 = vmatprep.subr.mxu0 0.0
    %3115 = vmatpush2.msra.mxu0 0.0
    %3116 = vmatprep.subr.mxu0 0.0
    %3117 = vmatpush2.msra.mxu0 0.0
    %3118 = vmatprep.subr.mxu0 0.0
    %3119 = vmatpush2.msra.mxu0 0.0
    %3120 = vmatprep.subr.mxu0 0.0
    %3121 = vmatpush2.msra.mxu0 0.0
    %3122 = vmatprep.subr.mxu0 0.0
    %3123 = vmatpush2.msra.mxu0 0.0
    %3124 = vmatprep.subr.mxu0 0.0
    %3125 = vmatpush2.msra.mxu0 0.0
    %3126 = vmatprep.subr.mxu0 0.0
    %3127 = vmatpush2.msra.mxu0 0.0
    %3128 = vmatprep.subr.mxu0 0.0
    %3129 = vmatpush2.msra.mxu0 0.0
    %3130 = vmatprep.subr.mxu0 0.0
    %3131 = vmatpush2.msra.mxu0 0.0
    %3132 = vmatprep.subr.mxu0 0.0
    %3133 = vmatpush2.msra.mxu0 0.0
    %3134 = vmatprep.subr.mxu0 0.0
    %3135 = vmatpush2.msra.mxu0 0.0
    %3136 = vmatprep.subr.mxu0 0.0
    %3137 = vmatpush2.msra.mxu0 0.0
    %3138 = vmatprep.subr.mxu0 0.0
    %3139 = vmatpush2.msra.mxu0 0.0
    %3140 = vmatprep.mubr.f32.mxu0 0.0
    %3141 = vmatmul.mubr.f32.gmra.mxu0 %v3074
    %v3142 = vpop.f32.mrf.mxu0
    %v3143 = vadd.f32 0.0, %v3142
    %v3144 = vpop.f32.mrf.mxu0
    %3145 = vdwg.mxu0
    %3146 = vrot.lane.b32.xlu0 %v2128, 112
    %v3147 = vpop.permute.xlu0 %3146
    %3148 = vrot.lane.b32.xlu0 %v2128, 80
    %v3149 = vpop.permute.xlu0 %3148
    %v3150 = vsel %vm276, %v3147, 0
    %v3152 = vsel %vm276, %v3149, 0
    %3154 = vmatprep.subr.mxu0 0.0
    %3155 = vmatpush1.xpose.msra.mxu0 0.0
    %3156 = vmatprep.subr.mxu0 0.0
    %3157 = vmatpush1.xpose.msra.mxu0 0.0
    %3158 = vmatprep.subr.mxu0 0.0
    %3159 = vmatpush1.xpose.msra.mxu0 0.0
    %3160 = vmatprep.subr.mxu0 0.0
    %3161 = vmatpush1.xpose.msra.mxu0 0.0
    %3162 = vmatprep.subr.mxu0 0.0
    %3163 = vmatpush1.xpose.msra.mxu0 0.0
    %3164 = vmatprep.subr.mxu0 0.0
    %3165 = vmatpush1.xpose.msra.mxu0 0.0
    %3166 = vmatprep.subr.mxu0 0.0
    %3167 = vmatpush1.xpose.msra.mxu0 0.0
    %3168 = vmatprep.subr.mxu0 0.0
    %3169 = vmatpush1.xpose.msra.mxu0 0.0
    %3170 = vmatprep.subr.mxu0 0.0
    %3171 = vmatpush1.xpose.msra.mxu0 0.0
    %3172 = vmatprep.subr.mxu0 0.0
    %3173 = vmatpush1.xpose.msra.mxu0 0.0
    %3174 = vmatprep.subr.mxu0 0.0
    %3175 = vmatpush1.xpose.msra.mxu0 0.0
    %3176 = vmatprep.subr.mxu0 0.0
    %3177 = vmatpush1.xpose.msra.mxu0 0.0
    %3178 = vmatprep.subr.mxu0 0.0
    %3179 = vmatpush1.xpose.msra.mxu0 0.0
    %3180 = vmatprep.subr.mxu0 0.0
    %3181 = vmatpush1.xpose.msra.mxu0 0.0
    %3182 = vmatprep.subr.mxu0 0.0
    %3183 = vmatpush1.xpose.msra.mxu0 0.0
    %3184 = vmatprep.subr.mxu0 0.0
    %3185 = vmatpush1.xpose.msra.mxu0 %v3152
    %3186 = vmatprep.subr.mxu0 0.0
    %3187 = vmatpush2.xpose.msra.mxu0 0.0
    %3188 = vmatprep.subr.mxu0 0.0
    %3189 = vmatpush2.xpose.msra.mxu0 0.0
    %3190 = vmatprep.subr.mxu0 0.0
    %3191 = vmatpush2.xpose.msra.mxu0 0.0
    %3192 = vmatprep.subr.mxu0 0.0
    %3193 = vmatpush2.xpose.msra.mxu0 0.0
    %3194 = vmatprep.subr.mxu0 0.0
    %3195 = vmatpush2.xpose.msra.mxu0 0.0
    %3196 = vmatprep.subr.mxu0 0.0
    %3197 = vmatpush2.xpose.msra.mxu0 0.0
    %3198 = vmatprep.subr.mxu0 0.0
    %3199 = vmatpush2.xpose.msra.mxu0 0.0
    %3200 = vmatprep.subr.mxu0 0.0
    %3201 = vmatpush2.xpose.msra.mxu0 0.0
    %3202 = vmatprep.subr.mxu0 0.0
    %3203 = vmatpush2.xpose.msra.mxu0 0.0
    %3204 = vmatprep.subr.mxu0 0.0
    %3205 = vmatpush2.xpose.msra.mxu0 0.0
    %3206 = vmatprep.subr.mxu0 0.0
    %3207 = vmatpush2.xpose.msra.mxu0 0.0
    %3208 = vmatprep.subr.mxu0 0.0
    %3209 = vmatpush2.xpose.msra.mxu0 0.0
    %3210 = vmatprep.subr.mxu0 0.0
    %3211 = vmatpush2.xpose.msra.mxu0 0.0
    %3212 = vmatprep.subr.mxu0 0.0
    %3213 = vmatpush2.xpose.msra.mxu0 0.0
    %3214 = vmatprep.subr.mxu0 0.0
    %3215 = vmatpush2.xpose.msra.mxu0 0.0
    %3216 = vmatprep.subr.mxu0 0.0
    %3217 = vmatpush2.xpose.msra.mxu0 0.0
    %3218 = vmatprep.mubr.f32.mxu0 0.0
    %3219 = vmatmul.mubr.f32.gmra.mxu0 %v3150
    %v3220 = vpop.f32.mrf.mxu0
    %v3221 = vadd.f32 0.0, %v3220
    %v3222 = vpop.f32.mrf.mxu0
    %3223 = vdwg.mxu0
    %v3224 = vmul.f32 %v3221, 0.35355338
    %v3225 = vadd.f32 %v3224, %v1043
    %v3226 = vsel %vm276, %v3225, -inf
    %3227 = vmax.xlane.f32.xlu0 %v3226
    %v3228 = vpop.xlane.xlu0 %3227
    %v3229 = vsub.f32 %v3225, %v3228
    %v3230 = vmul.f32 %v3229, 1.442695
    %v3231 = vpow.pop %v3230
    %v3232 = vsel %vm276, %v3231, 0.0
    %3233 = vadd.xlane.f32.xlu0 %v3232
    %v3234 = vpop.xlane.xlu0 %3233
    %v3235 = vrcp.pop %v3234
    %v3236 = vmul.f32 %v3231, %v3235
    %3237 = vrot.lane.b32.xlu0 %v2128, 48
    %v3238 = vpop.permute.xlu0 %3237
    %v3241 = vsel %vm276, %v3236, 0
    %3243 = vmatprep.subr.mxu0 0.0
    %3244 = vmatpush1.msra.mxu0 0.0
    %3245 = vmatprep.subr.mxu0 0.0
    %3246 = vmatpush1.msra.mxu0 0.0
    %3247 = vmatprep.subr.mxu0 0.0
    %3248 = vmatpush1.msra.mxu0 0.0
    %3249 = vmatprep.subr.mxu0 0.0
    %3250 = vmatpush1.msra.mxu0 0.0
    %3251 = vmatprep.subr.mxu0 0.0
    %3252 = vmatpush1.msra.mxu0 0.0
    %3253 = vmatprep.subr.mxu0 0.0
    %3254 = vmatpush1.msra.mxu0 0.0
    %3255 = vmatprep.subr.mxu0 0.0
    %3256 = vmatpush1.msra.mxu0 0.0
    %3257 = vmatprep.subr.mxu0 0.0
    %3258 = vmatpush1.msra.mxu0 0.0
    %3259 = vmatprep.subr.mxu0 0.0
    %3260 = vmatpush1.msra.mxu0 0.0
    %3261 = vmatprep.subr.mxu0 0.0
    %3262 = vmatpush1.msra.mxu0 0.0
    %3263 = vmatprep.subr.mxu0 0.0
    %3264 = vmatpush1.msra.mxu0 0.0
    %3265 = vmatprep.subr.mxu0 0.0
    %3266 = vmatpush1.msra.mxu0 0.0
    %3267 = vmatprep.subr.mxu0 0.0
    %3268 = vmatpush1.msra.mxu0 0.0
    %3269 = vmatprep.subr.mxu0 0.0
    %3270 = vmatpush1.msra.mxu0 0.0
    %3271 = vmatprep.subr.mxu0 0.0
    %3272 = vmatpush1.msra.mxu0 0.0
    %3273 = vmatprep.subr.mxu0 0.0
    %3274 = vmatpush1.msra.mxu0 %v3238
    %3275 = vmatprep.subr.mxu0 0.0
    %3276 = vmatpush2.msra.mxu0 0.0
    %3277 = vmatprep.subr.mxu0 0.0
    %3278 = vmatpush2.msra.mxu0 0.0
    %3279 = vmatprep.subr.mxu0 0.0
    %3280 = vmatpush2.msra.mxu0 0.0
    %3281 = vmatprep.subr.mxu0 0.0
    %3282 = vmatpush2.msra.mxu0 0.0
    %3283 = vmatprep.subr.mxu0 0.0
    %3284 = vmatpush2.msra.mxu0 0.0
    %3285 = vmatprep.subr.mxu0 0.0
    %3286 = vmatpush2.msra.mxu0 0.0
    %3287 = vmatprep.subr.mxu0 0.0
    %3288 = vmatpush2.msra.mxu0 0.0
    %3289 = vmatprep.subr.mxu0 0.0
    %3290 = vmatpush2.msra.mxu0 0.0
    %3291 = vmatprep.subr.mxu0 0.0
    %3292 = vmatpush2.msra.mxu0 0.0
    %3293 = vmatprep.subr.mxu0 0.0
    %3294 = vmatpush2.msra.mxu0 0.0
    %3295 = vmatprep.subr.mxu0 0.0
    %3296 = vmatpush2.msra.mxu0 0.0
    %3297 = vmatprep.subr.mxu0 0.0
    %3298 = vmatpush2.msra.mxu0 0.0
    %3299 = vmatprep.subr.mxu0 0.0
    %3300 = vmatpush2.msra.mxu0 0.0
    %3301 = vmatprep.subr.mxu0 0.0
    %3302 = vmatpush2.msra.mxu0 0.0
    %3303 = vmatprep.subr.mxu0 0.0
    %3304 = vmatpush2.msra.mxu0 0.0
    %3305 = vmatprep.subr.mxu0 0.0
    %3306 = vmatpush2.msra.mxu0 0.0
    %3307 = vmatprep.mubr.f32.mxu0 0.0
    %3308 = vmatmul.mubr.f32.gmra.mxu0 %v3241
    %v3309 = vpop.f32.mrf.mxu0
    %v3310 = vadd.f32 0.0, %v3309
    %v3311 = vpop.f32.mrf.mxu0
    %3312 = vdwg.mxu0
    %3313 = vrot.lane.b32.xlu0 %v2128, 104
    %v3314 = vpop.permute.xlu0 %3313
    %3315 = vrot.lane.b32.xlu0 %v2128, 72
    %v3316 = vpop.permute.xlu0 %3315
    %v3317 = vsel %vm276, %v3314, 0
    %v3319 = vsel %vm276, %v3316, 0
    %3321 = vmatprep.subr.mxu0 0.0
    %3322 = vmatpush1.xpose.msra.mxu0 0.0
    %3323 = vmatprep.subr.mxu0 0.0
    %3324 = vmatpush1.xpose.msra.mxu0 0.0
    %3325 = vmatprep.subr.mxu0 0.0
    %3326 = vmatpush1.xpose.msra.mxu0 0.0
    %3327 = vmatprep.subr.mxu0 0.0
    %3328 = vmatpush1.xpose.msra.mxu0 0.0
    %3329 = vmatprep.subr.mxu0 0.0
    %3330 = vmatpush1.xpose.msra.mxu0 0.0
    %3331 = vmatprep.subr.mxu0 0.0
    %3332 = vmatpush1.xpose.msra.mxu0 0.0
    %3333 = vmatprep.subr.mxu0 0.0
    %3334 = vmatpush1.xpose.msra.mxu0 0.0
    %3335 = vmatprep.subr.mxu0 0.0
    %3336 = vmatpush1.xpose.msra.mxu0 0.0
    %3337 = vmatprep.subr.mxu0 0.0
    %3338 = vmatpush1.xpose.msra.mxu0 0.0
    %3339 = vmatprep.subr.mxu0 0.0
    %3340 = vmatpush1.xpose.msra.mxu0 0.0
    %3341 = vmatprep.subr.mxu0 0.0
    %3342 = vmatpush1.xpose.msra.mxu0 0.0
    %3343 = vmatprep.subr.mxu0 0.0
    %3344 = vmatpush1.xpose.msra.mxu0 0.0
    %3345 = vmatprep.subr.mxu0 0.0
    %3346 = vmatpush1.xpose.msra.mxu0 0.0
    %3347 = vmatprep.subr.mxu0 0.0
    %3348 = vmatpush1.xpose.msra.mxu0 0.0
    %3349 = vmatprep.subr.mxu0 0.0
    %3350 = vmatpush1.xpose.msra.mxu0 0.0
    %3351 = vmatprep.subr.mxu0 0.0
    %3352 = vmatpush1.xpose.msra.mxu0 %v3319
    %3353 = vmatprep.subr.mxu0 0.0
    %3354 = vmatpush2.xpose.msra.mxu0 0.0
    %3355 = vmatprep.subr.mxu0 0.0
    %3356 = vmatpush2.xpose.msra.mxu0 0.0
    %3357 = vmatprep.subr.mxu0 0.0
    %3358 = vmatpush2.xpose.msra.mxu0 0.0
    %3359 = vmatprep.subr.mxu0 0.0
    %3360 = vmatpush2.xpose.msra.mxu0 0.0
    %3361 = vmatprep.subr.mxu0 0.0
    %3362 = vmatpush2.xpose.msra.mxu0 0.0
    %3363 = vmatprep.subr.mxu0 0.0
    %3364 = vmatpush2.xpose.msra.mxu0 0.0
    %3365 = vmatprep.subr.mxu0 0.0
    %3366 = vmatpush2.xpose.msra.mxu0 0.0
    %3367 = vmatprep.subr.mxu0 0.0
    %3368 = vmatpush2.xpose.msra.mxu0 0.0
    %3369 = vmatprep.subr.mxu0 0.0
    %3370 = vmatpush2.xpose.msra.mxu0 0.0
    %3371 = vmatprep.subr.mxu0 0.0
    %3372 = vmatpush2.xpose.msra.mxu0 0.0
    %3373 = vmatprep.subr.mxu0 0.0
    %3374 = vmatpush2.xpose.msra.mxu0 0.0
    %3375 = vmatprep.subr.mxu0 0.0
    %3376 = vmatpush2.xpose.msra.mxu0 0.0
    %3377 = vmatprep.subr.mxu0 0.0
    %3378 = vmatpush2.xpose.msra.mxu0 0.0
    %3379 = vmatprep.subr.mxu0 0.0
    %3380 = vmatpush2.xpose.msra.mxu0 0.0
    %3381 = vmatprep.subr.mxu0 0.0
    %3382 = vmatpush2.xpose.msra.mxu0 0.0
    %3383 = vmatprep.subr.mxu0 0.0
    %3384 = vmatpush2.xpose.msra.mxu0 0.0
    %3385 = vmatprep.mubr.f32.mxu0 0.0
    %3386 = vmatmul.mubr.f32.gmra.mxu0 %v3317
    %v3387 = vpop.f32.mrf.mxu0
    %v3388 = vadd.f32 0.0, %v3387
    %v3389 = vpop.f32.mrf.mxu0
    %3390 = vdwg.mxu0
    %v3391 = vmul.f32 %v3388, 0.35355338
    %v3392 = vadd.f32 %v3391, %v1043
    %v3393 = vsel %vm276, %v3392, -inf
    %3394 = vmax.xlane.f32.xlu0 %v3393
    %v3395 = vpop.xlane.xlu0 %3394
    %v3396 = vsub.f32 %v3392, %v3395
    %v3397 = vmul.f32 %v3396, 1.442695
    %v3398 = vpow.pop %v3397
    %v3399 = vsel %vm276, %v3398, 0.0
    %3400 = vadd.xlane.f32.xlu0 %v3399
    %v3401 = vpop.xlane.xlu0 %3400
    %v3402 = vrcp.pop %v3401
    %v3403 = vmul.f32 %v3398, %v3402
    %3404 = vrot.lane.b32.xlu0 %v2128, 40
    %v3405 = vpop.permute.xlu0 %3404
    %v3408 = vsel %vm276, %v3403, 0
    %3410 = vmatprep.subr.mxu0 0.0
    %3411 = vmatpush1.msra.mxu0 0.0
    %3412 = vmatprep.subr.mxu0 0.0
    %3413 = vmatpush1.msra.mxu0 0.0
    %3414 = vmatprep.subr.mxu0 0.0
    %3415 = vmatpush1.msra.mxu0 0.0
    %3416 = vmatprep.subr.mxu0 0.0
    %3417 = vmatpush1.msra.mxu0 0.0
    %3418 = vmatprep.subr.mxu0 0.0
    %3419 = vmatpush1.msra.mxu0 0.0
    %3420 = vmatprep.subr.mxu0 0.0
    %3421 = vmatpush1.msra.mxu0 0.0
    %3422 = vmatprep.subr.mxu0 0.0
    %3423 = vmatpush1.msra.mxu0 0.0
    %3424 = vmatprep.subr.mxu0 0.0
    %3425 = vmatpush1.msra.mxu0 0.0
    %3426 = vmatprep.subr.mxu0 0.0
    %3427 = vmatpush1.msra.mxu0 0.0
    %3428 = vmatprep.subr.mxu0 0.0
    %3429 = vmatpush1.msra.mxu0 0.0
    %3430 = vmatprep.subr.mxu0 0.0
    %3431 = vmatpush1.msra.mxu0 0.0
    %3432 = vmatprep.subr.mxu0 0.0
    %3433 = vmatpush1.msra.mxu0 0.0
    %3434 = vmatprep.subr.mxu0 0.0
    %3435 = vmatpush1.msra.mxu0 0.0
    %3436 = vmatprep.subr.mxu0 0.0
    %3437 = vmatpush1.msra.mxu0 0.0
    %3438 = vmatprep.subr.mxu0 0.0
    %3439 = vmatpush1.msra.mxu0 0.0
    %3440 = vmatprep.subr.mxu0 0.0
    %3441 = vmatpush1.msra.mxu0 %v3405
    %3442 = vmatprep.subr.mxu0 0.0
    %3443 = vmatpush2.msra.mxu0 0.0
    %3444 = vmatprep.subr.mxu0 0.0
    %3445 = vmatpush2.msra.mxu0 0.0
    %3446 = vmatprep.subr.mxu0 0.0
    %3447 = vmatpush2.msra.mxu0 0.0
    %3448 = vmatprep.subr.mxu0 0.0
    %3449 = vmatpush2.msra.mxu0 0.0
    %3450 = vmatprep.subr.mxu0 0.0
    %3451 = vmatpush2.msra.mxu0 0.0
    %3452 = vmatprep.subr.mxu0 0.0
    %3453 = vmatpush2.msra.mxu0 0.0
    %3454 = vmatprep.subr.mxu0 0.0
    %3455 = vmatpush2.msra.mxu0 0.0
    %3456 = vmatprep.subr.mxu0 0.0
    %3457 = vmatpush2.msra.mxu0 0.0
    %3458 = vmatprep.subr.mxu0 0.0
    %3459 = vmatpush2.msra.mxu0 0.0
    %3460 = vmatprep.subr.mxu0 0.0
    %3461 = vmatpush2.msra.mxu0 0.0
    %3462 = vmatprep.subr.mxu0 0.0
    %3463 = vmatpush2.msra.mxu0 0.0
    %3464 = vmatprep.subr.mxu0 0.0
    %3465 = vmatpush2.msra.mxu0 0.0
    %3466 = vmatprep.subr.mxu0 0.0
    %3467 = vmatpush2.msra.mxu0 0.0
    %3468 = vmatprep.subr.mxu0 0.0
    %3469 = vmatpush2.msra.mxu0 0.0
    %3470 = vmatprep.subr.mxu0 0.0
    %3471 = vmatpush2.msra.mxu0 0.0
    %3472 = vmatprep.subr.mxu0 0.0
    %3473 = vmatpush2.msra.mxu0 0.0
    %3474 = vmatprep.mubr.f32.mxu0 0.0
    %3475 = vmatmul.mubr.f32.gmra.mxu0 %v3408
    %v3476 = vpop.f32.mrf.mxu0
    %v3477 = vadd.f32 0.0, %v3476
    %v3478 = vpop.f32.mrf.mxu0
    %3479 = vdwg.mxu0
    %3481 = vrot.lane.b32.xlu0 %v3143, 8
    %v3482 = vpop.permute.xlu0 %3481
    %3485 = vrot.lane.b32.xlu0 %v3310, 16
    %v3486 = vpop.permute.xlu0 %3485
    %3489 = vrot.lane.b32.xlu0 %v3477, 24
    %v3490 = vpop.permute.xlu0 %3489
    %v3492 = vsel %vm276, %v2976, %v3482
    %v3493 = vsel %vm958, %v3492, %v3486
    %v3494 = vsel %vm960, %v3493, %v3490
    %s3495 = scalar_lea.vmem %s6, 32
    %v3496 = vld [vmem:[%s3495] sm:$0xff]
    %v3497 = vld [vmem:[%s3495 + $0x8] sm:$0xff]
    %v3498 = vld [vmem:[%s3495 + $0x10] sm:$0xff]
    %v3499 = vld [vmem:[%s3495 + $0x18] sm:$0xff]
    %s3500 = scalar_lea.vmem %s7, 1
    %v3501 = vld [vmem:[%s3500] sm:$0x1]
    %v3503 = vlaneseq
    %v3504 = vshrl.u32 %v3503, 7
    %v3505 = vsub.s32 0, %v3504
    %v3506 = vrot.slane %v3501, %v3505
    %v3509 = vsel %vm191, %v2812, 0
    %v3512 = vsel %vm191, %v3494, 0
    %3514 = vmatprep.subr.mxu0 0.0
    %3515 = vmatpush1.msra.mxu0 0.0
    %3516 = vmatprep.subr.mxu0 0.0
    %3517 = vmatpush1.msra.mxu0 0.0
    %3518 = vmatprep.subr.mxu0 0.0
    %3519 = vmatpush1.msra.mxu0 0.0
    %3520 = vmatprep.subr.mxu0 0.0
    %3521 = vmatpush1.msra.mxu0 0.0
    %3522 = vmatprep.subr.mxu0 0.0
    %3523 = vmatpush1.msra.mxu0 0.0
    %3524 = vmatprep.subr.mxu0 0.0
    %3525 = vmatpush1.msra.mxu0 0.0
    %3526 = vmatprep.subr.mxu0 0.0
    %3527 = vmatpush1.msra.mxu0 0.0
    %3528 = vmatprep.subr.mxu0 0.0
    %3529 = vmatpush1.msra.mxu0 0.0
    %3530 = vmatprep.subr.mxu0 0.0
    %3531 = vmatpush1.msra.mxu0 0.0
    %3532 = vmatprep.subr.mxu0 0.0
    %3533 = vmatpush1.msra.mxu0 0.0
    %3534 = vmatprep.subr.mxu0 0.0
    %3535 = vmatpush1.msra.mxu0 0.0
    %3536 = vmatprep.subr.mxu0 0.0
    %3537 = vmatpush1.msra.mxu0 0.0
    %3538 = vmatprep.subr.mxu0 0.0
    %3539 = vmatpush1.msra.mxu0 %v3499
    %3540 = vmatprep.subr.mxu0 0.0
    %3541 = vmatpush1.msra.mxu0 %v3498
    %3542 = vmatprep.subr.mxu0 0.0
    %3543 = vmatpush1.msra.mxu0 %v3497
    %3544 = vmatprep.subr.mxu0 0.0
    %3545 = vmatpush1.msra.mxu0 %v3496
    %3546 = vmatprep.subr.mxu0 0.0
    %3547 = vmatpush2.msra.mxu0 0.0
    %3548 = vmatprep.subr.mxu0 0.0
    %3549 = vmatpush2.msra.mxu0 0.0
    %3550 = vmatprep.subr.mxu0 0.0
    %3551 = vmatpush2.msra.mxu0 0.0
    %3552 = vmatprep.subr.mxu0 0.0
    %3553 = vmatpush2.msra.mxu0 0.0
    %3554 = vmatprep.subr.mxu0 0.0
    %3555 = vmatpush2.msra.mxu0 0.0
    %3556 = vmatprep.subr.mxu0 0.0
    %3557 = vmatpush2.msra.mxu0 0.0
    %3558 = vmatprep.subr.mxu0 0.0
    %3559 = vmatpush2.msra.mxu0 0.0
    %3560 = vmatprep.subr.mxu0 0.0
    %3561 = vmatpush2.msra.mxu0 0.0
    %3562 = vmatprep.subr.mxu0 0.0
    %3563 = vmatpush2.msra.mxu0 0.0
    %3564 = vmatprep.subr.mxu0 0.0
    %3565 = vmatpush2.msra.mxu0 0.0
    %3566 = vmatprep.subr.mxu0 0.0
    %3567 = vmatpush2.msra.mxu0 0.0
    %3568 = vmatprep.subr.mxu0 0.0
    %3569 = vmatpush2.msra.mxu0 0.0
    %3570 = vmatprep.subr.mxu0 0.0
    %3571 = vmatpush2.msra.mxu0 0.0
    %3572 = vmatprep.subr.mxu0 0.0
    %3573 = vmatpush2.msra.mxu0 0.0
    %3574 = vmatprep.subr.mxu0 0.0
    %3575 = vmatpush2.msra.mxu0 0.0
    %3576 = vmatprep.subr.mxu0 0.0
    %3577 = vmatpush2.msra.mxu0 0.0
    %3578 = vmatprep.mubr.f32.mxu0 0.0
    %3579 = vmatmul.mubr.f32.gmra.mxu0 %v3509
    %v3580 = vpop.f32.mrf.mxu0
    %v3581 = vadd.f32 %v3506, %v3580
    %v3582 = vpop.f32.mrf.mxu0
    %3583 = vmatprep.mubr.f32.mxu0 0.0
    %3584 = vmatmul.mubr.f32.gmra.mxu0 %v3512
    %v3585 = vpop.f32.mrf.mxu0
    %v3586 = vadd.f32 %v3506, %v3585
    %v3587 = vpop.f32.mrf.mxu0
    %3588 = vdwg.mxu0
    %s3589 = scalar_lea.vmem %s12, 4
    %v3590 = vld [vmem:[%s3589] sm:$0xf]
    %v3591 = vsel %vm191, %v3581, 0.0
    %3592 = vadd.xlane.f32.xlu0 %v3591
    %v3593 = vpop.xlane.xlu0 %3592
    %v3594 = vsel %vm191, %v3586, 0.0
    %3595 = vadd.xlane.f32.xlu0 %v3594
    %v3596 = vpop.xlane.xlu0 %3595
    %v3597 = vmul.f32 %v3593, %v1747
    %v3598 = vmul.f32 %v3596, %v1747
    %v3599 = vsub.f32 %v3581, %v3597
    %v3600 = vsub.f32 %v3586, %v3598
    %v3601 = vmul.f32 %v3599, %v3599
    %v3602 = vmul.f32 %v3600, %v3600
    %v3603 = vsel %vm191, %v3601, 0.0
    %3604 = vadd.xlane.f32.xlu0 %v3603
    %v3605 = vpop.xlane.xlu0 %3604
    %v3606 = vsel %vm191, %v3602, 0.0
    %3607 = vadd.xlane.f32.xlu0 %v3606
    %v3608 = vpop.xlane.xlu0 %3607
    %v3609 = vmul.f32 %v3605, %v1747
    %v3610 = vmul.f32 %v3608, %v1747
    %v3611 = vadd.f32 %v3609, 1e-12
    %v3612 = vadd.f32 %v3610, 1e-12
    %v3613 = vrsqrt.pop %v3611
    %v3614 = vmul.f32 %v3611, %v3613
    %vm3615 = vcmp.eq.f32.partialorder %v3611, inf
    %v3616 = vsel %vm3615, %v3611, %v3614
    %vm3617 = vcmp.eq.f32.partialorder %v3611, 0.0
    %v3618 = vand.u32 %v3611, 2147483648
    %v3619 = vsel %vm3617, %v3618, %v3616
    %v3620 = vrsqrt.pop %v3612
    %v3621 = vmul.f32 %v3612, %v3620
    %vm3622 = vcmp.eq.f32.partialorder %v3612, inf
    %v3623 = vsel %vm3622, %v3612, %v3621
    %vm3624 = vcmp.eq.f32.partialorder %v3612, 0.0
    %v3625 = vand.u32 %v3612, 2147483648
    %v3626 = vsel %vm3624, %v3625, %v3623
    %v3627 = vrcp.pop %v3619
    %v3628 = vmul.f32 %v3599, %v3627
    %v3629 = vrcp.pop %v3626
    %v3630 = vmul.f32 %v3600, %v3629
    %v3631 = vlaneseq
    %v3632 = vshrl.u32 %v3631, 7
    %v3633 = vsub.s32 0, %v3632
    %v3634 = vrot.slane %v3590, %v3633
    %v3635 = vmul.f32 %v3628, %v3634
    %v3636 = vmul.f32 %v3630, %v3634
    %v3637 = vlaneseq
    %v3638 = vshrl.u32 %v3637, 7
    %v3639 = vsub.s32 1, %v3638
    %v3640 = vrot.slane %v3590, %v3639
    %v3641 = vadd.f32 %v3635, %v3640
    %v3642 = vadd.f32 %v3636, %v3640
    %s3643 = scalar_lea.vmem %s8, 32
    %v3644 = vld [vmem:[%s3643] sm:$0xff]
    %v3645 = vld [vmem:[%s3643 + $0x8] sm:$0xff]
    %v3646 = vld [vmem:[%s3643 + $0x10] sm:$0xff]
    %v3647 = vld [vmem:[%s3643 + $0x18] sm:$0xff]
    %s3648 = scalar_lea.vmem %s9, 1
    %v3649 = vld [vmem:[%s3648] sm:$0x1]
    %v3651 = vlaneseq
    %v3652 = vshrl.u32 %v3651, 7
    %v3653 = vsub.s32 0, %v3652
    %v3654 = vrot.slane %v3649, %v3653
    %v3657 = vsel %vm191, %v3641, 0
    %v3660 = vsel %vm191, %v3642, 0
    %3662 = vmatprep.subr.mxu0 0.0
    %3663 = vmatpush1.msra.mxu0 0.0
    %3664 = vmatprep.subr.mxu0 0.0
    %3665 = vmatpush1.msra.mxu0 0.0
    %3666 = vmatprep.subr.mxu0 0.0
    %3667 = vmatpush1.msra.mxu0 0.0
    %3668 = vmatprep.subr.mxu0 0.0
    %3669 = vmatpush1.msra.mxu0 0.0
    %3670 = vmatprep.subr.mxu0 0.0
    %3671 = vmatpush1.msra.mxu0 0.0
    %3672 = vmatprep.subr.mxu0 0.0
    %3673 = vmatpush1.msra.mxu0 0.0
    %3674 = vmatprep.subr.mxu0 0.0
    %3675 = vmatpush1.msra.mxu0 0.0
    %3676 = vmatprep.subr.mxu0 0.0
    %3677 = vmatpush1.msra.mxu0 0.0
    %3678 = vmatprep.subr.mxu0 0.0
    %3679 = vmatpush1.msra.mxu0 0.0
    %3680 = vmatprep.subr.mxu0 0.0
    %3681 = vmatpush1.msra.mxu0 0.0
    %3682 = vmatprep.subr.mxu0 0.0
    %3683 = vmatpush1.msra.mxu0 0.0
    %3684 = vmatprep.subr.mxu0 0.0
    %3685 = vmatpush1.msra.mxu0 0.0
    %3686 = vmatprep.subr.mxu0 0.0
    %3687 = vmatpush1.msra.mxu0 %v3647
    %3688 = vmatprep.subr.mxu0 0.0
    %3689 = vmatpush1.msra.mxu0 %v3646
    %3690 = vmatprep.subr.mxu0 0.0
    %3691 = vmatpush1.msra.mxu0 %v3645
    %3692 = vmatprep.subr.mxu0 0.0
    %3693 = vmatpush1.msra.mxu0 %v3644
    %3694 = vmatprep.subr.mxu0 0.0
    %3695 = vmatpush2.msra.mxu0 0.0
    %3696 = vmatprep.subr.mxu0 0.0
    %3697 = vmatpush2.msra.mxu0 0.0
    %3698 = vmatprep.subr.mxu0 0.0
    %3699 = vmatpush2.msra.mxu0 0.0
    %3700 = vmatprep.subr.mxu0 0.0
    %3701 = vmatpush2.msra.mxu0 0.0
    %3702 = vmatprep.subr.mxu0 0.0
    %3703 = vmatpush2.msra.mxu0 0.0
    %3704 = vmatprep.subr.mxu0 0.0
    %3705 = vmatpush2.msra.mxu0 0.0
    %3706 = vmatprep.subr.mxu0 0.0
    %3707 = vmatpush2.msra.mxu0 0.0
    %3708 = vmatprep.subr.mxu0 0.0
    %3709 = vmatpush2.msra.mxu0 0.0
    %3710 = vmatprep.subr.mxu0 0.0
    %3711 = vmatpush2.msra.mxu0 0.0
    %3712 = vmatprep.subr.mxu0 0.0
    %3713 = vmatpush2.msra.mxu0 0.0
    %3714 = vmatprep.subr.mxu0 0.0
    %3715 = vmatpush2.msra.mxu0 0.0
    %3716 = vmatprep.subr.mxu0 0.0
    %3717 = vmatpush2.msra.mxu0 0.0
    %3718 = vmatprep.subr.mxu0 0.0
    %3719 = vmatpush2.msra.mxu0 0.0
    %3720 = vmatprep.subr.mxu0 0.0
    %3721 = vmatpush2.msra.mxu0 0.0
    %3722 = vmatprep.subr.mxu0 0.0
    %3723 = vmatpush2.msra.mxu0 0.0
    %3724 = vmatprep.subr.mxu0 0.0
    %3725 = vmatpush2.msra.mxu0 0.0
    %3726 = vmatprep.mubr.f32.mxu0 0.0
    %3727 = vmatmul.mubr.f32.gmra.mxu0 %v3657
    %v3728 = vpop.f32.mrf.mxu0
    %v3729 = vadd.f32 %v3654, %v3728
    %v3730 = vpop.f32.mrf.mxu0
    %3731 = vmatprep.mubr.f32.mxu0 0.0
    %3732 = vmatmul.mubr.f32.gmra.mxu0 %v3660
    %v3733 = vpop.f32.mrf.mxu0
    %v3734 = vadd.f32 %v3654, %v3733
    %v3735 = vpop.f32.mrf.mxu0
    %3736 = vdwg.mxu0
    %v3737 = vmax.f32 %v3729, 0.0
    %v3738 = vmax.f32 %v3734, 0.0
    %s3739 = scalar_lea.vmem %s10, 64
    %v3740 = vld [vmem:[%s3739] sm:$0xff]
    %v3741 = vld [vmem:[%s3739 + $0x8] sm:$0xff]
    %v3742 = vld [vmem:[%s3739 + $0x10] sm:$0xff]
    %v3743 = vld [vmem:[%s3739 + $0x18] sm:$0xff]
    %v3744 = vld [vmem:[%s3739 + $0x20] sm:$0xff]
    %v3745 = vld [vmem:[%s3739 + $0x28] sm:$0xff]
    %v3746 = vld [vmem:[%s3739 + $0x30] sm:$0xff]
    %v3747 = vld [vmem:[%s3739 + $0x38] sm:$0xff]
    %s3748 = scalar_lea.vmem %s11, 1
    %v3749 = vld [vmem:[%s3748] sm:$0x1]
    %v3751 = vlaneseq
    %v3752 = vshrl.u32 %v3751, 7
    %v3753 = vsub.s32 0, %v3752
    %v3754 = vrot.slane %v3749, %v3753
    %v3757 = vsel %vm1903, %v3737, 0
    %v3760 = vsel %vm1903, %v3738, 0
    %3762 = vmatprep.subr.mxu0 0.0
    %3763 = vmatpush1.msra.mxu0 0.0
    %3764 = vmatprep.subr.mxu0 0.0
    %3765 = vmatpush1.msra.mxu0 0.0
    %3766 = vmatprep.subr.mxu0 0.0
    %3767 = vmatpush1.msra.mxu0 0.0
    %3768 = vmatprep.subr.mxu0 0.0
    %3769 = vmatpush1.msra.mxu0 0.0
    %3770 = vmatprep.subr.mxu0 0.0
    %3771 = vmatpush1.msra.mxu0 0.0
    %3772 = vmatprep.subr.mxu0 0.0
    %3773 = vmatpush1.msra.mxu0 0.0
    %3774 = vmatprep.subr.mxu0 0.0
    %3775 = vmatpush1.msra.mxu0 0.0
    %3776 = vmatprep.subr.mxu0 0.0
    %3777 = vmatpush1.msra.mxu0 0.0
    %3778 = vmatprep.subr.mxu0 0.0
    %3779 = vmatpush1.msra.mxu0 %v3747
    %3780 = vmatprep.subr.mxu0 0.0
    %3781 = vmatpush1.msra.mxu0 %v3746
    %3782 = vmatprep.subr.mxu0 0.0
    %3783 = vmatpush1.msra.mxu0 %v3745
    %3784 = vmatprep.subr.mxu0 0.0
    %3785 = vmatpush1.msra.mxu0 %v3744
    %3786 = vmatprep.subr.mxu0 0.0
    %3787 = vmatpush1.msra.mxu0 %v3743
    %3788 = vmatprep.subr.mxu0 0.0
    %3789 = vmatpush1.msra.mxu0 %v3742
    %3790 = vmatprep.subr.mxu0 0.0
    %3791 = vmatpush1.msra.mxu0 %v3741
    %3792 = vmatprep.subr.mxu0 0.0
    %3793 = vmatpush1.msra.mxu0 %v3740
    %3794 = vmatprep.subr.mxu0 0.0
    %3795 = vmatpush2.msra.mxu0 0.0
    %3796 = vmatprep.subr.mxu0 0.0
    %3797 = vmatpush2.msra.mxu0 0.0
    %3798 = vmatprep.subr.mxu0 0.0
    %3799 = vmatpush2.msra.mxu0 0.0
    %3800 = vmatprep.subr.mxu0 0.0
    %3801 = vmatpush2.msra.mxu0 0.0
    %3802 = vmatprep.subr.mxu0 0.0
    %3803 = vmatpush2.msra.mxu0 0.0
    %3804 = vmatprep.subr.mxu0 0.0
    %3805 = vmatpush2.msra.mxu0 0.0
    %3806 = vmatprep.subr.mxu0 0.0
    %3807 = vmatpush2.msra.mxu0 0.0
    %3808 = vmatprep.subr.mxu0 0.0
    %3809 = vmatpush2.msra.mxu0 0.0
    %3810 = vmatprep.subr.mxu0 0.0
    %3811 = vmatpush2.msra.mxu0 0.0
    %3812 = vmatprep.subr.mxu0 0.0
    %3813 = vmatpush2.msra.mxu0 0.0
    %3814 = vmatprep.subr.mxu0 0.0
    %3815 = vmatpush2.msra.mxu0 0.0
    %3816 = vmatprep.subr.mxu0 0.0
    %3817 = vmatpush2.msra.mxu0 0.0
    %3818 = vmatprep.subr.mxu0 0.0
    %3819 = vmatpush2.msra.mxu0 0.0
    %3820 = vmatprep.subr.mxu0 0.0
    %3821 = vmatpush2.msra.mxu0 0.0
    %3822 = vmatprep.subr.mxu0 0.0
    %3823 = vmatpush2.msra.mxu0 0.0
    %3824 = vmatprep.subr.mxu0 0.0
    %3825 = vmatpush2.msra.mxu0 0.0
    %3826 = vmatprep.mubr.f32.mxu0 0.0
    %3827 = vmatmul.mubr.f32.gmra.mxu0 %v3757
    %v3828 = vpop.f32.mrf.mxu0
    %v3829 = vadd.f32 %v3754, %v3828
    %v3830 = vpop.f32.mrf.mxu0
    %3831 = vmatprep.mubr.f32.mxu0 0.0
    %3832 = vmatmul.mubr.f32.gmra.mxu0 %v3760
    %v3833 = vpop.f32.mrf.mxu0
    %v3834 = vadd.f32 %v3754, %v3833
    %v3835 = vpop.f32.mrf.mxu0
    %3836 = vdwg.mxu0
    %v3837 = vsel %vm191, %v3829, 0.0
    %3838 = vadd.xlane.f32.xlu0 %v3837
    %v3839 = vpop.xlane.xlu0 %3838
    %v3840 = vsel %vm191, %v3834, 0.0
    %3841 = vadd.xlane.f32.xlu0 %v3840
    %v3842 = vpop.xlane.xlu0 %3841
    %v3843 = vmul.f32 %v3839, %v1747
    %v3844 = vmul.f32 %v3842, %v1747
    %v3845 = vsub.f32 %v3829, %v3843
    %v3846 = vsub.f32 %v3834, %v3844
    %v3847 = vmul.f32 %v3845, %v3845
    %v3848 = vmul.f32 %v3846, %v3846
    %v3849 = vsel %vm191, %v3847, 0.0
    %3850 = vadd.xlane.f32.xlu0 %v3849
    %v3851 = vpop.xlane.xlu0 %3850
    %v3852 = vsel %vm191, %v3848, 0.0
    %3853 = vadd.xlane.f32.xlu0 %v3852
    %v3854 = vpop.xlane.xlu0 %3853
    %v3855 = vmul.f32 %v3851, %v1747
    %v3856 = vmul.f32 %v3854, %v1747
    %v3857 = vadd.f32 %v3855, 1e-12
    %v3858 = vadd.f32 %v3856, 1e-12
    %v3859 = vrsqrt.pop %v3857
    %v3860 = vmul.f32 %v3857, %v3859
    %vm3861 = vcmp.eq.f32.partialorder %v3857, inf
    %v3862 = vsel %vm3861, %v3857, %v3860
    %vm3863 = vcmp.eq.f32.partialorder %v3857, 0.0
    %v3864 = vand.u32 %v3857, 2147483648
    %v3865 = vsel %vm3863, %v3864, %v3862
    %v3866 = vrsqrt.pop %v3858
    %v3867 = vmul.f32 %v3858, %v3866
    %vm3868 = vcmp.eq.f32.partialorder %v3858, inf
    %v3869 = vsel %vm3868, %v3858, %v3867
    %vm3870 = vcmp.eq.f32.partialorder %v3858, 0.0
    %v3871 = vand.u32 %v3858, 2147483648
    %v3872 = vsel %vm3870, %v3871, %v3869
    %v3873 = vrcp.pop %v3865
    %v3874 = vmul.f32 %v3845, %v3873
    %v3875 = vrcp.pop %v3872
    %v3876 = vmul.f32 %v3846, %v3875
    %v3877 = vlaneseq
    %v3878 = vshrl.u32 %v3877, 7
    %v3879 = vsub.s32 2, %v3878
    %v3880 = vrot.slane %v3590, %v3879
    %v3881 = vmul.f32 %v3874, %v3880
    %v3882 = vmul.f32 %v3876, %v3880
    %v3883 = vlaneseq
    %v3884 = vshrl.u32 %v3883, 7
    %v3885 = vsub.s32 3, %v3884
    %v3886 = vrot.slane %v3590, %v3885
    %v3887 = vadd.f32 %v3881, %v3886
    %v3888 = vadd.f32 %v3882, %v3886
    %v3889 = vld [vmem:[%s13] sm:$0xff]
    %v3890 = vld [vmem:[%s13 + $0x8] sm:$0xff]
    %v3891 = vld [vmem:[%s13 + $0x10] sm:$0xff]
    %v3892 = vld [vmem:[%s13 + $0x18] sm:$0xff]
    %v3893 = vld [vmem:[%s14] sm:$0x1]
    %v3895 = vlaneseq
    %v3896 = vshrl.u32 %v3895, 7
    %v3897 = vsub.s32 0, %v3896
    %v3898 = vrot.slane %v3893, %v3897
    %v3901 = vsel %vm191, %v3887, 0
    %v3904 = vsel %vm191, %v3888, 0
    %3906 = vmatprep.subr.mxu0 0.0
    %3907 = vmatpush1.msra.mxu0 0.0
    %3908 = vmatprep.subr.mxu0 0.0
    %3909 = vmatpush1.msra.mxu0 0.0
    %3910 = vmatprep.subr.mxu0 0.0
    %3911 = vmatpush1.msra.mxu0 0.0
    %3912 = vmatprep.subr.mxu0 0.0
    %3913 = vmatpush1.msra.mxu0 0.0
    %3914 = vmatprep.subr.mxu0 0.0
    %3915 = vmatpush1.msra.mxu0 0.0
    %3916 = vmatprep.subr.mxu0 0.0
    %3917 = vmatpush1.msra.mxu0 0.0
    %3918 = vmatprep.subr.mxu0 0.0
    %3919 = vmatpush1.msra.mxu0 0.0
    %3920 = vmatprep.subr.mxu0 0.0
    %3921 = vmatpush1.msra.mxu0 0.0
    %3922 = vmatprep.subr.mxu0 0.0
    %3923 = vmatpush1.msra.mxu0 0.0
    %3924 = vmatprep.subr.mxu0 0.0
    %3925 = vmatpush1.msra.mxu0 0.0
    %3926 = vmatprep.subr.mxu0 0.0
    %3927 = vmatpush1.msra.mxu0 0.0
    %3928 = vmatprep.subr.mxu0 0.0
    %3929 = vmatpush1.msra.mxu0 0.0
    %3930 = vmatprep.subr.mxu0 0.0
    %3931 = vmatpush1.msra.mxu0 %v3892
    %3932 = vmatprep.subr.mxu0 0.0
    %3933 = vmatpush1.msra.mxu0 %v3891
    %3934 = vmatprep.subr.mxu0 0.0
    %3935 = vmatpush1.msra.mxu0 %v3890
    %3936 = vmatprep.subr.mxu0 0.0
    %3937 = vmatpush1.msra.mxu0 %v3889
    %3938 = vmatprep.subr.mxu0 0.0
    %3939 = vmatpush2.msra.mxu0 0.0
    %3940 = vmatprep.subr.mxu0 0.0
    %3941 = vmatpush2.msra.mxu0 0.0
    %3942 = vmatprep.subr.mxu0 0.0
    %3943 = vmatpush2.msra.mxu0 0.0
    %3944 = vmatprep.subr.mxu0 0.0
    %3945 = vmatpush2.msra.mxu0 0.0
    %3946 = vmatprep.subr.mxu0 0.0
    %3947 = vmatpush2.msra.mxu0 0.0
    %3948 = vmatprep.subr.mxu0 0.0
    %3949 = vmatpush2.msra.mxu0 0.0
    %3950 = vmatprep.subr.mxu0 0.0
    %3951 = vmatpush2.msra.mxu0 0.0
    %3952 = vmatprep.subr.mxu0 0.0
    %3953 = vmatpush2.msra.mxu0 0.0
    %3954 = vmatprep.subr.mxu0 0.0
    %3955 = vmatpush2.msra.mxu0 0.0
    %3956 = vmatprep.subr.mxu0 0.0
    %3957 = vmatpush2.msra.mxu0 0.0
    %3958 = vmatprep.subr.mxu0 0.0
    %3959 = vmatpush2.msra.mxu0 0.0
    %3960 = vmatprep.subr.mxu0 0.0
    %3961 = vmatpush2.msra.mxu0 0.0
    %3962 = vmatprep.subr.mxu0 0.0
    %3963 = vmatpush2.msra.mxu0 0.0
    %3964 = vmatprep.subr.mxu0 0.0
    %3965 = vmatpush2.msra.mxu0 0.0
    %3966 = vmatprep.subr.mxu0 0.0
    %3967 = vmatpush2.msra.mxu0 0.0
    %3968 = vmatprep.subr.mxu0 0.0
    %3969 = vmatpush2.msra.mxu0 0.0
    %3970 = vmatprep.mubr.f32.mxu0 0.0
    %3971 = vmatmul.mubr.f32.gmra.mxu0 %v3901
    %v3972 = vpop.f32.mrf.mxu0
    %v3973 = vadd.f32 %v3898, %v3972
    %v3974 = vpop.f32.mrf.mxu0
    %3975 = vmatprep.mubr.f32.mxu0 0.0
    %3976 = vmatmul.mubr.f32.gmra.mxu0 %v3904
    %v3977 = vpop.f32.mrf.mxu0
    %v3978 = vadd.f32 %v3898, %v3977
    %v3979 = vpop.f32.mrf.mxu0
    %3980 = vdwg.mxu0
    %v3981 = vtanh.pop %v3973
    %v3982 = vtanh.pop %v3978
    %v3983 = vld [vmem:[%s15] sm:$0xff]
    %v3984 = vld [vmem:[%s15 + $0x8] sm:$0xff]
    %v3985 = vld [vmem:[%s15 + $0x10] sm:$0xff]
    %v3986 = vld [vmem:[%s15 + $0x18] sm:$0xff]
    %v3987 = vld [vmem:[%s16] sm:$0x1]
    %v3989 = vlaneseq
    %v3990 = vshrl.u32 %v3989, 7
    %v3991 = vsub.s32 0, %v3990
    %v3992 = vrot.slane %v3987, %v3991
    %v3995 = vsel %vm191, %v3981, 0
    %v3998 = vsel %vm191, %v3982, 0
    %4000 = vmatprep.subr.mxu0 0.0
    %4001 = vmatpush1.msra.mxu0 0.0
    %4002 = vmatprep.subr.mxu0 0.0
    %4003 = vmatpush1.msra.mxu0 0.0
    %4004 = vmatprep.subr.mxu0 0.0
    %4005 = vmatpush1.msra.mxu0 0.0
    %4006 = vmatprep.subr.mxu0 0.0
    %4007 = vmatpush1.msra.mxu0 0.0
    %4008 = vmatprep.subr.mxu0 0.0
    %4009 = vmatpush1.msra.mxu0 0.0
    %4010 = vmatprep.subr.mxu0 0.0
    %4011 = vmatpush1.msra.mxu0 0.0
    %4012 = vmatprep.subr.mxu0 0.0
    %4013 = vmatpush1.msra.mxu0 0.0
    %4014 = vmatprep.subr.mxu0 0.0
    %4015 = vmatpush1.msra.mxu0 0.0
    %4016 = vmatprep.subr.mxu0 0.0
    %4017 = vmatpush1.msra.mxu0 0.0
    %4018 = vmatprep.subr.mxu0 0.0
    %4019 = vmatpush1.msra.mxu0 0.0
    %4020 = vmatprep.subr.mxu0 0.0
    %4021 = vmatpush1.msra.mxu0 0.0
    %4022 = vmatprep.subr.mxu0 0.0
    %4023 = vmatpush1.msra.mxu0 0.0
    %4024 = vmatprep.subr.mxu0 0.0
    %4025 = vmatpush1.msra.mxu0 %v3986
    %4026 = vmatprep.subr.mxu0 0.0
    %4027 = vmatpush1.msra.mxu0 %v3985
    %4028 = vmatprep.subr.mxu0 0.0
    %4029 = vmatpush1.msra.mxu0 %v3984
    %4030 = vmatprep.subr.mxu0 0.0
    %4031 = vmatpush1.msra.mxu0 %v3983
    %4032 = vmatprep.subr.mxu0 0.0
    %4033 = vmatpush2.msra.mxu0 0.0
    %4034 = vmatprep.subr.mxu0 0.0
    %4035 = vmatpush2.msra.mxu0 0.0
    %4036 = vmatprep.subr.mxu0 0.0
    %4037 = vmatpush2.msra.mxu0 0.0
    %4038 = vmatprep.subr.mxu0 0.0
    %4039 = vmatpush2.msra.mxu0 0.0
    %4040 = vmatprep.subr.mxu0 0.0
    %4041 = vmatpush2.msra.mxu0 0.0
    %4042 = vmatprep.subr.mxu0 0.0
    %4043 = vmatpush2.msra.mxu0 0.0
    %4044 = vmatprep.subr.mxu0 0.0
    %4045 = vmatpush2.msra.mxu0 0.0
    %4046 = vmatprep.subr.mxu0 0.0
    %4047 = vmatpush2.msra.mxu0 0.0
    %4048 = vmatprep.subr.mxu0 0.0
    %4049 = vmatpush2.msra.mxu0 0.0
    %4050 = vmatprep.subr.mxu0 0.0
    %4051 = vmatpush2.msra.mxu0 0.0
    %4052 = vmatprep.subr.mxu0 0.0
    %4053 = vmatpush2.msra.mxu0 0.0
    %4054 = vmatprep.subr.mxu0 0.0
    %4055 = vmatpush2.msra.mxu0 0.0
    %4056 = vmatprep.subr.mxu0 0.0
    %4057 = vmatpush2.msra.mxu0 0.0
    %4058 = vmatprep.subr.mxu0 0.0
    %4059 = vmatpush2.msra.mxu0 0.0
    %4060 = vmatprep.subr.mxu0 0.0
    %4061 = vmatpush2.msra.mxu0 0.0
    %4062 = vmatprep.subr.mxu0 0.0
    %4063 = vmatpush2.msra.mxu0 0.0
    %4064 = vmatprep.mubr.f32.mxu0 0.0
    %4065 = vmatmul.mubr.f32.gmra.mxu0 %v3995
    %v4066 = vpop.f32.mrf.mxu0
    %v4067 = vadd.f32 %v3992, %v4066
    %v4068 = vpop.f32.mrf.mxu0
    %4069 = vmatprep.mubr.f32.mxu0 0.0
    %4070 = vmatmul.mubr.f32.gmra.mxu0 %v3998
    %v4071 = vpop.f32.mrf.mxu0
    %v4072 = vadd.f32 %v3992, %v4071
    %v4073 = vpop.f32.mrf.mxu0
    %4074 = vdwg.mxu0
    %4075 = vxpose.xlu0.b32.start [1/16] %v4067, 128
    %4076 = vxpose.xlu0.b32.cont [2/16] %v4072, 128
    %4077 = vxpose.xlu0.b32.cont [3/16] 0.0, 128
    %4078 = vxpose.xlu0.b32.cont [4/16] 0.0, 128
    %4079 = vxpose.xlu0.b32.cont [5/16] 0.0, 128
    %4080 = vxpose.xlu0.b32.cont [6/16] 0.0, 128
    %4081 = vxpose.xlu0.b32.cont [7/16] 0.0, 128
    %4082 = vxpose.xlu0.b32.cont [8/16] 0.0, 128
    %4083 = vxpose.xlu0.b32.cont [9/16] 0.0, 128
    %4084 = vxpose.xlu0.b32.cont [10/16] 0.0, 128
    %4085 = vxpose.xlu0.b32.cont [11/16] 0.0, 128
    %4086 = vxpose.xlu0.b32.cont [12/16] 0.0, 128
    %4087 = vxpose.xlu0.b32.cont [13/16] 0.0, 128
    %4088 = vxpose.xlu0.b32.cont [14/16] 0.0, 128
    %4089 = vxpose.xlu0.b32.cont [15/16] 0.0, 128
    %4090 = vxpose.xlu0.b32.end [16/16] 0.0, 128
    %v4091 = vpop.trf.xlu0
    %v4092 = vpop.trf.xlu0
    %v4093 = vpop.trf.xlu0
    %v4094 = vpop.trf.xlu0
    %v4095 = vpop.trf.xlu0
    %v4096 = vpop.trf.xlu0
    %v4097 = vpop.trf.xlu0
    %v4098 = vpop.trf.xlu0
    %v4099 = vpop.trf.xlu0
    %v4100 = vpop.trf.xlu0
    %v4101 = vpop.trf.xlu0
    %v4102 = vpop.trf.xlu0
    %v4103 = vpop.trf.xlu0
    %v4104 = vpop.trf.xlu0
    %v4105 = vpop.trf.xlu0
    %v4106 = vpop.trf.xlu0
    %v4107 = vld [vmem:[%s19] sm:$0x1f]
    %4108 = vxpose.xlu0.b32.start [1/16] %v4107, 128
    %4109 = vxpose.xlu0.b32.cont [2/16] 0.0, 128
    %4110 = vxpose.xlu0.b32.cont [3/16] 0.0, 128
    %4111 = vxpose.xlu0.b32.cont [4/16] 0.0, 128
    %4112 = vxpose.xlu0.b32.cont [5/16] 0.0, 128
    %4113 = vxpose.xlu0.b32.cont [6/16] 0.0, 128
    %4114 = vxpose.xlu0.b32.cont [7/16] 0.0, 128
    %4115 = vxpose.xlu0.b32.cont [8/16] 0.0, 128
    %4116 = vxpose.xlu0.b32.cont [9/16] 0.0, 128
    %4117 = vxpose.xlu0.b32.cont [10/16] 0.0, 128
    %4118 = vxpose.xlu0.b32.cont [11/16] 0.0, 128
    %4119 = vxpose.xlu0.b32.cont [12/16] 0.0, 128
    %4120 = vxpose.xlu0.b32.cont [13/16] 0.0, 128
    %4121 = vxpose.xlu0.b32.cont [14/16] 0.0, 128
    %4122 = vxpose.xlu0.b32.cont [15/16] 0.0, 128
    %4123 = vxpose.xlu0.b32.end [16/16] 0.0, 128
    %v4124 = vpop.trf.xlu0
    %v4125 = vpop.trf.xlu0
    %v4126 = vpop.trf.xlu0
    %v4127 = vpop.trf.xlu0
    %v4128 = vpop.trf.xlu0
    %v4129 = vpop.trf.xlu0
    %v4130 = vpop.trf.xlu0
    %v4131 = vpop.trf.xlu0
    %v4132 = vpop.trf.xlu0
    %v4133 = vpop.trf.xlu0
    %v4134 = vpop.trf.xlu0
    %v4135 = vpop.trf.xlu0
    %v4136 = vpop.trf.xlu0
    %v4137 = vpop.trf.xlu0
    %v4138 = vpop.trf.xlu0
    %v4139 = vpop.trf.xlu0
    %v4140 = vld [vmem:[%s17] sm:$0x1]
    %v4141 = vld [vmem:[%s18] sm:$0x1]
    %v4142 = vlaneseq
    %v4143 = vshrl.u32 %v4142, 7
    %vm4144 = vcmp.eq.s32.totalorder %v4143, %v73
    %v4145 = vsel %vm4144, 0.0, -1e+09
    %v4146 = vadd.f32 %v4140, %v4067
    %v4147 = vsel %vm69, 1, 0
    %4148 = vrot.lane.b32.xlu0 %v4147, 127
    %v4149 = vpop.permute.xlu0 %4148
    %s4150 = vtos %v4149
    %v4151 = vstv %s4150
    %vm4152 = vcmp.eq.s32.totalorder %v4151, 1
    %v4153 = vsel %vm4152, %v4124, %v4145
    %v4155 = vlaneseq
    %v4156 = vshrl.u32 %v4155, 7
    %v4157 = vsub.s32 0, %v4156
    %v4158 = vrot.slane %v4146, %v4157
    %v4160 = vadd.f32 %v4158, %v4153
    %vm4161 = vcmask 36864
    %v4162 = vsel %vm4161, %v4160, -inf
    %4163 = vmax.xlane.f32.xlu0 %v4162
    %v4164 = vpop.xlane.xlu0 %4163
    %vm4165 = vcmp.eq.f32.partialorder %v4160, %v4164
    %v4166 = vsel %vm4165, %v73, 5
    %v4167 = vsel %vm4161, %v4166, 2147483647
    %v4168 = vand.u32 %v4167, 65535
    %v4169 = vshra.s32 %v4167, 16
    %v4170 = vcvt.s32.f32 %v4168
    %v4171 = vcvt.s32.f32 %v4169
    %4172 = vmin.xlane.f32.xlu0 %v4171
    %v4173 = vpop.xlane.xlu0 %4172
    %vm4174 = vcmp.eq.f32.partialorder %v4171, %v4173
    %v4175 = vsel %vm4174, %v4170, inf
    %4176 = vmin.xlane.f32.xlu0 %v4175
    %v4177 = vpop.xlane.xlu0 %4176
    %v4178 = vcvt.f32.s32 %v4177
    %v4179 = vcvt.f32.s32 %v4173
    %v4180 = vshll.u32 %v4179, 16
    %v4181 = vadd.s32 %v4180, %v4178
    %v4182 = vlaneseq
    %v4183 = vshrl.u32 %v4182, 7
    %v4184 = vsub.s32 0, %v4183
    %v4185 = vrot.slane %v4147, %v4184
    %vm4186 = vcmp.eq.s32.totalorder %v4185, 1
    %v4187 = vsel %vm4186, %v4091, 0.0
    %v4188 = vadd.f32 %v4164, %v4187
    %4189 = vrot.lane.b32.xlu0 %v4147, 126
    %v4190 = vpop.permute.xlu0 %4189
    %s4191 = vtos %v4190
    %v4192 = vstv %s4191
    %vm4193 = vcmp.eq.s32.totalorder %v4192, 1
    %v4194 = vsel %vm4193, %v4107, %v4145
    %4196 = vset.pattern.permute.xlu0 1
    %4197 = vperm.xlu0 %4196, %v4188
    %v4198 = vpop.permute.xlu0 %4197
    %v4200 = vadd.f32 %v4198, %v4194
    %v4201 = vsel %vm4161, %v4200, -inf
    %v4202 = vrot.slane %v4201, 4
    %v4203 = vmax.f32 %v4201, %v4202
    %v4204 = vrot.slane %v4203, 2
    %v4205 = vmax.f32 %v4203, %v4204
    %v4206 = vrot.slane %v4205, 1
    %v4207 = vmax.f32 %v4205, %v4206
    %vm4208 = vcmp.eq.f32.partialorder %v4200, %v4207
    %v4209 = vsel %vm4208, %v4143, 5
    %v4210 = vsel %vm4161, %v4209, 2147483647
    %v4211 = vrot.slane %v4210, 4
    %vm4212 = vcmp.lt.s32.totalorder %v4210, %v4211
    %v4213 = vsel %vm4212, %v4210, %v4211
    %v4214 = vrot.slane %v4213, 2
    %vm4215 = vcmp.lt.s32.totalorder %v4213, %v4214
    %v4216 = vsel %vm4215, %v4213, %v4214
    %v4217 = vrot.slane %v4216, 1
    %vm4218 = vcmp.lt.s32.totalorder %v4216, %v4217
    %v4219 = vsel %vm4218, %v4216, %v4217
    %4220 = vset.pattern.permute.xlu0 2
    %4221 = vperm.xlu0 %4220, %v4147
    %v4222 = vpop.permute.xlu0 %4221
    %vm4223 = vcmp.eq.s32.totalorder %v4222, 1
    %v4225 = vrot.slane %v4067, 2
    %v4227 = vsel %vm4223, %v4225, 0.0
    %v4228 = vadd.f32 %v4207, %v4227
    %4229 = vrot.lane.b32.xlu0 %v4147, 125
    %v4230 = vpop.permute.xlu0 %4229
    %s4231 = vtos %v4230
    %v4232 = vstv %s4231
    %vm4233 = vcmp.eq.s32.totalorder %v4232, 1
    %v4234 = vsel %vm4233, %v4124, %v4145
    %v4235 = vlaneseq
    %v4236 = vshrl.u32 %v4235, 7
    %v4237 = vsub.s32 0, %v4236
    %v4238 = vrot.slane %v4228, %v4237
    %v4239 = vadd.f32 %v4238, %v4234
    %v4240 = vsel %vm4161, %v4239, -inf
    %4241 = vmax.xlane.f32.xlu0 %v4240
    %v4242 = vpop.xlane.xlu0 %4241
    %vm4243 = vcmp.eq.f32.partialorder %v4239, %v4242
    %v4244 = vsel %vm4243, %v73, 5
    %v4245 = vsel %vm4161, %v4244, 2147483647
    %v4246 = vand.u32 %v4245, 65535
    %v4247 = vshra.s32 %v4245, 16
    %v4248 = vcvt.s32.f32 %v4246
    %v4249 = vcvt.s32.f32 %v4247
    %4250 = vmin.xlane.f32.xlu0 %v4249
    %v4251 = vpop.xlane.xlu0 %4250
    %vm4252 = vcmp.eq.f32.partialorder %v4249, %v4251
    %v4253 = vsel %vm4252, %v4248, inf
    %4254 = vmin.xlane.f32.xlu0 %v4253
    %v4255 = vpop.xlane.xlu0 %4254
    %v4256 = vcvt.f32.s32 %v4255
    %v4257 = vcvt.f32.s32 %v4251
    %v4258 = vshll.u32 %v4257, 16
    %v4259 = vadd.s32 %v4258, %v4256
    %v4260 = vadd.f32 %v4242, %v4187
    %4261 = vrot.lane.b32.xlu0 %v4147, 124
    %v4262 = vpop.permute.xlu0 %4261
    %s4263 = vtos %v4262
    %v4264 = vstv %s4263
    %vm4265 = vcmp.eq.s32.totalorder %v4264, 1
    %v4266 = vsel %vm4265, %v4107, %v4145
    %4268 = vset.pattern.permute.xlu0 3
    %4269 = vperm.xlu0 %4268, %v4260
    %v4270 = vpop.permute.xlu0 %4269
    %v4272 = vadd.f32 %v4270, %v4266
    %v4273 = vsel %vm4161, %v4272, -inf
    %v4274 = vrot.slane %v4273, 4
    %v4275 = vmax.f32 %v4273, %v4274
    %v4276 = vrot.slane %v4275, 2
    %v4277 = vmax.f32 %v4275, %v4276
    %v4278 = vrot.slane %v4277, 1
    %v4279 = vmax.f32 %v4277, %v4278
    %vm4280 = vcmp.eq.f32.partialorder %v4272, %v4279
    %v4281 = vsel %vm4280, %v4143, 5
    %v4282 = vsel %vm4161, %v4281, 2147483647
    %v4283 = vrot.slane %v4282, 4
    %vm4284 = vcmp.lt.s32.totalorder %v4282, %v4283
    %v4285 = vsel %vm4284, %v4282, %v4283
    %v4286 = vrot.slane %v4285, 2
    %vm4287 = vcmp.lt.s32.totalorder %v4285, %v4286
    %v4288 = vsel %vm4287, %v4285, %v4286
    %v4289 = vrot.slane %v4288, 1
    %vm4290 = vcmp.lt.s32.totalorder %v4288, %v4289
    %v4291 = vsel %vm4290, %v4288, %v4289
    %4292 = vset.pattern.permute.xlu0 4
    %4293 = vperm.xlu0 %4292, %v4147
    %v4294 = vpop.permute.xlu0 %4293
    %vm4295 = vcmp.eq.s32.totalorder %v4294, 1
    %v4296 = vrot.slane %v4067, 4
    %v4298 = vsel %vm4295, %v4296, 0.0
    %v4299 = vadd.f32 %v4279, %v4298
    %4300 = vrot.lane.b32.xlu0 %v4147, 123
    %v4301 = vpop.permute.xlu0 %4300
    %s4302 = vtos %v4301
    %v4303 = vstv %s4302
    %vm4304 = vcmp.eq.s32.totalorder %v4303, 1
    %v4305 = vsel %vm4304, %v4124, %v4145
    %v4306 = vlaneseq
    %v4307 = vshrl.u32 %v4306, 7
    %v4308 = vsub.s32 0, %v4307
    %v4309 = vrot.slane %v4299, %v4308
    %v4310 = vadd.f32 %v4309, %v4305
    %v4311 = vsel %vm4161, %v4310, -inf
    %4312 = vmax.xlane.f32.xlu0 %v4311
    %v4313 = vpop.xlane.xlu0 %4312
    %vm4314 = vcmp.eq.f32.partialorder %v4310, %v4313
    %v4315 = vsel %vm4314, %v73, 5
    %v4316 = vsel %vm4161, %v4315, 2147483647
    %v4317 = vand.u32 %v4316, 65535
    %v4318 = vshra.s32 %v4316, 16
    %v4319 = vcvt.s32.f32 %v4317
    %v4320 = vcvt.s32.f32 %v4318
    %4321 = vmin.xlane.f32.xlu0 %v4320
    %v4322 = vpop.xlane.xlu0 %4321
    %vm4323 = vcmp.eq.f32.partialorder %v4320, %v4322
    %v4324 = vsel %vm4323, %v4319, inf
    %4325 = vmin.xlane.f32.xlu0 %v4324
    %v4326 = vpop.xlane.xlu0 %4325
    %v4327 = vcvt.f32.s32 %v4326
    %v4328 = vcvt.f32.s32 %v4322
    %v4329 = vshll.u32 %v4328, 16
    %v4330 = vadd.s32 %v4329, %v4327
    %v4331 = vadd.f32 %v4313, %v4187
    %4332 = vrot.lane.b32.xlu0 %v4147, 122
    %v4333 = vpop.permute.xlu0 %4332
    %s4334 = vtos %v4333
    %v4335 = vstv %s4334
    %vm4336 = vcmp.eq.s32.totalorder %v4335, 1
    %v4337 = vsel %vm4336, %v4107, %v4145
    %4339 = vset.pattern.permute.xlu0 5
    %4340 = vperm.xlu0 %4339, %v4331
    %v4341 = vpop.permute.xlu0 %4340
    %v4343 = vadd.f32 %v4341, %v4337
    %v4344 = vsel %vm4161, %v4343, -inf
    %v4345 = vrot.slane %v4344, 4
    %v4346 = vmax.f32 %v4344, %v4345
    %v4347 = vrot.slane %v4346, 2
    %v4348 = vmax.f32 %v4346, %v4347
    %v4349 = vrot.slane %v4348, 1
    %v4350 = vmax.f32 %v4348, %v4349
    %vm4351 = vcmp.eq.f32.partialorder %v4343, %v4350
    %v4352 = vsel %vm4351, %v4143, 5
    %v4353 = vsel %vm4161, %v4352, 2147483647
    %v4354 = vrot.slane %v4353, 4
    %vm4355 = vcmp.lt.s32.totalorder %v4353, %v4354
    %v4356 = vsel %vm4355, %v4353, %v4354
    %v4357 = vrot.slane %v4356, 2
    %vm4358 = vcmp.lt.s32.totalorder %v4356, %v4357
    %v4359 = vsel %vm4358, %v4356, %v4357
    %v4360 = vrot.slane %v4359, 1
    %vm4361 = vcmp.lt.s32.totalorder %v4359, %v4360
    %v4362 = vsel %vm4361, %v4359, %v4360
    %4363 = vset.pattern.permute.xlu0 6
    %4364 = vperm.xlu0 %4363, %v4147
    %v4365 = vpop.permute.xlu0 %4364
    %vm4366 = vcmp.eq.s32.totalorder %v4365, 1
    %v4367 = vrot.slane %v4067, 6
    %v4369 = vsel %vm4366, %v4367, 0.0
    %v4370 = vadd.f32 %v4350, %v4369
    %4371 = vrot.lane.b32.xlu0 %v4147, 121
    %v4372 = vpop.permute.xlu0 %4371
    %s4373 = vtos %v4372
    %v4374 = vstv %s4373
    %vm4375 = vcmp.eq.s32.totalorder %v4374, 1
    %v4376 = vsel %vm4375, %v4124, %v4145
    %v4377 = vlaneseq
    %v4378 = vshrl.u32 %v4377, 7
    %v4379 = vsub.s32 0, %v4378
    %v4380 = vrot.slane %v4370, %v4379
    %v4381 = vadd.f32 %v4380, %v4376
    %v4382 = vsel %vm4161, %v4381, -inf
    %4383 = vmax.xlane.f32.xlu0 %v4382
    %v4384 = vpop.xlane.xlu0 %4383
    %vm4385 = vcmp.eq.f32.partialorder %v4381, %v4384
    %v4386 = vsel %vm4385, %v73, 5
    %v4387 = vsel %vm4161, %v4386, 2147483647
    %v4388 = vand.u32 %v4387, 65535
    %v4389 = vshra.s32 %v4387, 16
    %v4390 = vcvt.s32.f32 %v4388
    %v4391 = vcvt.s32.f32 %v4389
    %4392 = vmin.xlane.f32.xlu0 %v4391
    %v4393 = vpop.xlane.xlu0 %4392
    %vm4394 = vcmp.eq.f32.partialorder %v4391, %v4393
    %v4395 = vsel %vm4394, %v4390, inf
    %4396 = vmin.xlane.f32.xlu0 %v4395
    %v4397 = vpop.xlane.xlu0 %4396
    %v4398 = vcvt.f32.s32 %v4397
    %v4399 = vcvt.f32.s32 %v4393
    %v4400 = vshll.u32 %v4399, 16
    %v4401 = vadd.s32 %v4400, %v4398
    %v4402 = vadd.f32 %v4384, %v4187
    %4404 = vrot.lane.b32.xlu0 %v4402, 121
    %v4405 = vpop.permute.xlu0 %4404
    %4407 = vxpose.xlu0.b32.start [1/16] %v4405, 128
    %4408 = vxpose.xlu0.b32.cont [2/16] 0.0, 128
    %4409 = vxpose.xlu0.b32.cont [3/16] 0.0, 128
    %4410 = vxpose.xlu0.b32.cont [4/16] 0.0, 128
    %4411 = vxpose.xlu0.b32.cont [5/16] 0.0, 128
    %4412 = vxpose.xlu0.b32.cont [6/16] 0.0, 128
    %4413 = vxpose.xlu0.b32.cont [7/16] 0.0, 128
    %4414 = vxpose.xlu0.b32.cont [8/16] 0.0, 128
    %4415 = vxpose.xlu0.b32.cont [9/16] 0.0, 128
    %4416 = vxpose.xlu0.b32.cont [10/16] 0.0, 128
    %4417 = vxpose.xlu0.b32.cont [11/16] 0.0, 128
    %4418 = vxpose.xlu0.b32.cont [12/16] 0.0, 128
    %4419 = vxpose.xlu0.b32.cont [13/16] 0.0, 128
    %4420 = vxpose.xlu0.b32.cont [14/16] 0.0, 128
    %4421 = vxpose.xlu0.b32.cont [15/16] 0.0, 128
    %4422 = vxpose.xlu0.b32.end [16/16] 0.0, 128
    %v4423 = vpop.trf.xlu0
    %v4424 = vpop.trf.xlu0
    %v4425 = vpop.trf.xlu0
    %v4426 = vpop.trf.xlu0
    %v4427 = vpop.trf.xlu0
    %v4428 = vpop.trf.xlu0
    %v4429 = vpop.trf.xlu0
    %v4430 = vpop.trf.xlu0
    %v4431 = vpop.trf.xlu0
    %v4432 = vpop.trf.xlu0
    %v4433 = vpop.trf.xlu0
    %v4434 = vpop.trf.xlu0
    %v4435 = vpop.trf.xlu0
    %v4436 = vpop.trf.xlu0
    %v4437 = vpop.trf.xlu0
    %v4438 = vpop.trf.xlu0
    %v4439 = vadd.f32 %v4423, %v4141
    %vm4440 = vcmask 32768
    %v4441 = vsel %vm4440, %v4439, -inf
    %4442 = vmax.xlane.f32.xlu0 %v4441
    %v4443 = vpop.xlane.xlu0 %4442
    %vm4444 = vcmp.eq.f32.partialorder %v4439, %v4443
    %v4445 = vsel %vm4444, %v73, 5
    %v4446 = vsel %vm4440, %v4445, 2147483647
    %v4447 = vand.u32 %v4446, 65535
    %v4448 = vshra.s32 %v4446, 16
    %v4449 = vcvt.s32.f32 %v4447
    %v4450 = vcvt.s32.f32 %v4448
    %4451 = vmin.xlane.f32.xlu0 %v4450
    %v4452 = vpop.xlane.xlu0 %4451
    %vm4453 = vcmp.eq.f32.partialorder %v4450, %v4452
    %v4454 = vsel %vm4453, %v4449, inf
    %4455 = vmin.xlane.f32.xlu0 %v4454
    %v4456 = vpop.xlane.xlu0 %4455
    %v4457 = vcvt.f32.s32 %v4456
    %v4458 = vcvt.f32.s32 %v4452
    %v4459 = vshll.u32 %v4458, 16
    %v4460 = vadd.s32 %v4459, %v4457
    %vm4461 = vcmask 57344
    %v4462 = vsel %vm4461, %v4147, 0
    %v4463 = vand.u32 %v4462, 65535
    %v4464 = vshrl.u32 %v4462, 16
    %v4465 = vcvt.s32.f32 %v4463
    %v4466 = vcvt.s32.f32 %v4464
    %4467 = vadd.xlane.f32.xlu0 %v4465
    %v4468 = vpop.xlane.xlu0 %4467
    %4469 = vadd.xlane.f32.xlu0 %v4466
    %v4470 = vpop.xlane.xlu0 %4469
    %v4471 = vcvt.f32.s32 %v4468
    %v4472 = vcvt.f32.s32 %v4470
    %v4473 = vshll.u32 %v4472, 16
    %v4474 = vadd.s32 %v4473, %v4471
    %v4475 = vsub.s32 %v4474, 1
    %vm4476 = vcmp.eq.s32.totalorder %v4475, 7
    %v4477 = vsel %vm4476, %v4460, 0
    %vm4478 = vcmp.eq.s32.totalorder %v73, 7
    %v4479 = vsel %vm4478, %v4477, 0
    %v4480 = vlaneseq
    %v4481 = vshrl.u32 %v4480, 7
    %v4482 = vsub.s32 0, %v4481
    %v4483 = vrot.slane %v4477, %v4482
    %vm4484 = vcmp.eq.s32.totalorder %v4143, %v4483
    %v4485 = vsel %vm4484, %v4401, 0
    %vm4486 = vcmask 1044480
    %v4487 = vsel %vm4486, %v4485, 0
    %v4488 = vrot.slane %v4487, 4
    %v4489 = vadd.s32 %v4487, %v4488
    %v4490 = vrot.slane %v4489, 2
    %v4491 = vadd.s32 %v4489, %v4490
    %v4492 = vrot.slane %v4491, 1
    %v4493 = vadd.s32 %v4491, %v4492
    %vm4494 = vcmp.ge.s32.totalorder %v4475, 7
    %v4495 = vsel %vm4494, %v4493, %v4477
    %vm4496 = vcmp.eq.s32.totalorder %v4475, 6
    %v4497 = vsel %vm4496, %v4460, %v4495
    %vm4498 = vcmp.eq.s32.totalorder %v73, 6
    %v4499 = vsel %vm4498, %v4497, 0
    %v4500 = vadd.s32 %v4479, %v4499
    %vm4501 = vcmp.eq.s32.totalorder %v73, %v4497
    %v4502 = vsel %vm4501, %v4362, 0
    %v4503 = vsel %vm4440, %v4502, 0
    %v4504 = vand.u32 %v4503, 65535
    %v4505 = vshrl.u32 %v4503, 16
    %v4506 = vcvt.s32.f32 %v4504
    %v4507 = vcvt.s32.f32 %v4505
    %4508 = vadd.xlane.f32.xlu0 %v4506
    %v4509 = vpop.xlane.xlu0 %4508
    %4510 = vadd.xlane.f32.xlu0 %v4507
    %v4511 = vpop.xlane.xlu0 %4510
    %v4512 = vcvt.f32.s32 %v4509
    %v4513 = vcvt.f32.s32 %v4511
    %v4514 = vshll.u32 %v4513, 16
    %v4515 = vadd.s32 %v4514, %v4512
    %vm4516 = vcmp.ge.s32.totalorder %v4475, 6
    %v4517 = vsel %vm4516, %v4515, %v4497
    %vm4518 = vcmp.eq.s32.totalorder %v4475, 5
    %v4519 = vsel %vm4518, %v4460, %v4517
    %vm4520 = vcmp.eq.s32.totalorder %v73, 5
    %v4521 = vsel %vm4520, %v4519, 0
    %v4522 = vadd.s32 %v4500, %v4521
    %v4523 = vlaneseq
    %v4524 = vshrl.u32 %v4523, 7
    %v4525 = vsub.s32 0, %v4524
    %v4526 = vrot.slane %v4519, %v4525
    %vm4527 = vcmp.eq.s32.totalorder %v4143, %v4526
    %v4528 = vsel %vm4527, %v4330, 0
    %v4529 = vsel %vm4486, %v4528, 0
    %v4530 = vrot.slane %v4529, 4
    %v4531 = vadd.s32 %v4529, %v4530
    %v4532 = vrot.slane %v4531, 2
    %v4533 = vadd.s32 %v4531, %v4532
    %v4534 = vrot.slane %v4533, 1
    %v4535 = vadd.s32 %v4533, %v4534
    %vm4536 = vcmp.ge.s32.totalorder %v4475, 5
    %v4537 = vsel %vm4536, %v4535, %v4519
    %vm4538 = vcmp.eq.s32.totalorder %v4475, 4
    %v4539 = vsel %vm4538, %v4460, %v4537
    %vm4540 = vcmp.eq.s32.totalorder %v73, 4
    %v4541 = vsel %vm4540, %v4539, 0
    %v4542 = vadd.s32 %v4522, %v4541
    %vm4543 = vcmp.eq.s32.totalorder %v73, %v4539
    %v4544 = vsel %vm4543, %v4291, 0
    %v4545 = vsel %vm4440, %v4544, 0
    %v4546 = vand.u32 %v4545, 65535
    %v4547 = vshrl.u32 %v4545, 16
    %v4548 = vcvt.s32.f32 %v4546
    %v4549 = vcvt.s32.f32 %v4547
    %4550 = vadd.xlane.f32.xlu0 %v4548
    %v4551 = vpop.xlane.xlu0 %4550
    %4552 = vadd.xlane.f32.xlu0 %v4549
    %v4553 = vpop.xlane.xlu0 %4552
    %v4554 = vcvt.f32.s32 %v4551
    %v4555 = vcvt.f32.s32 %v4553
    %v4556 = vshll.u32 %v4555, 16
    %v4557 = vadd.s32 %v4556, %v4554
    %vm4558 = vcmp.ge.s32.totalorder %v4475, 4
    %v4559 = vsel %vm4558, %v4557, %v4539
    %vm4560 = vcmp.eq.s32.totalorder %v4475, 3
    %v4561 = vsel %vm4560, %v4460, %v4559
    %vm4562 = vcmp.eq.s32.totalorder %v73, 3
    %v4563 = vsel %vm4562, %v4561, 0
    %v4564 = vadd.s32 %v4542, %v4563
    %v4565 = vlaneseq
    %v4566 = vshrl.u32 %v4565, 7
    %v4567 = vsub.s32 0, %v4566
    %v4568 = vrot.slane %v4561, %v4567
    %vm4569 = vcmp.eq.s32.totalorder %v4143, %v4568
    %v4570 = vsel %vm4569, %v4259, 0
    %v4571 = vsel %vm4486, %v4570, 0
    %v4572 = vrot.slane %v4571, 4
    %v4573 = vadd.s32 %v4571, %v4572
    %v4574 = vrot.slane %v4573, 2
    %v4575 = vadd.s32 %v4573, %v4574
    %v4576 = vrot.slane %v4575, 1
    %v4577 = vadd.s32 %v4575, %v4576
    %vm4578 = vcmp.ge.s32.totalorder %v4475, 3
    %v4579 = vsel %vm4578, %v4577, %v4561
    %vm4580 = vcmp.eq.s32.totalorder %v4475, 2
    %v4581 = vsel %vm4580, %v4460, %v4579
    %vm4582 = vcmp.eq.s32.totalorder %v73, 2
    %v4583 = vsel %vm4582, %v4581, 0
    %v4584 = vadd.s32 %v4564, %v4583
    %vm4585 = vcmp.eq.s32.totalorder %v73, %v4581
    %v4586 = vsel %vm4585, %v4219, 0
    %v4587 = vsel %vm4440, %v4586, 0
    %v4588 = vand.u32 %v4587, 65535
    %v4589 = vshrl.u32 %v4587, 16
    %v4590 = vcvt.s32.f32 %v4588
    %v4591 = vcvt.s32.f32 %v4589
    %4592 = vadd.xlane.f32.xlu0 %v4590
    %v4593 = vpop.xlane.xlu0 %4592
    %4594 = vadd.xlane.f32.xlu0 %v4591
    %v4595 = vpop.xlane.xlu0 %4594
    %v4596 = vcvt.f32.s32 %v4593
    %v4597 = vcvt.f32.s32 %v4595
    %v4598 = vshll.u32 %v4597, 16
    %v4599 = vadd.s32 %v4598, %v4596
    %vm4600 = vcmp.ge.s32.totalorder %v4475, 2
    %v4601 = vsel %vm4600, %v4599, %v4581
    %vm4602 = vcmp.eq.s32.totalorder %v4475, 1
    %v4603 = vsel %vm4602, %v4460, %v4601
    %vm4604 = vcmp.eq.s32.totalorder %v73, 1
    %v4605 = vsel %vm4604, %v4603, 0
    %v4606 = vadd.s32 %v4584, %v4605
    %v4607 = vlaneseq
    %v4608 = vshrl.u32 %v4607, 7
    %v4609 = vsub.s32 0, %v4608
    %v4610 = vrot.slane %v4603, %v4609
    %vm4611 = vcmp.eq.s32.totalorder %v4143, %v4610
    %v4612 = vsel %vm4611, %v4181, 0
    %v4613 = vsel %vm4486, %v4612, 0
    %v4614 = vrot.slane %v4613, 4
    %v4615 = vadd.s32 %v4613, %v4614
    %v4616 = vrot.slane %v4615, 2
    %v4617 = vadd.s32 %v4615, %v4616
    %v4618 = vrot.slane %v4617, 1
    %v4619 = vadd.s32 %v4617, %v4618
    %vm4620 = vcmp.ge.s32.totalorder %v4475, 1
    %v4621 = vsel %vm4620, %v4619, %v4603
    %vm4622 = vcmp.eq.s32.totalorder %v4475, 0
    %v4623 = vsel %vm4622, %v4460, %v4621
    %vm4624 = vcmp.eq.s32.totalorder %v73, 0
    %v4625 = vsel %vm4624, %v4623, 0
    %v4626 = vadd.s32 %v4606, %v4625
    %v4627 = vadd.f32 %v4140, %v4072
    %v4628 = vrot.slane %v4147, 1
    %4629 = vrot.lane.b32.xlu0 %v4628, 127
    %v4630 = vpop.permute.xlu0 %4629
    %s4631 = vtos %v4630
    %v4632 = vstv %s4631
    %vm4633 = vcmp.eq.s32.totalorder %v4632, 1
    %v4634 = vsel %vm4633, %v4124, %v4145
    %v4636 = vlaneseq
    %v4637 = vshrl.u32 %v4636, 7
    %v4638 = vsub.s32 0, %v4637
    %v4639 = vrot.slane %v4627, %v4638
    %v4641 = vadd.f32 %v4639, %v4634
    %v4642 = vsel %vm4161, %v4641, -inf
    %4643 = vmax.xlane.f32.xlu0 %v4642
    %v4644 = vpop.xlane.xlu0 %4643
    %vm4645 = vcmp.eq.f32.partialorder %v4641, %v4644
    %v4646 = vsel %vm4645, %v73, 5
    %v4647 = vsel %vm4161, %v4646, 2147483647
    %v4648 = vand.u32 %v4647, 65535
    %v4649 = vshra.s32 %v4647, 16
    %v4650 = vcvt.s32.f32 %v4648
    %v4651 = vcvt.s32.f32 %v4649
    %4652 = vmin.xlane.f32.xlu0 %v4651
    %v4653 = vpop.xlane.xlu0 %4652
    %vm4654 = vcmp.eq.f32.partialorder %v4651, %v4653
    %v4655 = vsel %vm4654, %v4650, inf
    %4656 = vmin.xlane.f32.xlu0 %v4655
    %v4657 = vpop.xlane.xlu0 %4656
    %v4658 = vcvt.f32.s32 %v4657
    %v4659 = vcvt.f32.s32 %v4653
    %v4660 = vshll.u32 %v4659, 16
    %v4661 = vadd.s32 %v4660, %v4658
    %v4662 = vlaneseq
    %v4663 = vshrl.u32 %v4662, 7
    %v4664 = vsub.s32 1, %v4663
    %v4665 = vrot.slane %v4147, %v4664
    %vm4666 = vcmp.eq.s32.totalorder %v4665, 1
    %4668 = vrot.lane.b32.xlu0 %v4091, 120
    %v4669 = vpop.permute.xlu0 %4668
    %v4671 = vsel %vm4666, %v4669, 0.0
    %v4672 = vadd.f32 %v4644, %v4671
    %4673 = vrot.lane.b32.xlu0 %v4628, 126
    %v4674 = vpop.permute.xlu0 %4673
    %s4675 = vtos %v4674
    %v4676 = vstv %s4675
    %vm4677 = vcmp.eq.s32.totalorder %v4676, 1
    %v4678 = vsel %vm4677, %v4107, %v4145
    %4680 = vset.pattern.permute.xlu0 1
    %4681 = vperm.xlu0 %4680, %v4672
    %v4682 = vpop.permute.xlu0 %4681
    %v4684 = vadd.f32 %v4682, %v4678
    %v4685 = vsel %vm4161, %v4684, -inf
    %v4686 = vrot.slane %v4685, 4
    %v4687 = vmax.f32 %v4685, %v4686
    %v4688 = vrot.slane %v4687, 2
    %v4689 = vmax.f32 %v4687, %v4688
    %v4690 = vrot.slane %v4689, 1
    %v4691 = vmax.f32 %v4689, %v4690
    %vm4692 = vcmp.eq.f32.partialorder %v4684, %v4691
    %v4693 = vsel %vm4692, %v4143, 5
    %v4694 = vsel %vm4161, %v4693, 2147483647
    %v4695 = vrot.slane %v4694, 4
    %vm4696 = vcmp.lt.s32.totalorder %v4694, %v4695
    %v4697 = vsel %vm4696, %v4694, %v4695
    %v4698 = vrot.slane %v4697, 2
    %vm4699 = vcmp.lt.s32.totalorder %v4697, %v4698
    %v4700 = vsel %vm4699, %v4697, %v4698
    %v4701 = vrot.slane %v4700, 1
    %vm4702 = vcmp.lt.s32.totalorder %v4700, %v4701
    %v4703 = vsel %vm4702, %v4700, %v4701
    %v4705 = vrot.slane %v4072, 1
    %v4707 = vsel %vm4223, %v4705, 0.0
    %v4708 = vadd.f32 %v4691, %v4707
    %4709 = vrot.lane.b32.xlu0 %v4628, 125
    %v4710 = vpop.permute.xlu0 %4709
    %s4711 = vtos %v4710
    %v4712 = vstv %s4711
    %vm4713 = vcmp.eq.s32.totalorder %v4712, 1
    %v4714 = vsel %vm4713, %v4124, %v4145
    %v4715 = vlaneseq
    %v4716 = vshrl.u32 %v4715, 7
    %v4717 = vsub.s32 1, %v4716
    %v4718 = vrot.slane %v4708, %v4717
    %v4719 = vadd.f32 %v4718, %v4714
    %v4720 = vsel %vm4161, %v4719, -inf
    %4721 = vmax.xlane.f32.xlu0 %v4720
    %v4722 = vpop.xlane.xlu0 %4721
    %vm4723 = vcmp.eq.f32.partialorder %v4719, %v4722
    %v4724 = vsel %vm4723, %v73, 5
    %v4725 = vsel %vm4161, %v4724, 2147483647
    %v4726 = vand.u32 %v4725, 65535
    %v4727 = vshra.s32 %v4725, 16
    %v4728 = vcvt.s32.f32 %v4726
    %v4729 = vcvt.s32.f32 %v4727
    %4730 = vmin.xlane.f32.xlu0 %v4729
    %v4731 = vpop.xlane.xlu0 %4730
    %vm4732 = vcmp.eq.f32.partialorder %v4729, %v4731
    %v4733 = vsel %vm4732, %v4728, inf
    %4734 = vmin.xlane.f32.xlu0 %v4733
    %v4735 = vpop.xlane.xlu0 %4734
    %v4736 = vcvt.f32.s32 %v4735
    %v4737 = vcvt.f32.s32 %v4731
    %v4738 = vshll.u32 %v4737, 16
    %v4739 = vadd.s32 %v4738, %v4736
    %v4740 = vadd.f32 %v4722, %v4671
    %4741 = vrot.lane.b32.xlu0 %v4628, 124
    %v4742 = vpop.permute.xlu0 %4741
    %s4743 = vtos %v4742
    %v4744 = vstv %s4743
    %vm4745 = vcmp.eq.s32.totalorder %v4744, 1
    %v4746 = vsel %vm4745, %v4107, %v4145
    %4748 = vset.pattern.permute.xlu0 3
    %4749 = vperm.xlu0 %4748, %v4740
    %v4750 = vpop.permute.xlu0 %4749
    %v4752 = vadd.f32 %v4750, %v4746
    %v4753 = vsel %vm4161, %v4752, -inf
    %v4754 = vrot.slane %v4753, 4
    %v4755 = vmax.f32 %v4753, %v4754
    %v4756 = vrot.slane %v4755, 2
    %v4757 = vmax.f32 %v4755, %v4756
    %v4758 = vrot.slane %v4757, 1
    %v4759 = vmax.f32 %v4757, %v4758
    %vm4760 = vcmp.eq.f32.partialorder %v4752, %v4759
    %v4761 = vsel %vm4760, %v4143, 5
    %v4762 = vsel %vm4161, %v4761, 2147483647
    %v4763 = vrot.slane %v4762, 4
    %vm4764 = vcmp.lt.s32.totalorder %v4762, %v4763
    %v4765 = vsel %vm4764, %v4762, %v4763
    %v4766 = vrot.slane %v4765, 2
    %vm4767 = vcmp.lt.s32.totalorder %v4765, %v4766
    %v4768 = vsel %vm4767, %v4765, %v4766
    %v4769 = vrot.slane %v4768, 1
    %vm4770 = vcmp.lt.s32.totalorder %v4768, %v4769
    %v4771 = vsel %vm4770, %v4768, %v4769
    %v4772 = vrot.slane %v4072, 3
    %v4774 = vsel %vm4295, %v4772, 0.0
    %v4775 = vadd.f32 %v4759, %v4774
    %4776 = vrot.lane.b32.xlu0 %v4628, 123
    %v4777 = vpop.permute.xlu0 %4776
    %s4778 = vtos %v4777
    %v4779 = vstv %s4778
    %vm4780 = vcmp.eq.s32.totalorder %v4779, 1
    %v4781 = vsel %vm4780, %v4124, %v4145
    %v4782 = vlaneseq
    %v4783 = vshrl.u32 %v4782, 7
    %v4784 = vsub.s32 1, %v4783
    %v4785 = vrot.slane %v4775, %v4784
    %v4786 = vadd.f32 %v4785, %v4781
    %v4787 = vsel %vm4161, %v4786, -inf
    %4788 = vmax.xlane.f32.xlu0 %v4787
    %v4789 = vpop.xlane.xlu0 %4788
    %vm4790 = vcmp.eq.f32.partialorder %v4786, %v4789
    %v4791 = vsel %vm4790, %v73, 5
    %v4792 = vsel %vm4161, %v4791, 2147483647
    %v4793 = vand.u32 %v4792, 65535
    %v4794 = vshra.s32 %v4792, 16
    %v4795 = vcvt.s32.f32 %v4793
    %v4796 = vcvt.s32.f32 %v4794
    %4797 = vmin.xlane.f32.xlu0 %v4796
    %v4798 = vpop.xlane.xlu0 %4797
    %vm4799 = vcmp.eq.f32.partialorder %v4796, %v4798
    %v4800 = vsel %vm4799, %v4795, inf
    %4801 = vmin.xlane.f32.xlu0 %v4800
    %v4802 = vpop.xlane.xlu0 %4801
    %v4803 = vcvt.f32.s32 %v4802
    %v4804 = vcvt.f32.s32 %v4798
    %v4805 = vshll.u32 %v4804, 16
    %v4806 = vadd.s32 %v4805, %v4803
    %v4807 = vadd.f32 %v4789, %v4671
    %4808 = vrot.lane.b32.xlu0 %v4628, 122
    %v4809 = vpop.permute.xlu0 %4808
    %s4810 = vtos %v4809
    %v4811 = vstv %s4810
    %vm4812 = vcmp.eq.s32.totalorder %v4811, 1
    %v4813 = vsel %vm4812, %v4107, %v4145
    %4815 = vset.pattern.permute.xlu0 5
    %4816 = vperm.xlu0 %4815, %v4807
    %v4817 = vpop.permute.xlu0 %4816
    %v4819 = vadd.f32 %v4817, %v4813
    %v4820 = vsel %vm4161, %v4819, -inf
    %v4821 = vrot.slane %v4820, 4
    %v4822 = vmax.f32 %v4820, %v4821
    %v4823 = vrot.slane %v4822, 2
    %v4824 = vmax.f32 %v4822, %v4823
    %v4825 = vrot.slane %v4824, 1
    %v4826 = vmax.f32 %v4824, %v4825
    %vm4827 = vcmp.eq.f32.partialorder %v4819, %v4826
    %v4828 = vsel %vm4827, %v4143, 5
    %v4829 = vsel %vm4161, %v4828, 2147483647
    %v4830 = vrot.slane %v4829, 4
    %vm4831 = vcmp.lt.s32.totalorder %v4829, %v4830
    %v4832 = vsel %vm4831, %v4829, %v4830
    %v4833 = vrot.slane %v4832, 2
    %vm4834 = vcmp.lt.s32.totalorder %v4832, %v4833
    %v4835 = vsel %vm4834, %v4832, %v4833
    %v4836 = vrot.slane %v4835, 1
    %vm4837 = vcmp.lt.s32.totalorder %v4835, %v4836
    %v4838 = vsel %vm4837, %v4835, %v4836
    %v4839 = vrot.slane %v4072, 5
    %v4841 = vsel %vm4366, %v4839, 0.0
    %v4842 = vadd.f32 %v4826, %v4841
    %4843 = vrot.lane.b32.xlu0 %v4628, 121
    %v4844 = vpop.permute.xlu0 %4843
    %s4845 = vtos %v4844
    %v4846 = vstv %s4845
    %vm4847 = vcmp.eq.s32.totalorder %v4846, 1
    %v4848 = vsel %vm4847, %v4124, %v4145
    %v4849 = vlaneseq
    %v4850 = vshrl.u32 %v4849, 7
    %v4851 = vsub.s32 1, %v4850
    %v4852 = vrot.slane %v4842, %v4851
    %v4853 = vadd.f32 %v4852, %v4848
    %v4854 = vsel %vm4161, %v4853, -inf
    %4855 = vmax.xlane.f32.xlu0 %v4854
    %v4856 = vpop.xlane.xlu0 %4855
    %vm4857 = vcmp.eq.f32.partialorder %v4853, %v4856
    %v4858 = vsel %vm4857, %v73, 5
    %v4859 = vsel %vm4161, %v4858, 2147483647
    %v4860 = vand.u32 %v4859, 65535
    %v4861 = vshra.s32 %v4859, 16
    %v4862 = vcvt.s32.f32 %v4860
    %v4863 = vcvt.s32.f32 %v4861
    %4864 = vmin.xlane.f32.xlu0 %v4863
    %v4865 = vpop.xlane.xlu0 %4864
    %vm4866 = vcmp.eq.f32.partialorder %v4863, %v4865
    %v4867 = vsel %vm4866, %v4862, inf
    %4868 = vmin.xlane.f32.xlu0 %v4867
    %v4869 = vpop.xlane.xlu0 %4868
    %v4870 = vcvt.f32.s32 %v4869
    %v4871 = vcvt.f32.s32 %v4865
    %v4872 = vshll.u32 %v4871, 16
    %v4873 = vadd.s32 %v4872, %v4870
    %v4874 = vadd.f32 %v4856, %v4671
    %4876 = vrot.lane.b32.xlu0 %v4874, 121
    %v4877 = vpop.permute.xlu0 %4876
    %4879 = vxpose.xlu0.b32.start [1/16] %v4877, 128
    %4880 = vxpose.xlu0.b32.cont [2/16] 0.0, 128
    %4881 = vxpose.xlu0.b32.cont [3/16] 0.0, 128
    %4882 = vxpose.xlu0.b32.cont [4/16] 0.0, 128
    %4883 = vxpose.xlu0.b32.cont [5/16] 0.0, 128
    %4884 = vxpose.xlu0.b32.cont [6/16] 0.0, 128
    %4885 = vxpose.xlu0.b32.cont [7/16] 0.0, 128
    %4886 = vxpose.xlu0.b32.cont [8/16] 0.0, 128
    %4887 = vxpose.xlu0.b32.cont [9/16] 0.0, 128
    %4888 = vxpose.xlu0.b32.cont [10/16] 0.0, 128
    %4889 = vxpose.xlu0.b32.cont [11/16] 0.0, 128
    %4890 = vxpose.xlu0.b32.cont [12/16] 0.0, 128
    %4891 = vxpose.xlu0.b32.cont [13/16] 0.0, 128
    %4892 = vxpose.xlu0.b32.cont [14/16] 0.0, 128
    %4893 = vxpose.xlu0.b32.cont [15/16] 0.0, 128
    %4894 = vxpose.xlu0.b32.end [16/16] 0.0, 128
    %v4895 = vpop.trf.xlu0
    %v4896 = vpop.trf.xlu0
    %v4897 = vpop.trf.xlu0
    %v4898 = vpop.trf.xlu0
    %v4899 = vpop.trf.xlu0
    %v4900 = vpop.trf.xlu0
    %v4901 = vpop.trf.xlu0
    %v4902 = vpop.trf.xlu0
    %v4903 = vpop.trf.xlu0
    %v4904 = vpop.trf.xlu0
    %v4905 = vpop.trf.xlu0
    %v4906 = vpop.trf.xlu0
    %v4907 = vpop.trf.xlu0
    %v4908 = vpop.trf.xlu0
    %v4909 = vpop.trf.xlu0
    %v4910 = vpop.trf.xlu0
    %v4911 = vadd.f32 %v4895, %v4141
    %v4912 = vsel %vm4440, %v4911, -inf
    %4913 = vmax.xlane.f32.xlu0 %v4912
    %v4914 = vpop.xlane.xlu0 %4913
    %vm4915 = vcmp.eq.f32.partialorder %v4911, %v4914
    %v4916 = vsel %vm4915, %v73, 5
    %v4917 = vsel %vm4440, %v4916, 2147483647
    %v4918 = vand.u32 %v4917, 65535
    %v4919 = vshra.s32 %v4917, 16
    %v4920 = vcvt.s32.f32 %v4918
    %v4921 = vcvt.s32.f32 %v4919
    %4922 = vmin.xlane.f32.xlu0 %v4921
    %v4923 = vpop.xlane.xlu0 %4922
    %vm4924 = vcmp.eq.f32.partialorder %v4921, %v4923
    %v4925 = vsel %vm4924, %v4920, inf
    %4926 = vmin.xlane.f32.xlu0 %v4925
    %v4927 = vpop.xlane.xlu0 %4926
    %v4928 = vcvt.f32.s32 %v4927
    %v4929 = vcvt.f32.s32 %v4923
    %v4930 = vshll.u32 %v4929, 16
    %v4931 = vadd.s32 %v4930, %v4928
    %vm4932 = vcmask 58369
    %v4933 = vsel %vm4932, %v4147, 0
    %v4934 = vand.u32 %v4933, 65535
    %v4935 = vshrl.u32 %v4933, 16
    %v4936 = vcvt.s32.f32 %v4934
    %v4937 = vcvt.s32.f32 %v4935
    %4938 = vadd.xlane.f32.xlu0 %v4936
    %v4939 = vpop.xlane.xlu0 %4938
    %4940 = vadd.xlane.f32.xlu0 %v4937
    %v4941 = vpop.xlane.xlu0 %4940
    %v4942 = vcvt.f32.s32 %v4939
    %v4943 = vcvt.f32.s32 %v4941
    %v4944 = vshll.u32 %v4943, 16
    %v4945 = vadd.s32 %v4944, %v4942
    %v4946 = vsub.s32 %v4945, 1
    %vm4947 = vcmp.eq.s32.totalorder %v4946, 7
    %v4948 = vrot.slane %v4931, 7
    %v4949 = vsel %vm4947, %v4948, 0
    %4950 = vset.pattern.permute.xlu0 0
    %4951 = vperm.xlu0 %4950, %v4949
    %v4952 = vpop.permute.xlu0 %4951
    %v4953 = vsel %vm4478, %v4952, 0
    %v4954 = vlaneseq
    %v4955 = vshrl.u32 %v4954, 7
    %v4956 = vsub.s32 1, %v4955
    %v4957 = vrot.slane %v4949, %v4956
    %vm4958 = vcmp.eq.s32.totalorder %v4143, %v4957
    %v4959 = vsel %vm4958, %v4873, 0
    %vm4960 = vcmask 4096
    %v4961 = vsel %vm4960, %v4959, 0
    %v4962 = vrot.slane %v4961, 4
    %v4963 = vadd.s32 %v4961, %v4962
    %v4964 = vrot.slane %v4963, 2
    %v4965 = vadd.s32 %v4963, %v4964
    %v4966 = vrot.slane %v4965, 1
    %v4967 = vadd.s32 %v4965, %v4966
    %vm4968 = vcmp.ge.s32.totalorder %v4946, 7
    %v4969 = vsel %vm4968, %v4967, %v4949
    %vm4970 = vcmp.eq.s32.totalorder %v4946, 6
    %v4971 = vsel %vm4970, %v4948, %v4969
    %4972 = vset.pattern.permute.xlu0 0
    %4973 = vperm.xlu0 %4972, %v4971
    %v4974 = vpop.permute.xlu0 %4973
    %v4975 = vsel %vm4498, %v4974, 0
    %v4976 = vadd.s32 %v4953, %v4975
    %vm4977 = vcmp.eq.s32.totalorder %v73, %v4974
    %v4978 = vsel %vm4977, %v4838, 0
    %vm4979 = vcmask 33793
    %v4980 = vsel %vm4979, %v4978, 0
    %v4981 = vand.u32 %v4980, 65535
    %v4982 = vshrl.u32 %v4980, 16
    %v4983 = vcvt.s32.f32 %v4981
    %v4984 = vcvt.s32.f32 %v4982
    %4985 = vadd.xlane.f32.xlu0 %v4983
    %v4986 = vpop.xlane.xlu0 %4985
    %4987 = vadd.xlane.f32.xlu0 %v4984
    %v4988 = vpop.xlane.xlu0 %4987
    %v4989 = vcvt.f32.s32 %v4986
    %v4990 = vcvt.f32.s32 %v4988
    %v4991 = vshll.u32 %v4990, 16
    %v4992 = vadd.s32 %v4991, %v4989
    %vm4993 = vcmp.ge.s32.totalorder %v4946, 6
    %v4994 = vsel %vm4993, %v4992, %v4971
    %vm4995 = vcmp.eq.s32.totalorder %v4946, 5
    %v4996 = vsel %vm4995, %v4948, %v4994
    %4997 = vset.pattern.permute.xlu0 0
    %4998 = vperm.xlu0 %4997, %v4996
    %v4999 = vpop.permute.xlu0 %4998
    %v5000 = vsel %vm4520, %v4999, 0
    %v5001 = vadd.s32 %v4976, %v5000
    %v5002 = vlaneseq
    %v5003 = vshrl.u32 %v5002, 7
    %v5004 = vsub.s32 1, %v5003
    %v5005 = vrot.slane %v4996, %v5004
    %vm5006 = vcmp.eq.s32.totalorder %v4143, %v5005
    %v5007 = vsel %vm5006, %v4806, 0
    %v5008 = vsel %vm4960, %v5007, 0
    %v5009 = vrot.slane %v5008, 4
    %v5010 = vadd.s32 %v5008, %v5009
    %v5011 = vrot.slane %v5010, 2
    %v5012 = vadd.s32 %v5010, %v5011
    %v5013 = vrot.slane %v5012, 1
    %v5014 = vadd.s32 %v5012, %v5013
    %vm5015 = vcmp.ge.s32.totalorder %v4946, 5
    %v5016 = vsel %vm5015, %v5014, %v4996
    %vm5017 = vcmp.eq.s32.totalorder %v4946, 4
    %v5018 = vsel %vm5017, %v4948, %v5016
    %5019 = vset.pattern.permute.xlu0 0
    %5020 = vperm.xlu0 %5019, %v5018
    %v5021 = vpop.permute.xlu0 %5020
    %v5022 = vsel %vm4540, %v5021, 0
    %v5023 = vadd.s32 %v5001, %v5022
    %vm5024 = vcmp.eq.s32.totalorder %v73, %v5021
    %v5025 = vsel %vm5024, %v4771, 0
    %v5026 = vsel %vm4979, %v5025, 0
    %v5027 = vand.u32 %v5026, 65535
    %v5028 = vshrl.u32 %v5026, 16
    %v5029 = vcvt.s32.f32 %v5027
    %v5030 = vcvt.s32.f32 %v5028
    %5031 = vadd.xlane.f32.xlu0 %v5029
    %v5032 = vpop.xlane.xlu0 %5031
    %5033 = vadd.xlane.f32.xlu0 %v5030
    %v5034 = vpop.xlane.xlu0 %5033
    %v5035 = vcvt.f32.s32 %v5032
    %v5036 = vcvt.f32.s32 %v5034
    %v5037 = vshll.u32 %v5036, 16
    %v5038 = vadd.s32 %v5037, %v5035
    %vm5039 = vcmp.ge.s32.totalorder %v4946, 4
    %v5040 = vsel %vm5039, %v5038, %v5018
    %vm5041 = vcmp.eq.s32.totalorder %v4946, 3
    %v5042 = vsel %vm5041, %v4948, %v5040
    %5043 = vset.pattern.permute.xlu0 0
    %5044 = vperm.xlu0 %5043, %v5042
    %v5045 = vpop.permute.xlu0 %5044
    %v5046 = vsel %vm4562, %v5045, 0
    %v5047 = vadd.s32 %v5023, %v5046
    %v5048 = vlaneseq
    %v5049 = vshrl.u32 %v5048, 7
    %v5050 = vsub.s32 1, %v5049
    %v5051 = vrot.slane %v5042, %v5050
    %vm5052 = vcmp.eq.s32.totalorder %v4143, %v5051
    %v5053 = vsel %vm5052, %v4739, 0
    %v5054 = vsel %vm4960, %v5053, 0
    %v5055 = vrot.slane %v5054, 4
    %v5056 = vadd.s32 %v5054, %v5055
    %v5057 = vrot.slane %v5056, 2
    %v5058 = vadd.s32 %v5056, %v5057
    %v5059 = vrot.slane %v5058, 1
    %v5060 = vadd.s32 %v5058, %v5059
    %vm5061 = vcmp.ge.s32.totalorder %v4946, 3
    %v5062 = vsel %vm5061, %v5060, %v5042
    %vm5063 = vcmp.eq.s32.totalorder %v4946, 2
    %v5064 = vsel %vm5063, %v4948, %v5062
    %5065 = vset.pattern.permute.xlu0 0
    %5066 = vperm.xlu0 %5065, %v5064
    %v5067 = vpop.permute.xlu0 %5066
    %v5068 = vsel %vm4582, %v5067, 0
    %v5069 = vadd.s32 %v5047, %v5068
    %vm5070 = vcmp.eq.s32.totalorder %v73, %v5067
    %v5071 = vsel %vm5070, %v4703, 0
    %v5072 = vsel %vm4979, %v5071, 0
    %v5073 = vand.u32 %v5072, 65535
    %v5074 = vshrl.u32 %v5072, 16
    %v5075 = vcvt.s32.f32 %v5073
    %v5076 = vcvt.s32.f32 %v5074
    %5077 = vadd.xlane.f32.xlu0 %v5075
    %v5078 = vpop.xlane.xlu0 %5077
    %5079 = vadd.xlane.f32.xlu0 %v5076
    %v5080 = vpop.xlane.xlu0 %5079
    %v5081 = vcvt.f32.s32 %v5078
    %v5082 = vcvt.f32.s32 %v5080
    %v5083 = vshll.u32 %v5082, 16
    %v5084 = vadd.s32 %v5083, %v5081
    %vm5085 = vcmp.ge.s32.totalorder %v4946, 2
    %v5086 = vsel %vm5085, %v5084, %v5064
    %vm5087 = vcmp.eq.s32.totalorder %v4946, 1
    %v5088 = vsel %vm5087, %v4948, %v5086
    %5089 = vset.pattern.permute.xlu0 0
    %5090 = vperm.xlu0 %5089, %v5088
    %v5091 = vpop.permute.xlu0 %5090
    %v5092 = vsel %vm4604, %v5091, 0
    %v5093 = vadd.s32 %v5069, %v5092
    %v5094 = vlaneseq
    %v5095 = vshrl.u32 %v5094, 7
    %v5096 = vsub.s32 1, %v5095
    %v5097 = vrot.slane %v5088, %v5096
    %vm5098 = vcmp.eq.s32.totalorder %v4143, %v5097
    %v5099 = vsel %vm5098, %v4661, 0
    %v5100 = vsel %vm4960, %v5099, 0
    %v5101 = vrot.slane %v5100, 4
    %v5102 = vadd.s32 %v5100, %v5101
    %v5103 = vrot.slane %v5102, 2
    %v5104 = vadd.s32 %v5102, %v5103
    %v5105 = vrot.slane %v5104, 1
    %v5106 = vadd.s32 %v5104, %v5105
    %vm5107 = vcmp.ge.s32.totalorder %v4946, 1
    %v5108 = vsel %vm5107, %v5106, %v5088
    %vm5109 = vcmp.eq.s32.totalorder %v4946, 0
    %v5110 = vsel %vm5109, %v4948, %v5108
    %5111 = vset.pattern.permute.xlu0 0
    %5112 = vperm.xlu0 %5111, %v5110
    %v5113 = vpop.permute.xlu0 %5112
    %v5114 = vsel %vm4624, %v5113, 0
    %v5115 = vadd.s32 %v5093, %v5114
    %vm5116 = vcmask 1040384
    %v5117 = vsel %vm5116, %v4626, %v5115
    %vm5118 = vcmask 58368
    %5119 = vst.msk [vmem:[#allocation2] sm:$0x3] %vm5118, %v5117
    // Predicated region
    $region82: #{transformer_crf_decode.1} parent=1 // pred_check
      _
    $region83: #{transformer_crf_decode.1} parent=1 // pred_check_branch
      %5121 = sbr.rel (0) target = $region85
    $region84: #{transformer_crf_decode.1} parent=1 // pred_region
      %s5123 = ssub.s32 32, 32
      %5124 = vsyncadd [#allocation3], %s5123
      %s5126 = sshll.u32 [#allocation2], 4
      %s5127 = int_to_ptr.vmem [resolvable:$true] %s5126
      %5129 = dma.vmem_to_hbm [thread:$0]  %s5127, 32, %s20, [#allocation3]
    $region85: #{transformer_crf_decode.1} parent=1 // pred_fallthru
      _
    // Predicated region
    $region86: #{transformer_crf_decode.1} parent=1 // pred_check
      _
    $region87: #{transformer_crf_decode.1} parent=1 // pred_check_branch
      %5131 = sbr.rel (0) target = $region89
    $region88: #{transformer_crf_decode.1} parent=1 // pred_region
      %5132 = dma.done [#allocation3], 32
    $region89: #{transformer_crf_decode.1} parent=1 // pred_fallthru
      _
    %5133 = vsyncpa [#allocation3], 1

</llo_original>
